<compile_context>
chip_gen: v7x
topology: tpu7x:2x2x1
jax: 0.10.0
libtpu: 0.0.40
codegen_flags: <defaults>
</compile_context>

<pallas_src>
import functools

import jax
import jax.numpy as jnp
import numpy as np
from jax.experimental import pallas as pl
from jax.experimental.pallas import tpu as pltpu


def _round_up(x, m):
    return (x + m - 1) // m * m


_VMEM_LIMIT = 32 * 1024 * 1024
_CPARAMS = pltpu.CompilerParams(vmem_limit_bytes=_VMEM_LIMIT)


# ---------------------------------------------------------------------------
# Generic matmul + bias + activation (full-block, or small M-grid for pipelining)
# ---------------------------------------------------------------------------
def _matmul_bias_act_kernel(a_ref, b_ref, bias_ref, o_ref, *, act):
    acc = jnp.dot(a_ref[...], b_ref[...], preferred_element_type=jnp.float32)
    acc = acc + bias_ref[...]
    if act == "relu":
        acc = jnp.maximum(acc, 0.0)
    elif act == "sigmoid":
        acc = jax.nn.sigmoid(acc)
    o_ref[...] = acc.astype(o_ref.dtype)


def matmul_bias_act(a, b, bias_row, act, out_dtype, m_tile=None):
    """act(a @ b + bias).  a: [M, K] bf16, b: [K, N] bf16, bias_row: [1, N] f32."""
    M, K = a.shape
    K2, Nd = b.shape
    assert K == K2
    kernel = functools.partial(_matmul_bias_act_kernel, act=act)
    if m_tile is None or M % m_tile != 0 or M // m_tile < 2:
        return pl.pallas_call(
            kernel,
            out_shape=jax.ShapeDtypeStruct((M, Nd), out_dtype),
            compiler_params=_CPARAMS,
        )(a, b, bias_row)
    # Small M-grid: weight/bias blocks are grid-invariant, cols/out blocks tile M.
    return pl.pallas_call(
        kernel,
        out_shape=jax.ShapeDtypeStruct((M, Nd), out_dtype),
        grid=(M // m_tile,),
        in_specs=[
            pl.BlockSpec((m_tile, K), lambda i: (i, 0)),
            pl.BlockSpec((K, Nd), lambda i: (0, 0)),
            pl.BlockSpec((1, Nd), lambda i: (0, 0)),
        ],
        out_specs=pl.BlockSpec((m_tile, Nd), lambda i: (i, 0)),
        compiler_params=pltpu.CompilerParams(
            dimension_semantics=("parallel",),
            vmem_limit_bytes=_VMEM_LIMIT),
    )(a, b, bias_row)


# ---------------------------------------------------------------------------
# Fused middle block: enc2 + enc3 + latent2dist + reparam + dist2latent + dec1 + dec2
# ---------------------------------------------------------------------------
def _fused_mid_kernel(cols2_ref, eps_ref, y_ref,
                      w2_ref, b2_ref, w3_ref, b3_ref,
                      wld_ref, bld_ref,
                      wdz_ref, wdy_ref, bd_ref,
                      w1_ref, b1_ref, wd2_ref, bd2_ref,
                      dist_ref, d2_ref,
                      lat_ref, cols_d2_ref,
                      *, n, latent_dim):
    f32 = jnp.float32
    bf16 = jnp.bfloat16
    c2 = w2_ref.shape[1]                  # enc2 OC (=128) == dec1 OC

    # enc2: Conv2d(64,128,4,s=2,p=1) over the 8x8 map; cols rows ordered (cell, n).
    v2 = jnp.dot(cols2_ref[...], w2_ref[...], preferred_element_type=f32) + b2_ref[...]
    v2 = jnp.maximum(v2, 0.0).astype(bf16)                              # [16*n, 128]

    # flatten(NHWC) -> per-image rows, assembled in a VMEM scratch (rows >= n stay 0).
    lat_ref[...] = jnp.zeros(lat_ref.shape, bf16)
    for c in range(16):
        lat_ref[0:n, c * c2:(c + 1) * c2] = v2[c * n:(c + 1) * n, :]
    lat = lat_ref[...]                                                  # [npad, 2048]

    # enc3: Conv2d(128,256,4,s=1) over the whole 4x4 map == dense, + ReLU.
    h = jnp.dot(lat, w3_ref[...], preferred_element_type=f32) + b3_ref[...]
    h = jnp.maximum(h, 0.0).astype(bf16)                                # [npad, 256]

    # latent2dist: one lane-contiguous (mu || logvar) buffer.
    dist = jnp.dot(h, wld_ref[...], preferred_element_type=f32) + bld_ref[...]
    dist_ref[...] = dist                                                # [npad, 2*latent]
    mu = dist[:, :latent_dim]
    logvar = dist[:, latent_dim:]

    # reparameterize: z = eps * exp(0.5 * logvar) + mu
    z = eps_ref[...] * jnp.exp(0.5 * logvar) + mu                       # [npad, latent]

    # dist2latent on cat([z, y]) == z @ Wz + y @ Wy, then the decoder's leading ReLU.
    r = (jnp.dot(z.astype(bf16), wdz_ref[...], preferred_element_type=f32)
         + jnp.dot(y_ref[...], wdy_ref[...], preferred_element_type=f32)
         + bd_ref[...])
    r = jnp.maximum(r, 0.0).astype(bf16)                                # [npad, 256]

    # dec1: ConvTranspose2d(256,128,4) on a 1x1 map == dense -> NHWC-flat 4x4x128, + ReLU.
    d1 = jnp.dot(r, w1_ref[...], preferred_element_type=f32) + b1_ref[...]
    d1 = jnp.maximum(d1, 0.0).astype(bf16)[:n, :]                       # [n, 2048]

    # dec2: ConvTranspose2d(128,64,4,s=2,p=1) in sub-pixel form.  In-kernel im2col:
    # k=3/s=1/p=1 taps are 128-lane-aligned static slices of the lane-flat d1 rows,
    # assembled per output cell into a VMEM cols scratch (rows ordered (cell, n)).
    zero_tap = jnp.zeros((n, c2), bf16)
    for yy in range(4):
        for xx in range(4):
            taps = []
            for dy in (-1, 0, 1):
                for dx in (-1, 0, 1):
                    sy, sx = yy + dy, xx + dx
                    if 0 <= sy < 4 and 0 <= sx < 4:
                        off = (sy * 4 + sx) * c2
                        taps.append(d1[:, off:off + c2])
                    else:
                        taps.append(zero_tap)
            cell = yy * 4 + xx
            cols_d2_ref[cell * n:(cell + 1) * n, :] = jnp.concatenate(taps, axis=1)

    d2 = (jnp.dot(cols_d2_ref[...], wd2_ref[...], preferred_element_type=f32)
          + bd2_ref[...])
    d2_ref[...] = jnp.maximum(d2, 0.0).astype(d2_ref.dtype)             # [16*n, 4*64]


def fused_mid(cols2, eps, y_p, q, *, n, latent_dim):
    npad = eps.shape[0]
    k_lat = q["enc3_w"].shape[0]
    k_d2 = q["dec2_w"].shape[0]
    kernel = functools.partial(_fused_mid_kernel, n=n, latent_dim=latent_dim)
    return pl.pallas_call(
        kernel,
        out_shape=(
            jax.ShapeDtypeStruct((npad, 2 * latent_dim), jnp.float32),           # mu || logvar
            jax.ShapeDtypeStruct((16 * n, q["dec2_w"].shape[1]), jnp.bfloat16),  # dec2 out
        ),
        scratch_shapes=[
            pltpu.VMEM((npad, k_lat), jnp.bfloat16),     # flattened enc2 output
            pltpu.VMEM((16 * n, k_d2), jnp.bfloat16),    # dec2 in-kernel im2col cols
        ],
        compiler_params=_CPARAMS,
    )(cols2, eps, y_p,
      q["enc2_w"], q["enc2_b"], q["enc3_w"], q["enc3_b"],
      q["l2d_w"], q["l2d_b"],
      q["wdz"], q["wdy"], q["bd"],
      q["dec1_w"], q["dec1_b"], q["dec2_w"], q["dec2_b"])


# ---------------------------------------------------------------------------
# NHWC im2col + per-layer conv wrappers (tiny XLA glue; matmuls run in Pallas)
# ---------------------------------------------------------------------------
def _im2col_nhwc(x, k, stride, pad):
    """x: [N, H, W, C] -> [N, Ho, Wo, k*k*C] patch tensor, K ordered (kh, kw, c)."""
    N, H, W, C = x.shape
    xp = jnp.pad(x, ((0, 0), (pad, pad), (pad, pad), (0, 0)))
    Ho = (H + 2 * pad - k) // stride + 1
    Wo = (W + 2 * pad - k) // stride + 1
    patches = [
        xp[:, i:i + stride * Ho:stride, j:j + stride * Wo:stride, :]
        for i in range(k) for j in range(k)
    ]
    return jnp.concatenate(patches, axis=-1), Ho, Wo


def _im2col_rows(x, k, stride, pad):
    """Rows ordered (n, oy, ox)."""
    cols, Ho, Wo = _im2col_nhwc(x, k, stride, pad)
    return cols.reshape(x.shape[0] * Ho * Wo, -1), Ho, Wo


def _im2col_cells_first(x, k, stride, pad):
    """Rows ordered (oy, ox, n) -- the layout the fused middle kernel expects."""
    cols, Ho, Wo = _im2col_nhwc(x, k, stride, pad)
    cols = jnp.transpose(cols, (1, 2, 0, 3))
    return cols.reshape(Ho * Wo * x.shape[0], -1)


def conv2d_nhwc(x, w_mat, bias_row, *, k, stride, pad, act,
                out_dtype=jnp.bfloat16, m_tile=None):
    """PyTorch-semantics Conv2d on NHWC input; w_mat [k*k*C, OC] (pre-laid-out)."""
    N = x.shape[0]
    cols, Ho, Wo = _im2col_rows(x, k, stride, pad)
    out = matmul_bias_act(cols.astype(jnp.bfloat16), w_mat, bias_row, act,
                          out_dtype, m_tile=m_tile)
    return out.reshape(N, Ho, Wo, w_mat.shape[1])


def conv_transpose2d_subpixel(x, w_mat, bias_row, *, act,
                              out_dtype=jnp.bfloat16, m_tile=None):
    """PyTorch ConvTranspose2d(k=4, s=2, p=1) on NHWC via sub-pixel decomposition."""
    N, h, w, _ = x.shape
    cols, _, _ = _im2col_rows(x, 3, 1, 1)
    out = matmul_bias_act(cols.astype(jnp.bfloat16), w_mat, bias_row, act,
                          out_dtype, m_tile=m_tile)
    OC = w_mat.shape[1] // 4
    out = out.reshape(N, h, w, 2, 2, OC)                       # (n, Y, X, r, s, oc)
    return out.transpose(0, 1, 3, 2, 4, 5).reshape(N, 2 * h, 2 * w, OC)


# ---------------------------------------------------------------------------
# Parameters: PyTorch-convention init + ONE-TIME layout prep (outside jit)
# ---------------------------------------------------------------------------
def init_params(key, channels=1, latent_dim=16, num_classes=10):
    """Mirrors weights_init(init_type='gaussian'): W ~ N(0, 0.02), b = 0."""
    def w(k, shape):
        return 0.02 * jax.random.normal(k, shape, jnp.float32)

    ks = jax.random.split(key, 10)
    p = {}
    p["stem_w"], p["stem_b"] = w(ks[0], (32, channels, 4, 4)), jnp.zeros((32,), jnp.float32)
    p["enc1_w"], p["enc1_b"] = w(ks[1], (64, 32, 4, 4)), jnp.zeros((64,), jnp.float32)
    p["enc2_w"], p["enc2_b"] = w(ks[2], (128, 64, 4, 4)), jnp.zeros((128,), jnp.float32)
    p["enc3_w"], p["enc3_b"] = w(ks[3], (256, 128, 4, 4)), jnp.zeros((256,), jnp.float32)
    p["l2d_w"], p["l2d_b"] = w(ks[4], (2 * latent_dim, 256)), jnp.zeros((2 * latent_dim,), jnp.float32)
    p["d2l_w"], p["d2l_b"] = w(ks[5], (256, latent_dim + num_classes)), jnp.zeros((256,), jnp.float32)
    p["dec1_w"], p["dec1_b"] = w(ks[6], (256, 128, 4, 4)), jnp.zeros((128,), jnp.float32)
    p["dec2_w"], p["dec2_b"] = w(ks[7], (128, 64, 4, 4)), jnp.zeros((64,), jnp.float32)
    p["dec3_w"], p["dec3_b"] = w(ks[8], (64, 32, 4, 4)), jnp.zeros((32,), jnp.float32)
    p["final_w"], p["final_b"] = w(ks[9], (32, channels, 4, 4)), jnp.zeros((channels,), jnp.float32)
    return p


def _conv_w_to_mat(w):
    """Conv2d weight [OC, IC, KH, KW] -> [KH*KW*IC, OC] (K order: kh, kw, ic)."""
    OC, IC, KH, KW = w.shape
    return jnp.transpose(w, (2, 3, 1, 0)).reshape(KH * KW * IC, OC).astype(jnp.bfloat16)


def _subpixel_deconv_w_to_mat(wt, b):
    """ConvTranspose2d(k=4, s=2, p=1) weight [IC, OC, 4, 4] -> [9*IC, 4*OC].

    Matmul against a k=3/s=1/p=1 im2col of the input; output column
    (r*2+s)*OC + oc holds output pixel (2Y+r, 2X+s, oc).
    """
    wt = np.asarray(wt, np.float32)
    assert wt.shape[2] == 4 and wt.shape[3] == 4, "sub-pixel rewrite assumes k=4, s=2, p=1"
    IC, OC = wt.shape[0], wt.shape[1]
    wm = np.zeros((3, 3, IC, 2, 2, OC), np.float32)
    for r in range(2):
        for s in range(2):
            for u in range(3):
                kh = 3 - 2 * u + r
                if not 0 <= kh < 4:
                    continue
                for v in range(3):
                    kw = 3 - 2 * v + s
                    if not 0 <= kw < 4:
                        continue
                    wm[u, v, :, r, s, :] = wt[:, :, kh, kw]
    wm = wm.reshape(9 * IC, 4 * OC)
    b4 = np.tile(np.asarray(b, np.float32), 4).reshape(1, 4 * OC)
    return jnp.asarray(wm, jnp.bfloat16), jnp.asarray(b4, jnp.float32)


def _bias_row(b):
    return jnp.asarray(b, jnp.float32).reshape(1, -1)


def prepare_params(p, latent_dim=16):
    """One-time (outside jit) re-layout of PyTorch-convention weights."""
    bf16 = jnp.bfloat16
    q = {}
    for name in ("stem", "enc1", "enc2", "enc3"):
        q[name + "_w"] = _conv_w_to_mat(p[name + "_w"])
        q[name + "_b"] = _bias_row(p[name + "_b"])
    # latent2dist as ONE [256, 2*latent] matmul (mu || logvar lane-contiguous).
    q["l2d_w"] = p["l2d_w"].T.astype(bf16)
    q["l2d_b"] = _bias_row(p["l2d_b"])
    # dist2latent split so cat([z, y]) is never materialized; class half K padded.
    wz = p["d2l_w"][:, :latent_dim].T                                  # [latent, 256]
    wy = p["d2l_w"][:, latent_dim:].T                                  # [classes, 256]
    ncls_p = _round_up(wy.shape[0], 8)
    q["wdz"] = wz.astype(bf16)
    q["wdy"] = jnp.pad(wy, ((0, ncls_p - wy.shape[0]), (0, 0))).astype(bf16)
    q["bd"] = _bias_row(p["d2l_b"])
    # dec1: ConvTranspose2d(256,128,4) on a 1x1 map == dense 256 -> 4*4*128 (NHWC-flat).
    q["dec1_w"] = jnp.transpose(p["dec1_w"], (0, 2, 3, 1)).reshape(p["dec1_w"].shape[0], -1).astype(bf16)
    q["dec1_b"] = _bias_row(jnp.tile(p["dec1_b"], 16))
    # Stride-2 decoder convs as sub-pixel matmuls.
    for name in ("dec2", "dec3", "final"):
        q[name + "_w"], q[name + "_b"] = _subpixel_deconv_w_to_mat(p[name + "_w"], p[name + "_b"])
    return q


# ---------------------------------------------------------------------------
# Forward:  (decode(cat(reparam(encode(x)), y)), mu, logvar)
# ---------------------------------------------------------------------------
def forward(q, x, y, eps_key):
    """x: [N, C, 32, 32] f32 (NCHW), y: [N, num_classes] f32."""
    N = x.shape[0]
    latent_dim = q["wdz"].shape[0]
    bf16 = jnp.bfloat16
    npad = max(16, _round_up(N, 8))                                     # bf16 sublane tile

    xh = jnp.transpose(x, (0, 2, 3, 1)).astype(bf16)                    # NCHW -> NHWC

    # ---- encoder head: stem + first _encoder conv ----
    h = conv2d_nhwc(xh, q["stem_w"], q["stem_b"], k=4, stride=2, pad=1,
                    act="relu")                                         # [N,16,16,32]
    h = conv2d_nhwc(h, q["enc1_w"], q["enc1_b"], k=4, stride=2, pad=1,
                    act="relu", m_tile=64)                              # [N,8,8,64]

    # ---- fused middle: enc2 + enc3 + latent2dist + reparam + dist2latent + dec1 + dec2 ----
    cols2 = _im2col_cells_first(h, 4, 2, 1).astype(bf16)                # [16N, 1024]
    eps = jax.random.normal(eps_key, (npad, latent_dim), jnp.float32)
    ncls_p = q["wdy"].shape[0]
    y_p = jnp.pad(y.astype(bf16), ((0, npad - N), (0, ncls_p - y.shape[1])))
    dist, d2 = fused_mid(cols2, eps, y_p, q, n=N, latent_dim=latent_dim)
    mu, logvar = dist[:N, :latent_dim], dist[:N, latent_dim:]

    # dec2 depth-to-space: rows (cell, n), cols (r, s, oc) -> [N, 8, 8, 64]
    oc2 = q["dec2_w"].shape[1] // 4
    r = d2.reshape(4, 4, N, 2, 2, oc2).transpose(2, 0, 3, 1, 4, 5).reshape(N, 8, 8, oc2)

    # ---- remaining decoder: sub-pixel ConvTranspose2d(k=4, s=2, p=1) layers ----
    r = conv_transpose2d_subpixel(r, q["dec3_w"], q["dec3_b"], act="relu",
                                  m_tile=64)                            # [N,16,16,32]
    out = conv_transpose2d_subpixel(r, q["final_w"], q["final_b"], act="sigmoid",
                                    out_dtype=jnp.float32, m_tile=256)  # [N,32,32,C]
    return jnp.transpose(out, (0, 3, 1, 2)), mu, logvar


if __name__ == "__main__":
    key = jax.random.PRNGKey(0)
    kp, kx, ky, keps = jax.random.split(key, 4)

    N, C, H, W = 2, 1, 32, 32              # img_shape=32 branch, single channel
    latent_dim, num_classes = 16, 10

    torch_style_params = init_params(kp, channels=C, latent_dim=latent_dim, num_classes=num_classes)
    q = prepare_params(torch_style_params, latent_dim=latent_dim)   # one-time weight layout

    x = jax.random.uniform(kx, (N, C, H, W), jnp.float32)
    y = jax.nn.one_hot(jax.random.randint(ky, (N,), 0, num_classes),
                       num_classes).astype(jnp.float32)

    fwd = jax.jit(forward)
    out, mu, logvar = fwd(q, x, y, keps)
    jax.block_until_ready((out, mu, logvar))

    assert out.shape == (N, C, H, W)
    assert mu.shape == (N, latent_dim) and logvar.shape == (N, latent_dim)
    assert bool(jnp.all(jnp.isfinite(out))) and bool(jnp.all((out >= 0) & (out <= 1)))
    print("KERNEL_OK")
</pallas_src>

<mosaic_0001>
module attributes {stable_mosaic.version = 11 : i64} {
  func.func @_matmul_bias_act_kernel(%arg0: memref<512x16xbf16, #tpu.memory_space<vmem>>, %arg1: memref<16x32xbf16, #tpu.memory_space<vmem>>, %arg2: memref<1x32xf32, #tpu.memory_space<vmem>>, %arg3: memref<512x32xbf16, #tpu.memory_space<vmem>>) attributes {dimension_semantics = [], scalar_prefetch = 0 : i64, scratch_operands = 0 : i64, tpu.core_type = #tpu.core_type<tc>} {
    %c0 = arith.constant 0 : index
    %c0_0 = arith.constant 0 : index
    %0 = vector.load %arg0[%c0, %c0_0] : memref<512x16xbf16, #tpu.memory_space<vmem>>, vector<512x16xbf16>
    %c0_1 = arith.constant 0 : index
    %c0_2 = arith.constant 0 : index
    %1 = vector.load %arg1[%c0_1, %c0_2] : memref<16x32xbf16, #tpu.memory_space<vmem>>, vector<16x32xbf16>
    %cst = arith.constant dense<0.000000e+00> : vector<512x32xf32>
    %2 = tpu.matmul %0, %1, %cst {dimension_numbers = #tpu.dot_dimension_numbers<[1], [0], [0], [1], [0, 0, 1, 1], [], []>} : vector<512x16xbf16>, vector<16x32xbf16>, vector<512x32xf32> -> vector<512x32xf32>
    %c0_3 = arith.constant 0 : index
    %c0_4 = arith.constant 0 : index
    %3 = vector.load %arg2[%c0_3, %c0_4] : memref<1x32xf32, #tpu.memory_space<vmem>>, vector<1x32xf32>
    %4 = vector.broadcast %3 : vector<1x32xf32> to vector<512x32xf32>
    %5 = arith.addf %2, %4 : vector<512x32xf32>
    %cst_5 = arith.constant 0.000000e+00 : f32
    %6 = vector.broadcast %cst_5 : f32 to vector<512x32xf32>
    %7 = arith.maximumf %5, %6 : vector<512x32xf32>
    %8 = arith.truncf %7 : vector<512x32xf32> to vector<512x32xbf16>
    %c0_6 = arith.constant 0 : index
    %c0_7 = arith.constant 0 : index
    %9 = vector.load %arg3[%c0_6, %c0_7] : memref<512x32xbf16, #tpu.memory_space<vmem>>, vector<512x32xbf16>
    tpu.vector_store %arg3[%c0_6, %c0_7], %8 {strides = array<i32>} : memref<512x32xbf16, #tpu.memory_space<vmem>>, vector<512x32xbf16>,
    return
  }
}

module attributes {stable_mosaic.version = 11 : i64} {
  func.func @_matmul_bias_act_kernel(%arg0: i32, %arg1: memref<64x512xbf16, #tpu.memory_space<vmem>>, %arg2: memref<512x64xbf16, #tpu.memory_space<vmem>>, %arg3: memref<1x64xf32, #tpu.memory_space<vmem>>, %arg4: memref<64x64xbf16, #tpu.memory_space<vmem>>) attributes {dimension_semantics = [#tpu.dimension_semantics<parallel>], iteration_bounds = array<i64: 2>, scalar_prefetch = 0 : i64, scratch_operands = 0 : i64, tpu.core_type = #tpu.core_type<tc>, window_params = [{transform_indices = @transform_0, window_bounds = array<i64: 64, 512>}, {pipeline_mode = #tpu.pipeline_mode<synchronous>, transform_indices = @transform_1, window_bounds = array<i64: 512, 64>}, {pipeline_mode = #tpu.pipeline_mode<synchronous>, transform_indices = @transform_2, window_bounds = array<i64: 1, 64>}, {transform_indices = @transform_3, window_bounds = array<i64: 64, 64>}]} {
    %c0 = arith.constant 0 : index
    %c0_0 = arith.constant 0 : index
    %0 = vector.load %arg1[%c0, %c0_0] : memref<64x512xbf16, #tpu.memory_space<vmem>>, vector<64x512xbf16>
    %c0_1 = arith.constant 0 : index
    %c0_2 = arith.constant 0 : index
    %1 = vector.load %arg2[%c0_1, %c0_2] : memref<512x64xbf16, #tpu.memory_space<vmem>>, vector<512x64xbf16>
    %cst = arith.constant dense<0.000000e+00> : vector<64x64xf32>
    %2 = tpu.matmul %0, %1, %cst {dimension_numbers = #tpu.dot_dimension_numbers<[1], [0], [0], [1], [0, 0, 1, 1], [], []>} : vector<64x512xbf16>, vector<512x64xbf16>, vector<64x64xf32> -> vector<64x64xf32>
    %c0_3 = arith.constant 0 : index
    %c0_4 = arith.constant 0 : index
    %3 = vector.load %arg3[%c0_3, %c0_4] : memref<1x64xf32, #tpu.memory_space<vmem>>, vector<1x64xf32>
    %4 = vector.broadcast %3 : vector<1x64xf32> to vector<64x64xf32>
    %5 = arith.addf %2, %4 : vector<64x64xf32>
    %cst_5 = arith.constant 0.000000e+00 : f32
    %6 = vector.broadcast %cst_5 : f32 to vector<64x64xf32>
    %7 = arith.maximumf %5, %6 : vector<64x64xf32>
    %8 = arith.truncf %7 : vector<64x64xf32> to vector<64x64xbf16>
    %c0_6 = arith.constant 0 : index
    %c0_7 = arith.constant 0 : index
    %9 = vector.load %arg4[%c0_6, %c0_7] : memref<64x64xbf16, #tpu.memory_space<vmem>>, vector<64x64xbf16>
    tpu.vector_store %arg4[%c0_6, %c0_7], %8 {strides = array<i32>} : memref<64x64xbf16, #tpu.memory_space<vmem>>, vector<64x64xbf16>,
    return
  }
  func.func @transform_0(%arg0: i32) -> (i32, i32) {
    %c0_i32 = arith.constant 0 : i32
    %c0_i32_0 = arith.constant 0 : i32
    return %arg0, %c0_i32 : i32, i32
  }
  func.func @transform_1(%arg0: i32) -> (i32, i32) {
    %c0_i32 = arith.constant 0 : i32
    %c0_i32_0 = arith.constant 0 : i32
    %c0_i32_1 = arith.constant 0 : i32
    return %c0_i32, %c0_i32_0 : i32, i32
  }
  func.func @transform_2(%arg0: i32) -> (i32, i32) {
    %c0_i32 = arith.constant 0 : i32
    %c0_i32_0 = arith.constant 0 : i32
    %c0_i32_1 = arith.constant 0 : i32
    return %c0_i32, %c0_i32_0 : i32, i32
  }
  func.func @transform_3(%arg0: i32) -> (i32, i32) {
    %c0_i32 = arith.constant 0 : i32
    %c0_i32_0 = arith.constant 0 : i32
    return %arg0, %c0_i32 : i32, i32
  }
}

module attributes {stable_mosaic.version = 11 : i64} {
  func.func @_fused_mid_kernel(%arg0: memref<32x1024xbf16, #tpu.memory_space<vmem>>, %arg1: memref<16x16xf32, #tpu.memory_space<vmem>>, %arg2: memref<16x16xbf16, #tpu.memory_space<vmem>>, %arg3: memref<1024x128xbf16, #tpu.memory_space<vmem>>, %arg4: memref<1x128xf32, #tpu.memory_space<vmem>>, %arg5: memref<2048x256xbf16, #tpu.memory_space<vmem>>, %arg6: memref<1x256xf32, #tpu.memory_space<vmem>>, %arg7: memref<256x32xbf16, #tpu.memory_space<vmem>>, %arg8: memref<1x32xf32, #tpu.memory_space<vmem>>, %arg9: memref<16x256xbf16, #tpu.memory_space<vmem>>, %arg10: memref<16x256xbf16, #tpu.memory_space<vmem>>, %arg11: memref<1x256xf32, #tpu.memory_space<vmem>>, %arg12: memref<256x2048xbf16, #tpu.memory_space<vmem>>, %arg13: memref<1x2048xf32, #tpu.memory_space<vmem>>, %arg14: memref<1152x256xbf16, #tpu.memory_space<vmem>>, %arg15: memref<1x256xf32, #tpu.memory_space<vmem>>, %arg16: memref<16x32xf32, #tpu.memory_space<vmem>>, %arg17: memref<32x256xbf16, #tpu.memory_space<vmem>>, %arg18: memref<16x2048xbf16, #tpu.memory_space<vmem>>, %arg19: memref<32x1152xbf16, #tpu.memory_space<vmem>>) attributes {dimension_semantics = [], scalar_prefetch = 0 : i64, scratch_operands = 2 : i64, tpu.core_type = #tpu.core_type<tc>} {
    %c0 = arith.constant 0 : index
    %c0_0 = arith.constant 0 : index
    %0 = vector.load %arg0[%c0, %c0_0] : memref<32x1024xbf16, #tpu.memory_space<vmem>>, vector<32x1024xbf16>
    %c0_1 = arith.constant 0 : index
    %c0_2 = arith.constant 0 : index
    %1 = vector.load %arg3[%c0_1, %c0_2] : memref<1024x128xbf16, #tpu.memory_space<vmem>>, vector<1024x128xbf16>
    %cst = arith.constant dense<0.000000e+00> : vector<32x128xf32>
    %2 = tpu.matmul %0, %1, %cst {dimension_numbers = #tpu.dot_dimension_numbers<[1], [0], [0], [1], [0, 0, 1, 1], [], []>} : vector<32x1024xbf16>, vector<1024x128xbf16>, vector<32x128xf32> -> vector<32x128xf32>
    %c0_3 = arith.constant 0 : index
    %c0_4 = arith.constant 0 : index
    %3 = vector.load %arg4[%c0_3, %c0_4] : memref<1x128xf32, #tpu.memory_space<vmem>>, vector<1x128xf32>
    %4 = vector.broadcast %3 : vector<1x128xf32> to vector<32x128xf32>
    %5 = arith.addf %2, %4 : vector<32x128xf32>
    %cst_5 = arith.constant 0.000000e+00 : f32
    %6 = vector.broadcast %cst_5 : f32 to vector<32x128xf32>
    %7 = arith.maximumf %5, %6 : vector<32x128xf32>
    %8 = arith.truncf %7 : vector<32x128xf32> to vector<32x128xbf16>
    %cst_6 = arith.constant 0.000000e+00 : bf16
    %9 = vector.broadcast %cst_6 : bf16 to vector<16x2048xbf16>
    %c0_7 = arith.constant 0 : index
    %c0_8 = arith.constant 0 : index
    %10 = vector.load %arg18[%c0_7, %c0_8] : memref<16x2048xbf16, #tpu.memory_space<vmem>>, vector<16x2048xbf16>
    tpu.vector_store %arg18[%c0_7, %c0_8], %9 {strides = array<i32>} : memref<16x2048xbf16, #tpu.memory_space<vmem>>, vector<16x2048xbf16>,
    %11 = vector.extract_strided_slice %8 {offsets = [0, 0], sizes = [2, 128], strides = [1, 1]} : vector<32x128xbf16> to vector<2x128xbf16>
    %c0_9 = arith.constant 0 : index
    %c0_10 = arith.constant 0 : index
    %12 = vector.load %arg18[%c0_9, %c0_10] : memref<16x2048xbf16, #tpu.memory_space<vmem>>, vector<2x128xbf16>
    tpu.vector_store %arg18[%c0_9, %c0_10], %11 {strides = array<i32>} : memref<16x2048xbf16, #tpu.memory_space<vmem>>, vector<2x128xbf16>,
    %13 = vector.extract_strided_slice %8 {offsets = [2, 0], sizes = [2, 128], strides = [1, 1]} : vector<32x128xbf16> to vector<2x128xbf16>
    %c0_11 = arith.constant 0 : index
    %c128 = arith.constant 128 : index
    %14 = vector.load %arg18[%c0_11, %c128] : memref<16x2048xbf16, #tpu.memory_space<vmem>>, vector<2x128xbf16>
    tpu.vector_store %arg18[%c0_11, %c128], %13 {strides = array<i32>} : memref<16x2048xbf16, #tpu.memory_space<vmem>>, vector<2x128xbf16>,
    %15 = vector.extract_strided_slice %8 {offsets = [4, 0], sizes = [2, 128], strides = [1, 1]} : vector<32x128xbf16> to vector<2x128xbf16>
    %c0_12 = arith.constant 0 : index
    %c256 = arith.constant 256 : index
    %16 = vector.load %arg18[%c0_12, %c256] : memref<16x2048xbf16, #tpu.memory_space<vmem>>, vector<2x128xbf16>
    tpu.vector_store %arg18[%c0_12, %c256], %15 {strides = array<i32>} : memref<16x2048xbf16, #tpu.memory_space<vmem>>, vector<2x128xbf16>,
    %17 = vector.extract_strided_slice %8 {offsets = [6, 0], sizes = [2, 128], strides = [1, 1]} : vector<32x128xbf16> to vector<2x128xbf16>
    %c0_13 = arith.constant 0 : index
    %c384 = arith.constant 384 : index
    %18 = vector.load %arg18[%c0_13, %c384] : memref<16x2048xbf16, #tpu.memory_space<vmem>>, vector<2x128xbf16>
    tpu.vector_store %arg18[%c0_13, %c384], %17 {strides = array<i32>} : memref<16x2048xbf16, #tpu.memory_space<vmem>>, vector<2x128xbf16>,
    %19 = vector.extract_strided_slice %8 {offsets = [8, 0], sizes = [2, 128], strides = [1, 1]} : vector<32x128xbf16> to vector<2x128xbf16>
    %c0_14 = arith.constant 0 : index
    %c512 = arith.constant 512 : index
    %20 = vector.load %arg18[%c0_14, %c512] : memref<16x2048xbf16, #tpu.memory_space<vmem>>, vector<2x128xbf16>
    tpu.vector_store %arg18[%c0_14, %c512], %19 {strides = array<i32>} : memref<16x2048xbf16, #tpu.memory_space<vmem>>, vector<2x128xbf16>,
    %21 = vector.extract_strided_slice %8 {offsets = [10, 0], sizes = [2, 128], strides = [1, 1]} : vector<32x128xbf16> to vector<2x128xbf16>
    %c0_15 = arith.constant 0 : index
    %c640 = arith.constant 640 : index
    %22 = vector.load %arg18[%c0_15, %c640] : memref<16x2048xbf16, #tpu.memory_space<vmem>>, vector<2x128xbf16>
    tpu.vector_store %arg18[%c0_15, %c640], %21 {strides = array<i32>} : memref<16x2048xbf16, #tpu.memory_space<vmem>>, vector<2x128xbf16>,
    %23 = vector.extract_strided_slice %8 {offsets = [12, 0], sizes = [2, 128], strides = [1, 1]} : vector<32x128xbf16> to vector<2x128xbf16>
    %c0_16 = arith.constant 0 : index
    %c768 = arith.constant 768 : index
    %24 = vector.load %arg18[%c0_16, %c768] : memref<16x2048xbf16, #tpu.memory_space<vmem>>, vector<2x128xbf16>
    tpu.vector_store %arg18[%c0_16, %c768], %23 {strides = array<i32>} : memref<16x2048xbf16, #tpu.memory_space<vmem>>, vector<2x128xbf16>,
    %25 = vector.extract_strided_slice %8 {offsets = [14, 0], sizes = [2, 128], strides = [1, 1]} : vector<32x128xbf16> to vector<2x128xbf16>
    %c0_17 = arith.constant 0 : index
    %c896 = arith.constant 896 : index
    %26 = vector.load %arg18[%c0_17, %c896] : memref<16x2048xbf16, #tpu.memory_space<vmem>>, vector<2x128xbf16>
    tpu.vector_store %arg18[%c0_17, %c896], %25 {strides = array<i32>} : memref<16x2048xbf16, #tpu.memory_space<vmem>>, vector<2x128xbf16>,
    %27 = vector.extract_strided_slice %8 {offsets = [16, 0], sizes = [2, 128], strides = [1, 1]} : vector<32x128xbf16> to vector<2x128xbf16>
    %c0_18 = arith.constant 0 : index
    %c1024 = arith.constant 1024 : index
    %28 = vector.load %arg18[%c0_18, %c1024] : memref<16x2048xbf16, #tpu.memory_space<vmem>>, vector<2x128xbf16>
    tpu.vector_store %arg18[%c0_18, %c1024], %27 {strides = array<i32>} : memref<16x2048xbf16, #tpu.memory_space<vmem>>, vector<2x128xbf16>,
    %29 = vector.extract_strided_slice %8 {offsets = [18, 0], sizes = [2, 128], strides = [1, 1]} : vector<32x128xbf16> to vector<2x128xbf16>
    %c0_19 = arith.constant 0 : index
    %c1152 = arith.constant 1152 : index
    %30 = vector.load %arg18[%c0_19, %c1152] : memref<16x2048xbf16, #tpu.memory_space<vmem>>, vector<2x128xbf16>
    tpu.vector_store %arg18[%c0_19, %c1152], %29 {strides = array<i32>} : memref<16x2048xbf16, #tpu.memory_space<vmem>>, vector<2x128xbf16>,
    %31 = vector.extract_strided_slice %8 {offsets = [20, 0], sizes = [2, 128], strides = [1, 1]} : vector<32x128xbf16> to vector<2x128xbf16>
    %c0_20 = arith.constant 0 : index
    %c1280 = arith.constant 1280 : index
    %32 = vector.load %arg18[%c0_20, %c1280] : memref<16x2048xbf16, #tpu.memory_space<vmem>>, vector<2x128xbf16>
    tpu.vector_store %arg18[%c0_20, %c1280], %31 {strides = array<i32>} : memref<16x2048xbf16, #tpu.memory_space<vmem>>, vector<2x128xbf16>,
    %33 = vector.extract_strided_slice %8 {offsets = [22, 0], sizes = [2, 128], strides = [1, 1]} : vector<32x128xbf16> to vector<2x128xbf16>
    %c0_21 = arith.constant 0 : index
    %c1408 = arith.constant 1408 : index
    %34 = vector.load %arg18[%c0_21, %c1408] : memref<16x2048xbf16, #tpu.memory_space<vmem>>, vector<2x128xbf16>
    tpu.vector_store %arg18[%c0_21, %c1408], %33 {strides = array<i32>} : memref<16x2048xbf16, #tpu.memory_space<vmem>>, vector<2x128xbf16>,
    %35 = vector.extract_strided_slice %8 {offsets = [24, 0], sizes = [2, 128], strides = [1, 1]} : vector<32x128xbf16> to vector<2x128xbf16>
    %c0_22 = arith.constant 0 : index
    %c1536 = arith.constant 1536 : index
    %36 = vector.load %arg18[%c0_22, %c1536] : memref<16x2048xbf16, #tpu.memory_space<vmem>>, vector<2x128xbf16>
    tpu.vector_store %arg18[%c0_22, %c1536], %35 {strides = array<i32>} : memref<16x2048xbf16, #tpu.memory_space<vmem>>, vector<2x128xbf16>,
    %37 = vector.extract_strided_slice %8 {offsets = [26, 0], sizes = [2, 128], strides = [1, 1]} : vector<32x128xbf16> to vector<2x128xbf16>
    %c0_23 = arith.constant 0 : index
    %c1664 = arith.constant 1664 : index
    %38 = vector.load %arg18[%c0_23, %c1664] : memref<16x2048xbf16, #tpu.memory_space<vmem>>, vector<2x128xbf16>
    tpu.vector_store %arg18[%c0_23, %c1664], %37 {strides = array<i32>} : memref<16x2048xbf16, #tpu.memory_space<vmem>>, vector<2x128xbf16>,
    %39 = vector.extract_strided_slice %8 {offsets = [28, 0], sizes = [2, 128], strides = [1, 1]} : vector<32x128xbf16> to vector<2x128xbf16>
    %c0_24 = arith.constant 0 : index
    %c1792 = arith.constant 1792 : index
    %40 = vector.load %arg18[%c0_24, %c1792] : memref<16x2048xbf16, #tpu.memory_space<vmem>>, vector<2x128xbf16>
    tpu.vector_store %arg18[%c0_24, %c1792], %39 {strides = array<i32>} : memref<16x2048xbf16, #tpu.memory_space<vmem>>, vector<2x128xbf16>,
    %41 = vector.extract_strided_slice %8 {offsets = [30, 0], sizes = [2, 128], strides = [1, 1]} : vector<32x128xbf16> to vector<2x128xbf16>
    %c0_25 = arith.constant 0 : index
    %c1920 = arith.constant 1920 : index
    %42 = vector.load %arg18[%c0_25, %c1920] : memref<16x2048xbf16, #tpu.memory_space<vmem>>, vector<2x128xbf16>
    tpu.vector_store %arg18[%c0_25, %c1920], %41 {strides = array<i32>} : memref<16x2048xbf16, #tpu.memory_space<vmem>>, vector<2x128xbf16>,
    %c0_26 = arith.constant 0 : index
    %c0_27 = arith.constant 0 : index
    %43 = vector.load %arg18[%c0_26, %c0_27] : memref<16x2048xbf16, #tpu.memory_space<vmem>>, vector<16x2048xbf16>
    %c0_28 = arith.constant 0 : index
    %c0_29 = arith.constant 0 : index
    %44 = vector.load %arg5[%c0_28, %c0_29] : memref<2048x256xbf16, #tpu.memory_space<vmem>>, vector<2048x256xbf16>
    %cst_30 = arith.constant dense<0.000000e+00> : vector<16x256xf32>
    %45 = tpu.matmul %43, %44, %cst_30 {dimension_numbers = #tpu.dot_dimension_numbers<[1], [0], [0], [1], [0, 0, 1, 1], [], []>} : vector<16x2048xbf16>, vector<2048x256xbf16>, vector<16x256xf32> -> vector<16x256xf32>
    %c0_31 = arith.constant 0 : index
    %c0_32 = arith.constant 0 : index
    %46 = vector.load %arg6[%c0_31, %c0_32] : memref<1x256xf32, #tpu.memory_space<vmem>>, vector<1x256xf32>
    %47 = vector.broadcast %46 : vector<1x256xf32> to vector<16x256xf32>
    %48 = arith.addf %45, %47 : vector<16x256xf32>
    %cst_33 = arith.constant 0.000000e+00 : f32
    %49 = vector.broadcast %cst_33 : f32 to vector<16x256xf32>
    %50 = arith.maximumf %48, %49 : vector<16x256xf32>
    %51 = arith.truncf %50 : vector<16x256xf32> to vector<16x256xbf16>
    %c0_34 = arith.constant 0 : index
    %c0_35 = arith.constant 0 : index
    %52 = vector.load %arg7[%c0_34, %c0_35] : memref<256x32xbf16, #tpu.memory_space<vmem>>, vector<256x32xbf16>
    %cst_36 = arith.constant dense<0.000000e+00> : vector<16x32xf32>
    %53 = tpu.matmul %51, %52, %cst_36 {dimension_numbers = #tpu.dot_dimension_numbers<[1], [0], [0], [1], [0, 0, 1, 1], [], []>} : vector<16x256xbf16>, vector<256x32xbf16>, vector<16x32xf32> -> vector<16x32xf32>
    %c0_37 = arith.constant 0 : index
    %c0_38 = arith.constant 0 : index
    %54 = vector.load %arg8[%c0_37, %c0_38] : memref<1x32xf32, #tpu.memory_space<vmem>>, vector<1x32xf32>
    %55 = vector.broadcast %54 : vector<1x32xf32> to vector<16x32xf32>
    %56 = arith.addf %53, %55 : vector<16x32xf32>
    %c0_39 = arith.constant 0 : index
    %c0_40 = arith.constant 0 : index
    %57 = vector.load %arg16[%c0_39, %c0_40] : memref<16x32xf32, #tpu.memory_space<vmem>>, vector<16x32xf32>
    tpu.vector_store %arg16[%c0_39, %c0_40], %56 {strides = array<i32>} : memref<16x32xf32, #tpu.memory_space<vmem>>, vector<16x32xf32>,
    %58 = vector.extract_strided_slice %56 {offsets = [0, 0], sizes = [16, 16], strides = [1, 1]} : vector<16x32xf32> to vector<16x16xf32>
    %59 = vector.extract_strided_slice %56 {offsets = [0, 16], sizes = [16, 16], strides = [1, 1]} : vector<16x32xf32> to vector<16x16xf32>
    %c0_41 = arith.constant 0 : index
    %c0_42 = arith.constant 0 : index
    %60 = vector.load %arg1[%c0_41, %c0_42] : memref<16x16xf32, #tpu.memory_space<vmem>>, vector<16x16xf32>
    %cst_43 = arith.constant 5.000000e-01 : f32
    %61 = vector.broadcast %cst_43 : f32 to vector<16x16xf32>
    %62 = arith.mulf %61, %59 : vector<16x16xf32>
    %63 = math.exp %62 : vector<16x16xf32>
    %64 = arith.mulf %60, %63 : vector<16x16xf32>
    %65 = arith.addf %64, %58 : vector<16x16xf32>
    %66 = arith.truncf %65 : vector<16x16xf32> to vector<16x16xbf16>
    %c0_44 = arith.constant 0 : index
    %c0_45 = arith.constant 0 : index
    %67 = vector.load %arg9[%c0_44, %c0_45] : memref<16x256xbf16, #tpu.memory_space<vmem>>, vector<16x256xbf16>
    %cst_46 = arith.constant dense<0.000000e+00> : vector<16x256xf32>
    %68 = tpu.matmul %66, %67, %cst_46 {dimension_numbers = #tpu.dot_dimension_numbers<[1], [0], [0], [1], [0, 0, 1, 1], [], []>} : vector<16x16xbf16>, vector<16x256xbf16>, vector<16x256xf32> -> vector<16x256xf32>
    %c0_47 = arith.constant 0 : index
    %c0_48 = arith.constant 0 : index
    %69 = vector.load %arg2[%c0_47, %c0_48] : memref<16x16xbf16, #tpu.memory_space<vmem>>, vector<16x16xbf16>
    %c0_49 = arith.constant 0 : index
    %c0_50 = arith.constant 0 : index
    %70 = vector.load %arg10[%c0_49, %c0_50] : memref<16x256xbf16, #tpu.memory_space<vmem>>, vector<16x256xbf16>
    %cst_51 = arith.constant dense<0.000000e+00> : vector<16x256xf32>
    %71 = tpu.matmul %69, %70, %cst_51 {dimension_numbers = #tpu.dot_dimension_numbers<[1], [0], [0], [1], [0, 0, 1, 1], [], []>} : vector<16x16xbf16>, vector<16x256xbf16>, vector<16x256xf32> -> vector<16x256xf32>
    %72 = arith.addf %68, %71 : vector<16x256xf32>
    %c0_52 = arith.constant 0 : index
    %c0_53 = arith.constant 0 : index
    %73 = vector.load %arg11[%c0_52, %c0_53] : memref<1x256xf32, #tpu.memory_space<vmem>>, vector<1x256xf32>
    %74 = vector.broadcast %73 : vector<1x256xf32> to vector<16x256xf32>
    %75 = arith.addf %72, %74 : vector<16x256xf32>
    %cst_54 = arith.constant 0.000000e+00 : f32
    %76 = vector.broadcast %cst_54 : f32 to vector<16x256xf32>
    %77 = arith.maximumf %75, %76 : vector<16x256xf32>
    %78 = arith.truncf %77 : vector<16x256xf32> to vector<16x256xbf16>
    %c0_55 = arith.constant 0 : index
    %c0_56 = arith.constant 0 : index
    %79 = vector.load %arg12[%c0_55, %c0_56] : memref<256x2048xbf16, #tpu.memory_space<vmem>>, vector<256x2048xbf16>
    %cst_57 = arith.constant dense<0.000000e+00> : vector<16x2048xf32>
    %80 = tpu.matmul %78, %79, %cst_57 {dimension_numbers = #tpu.dot_dimension_numbers<[1], [0], [0], [1], [0, 0, 1, 1], [], []>} : vector<16x256xbf16>, vector<256x2048xbf16>, vector<16x2048xf32> -> vector<16x2048xf32>
    %c0_58 = arith.constant 0 : index
    %c0_59 = arith.constant 0 : index
    %81 = vector.load %arg13[%c0_58, %c0_59] : memref<1x2048xf32, #tpu.memory_space<vmem>>, vector<1x2048xf32>
    %82 = vector.broadcast %81 : vector<1x2048xf32> to vector<16x2048xf32>
    %83 = arith.addf %80, %82 : vector<16x2048xf32>
    %cst_60 = arith.constant 0.000000e+00 : f32
    %84 = vector.broadcast %cst_60 : f32 to vector<16x2048xf32>
    %85 = arith.maximumf %83, %84 : vector<16x2048xf32>
    %86 = arith.truncf %85 : vector<16x2048xf32> to vector<16x2048xbf16>
    %87 = vector.extract_strided_slice %86 {offsets = [0, 0], sizes = [2, 2048], strides = [1, 1]} : vector<16x2048xbf16> to vector<2x2048xbf16>
    %cst_61 = arith.constant 0.000000e+00 : bf16
    %88 = vector.broadcast %cst_61 : bf16 to vector<2x128xbf16>
    %89 = vector.extract_strided_slice %87 {offsets = [0, 0], sizes = [2, 128], strides = [1, 1]} : vector<2x2048xbf16> to vector<2x128xbf16>
    %90 = vector.extract_strided_slice %87 {offsets = [0, 128], sizes = [2, 128], strides = [1, 1]} : vector<2x2048xbf16> to vector<2x128xbf16>
    %91 = vector.extract_strided_slice %87 {offsets = [0, 512], sizes = [2, 128], strides = [1, 1]} : vector<2x2048xbf16> to vector<2x128xbf16>
    %92 = vector.extract_strided_slice %87 {offsets = [0, 640], sizes = [2, 128], strides = [1, 1]} : vector<2x2048xbf16> to vector<2x128xbf16>
    %93 = tpu.concatenate %88, %88, %88, %88, %89, %90, %88, %91, %92 in 1 : vector<2x128xbf16>, vector<2x128xbf16>, vector<2x128xbf16>, vector<2x128xbf16>, vector<2x128xbf16>, vector<2x128xbf16>, vector<2x128xbf16>, vector<2x128xbf16>, vector<2x128xbf16> -> vector<2x1152xbf16>
    %c0_62 = arith.constant 0 : index
    %c0_63 = arith.constant 0 : index
    %94 = vector.load %arg19[%c0_62, %c0_63] : memref<32x1152xbf16, #tpu.memory_space<vmem>>, vector<2x1152xbf16>
    tpu.vector_store %arg19[%c0_62, %c0_63], %93 {strides = array<i32>} : memref<32x1152xbf16, #tpu.memory_space<vmem>>, vector<2x1152xbf16>,
    %95 = vector.extract_strided_slice %87 {offsets = [0, 0], sizes = [2, 128], strides = [1, 1]} : vector<2x2048xbf16> to vector<2x128xbf16>
    %96 = vector.extract_strided_slice %87 {offsets = [0, 128], sizes = [2, 128], strides = [1, 1]} : vector<2x2048xbf16> to vector<2x128xbf16>
    %97 = vector.extract_strided_slice %87 {offsets = [0, 256], sizes = [2, 128], strides = [1, 1]} : vector<2x2048xbf16> to vector<2x128xbf16>
    %98 = vector.extract_strided_slice %87 {offsets = [0, 512], sizes = [2, 128], strides = [1, 1]} : vector<2x2048xbf16> to vector<2x128xbf16>
    %99 = vector.extract_strided_slice %87 {offsets = [0, 640], sizes = [2, 128], strides = [1, 1]} : vector<2x2048xbf16> to vector<2x128xbf16>
    %100 = vector.extract_strided_slice %87 {offsets = [0, 768], sizes = [2, 128], strides = [1, 1]} : vector<2x2048xbf16> to vector<2x128xbf16>
    %101 = tpu.concatenate %88, %88, %88, %95, %96, %97, %98, %99, %100 in 1 : vector<2x128xbf16>, vector<2x128xbf16>, vector<2x128xbf16>, vector<2x128xbf16>, vector<2x128xbf16>, vector<2x128xbf16>, vector<2x128xbf16>, vector<2x128xbf16>, vector<2x128xbf16> -> vector<2x1152xbf16>
    %c2 = arith.constant 2 : index
    %c0_64 = arith.constant 0 : index
    %102 = vector.load %arg19[%c2, %c0_64] : memref<32x1152xbf16, #tpu.memory_space<vmem>>, vector<2x1152xbf16>
    tpu.vector_store %arg19[%c2, %c0_64], %101 {strides = array<i32>} : memref<32x1152xbf16, #tpu.memory_space<vmem>>, vector<2x1152xbf16>,
    %103 = vector.extract_strided_slice %87 {offsets = [0, 128], sizes = [2, 128], strides = [1, 1]} : vector<2x2048xbf16> to vector<2x128xbf16>
    %104 = vector.extract_strided_slice %87 {offsets = [0, 256], sizes = [2, 128], strides = [1, 1]} : vector<2x2048xbf16> to vector<2x128xbf16>
    %105 = vector.extract_strided_slice %87 {offsets = [0, 384], sizes = [2, 128], strides = [1, 1]} : vector<2x2048xbf16> to vector<2x128xbf16>
    %106 = vector.extract_strided_slice %87 {offsets = [0, 640], sizes = [2, 128], strides = [1, 1]} : vector<2x2048xbf16> to vector<2x128xbf16>
    %107 = vector.extract_strided_slice %87 {offsets = [0, 768], sizes = [2, 128], strides = [1, 1]} : vector<2x2048xbf16> to vector<2x128xbf16>
    %108 = vector.extract_strided_slice %87 {offsets = [0, 896], sizes = [2, 128], strides = [1, 1]} : vector<2x2048xbf16> to vector<2x128xbf16>
    %109 = tpu.concatenate %88, %88, %88, %103, %104, %105, %106, %107, %108 in 1 : vector<2x128xbf16>, vector<2x128xbf16>, vector<2x128xbf16>, vector<2x128xbf16>, vector<2x128xbf16>, vector<2x128xbf16>, vector<2x128xbf16>, vector<2x128xbf16>, vector<2x128xbf16> -> vector<2x1152xbf16>
    %c4 = arith.constant 4 : index
    %c0_65 = arith.constant 0 : index
    %110 = vector.load %arg19[%c4, %c0_65] : memref<32x1152xbf16, #tpu.memory_space<vmem>>, vector<2x1152xbf16>
    tpu.vector_store %arg19[%c4, %c0_65], %109 {strides = array<i32>} : memref<32x1152xbf16, #tpu.memory_space<vmem>>, vector<2x1152xbf16>,
    %111 = vector.extract_strided_slice %87 {offsets = [0, 256], sizes = [2, 128], strides = [1, 1]} : vector<2x2048xbf16> to vector<2x128xbf16>
    %112 = vector.extract_strided_slice %87 {offsets = [0, 384], sizes = [2, 128], strides = [1, 1]} : vector<2x2048xbf16> to vector<2x128xbf16>
    %113 = vector.extract_strided_slice %87 {offsets = [0, 768], sizes = [2, 128], strides = [1, 1]} : vector<2x2048xbf16> to vector<2x128xbf16>
    %114 = vector.extract_strided_slice %87 {offsets = [0, 896], sizes = [2, 128], strides = [1, 1]} : vector<2x2048xbf16> to vector<2x128xbf16>
    %115 = tpu.concatenate %88, %88, %88, %111, %112, %88, %113, %114, %88 in 1 : vector<2x128xbf16>, vector<2x128xbf16>, vector<2x128xbf16>, vector<2x128xbf16>, vector<2x128xbf16>, vector<2x128xbf16>, vector<2x128xbf16>, vector<2x128xbf16>, vector<2x128xbf16> -> vector<2x1152xbf16>
    %c6 = arith.constant 6 : index
    %c0_66 = arith.constant 0 : index
    %116 = vector.load %arg19[%c6, %c0_66] : memref<32x1152xbf16, #tpu.memory_space<vmem>>, vector<2x1152xbf16>
    tpu.vector_store %arg19[%c6, %c0_66], %115 {strides = array<i32>} : memref<32x1152xbf16, #tpu.memory_space<vmem>>, vector<2x1152xbf16>,
    %117 = vector.extract_strided_slice %87 {offsets = [0, 0], sizes = [2, 128], strides = [1, 1]} : vector<2x2048xbf16> to vector<2x128xbf16>
    %118 = vector.extract_strided_slice %87 {offsets = [0, 128], sizes = [2, 128], strides = [1, 1]} : vector<2x2048xbf16> to vector<2x128xbf16>
    %119 = vector.extract_strided_slice %87 {offsets = [0, 512], sizes = [2, 128], strides = [1, 1]} : vector<2x2048xbf16> to vector<2x128xbf16>
    %120 = vector.extract_strided_slice %87 {offsets = [0, 640], sizes = [2, 128], strides = [1, 1]} : vector<2x2048xbf16> to vector<2x128xbf16>
    %121 = vector.extract_strided_slice %87 {offsets = [0, 1024], sizes = [2, 128], strides = [1, 1]} : vector<2x2048xbf16> to vector<2x128xbf16>
    %122 = vector.extract_strided_slice %87 {offsets = [0, 1152], sizes = [2, 128], strides = [1, 1]} : vector<2x2048xbf16> to vector<2x128xbf16>
    %123 = tpu.concatenate %88, %117, %118, %88, %119, %120, %88, %121, %122 in 1 : vector<2x128xbf16>, vector<2x128xbf16>, vector<2x128xbf16>, vector<2x128xbf16>, vector<2x128xbf16>, vector<2x128xbf16>, vector<2x128xbf16>, vector<2x128xbf16>, vector<2x128xbf16> -> vector<2x1152xbf16>
    %c8 = arith.constant 8 : index
    %c0_67 = arith.constant 0 : index
    %124 = vector.load %arg19[%c8, %c0_67] : memref<32x1152xbf16, #tpu.memory_space<vmem>>, vector<2x1152xbf16>
    tpu.vector_store %arg19[%c8, %c0_67], %123 {strides = array<i32>} : memref<32x1152xbf16, #tpu.memory_space<vmem>>, vector<2x1152xbf16>,
    %125 = vector.extract_strided_slice %87 {offsets = [0, 0], sizes = [2, 128], strides = [1, 1]} : vector<2x2048xbf16> to vector<2x128xbf16>
    %126 = vector.extract_strided_slice %87 {offsets = [0, 128], sizes = [2, 128], strides = [1, 1]} : vector<2x2048xbf16> to vector<2x128xbf16>
    %127 = vector.extract_strided_slice %87 {offsets = [0, 256], sizes = [2, 128], strides = [1, 1]} : vector<2x2048xbf16> to vector<2x128xbf16>
    %128 = vector.extract_strided_slice %87 {offsets = [0, 512], sizes = [2, 128], strides = [1, 1]} : vector<2x2048xbf16> to vector<2x128xbf16>
    %129 = vector.extract_strided_slice %87 {offsets = [0, 640], sizes = [2, 128], strides = [1, 1]} : vector<2x2048xbf16> to vector<2x128xbf16>
    %130 = vector.extract_strided_slice %87 {offsets = [0, 768], sizes = [2, 128], strides = [1, 1]} : vector<2x2048xbf16> to vector<2x128xbf16>
    %131 = vector.extract_strided_slice %87 {offsets = [0, 1024], sizes = [2, 128], strides = [1, 1]} : vector<2x2048xbf16> to vector<2x128xbf16>
    %132 = vector.extract_strided_slice %87 {offsets = [0, 1152], sizes = [2, 128], strides = [1, 1]} : vector<2x2048xbf16> to vector<2x128xbf16>
    %133 = vector.extract_strided_slice %87 {offsets = [0, 1280], sizes = [2, 128], strides = [1, 1]} : vector<2x2048xbf16> to vector<2x128xbf16>
    %134 = tpu.concatenate %125, %126, %127, %128, %129, %130, %131, %132, %133 in 1 : vector<2x128xbf16>, vector<2x128xbf16>, vector<2x128xbf16>, vector<2x128xbf16>, vector<2x128xbf16>, vector<2x128xbf16>, vector<2x128xbf16>, vector<2x128xbf16>, vector<2x128xbf16> -> vector<2x1152xbf16>
    %c10 = arith.constant 10 : index
    %c0_68 = arith.constant 0 : index
    %135 = vector.load %arg19[%c10, %c0_68] : memref<32x1152xbf16, #tpu.memory_space<vmem>>, vector<2x1152xbf16>
    tpu.vector_store %arg19[%c10, %c0_68], %134 {strides = array<i32>} : memref<32x1152xbf16, #tpu.memory_space<vmem>>, vector<2x1152xbf16>,
    %136 = vector.extract_strided_slice %87 {offsets = [0, 128], sizes = [2, 128], strides = [1, 1]} : vector<2x2048xbf16> to vector<2x128xbf16>
    %137 = vector.extract_strided_slice %87 {offsets = [0, 256], sizes = [2, 128], strides = [1, 1]} : vector<2x2048xbf16> to vector<2x128xbf16>
    %138 = vector.extract_strided_slice %87 {offsets = [0, 384], sizes = [2, 128], strides = [1, 1]} : vector<2x2048xbf16> to vector<2x128xbf16>
    %139 = vector.extract_strided_slice %87 {offsets = [0, 640], sizes = [2, 128], strides = [1, 1]} : vector<2x2048xbf16> to vector<2x128xbf16>
    %140 = vector.extract_strided_slice %87 {offsets = [0, 768], sizes = [2, 128], strides = [1, 1]} : vector<2x2048xbf16> to vector<2x128xbf16>
    %141 = vector.extract_strided_slice %87 {offsets = [0, 896], sizes = [2, 128], strides = [1, 1]} : vector<2x2048xbf16> to vector<2x128xbf16>
    %142 = vector.extract_strided_slice %87 {offsets = [0, 1152], sizes = [2, 128], strides = [1, 1]} : vector<2x2048xbf16> to vector<2x128xbf16>
    %143 = vector.extract_strided_slice %87 {offsets = [0, 1280], sizes = [2, 128], strides = [1, 1]} : vector<2x2048xbf16> to vector<2x128xbf16>
    %144 = vector.extract_strided_slice %87 {offsets = [0, 1408], sizes = [2, 128], strides = [1, 1]} : vector<2x2048xbf16> to vector<2x128xbf16>
    %145 = tpu.concatenate %136, %137, %138, %139, %140, %141, %142, %143, %144 in 1 : vector<2x128xbf16>, vector<2x128xbf16>, vector<2x128xbf16>, vector<2x128xbf16>, vector<2x128xbf16>, vector<2x128xbf16>, vector<2x128xbf16>, vector<2x128xbf16>, vector<2x128xbf16> -> vector<2x1152xbf16>
    %c12 = arith.constant 12 : index
    %c0_69 = arith.constant 0 : index
    %146 = vector.load %arg19[%c12, %c0_69] : memref<32x1152xbf16, #tpu.memory_space<vmem>>, vector<2x1152xbf16>
    tpu.vector_store %arg19[%c12, %c0_69], %145 {strides = array<i32>} : memref<32x1152xbf16, #tpu.memory_space<vmem>>, vector<2x1152xbf16>,
    %147 = vector.extract_strided_slice %87 {offsets = [0, 256], sizes = [2, 128], strides = [1, 1]} : vector<2x2048xbf16> to vector<2x128xbf16>
    %148 = vector.extract_strided_slice %87 {offsets = [0, 384], sizes = [2, 128], strides = [1, 1]} : vector<2x2048xbf16> to vector<2x128xbf16>
    %149 = vector.extract_strided_slice %87 {offsets = [0, 768], sizes = [2, 128], strides = [1, 1]} : vector<2x2048xbf16> to vector<2x128xbf16>
    %150 = vector.extract_strided_slice %87 {offsets = [0, 896], sizes = [2, 128], strides = [1, 1]} : vector<2x2048xbf16> to vector<2x128xbf16>
    %151 = vector.extract_strided_slice %87 {offsets = [0, 1280], sizes = [2, 128], strides = [1, 1]} : vector<2x2048xbf16> to vector<2x128xbf16>
    %152 = vector.extract_strided_slice %87 {offsets = [0, 1408], sizes = [2, 128], strides = [1, 1]} : vector<2x2048xbf16> to vector<2x128xbf16>
    %153 = tpu.concatenate %147, %148, %88, %149, %150, %88, %151, %152, %88 in 1 : vector<2x128xbf16>, vector<2x128xbf16>, vector<2x128xbf16>, vector<2x128xbf16>, vector<2x128xbf16>, vector<2x128xbf16>, vector<2x128xbf16>, vector<2x128xbf16>, vector<2x128xbf16> -> vector<2x1152xbf16>
    %c14 = arith.constant 14 : index
    %c0_70 = arith.constant 0 : index
    %154 = vector.load %arg19[%c14, %c0_70] : memref<32x1152xbf16, #tpu.memory_space<vmem>>, vector<2x1152xbf16>
    tpu.vector_store %arg19[%c14, %c0_70], %153 {strides = array<i32>} : memref<32x1152xbf16, #tpu.memory_space<vmem>>, vector<2x1152xbf16>,
    %155 = vector.extract_strided_slice %87 {offsets = [0, 512], sizes = [2, 128], strides = [1, 1]} : vector<2x2048xbf16> to vector<2x128xbf16>
    %156 = vector.extract_strided_slice %87 {offsets = [0, 640], sizes = [2, 128], strides = [1, 1]} : vector<2x2048xbf16> to vector<2x128xbf16>
    %157 = vector.extract_strided_slice %87 {offsets = [0, 1024], sizes = [2, 128], strides = [1, 1]} : vector<2x2048xbf16> to vector<2x128xbf16>
    %158 = vector.extract_strided_slice %87 {offsets = [0, 1152], sizes = [2, 128], strides = [1, 1]} : vector<2x2048xbf16> to vector<2x128xbf16>
    %159 = vector.extract_strided_slice %87 {offsets = [0, 1536], sizes = [2, 128], strides = [1, 1]} : vector<2x2048xbf16> to vector<2x128xbf16>
    %160 = vector.extract_strided_slice %87 {offsets = [0, 1664], sizes = [2, 128], strides = [1, 1]} : vector<2x2048xbf16> to vector<2x128xbf16>
    %161 = tpu.concatenate %88, %155, %156, %88, %157, %158, %88, %159, %160 in 1 : vector<2x128xbf16>, vector<2x128xbf16>, vector<2x128xbf16>, vector<2x128xbf16>, vector<2x128xbf16>, vector<2x128xbf16>, vector<2x128xbf16>, vector<2x128xbf16>, vector<2x128xbf16> -> vector<2x1152xbf16>
    %c16 = arith.constant 16 : index
    %c0_71 = arith.constant 0 : index
    %162 = vector.load %arg19[%c16, %c0_71] : memref<32x1152xbf16, #tpu.memory_space<vmem>>, vector<2x1152xbf16>
    tpu.vector_store %arg19[%c16, %c0_71], %161 {strides = array<i32>} : memref<32x1152xbf16, #tpu.memory_space<vmem>>, vector<2x1152xbf16>,
    %163 = vector.extract_strided_slice %87 {offsets = [0, 512], sizes = [2, 128], strides = [1, 1]} : vector<2x2048xbf16> to vector<2x128xbf16>
    %164 = vector.extract_strided_slice %87 {offsets = [0, 640], sizes = [2, 128], strides = [1, 1]} : vector<2x2048xbf16> to vector<2x128xbf16>
    %165 = vector.extract_strided_slice %87 {offsets = [0, 768], sizes = [2, 128], strides = [1, 1]} : vector<2x2048xbf16> to vector<2x128xbf16>
    %166 = vector.extract_strided_slice %87 {offsets = [0, 1024], sizes = [2, 128], strides = [1, 1]} : vector<2x2048xbf16> to vector<2x128xbf16>
    %167 = vector.extract_strided_slice %87 {offsets = [0, 1152], sizes = [2, 128], strides = [1, 1]} : vector<2x2048xbf16> to vector<2x128xbf16>
    %168 = vector.extract_strided_slice %87 {offsets = [0, 1280], sizes = [2, 128], strides = [1, 1]} : vector<2x2048xbf16> to vector<2x128xbf16>
    %169 = vector.extract_strided_slice %87 {offsets = [0, 1536], sizes = [2, 128], strides = [1, 1]} : vector<2x2048xbf16> to vector<2x128xbf16>
    %170 = vector.extract_strided_slice %87 {offsets = [0, 1664], sizes = [2, 128], strides = [1, 1]} : vector<2x2048xbf16> to vector<2x128xbf16>
    %171 = vector.extract_strided_slice %87 {offsets = [0, 1792], sizes = [2, 128], strides = [1, 1]} : vector<2x2048xbf16> to vector<2x128xbf16>
    %172 = tpu.concatenate %163, %164, %165, %166, %167, %168, %169, %170, %171 in 1 : vector<2x128xbf16>, vector<2x128xbf16>, vector<2x128xbf16>, vector<2x128xbf16>, vector<2x128xbf16>, vector<2x128xbf16>, vector<2x128xbf16>, vector<2x128xbf16>, vector<2x128xbf16> -> vector<2x1152xbf16>
    %c18 = arith.constant 18 : index
    %c0_72 = arith.constant 0 : index
    %173 = vector.load %arg19[%c18, %c0_72] : memref<32x1152xbf16, #tpu.memory_space<vmem>>, vector<2x1152xbf16>
    tpu.vector_store %arg19[%c18, %c0_72], %172 {strides = array<i32>} : memref<32x1152xbf16, #tpu.memory_space<vmem>>, vector<2x1152xbf16>,
    %174 = vector.extract_strided_slice %87 {offsets = [0, 640], sizes = [2, 128], strides = [1, 1]} : vector<2x2048xbf16> to vector<2x128xbf16>
    %175 = vector.extract_strided_slice %87 {offsets = [0, 768], sizes = [2, 128], strides = [1, 1]} : vector<2x2048xbf16> to vector<2x128xbf16>
    %176 = vector.extract_strided_slice %87 {offsets = [0, 896], sizes = [2, 128], strides = [1, 1]} : vector<2x2048xbf16> to vector<2x128xbf16>
    %177 = vector.extract_strided_slice %87 {offsets = [0, 1152], sizes = [2, 128], strides = [1, 1]} : vector<2x2048xbf16> to vector<2x128xbf16>
    %178 = vector.extract_strided_slice %87 {offsets = [0, 1280], sizes = [2, 128], strides = [1, 1]} : vector<2x2048xbf16> to vector<2x128xbf16>
    %179 = vector.extract_strided_slice %87 {offsets = [0, 1408], sizes = [2, 128], strides = [1, 1]} : vector<2x2048xbf16> to vector<2x128xbf16>
    %180 = vector.extract_strided_slice %87 {offsets = [0, 1664], sizes = [2, 128], strides = [1, 1]} : vector<2x2048xbf16> to vector<2x128xbf16>
    %181 = vector.extract_strided_slice %87 {offsets = [0, 1792], sizes = [2, 128], strides = [1, 1]} : vector<2x2048xbf16> to vector<2x128xbf16>
    %182 = vector.extract_strided_slice %87 {offsets = [0, 1920], sizes = [2, 128], strides = [1, 1]} : vector<2x2048xbf16> to vector<2x128xbf16>
    %183 = tpu.concatenate %174, %175, %176, %177, %178, %179, %180, %181, %182 in 1 : vector<2x128xbf16>, vector<2x128xbf16>, vector<2x128xbf16>, vector<2x128xbf16>, vector<2x128xbf16>, vector<2x128xbf16>, vector<2x128xbf16>, vector<2x128xbf16>, vector<2x128xbf16> -> vector<2x1152xbf16>
    %c20 = arith.constant 20 : index
    %c0_73 = arith.constant 0 : index
    %184 = vector.load %arg19[%c20, %c0_73] : memref<32x1152xbf16, #tpu.memory_space<vmem>>, vector<2x1152xbf16>
    tpu.vector_store %arg19[%c20, %c0_73], %183 {strides = array<i32>} : memref<32x1152xbf16, #tpu.memory_space<vmem>>, vector<2x1152xbf16>,
    %185 = vector.extract_strided_slice %87 {offsets = [0, 768], sizes = [2, 128], strides = [1, 1]} : vector<2x2048xbf16> to vector<2x128xbf16>
    %186 = vector.extract_strided_slice %87 {offsets = [0, 896], sizes = [2, 128], strides = [1, 1]} : vector<2x2048xbf16> to vector<2x128xbf16>
    %187 = vector.extract_strided_slice %87 {offsets = [0, 1280], sizes = [2, 128], strides = [1, 1]} : vector<2x2048xbf16> to vector<2x128xbf16>
    %188 = vector.extract_strided_slice %87 {offsets = [0, 1408], sizes = [2, 128], strides = [1, 1]} : vector<2x2048xbf16> to vector<2x128xbf16>
    %189 = vector.extract_strided_slice %87 {offsets = [0, 1792], sizes = [2, 128], strides = [1, 1]} : vector<2x2048xbf16> to vector<2x128xbf16>
    %190 = vector.extract_strided_slice %87 {offsets = [0, 1920], sizes = [2, 128], strides = [1, 1]} : vector<2x2048xbf16> to vector<2x128xbf16>
    %191 = tpu.concatenate %185, %186, %88, %187, %188, %88, %189, %190, %88 in 1 : vector<2x128xbf16>, vector<2x128xbf16>, vector<2x128xbf16>, vector<2x128xbf16>, vector<2x128xbf16>, vector<2x128xbf16>, vector<2x128xbf16>, vector<2x128xbf16>, vector<2x128xbf16> -> vector<2x1152xbf16>
    %c22 = arith.constant 22 : index
    %c0_74 = arith.constant 0 : index
    %192 = vector.load %arg19[%c22, %c0_74] : memref<32x1152xbf16, #tpu.memory_space<vmem>>, vector<2x1152xbf16>
    tpu.vector_store %arg19[%c22, %c0_74], %191 {strides = array<i32>} : memref<32x1152xbf16, #tpu.memory_space<vmem>>, vector<2x1152xbf16>,
    %193 = vector.extract_strided_slice %87 {offsets = [0, 1024], sizes = [2, 128], strides = [1, 1]} : vector<2x2048xbf16> to vector<2x128xbf16>
    %194 = vector.extract_strided_slice %87 {offsets = [0, 1152], sizes = [2, 128], strides = [1, 1]} : vector<2x2048xbf16> to vector<2x128xbf16>
    %195 = vector.extract_strided_slice %87 {offsets = [0, 1536], sizes = [2, 128], strides = [1, 1]} : vector<2x2048xbf16> to vector<2x128xbf16>
    %196 = vector.extract_strided_slice %87 {offsets = [0, 1664], sizes = [2, 128], strides = [1, 1]} : vector<2x2048xbf16> to vector<2x128xbf16>
    %197 = tpu.concatenate %88, %193, %194, %88, %195, %196, %88, %88, %88 in 1 : vector<2x128xbf16>, vector<2x128xbf16>, vector<2x128xbf16>, vector<2x128xbf16>, vector<2x128xbf16>, vector<2x128xbf16>, vector<2x128xbf16>, vector<2x128xbf16>, vector<2x128xbf16> -> vector<2x1152xbf16>
    %c24 = arith.constant 24 : index
    %c0_75 = arith.constant 0 : index
    %198 = vector.load %arg19[%c24, %c0_75] : memref<32x1152xbf16, #tpu.memory_space<vmem>>, vector<2x1152xbf16>
    tpu.vector_store %arg19[%c24, %c0_75], %197 {strides = array<i32>} : memref<32x1152xbf16, #tpu.memory_space<vmem>>, vector<2x1152xbf16>,
    %199 = vector.extract_strided_slice %87 {offsets = [0, 1024], sizes = [2, 128], strides = [1, 1]} : vector<2x2048xbf16> to vector<2x128xbf16>
    %200 = vector.extract_strided_slice %87 {offsets = [0, 1152], sizes = [2, 128], strides = [1, 1]} : vector<2x2048xbf16> to vector<2x128xbf16>
    %201 = vector.extract_strided_slice %87 {offsets = [0, 1280], sizes = [2, 128], strides = [1, 1]} : vector<2x2048xbf16> to vector<2x128xbf16>
    %202 = vector.extract_strided_slice %87 {offsets = [0, 1536], sizes = [2, 128], strides = [1, 1]} : vector<2x2048xbf16> to vector<2x128xbf16>
    %203 = vector.extract_strided_slice %87 {offsets = [0, 1664], sizes = [2, 128], strides = [1, 1]} : vector<2x2048xbf16> to vector<2x128xbf16>
    %204 = vector.extract_strided_slice %87 {offsets = [0, 1792], sizes = [2, 128], strides = [1, 1]} : vector<2x2048xbf16> to vector<2x128xbf16>
    %205 = tpu.concatenate %199, %200, %201, %202, %203, %204, %88, %88, %88 in 1 : vector<2x128xbf16>, vector<2x128xbf16>, vector<2x128xbf16>, vector<2x128xbf16>, vector<2x128xbf16>, vector<2x128xbf16>, vector<2x128xbf16>, vector<2x128xbf16>, vector<2x128xbf16> -> vector<2x1152xbf16>
    %c26 = arith.constant 26 : index
    %c0_76 = arith.constant 0 : index
    %206 = vector.load %arg19[%c26, %c0_76] : memref<32x1152xbf16, #tpu.memory_space<vmem>>, vector<2x1152xbf16>
    tpu.vector_store %arg19[%c26, %c0_76], %205 {strides = array<i32>} : memref<32x1152xbf16, #tpu.memory_space<vmem>>, vector<2x1152xbf16>,
    %207 = vector.extract_strided_slice %87 {offsets = [0, 1152], sizes = [2, 128], strides = [1, 1]} : vector<2x2048xbf16> to vector<2x128xbf16>
    %208 = vector.extract_strided_slice %87 {offsets = [0, 1280], sizes = [2, 128], strides = [1, 1]} : vector<2x2048xbf16> to vector<2x128xbf16>
    %209 = vector.extract_strided_slice %87 {offsets = [0, 1408], sizes = [2, 128], strides = [1, 1]} : vector<2x2048xbf16> to vector<2x128xbf16>
    %210 = vector.extract_strided_slice %87 {offsets = [0, 1664], sizes = [2, 128], strides = [1, 1]} : vector<2x2048xbf16> to vector<2x128xbf16>
    %211 = vector.extract_strided_slice %87 {offsets = [0, 1792], sizes = [2, 128], strides = [1, 1]} : vector<2x2048xbf16> to vector<2x128xbf16>
    %212 = vector.extract_strided_slice %87 {offsets = [0, 1920], sizes = [2, 128], strides = [1, 1]} : vector<2x2048xbf16> to vector<2x128xbf16>
    %213 = tpu.concatenate %207, %208, %209, %210, %211, %212, %88, %88, %88 in 1 : vector<2x128xbf16>, vector<2x128xbf16>, vector<2x128xbf16>, vector<2x128xbf16>, vector<2x128xbf16>, vector<2x128xbf16>, vector<2x128xbf16>, vector<2x128xbf16>, vector<2x128xbf16> -> vector<2x1152xbf16>
    %c28 = arith.constant 28 : index
    %c0_77 = arith.constant 0 : index
    %214 = vector.load %arg19[%c28, %c0_77] : memref<32x1152xbf16, #tpu.memory_space<vmem>>, vector<2x1152xbf16>
    tpu.vector_store %arg19[%c28, %c0_77], %213 {strides = array<i32>} : memref<32x1152xbf16, #tpu.memory_space<vmem>>, vector<2x1152xbf16>,
    %215 = vector.extract_strided_slice %87 {offsets = [0, 1280], sizes = [2, 128], strides = [1, 1]} : vector<2x2048xbf16> to vector<2x128xbf16>
    %216 = vector.extract_strided_slice %87 {offsets = [0, 1408], sizes = [2, 128], strides = [1, 1]} : vector<2x2048xbf16> to vector<2x128xbf16>
    %217 = vector.extract_strided_slice %87 {offsets = [0, 1792], sizes = [2, 128], strides = [1, 1]} : vector<2x2048xbf16> to vector<2x128xbf16>
    %218 = vector.extract_strided_slice %87 {offsets = [0, 1920], sizes = [2, 128], strides = [1, 1]} : vector<2x2048xbf16> to vector<2x128xbf16>
    %219 = tpu.concatenate %215, %216, %88, %217, %218, %88, %88, %88, %88 in 1 : vector<2x128xbf16>, vector<2x128xbf16>, vector<2x128xbf16>, vector<2x128xbf16>, vector<2x128xbf16>, vector<2x128xbf16>, vector<2x128xbf16>, vector<2x128xbf16>, vector<2x128xbf16> -> vector<2x1152xbf16>
    %c30 = arith.constant 30 : index
    %c0_78 = arith.constant 0 : index
    %220 = vector.load %arg19[%c30, %c0_78] : memref<32x1152xbf16, #tpu.memory_space<vmem>>, vector<2x1152xbf16>
    tpu.vector_store %arg19[%c30, %c0_78], %219 {strides = array<i32>} : memref<32x1152xbf16, #tpu.memory_space<vmem>>, vector<2x1152xbf16>,
    %c0_79 = arith.constant 0 : index
    %c0_80 = arith.constant 0 : index
    %221 = vector.load %arg19[%c0_79, %c0_80] : memref<32x1152xbf16, #tpu.memory_space<vmem>>, vector<32x1152xbf16>
    %c0_81 = arith.constant 0 : index
    %c0_82 = arith.constant 0 : index
    %222 = vector.load %arg14[%c0_81, %c0_82] : memref<1152x256xbf16, #tpu.memory_space<vmem>>, vector<1152x256xbf16>
    %cst_83 = arith.constant dense<0.000000e+00> : vector<32x256xf32>
    %223 = tpu.matmul %221, %222, %cst_83 {dimension_numbers = #tpu.dot_dimension_numbers<[1], [0], [0], [1], [0, 0, 1, 1], [], []>} : vector<32x1152xbf16>, vector<1152x256xbf16>, vector<32x256xf32> -> vector<32x256xf32>
    %c0_84 = arith.constant 0 : index
    %c0_85 = arith.constant 0 : index
    %224 = vector.load %arg15[%c0_84, %c0_85] : memref<1x256xf32, #tpu.memory_space<vmem>>, vector<1x256xf32>
    %225 = vector.broadcast %224 : vector<1x256xf32> to vector<32x256xf32>
    %226 = arith.addf %223, %225 : vector<32x256xf32>
    %cst_86 = arith.constant 0.000000e+00 : f32
    %227 = vector.broadcast %cst_86 : f32 to vector<32x256xf32>
    %228 = arith.maximumf %226, %227 : vector<32x256xf32>
    %229 = arith.truncf %228 : vector<32x256xf32> to vector<32x256xbf16>
    %c0_87 = arith.constant 0 : index
    %c0_88 = arith.constant 0 : index
    %230 = vector.load %arg17[%c0_87, %c0_88] : memref<32x256xbf16, #tpu.memory_space<vmem>>, vector<32x256xbf16>
    tpu.vector_store %arg17[%c0_87, %c0_88], %229 {strides = array<i32>} : memref<32x256xbf16, #tpu.memory_space<vmem>>, vector<32x256xbf16>,
    return
  }
}

module attributes {stable_mosaic.version = 11 : i64} {
  func.func @_matmul_bias_act_kernel(%arg0: i32, %arg1: memref<64x576xbf16, #tpu.memory_space<vmem>>, %arg2: memref<576x128xbf16, #tpu.memory_space<vmem>>, %arg3: memref<1x128xf32, #tpu.memory_space<vmem>>, %arg4: memref<64x128xbf16, #tpu.memory_space<vmem>>) attributes {dimension_semantics = [#tpu.dimension_semantics<parallel>], iteration_bounds = array<i64: 2>, scalar_prefetch = 0 : i64, scratch_operands = 0 : i64, tpu.core_type = #tpu.core_type<tc>, window_params = [{transform_indices = @transform_0, window_bounds = array<i64: 64, 576>}, {pipeline_mode = #tpu.pipeline_mode<synchronous>, transform_indices = @transform_1, window_bounds = array<i64: 576, 128>}, {pipeline_mode = #tpu.pipeline_mode<synchronous>, transform_indices = @transform_2, window_bounds = array<i64: 1, 128>}, {transform_indices = @transform_3, window_bounds = array<i64: 64, 128>}]} {
    %c0 = arith.constant 0 : index
    %c0_0 = arith.constant 0 : index
    %0 = vector.load %arg1[%c0, %c0_0] : memref<64x576xbf16, #tpu.memory_space<vmem>>, vector<64x576xbf16>
    %c0_1 = arith.constant 0 : index
    %c0_2 = arith.constant 0 : index
    %1 = vector.load %arg2[%c0_1, %c0_2] : memref<576x128xbf16, #tpu.memory_space<vmem>>, vector<576x128xbf16>
    %cst = arith.constant dense<0.000000e+00> : vector<64x128xf32>
    %2 = tpu.matmul %0, %1, %cst {dimension_numbers = #tpu.dot_dimension_numbers<[1], [0], [0], [1], [0, 0, 1, 1], [], []>} : vector<64x576xbf16>, vector<576x128xbf16>, vector<64x128xf32> -> vector<64x128xf32>
    %c0_3 = arith.constant 0 : index
    %c0_4 = arith.constant 0 : index
    %3 = vector.load %arg3[%c0_3, %c0_4] : memref<1x128xf32, #tpu.memory_space<vmem>>, vector<1x128xf32>
    %4 = vector.broadcast %3 : vector<1x128xf32> to vector<64x128xf32>
    %5 = arith.addf %2, %4 : vector<64x128xf32>
    %cst_5 = arith.constant 0.000000e+00 : f32
    %6 = vector.broadcast %cst_5 : f32 to vector<64x128xf32>
    %7 = arith.maximumf %5, %6 : vector<64x128xf32>
    %8 = arith.truncf %7 : vector<64x128xf32> to vector<64x128xbf16>
    %c0_6 = arith.constant 0 : index
    %c0_7 = arith.constant 0 : index
    %9 = vector.load %arg4[%c0_6, %c0_7] : memref<64x128xbf16, #tpu.memory_space<vmem>>, vector<64x128xbf16>
    tpu.vector_store %arg4[%c0_6, %c0_7], %8 {strides = array<i32>} : memref<64x128xbf16, #tpu.memory_space<vmem>>, vector<64x128xbf16>,
    return
  }
  func.func @transform_0(%arg0: i32) -> (i32, i32) {
    %c0_i32 = arith.constant 0 : i32
    %c0_i32_0 = arith.constant 0 : i32
    return %arg0, %c0_i32 : i32, i32
  }
  func.func @transform_1(%arg0: i32) -> (i32, i32) {
    %c0_i32 = arith.constant 0 : i32
    %c0_i32_0 = arith.constant 0 : i32
    %c0_i32_1 = arith.constant 0 : i32
    return %c0_i32, %c0_i32_0 : i32, i32
  }
  func.func @transform_2(%arg0: i32) -> (i32, i32) {
    %c0_i32 = arith.constant 0 : i32
    %c0_i32_0 = arith.constant 0 : i32
    %c0_i32_1 = arith.constant 0 : i32
    return %c0_i32, %c0_i32_0 : i32, i32
  }
  func.func @transform_3(%arg0: i32) -> (i32, i32) {
    %c0_i32 = arith.constant 0 : i32
    %c0_i32_0 = arith.constant 0 : i32
    return %arg0, %c0_i32 : i32, i32
  }
}

module attributes {stable_mosaic.version = 11 : i64} {
  func.func @_matmul_bias_act_kernel(%arg0: i32, %arg1: memref<256x288xbf16, #tpu.memory_space<vmem>>, %arg2: memref<288x4xbf16, #tpu.memory_space<vmem>>, %arg3: memref<1x4xf32, #tpu.memory_space<vmem>>, %arg4: memref<256x4xf32, #tpu.memory_space<vmem>>) attributes {dimension_semantics = [#tpu.dimension_semantics<parallel>], iteration_bounds = array<i64: 2>, scalar_prefetch = 0 : i64, scratch_operands = 0 : i64, tpu.core_type = #tpu.core_type<tc>, window_params = [{transform_indices = @transform_0, window_bounds = array<i64: 256, 288>}, {pipeline_mode = #tpu.pipeline_mode<synchronous>, transform_indices = @transform_1, window_bounds = array<i64: 288, 4>}, {pipeline_mode = #tpu.pipeline_mode<synchronous>, transform_indices = @transform_2, window_bounds = array<i64: 1, 4>}, {transform_indices = @transform_3, window_bounds = array<i64: 256, 4>}]} {
    %c0 = arith.constant 0 : index
    %c0_0 = arith.constant 0 : index
    %0 = vector.load %arg1[%c0, %c0_0] : memref<256x288xbf16, #tpu.memory_space<vmem>>, vector<256x288xbf16>
    %c0_1 = arith.constant 0 : index
    %c0_2 = arith.constant 0 : index
    %1 = vector.load %arg2[%c0_1, %c0_2] : memref<288x4xbf16, #tpu.memory_space<vmem>>, vector<288x4xbf16>
    %cst = arith.constant dense<0.000000e+00> : vector<256x4xf32>
    %2 = tpu.matmul %0, %1, %cst {dimension_numbers = #tpu.dot_dimension_numbers<[1], [0], [0], [1], [0, 0, 1, 1], [], []>} : vector<256x288xbf16>, vector<288x4xbf16>, vector<256x4xf32> -> vector<256x4xf32>
    %c0_3 = arith.constant 0 : index
    %c0_4 = arith.constant 0 : index
    %3 = vector.load %arg3[%c0_3, %c0_4] : memref<1x4xf32, #tpu.memory_space<vmem>>, vector<1x4xf32>
    %4 = vector.broadcast %3 : vector<1x4xf32> to vector<256x4xf32>
    %5 = arith.addf %2, %4 : vector<256x4xf32>
    %6 = arith.negf %5 : vector<256x4xf32>
    %7 = math.exp %6 : vector<256x4xf32>
    %cst_5 = arith.constant 1.000000e+00 : f32
    %8 = vector.broadcast %cst_5 : f32 to vector<256x4xf32>
    %9 = arith.addf %8, %7 : vector<256x4xf32>
    %10 = arith.divf %8, %9 : vector<256x4xf32>
    %c0_6 = arith.constant 0 : index
    %c0_7 = arith.constant 0 : index
    %11 = vector.load %arg4[%c0_6, %c0_7] : memref<256x4xf32, #tpu.memory_space<vmem>>, vector<256x4xf32>
    tpu.vector_store %arg4[%c0_6, %c0_7], %10 {strides = array<i32>} : memref<256x4xf32, #tpu.memory_space<vmem>>, vector<256x4xf32>,
    return
  }
  func.func @transform_0(%arg0: i32) -> (i32, i32) {
    %c0_i32 = arith.constant 0 : i32
    %c0_i32_0 = arith.constant 0 : i32
    return %arg0, %c0_i32 : i32, i32
  }
  func.func @transform_1(%arg0: i32) -> (i32, i32) {
    %c0_i32 = arith.constant 0 : i32
    %c0_i32_0 = arith.constant 0 : i32
    %c0_i32_1 = arith.constant 0 : i32
    return %c0_i32, %c0_i32_0 : i32, i32
  }
  func.func @transform_2(%arg0: i32) -> (i32, i32) {
    %c0_i32 = arith.constant 0 : i32
    %c0_i32_0 = arith.constant 0 : i32
    %c0_i32_1 = arith.constant 0 : i32
    return %c0_i32, %c0_i32_0 : i32, i32
  }
  func.func @transform_3(%arg0: i32) -> (i32, i32) {
    %c0_i32 = arith.constant 0 : i32
    %c0_i32_0 = arith.constant 0 : i32
    return %arg0, %c0_i32 : i32, i32
  }
}

</mosaic_0001>

<llo_original>
// kernel: forward.5
$region0: #{forward.5}
  #allocation0 [shape = 'u32[]', space=smem, size = 0x4, offset = 0x4, fixed_abs, tag = 'smem constant byte address 0x4 - core index']
  #allocation1 [shape = 'u32[144,128]{1,0:T(1,128)}', space=vmem, size = 0x12000, scoped, tag = 'internal scratch']
  %s0 = inlined_call_operand.vmem [shape: bf16[512,16], index: 0, kind: input, shape index: {}]
  %s1 = inlined_call_operand.vmem [shape: bf16[16,32], index: 1, kind: input, shape index: {}]
  %s2 = inlined_call_operand.vmem [shape: f32[1,32], index: 2, kind: input, shape index: {}]
  %s3 = inlined_call_operand.vmem [shape: bf16[512,32], index: 3, kind: output, shape index: {}]
  %s4 = sld [smem:[#allocation0]]
  $region22: #{forward.5} parent=0
    _
  %s6 = ssub.s32 1, %s4
  %s7 = scalar_select 0, %s6, %s4
  // Predicated region
  $region2: #{forward.5} parent=0 // pred_check
    _
  $region3: #{forward.5} parent=0 // pred_check_branch
    %9 = sbr.rel (0) target = $region5
  $region4: #{forward.5} parent=0 // pred_region
    _
  $region5: #{forward.5} parent=0 // pred_fallthru
    _
  // Predicated region
  $region6: #{forward.5} parent=0 // pred_check
    _
  $region7: #{forward.5} parent=0 // pred_check_branch
    %11 = sbr.rel (0) target = $region9
  $region8: #{forward.5} parent=0 // pred_region
    _
  $region9: #{forward.5} parent=0 // pred_fallthru
    _
  // Predicated region
  $region10: #{forward.5} parent=0 // pred_check
    _
  $region11: #{forward.5} parent=0 // pred_check_branch
    %13 = sbr.rel (0) target = $region13
  $region12: #{forward.5} parent=0 // pred_region
    _
  $region13: #{forward.5} parent=0 // pred_fallthru
    _
  %v15 = vld [vmem:[%s0] sm:$0xf]
  %v16 = vld [vmem:[%s0 + $0x4] sm:$0xf]
  %v17 = vld [vmem:[%s0 + $0x8] sm:$0xf]
  %v18 = vld [vmem:[%s0 + $0xc] sm:$0xf]
  %v19 = vld [vmem:[%s0 + $0x10] sm:$0xf]
  %v20 = vld [vmem:[%s0 + $0x14] sm:$0xf]
  %v21 = vld [vmem:[%s0 + $0x18] sm:$0xf]
  %v22 = vld [vmem:[%s0 + $0x1c] sm:$0xf]
  %v23 = vld [vmem:[%s0 + $0x20] sm:$0xf]
  %v24 = vld [vmem:[%s0 + $0x24] sm:$0xf]
  %v25 = vld [vmem:[%s0 + $0x28] sm:$0xf]
  %v26 = vld [vmem:[%s0 + $0x2c] sm:$0xf]
  %v27 = vld [vmem:[%s0 + $0x30] sm:$0xf]
  %v28 = vld [vmem:[%s0 + $0x34] sm:$0xf]
  %v29 = vld [vmem:[%s0 + $0x38] sm:$0xf]
  %v30 = vld [vmem:[%s0 + $0x3c] sm:$0xf]
  %v31 = vld [vmem:[%s0 + $0x40] sm:$0xf]
  %v32 = vld [vmem:[%s0 + $0x44] sm:$0xf]
  %v33 = vld [vmem:[%s0 + $0x48] sm:$0xf]
  %v34 = vld [vmem:[%s0 + $0x4c] sm:$0xf]
  %v35 = vld [vmem:[%s0 + $0x50] sm:$0xf]
  %v36 = vld [vmem:[%s0 + $0x54] sm:$0xf]
  %v37 = vld [vmem:[%s0 + $0x58] sm:$0xf]
  %v38 = vld [vmem:[%s0 + $0x5c] sm:$0xf]
  %v39 = vld [vmem:[%s0 + $0x60] sm:$0xf]
  %v40 = vld [vmem:[%s0 + $0x64] sm:$0xf]
  %v41 = vld [vmem:[%s0 + $0x68] sm:$0xf]
  %v42 = vld [vmem:[%s0 + $0x6c] sm:$0xf]
  %v43 = vld [vmem:[%s0 + $0x70] sm:$0xf]
  %v44 = vld [vmem:[%s0 + $0x74] sm:$0xf]
  %v45 = vld [vmem:[%s0 + $0x78] sm:$0xf]
  %v46 = vld [vmem:[%s0 + $0x7c] sm:$0xf]
  %v47 = vld [vmem:[%s0 + $0x80] sm:$0xf]
  %v48 = vld [vmem:[%s0 + $0x84] sm:$0xf]
  %v49 = vld [vmem:[%s0 + $0x88] sm:$0xf]
  %v50 = vld [vmem:[%s0 + $0x8c] sm:$0xf]
  %v51 = vld [vmem:[%s0 + $0x90] sm:$0xf]
  %v52 = vld [vmem:[%s0 + $0x94] sm:$0xf]
  %v53 = vld [vmem:[%s0 + $0x98] sm:$0xf]
  %v54 = vld [vmem:[%s0 + $0x9c] sm:$0xf]
  %v55 = vld [vmem:[%s0 + $0xa0] sm:$0xf]
  %v56 = vld [vmem:[%s0 + $0xa4] sm:$0xf]
  %v57 = vld [vmem:[%s0 + $0xa8] sm:$0xf]
  %v58 = vld [vmem:[%s0 + $0xac] sm:$0xf]
  %v59 = vld [vmem:[%s0 + $0xb0] sm:$0xf]
  %v60 = vld [vmem:[%s0 + $0xb4] sm:$0xf]
  %v61 = vld [vmem:[%s0 + $0xb8] sm:$0xf]
  %v62 = vld [vmem:[%s0 + $0xbc] sm:$0xf]
  %v63 = vld [vmem:[%s0 + $0xc0] sm:$0xf]
  %v64 = vld [vmem:[%s0 + $0xc4] sm:$0xf]
  %v65 = vld [vmem:[%s0 + $0xc8] sm:$0xf]
  %v66 = vld [vmem:[%s0 + $0xcc] sm:$0xf]
  %v67 = vld [vmem:[%s0 + $0xd0] sm:$0xf]
  %v68 = vld [vmem:[%s0 + $0xd4] sm:$0xf]
  %v69 = vld [vmem:[%s0 + $0xd8] sm:$0xf]
  %v70 = vld [vmem:[%s0 + $0xdc] sm:$0xf]
  %v71 = vld [vmem:[%s0 + $0xe0] sm:$0xf]
  %v72 = vld [vmem:[%s0 + $0xe4] sm:$0xf]
  %v73 = vld [vmem:[%s0 + $0xe8] sm:$0xf]
  %v74 = vld [vmem:[%s0 + $0xec] sm:$0xf]
  %v75 = vld [vmem:[%s0 + $0xf0] sm:$0xf]
  %v76 = vld [vmem:[%s0 + $0xf4] sm:$0xf]
  %v77 = vld [vmem:[%s0 + $0xf8] sm:$0xf]
  %v78 = vld [vmem:[%s0 + $0xfc] sm:$0xf]
  %v79 = vld [vmem:[%s1] sm:$0xf]
  %v80 = vld [vmem:[%s1 + $0x4] sm:$0xf]
  %v81 = vld [vmem:[%s2] sm:$0x1]
  %v83 = vlaneseq
  %v84 = vshrl.u32 %v83, 7
  %v85 = vsub.s32 0, %v84
  %v86 = vrot.slane %v81, %v85
  %v152 = vunpack.c.l.b16 %v15
  %v153 = vunpack.c.l.b16 %v16
  %v154 = vunpack.c.l.b16 %v17
  %v155 = vunpack.c.l.b16 %v18
  %v156 = vunpack.c.l.b16 %v19
  %v157 = vunpack.c.l.b16 %v20
  %v158 = vunpack.c.l.b16 %v21
  %v159 = vunpack.c.l.b16 %v22
  %v160 = vunpack.c.l.b16 %v23
  %v161 = vunpack.c.l.b16 %v24
  %v162 = vunpack.c.l.b16 %v25
  %v163 = vunpack.c.l.b16 %v26
  %v164 = vunpack.c.l.b16 %v27
  %v165 = vunpack.c.l.b16 %v28
  %v166 = vunpack.c.l.b16 %v29
  %v167 = vunpack.c.l.b16 %v30
  %v168 = vunpack.c.l.b16 %v31
  %v169 = vunpack.c.l.b16 %v32
  %v170 = vunpack.c.l.b16 %v33
  %v171 = vunpack.c.l.b16 %v34
  %v172 = vunpack.c.l.b16 %v35
  %v173 = vunpack.c.l.b16 %v36
  %v174 = vunpack.c.l.b16 %v37
  %v175 = vunpack.c.l.b16 %v38
  %v176 = vunpack.c.l.b16 %v39
  %v177 = vunpack.c.l.b16 %v40
  %v178 = vunpack.c.l.b16 %v41
  %v179 = vunpack.c.l.b16 %v42
  %v180 = vunpack.c.l.b16 %v43
  %v181 = vunpack.c.l.b16 %v44
  %v182 = vunpack.c.l.b16 %v45
  %v183 = vunpack.c.l.b16 %v46
  %v184 = vunpack.c.l.b16 %v47
  %v185 = vunpack.c.l.b16 %v48
  %v186 = vunpack.c.l.b16 %v49
  %v187 = vunpack.c.l.b16 %v50
  %v188 = vunpack.c.l.b16 %v51
  %v189 = vunpack.c.l.b16 %v52
  %v190 = vunpack.c.l.b16 %v53
  %v191 = vunpack.c.l.b16 %v54
  %v192 = vunpack.c.l.b16 %v55
  %v193 = vunpack.c.l.b16 %v56
  %v194 = vunpack.c.l.b16 %v57
  %v195 = vunpack.c.l.b16 %v58
  %v196 = vunpack.c.l.b16 %v59
  %v197 = vunpack.c.l.b16 %v60
  %v198 = vunpack.c.l.b16 %v61
  %v199 = vunpack.c.l.b16 %v62
  %v200 = vunpack.c.l.b16 %v63
  %v201 = vunpack.c.l.b16 %v64
  %v202 = vunpack.c.l.b16 %v65
  %v203 = vunpack.c.l.b16 %v66
  %v204 = vunpack.c.l.b16 %v67
  %v205 = vunpack.c.l.b16 %v68
  %v206 = vunpack.c.l.b16 %v69
  %v207 = vunpack.c.l.b16 %v70
  %v208 = vunpack.c.l.b16 %v71
  %v209 = vunpack.c.l.b16 %v72
  %v210 = vunpack.c.l.b16 %v73
  %v211 = vunpack.c.l.b16 %v74
  %v212 = vunpack.c.l.b16 %v75
  %v213 = vunpack.c.l.b16 %v76
  %v214 = vunpack.c.l.b16 %v77
  %v215 = vunpack.c.l.b16 %v78
  %v216 = vpack.c.b16 %v153, %v152
  %v217 = vpack.c.b16 %v155, %v154
  %v218 = vpack.c.b16 %v157, %v156
  %v219 = vpack.c.b16 %v159, %v158
  %v220 = vpack.c.b16 %v161, %v160
  %v221 = vpack.c.b16 %v163, %v162
  %v222 = vpack.c.b16 %v165, %v164
  %v223 = vpack.c.b16 %v167, %v166
  %v224 = vpack.c.b16 %v169, %v168
  %v225 = vpack.c.b16 %v171, %v170
  %v226 = vpack.c.b16 %v173, %v172
  %v227 = vpack.c.b16 %v175, %v174
  %v228 = vpack.c.b16 %v177, %v176
  %v229 = vpack.c.b16 %v179, %v178
  %v230 = vpack.c.b16 %v181, %v180
  %v231 = vpack.c.b16 %v183, %v182
  %v232 = vpack.c.b16 %v185, %v184
  %v233 = vpack.c.b16 %v187, %v186
  %v234 = vpack.c.b16 %v189, %v188
  %v235 = vpack.c.b16 %v191, %v190
  %v236 = vpack.c.b16 %v193, %v192
  %v237 = vpack.c.b16 %v195, %v194
  %v238 = vpack.c.b16 %v197, %v196
  %v239 = vpack.c.b16 %v199, %v198
  %v240 = vpack.c.b16 %v201, %v200
  %v241 = vpack.c.b16 %v203, %v202
  %v242 = vpack.c.b16 %v205, %v204
  %v243 = vpack.c.b16 %v207, %v206
  %v244 = vpack.c.b16 %v209, %v208
  %v245 = vpack.c.b16 %v211, %v210
  %v246 = vpack.c.b16 %v213, %v212
  %v247 = vpack.c.b16 %v215, %v214
  %v250 = vunpack.c.l.b16 %v79
  %v251 = vunpack.c.l.b16 %v80
  %v252 = vpack.c.b16 %v251, %v250
  %vm254 = vcmask 130048
  %v256 = vsel %vm254, %v216, 0
  %v259 = vsel %vm254, %v217, 0
  %v262 = vsel %vm254, %v218, 0
  %v265 = vsel %vm254, %v219, 0
  %v268 = vsel %vm254, %v220, 0
  %v271 = vsel %vm254, %v221, 0
  %v274 = vsel %vm254, %v222, 0
  %v277 = vsel %vm254, %v223, 0
  %v280 = vsel %vm254, %v224, 0
  %v283 = vsel %vm254, %v225, 0
  %v286 = vsel %vm254, %v226, 0
  %v289 = vsel %vm254, %v227, 0
  %v292 = vsel %vm254, %v228, 0
  %v295 = vsel %vm254, %v229, 0
  %v298 = vsel %vm254, %v230, 0
  %v301 = vsel %vm254, %v231, 0
  %v304 = vsel %vm254, %v232, 0
  %v307 = vsel %vm254, %v233, 0
  %v310 = vsel %vm254, %v234, 0
  %v313 = vsel %vm254, %v235, 0
  %v316 = vsel %vm254, %v236, 0
  %v319 = vsel %vm254, %v237, 0
  %v322 = vsel %vm254, %v238, 0
  %v325 = vsel %vm254, %v239, 0
  %v328 = vsel %vm254, %v240, 0
  %v331 = vsel %vm254, %v241, 0
  %v334 = vsel %vm254, %v242, 0
  %v337 = vsel %vm254, %v243, 0
  %v340 = vsel %vm254, %v244, 0
  %v343 = vsel %vm254, %v245, 0
  %v346 = vsel %vm254, %v246, 0
  %v349 = vsel %vm254, %v247, 0
  %351 = vmatprep.subr.bf16.mxu0 0
  %352 = vmatpush1.bf16.msra.mxu0 %v252
  %353 = vmatprep.subr.bf16.mxu0 0
  %354 = vmatpush1.bf16.msra.mxu0 0
  %355 = vmatprep.subr.bf16.mxu0 0
  %356 = vmatpush1.bf16.msra.mxu0 0
  %357 = vmatprep.subr.bf16.mxu0 0
  %358 = vmatpush1.bf16.msra.mxu0 0
  %359 = vmatprep.subr.bf16.mxu0 0
  %360 = vmatpush1.bf16.msra.mxu0 0
  %361 = vmatprep.subr.bf16.mxu0 0
  %362 = vmatpush1.bf16.msra.mxu0 0
  %363 = vmatprep.subr.bf16.mxu0 0
  %364 = vmatpush1.bf16.msra.mxu0 0
  %365 = vmatprep.subr.bf16.mxu0 0
  %366 = vmatpush1.bf16.msra.mxu0 0
  %367 = vmatprep.subr.bf16.mxu0 0
  %368 = vmatpush1.bf16.msra.mxu0 0
  %369 = vmatprep.subr.bf16.mxu0 0
  %370 = vmatpush1.bf16.msra.mxu0 0
  %371 = vmatprep.subr.bf16.mxu0 0
  %372 = vmatpush1.bf16.msra.mxu0 0
  %373 = vmatprep.subr.bf16.mxu0 0
  %374 = vmatpush1.bf16.msra.mxu0 0
  %375 = vmatprep.subr.bf16.mxu0 0
  %376 = vmatpush1.bf16.msra.mxu0 0
  %377 = vmatprep.subr.bf16.mxu0 0
  %378 = vmatpush1.bf16.msra.mxu0 0
  %379 = vmatprep.subr.bf16.mxu0 0
  %380 = vmatpush1.bf16.msra.mxu0 0
  %381 = vmatprep.subr.bf16.mxu0 0
  %382 = vmatpush1.bf16.msra.mxu0 0
  %383 = vmatprep.mubr.bf16.mxu0 0
  %384 = vmatmul.mubr.bf16.gmra.mrb[0].mxu0 %v256
  %v385 = vpop.f32.mrb[0].mxu0
  %v386 = vadd.f32 %v86, %v385
  %v387 = vpop.f32.mrb[0].mxu0
  %v388 = vpop.f32.mrb[0].mxu0
  %v389 = vadd.f32 %v86, %v388
  %v390 = vpop.f32.mrb[0].mxu0
  %391 = vmatprep.mubr.bf16.mxu0 0
  %392 = vmatmul.mubr.bf16.gmra.mrb[0].mxu0 %v259
  %v393 = vpop.f32.mrb[0].mxu0
  %v394 = vadd.f32 %v86, %v393
  %v395 = vpop.f32.mrb[0].mxu0
  %v396 = vpop.f32.mrb[0].mxu0
  %v397 = vadd.f32 %v86, %v396
  %v398 = vpop.f32.mrb[0].mxu0
  %399 = vmatprep.mubr.bf16.mxu0 0
  %400 = vmatmul.mubr.bf16.gmra.mrb[0].mxu0 %v262
  %v401 = vpop.f32.mrb[0].mxu0
  %v402 = vadd.f32 %v86, %v401
  %v403 = vpop.f32.mrb[0].mxu0
  %v404 = vpop.f32.mrb[0].mxu0
  %v405 = vadd.f32 %v86, %v404
  %v406 = vpop.f32.mrb[0].mxu0
  %407 = vmatprep.mubr.bf16.mxu0 0
  %408 = vmatmul.mubr.bf16.gmra.mrb[0].mxu0 %v265
  %v409 = vpop.f32.mrb[0].mxu0
  %v410 = vadd.f32 %v86, %v409
  %v411 = vpop.f32.mrb[0].mxu0
  %v412 = vpop.f32.mrb[0].mxu0
  %v413 = vadd.f32 %v86, %v412
  %v414 = vpop.f32.mrb[0].mxu0
  %415 = vmatprep.mubr.bf16.mxu0 0
  %416 = vmatmul.mubr.bf16.gmra.mrb[0].mxu0 %v268
  %v417 = vpop.f32.mrb[0].mxu0
  %v418 = vadd.f32 %v86, %v417
  %v419 = vpop.f32.mrb[0].mxu0
  %v420 = vpop.f32.mrb[0].mxu0
  %v421 = vadd.f32 %v86, %v420
  %v422 = vpop.f32.mrb[0].mxu0
  %423 = vmatprep.mubr.bf16.mxu0 0
  %424 = vmatmul.mubr.bf16.gmra.mrb[0].mxu0 %v271
  %v425 = vpop.f32.mrb[0].mxu0
  %v426 = vadd.f32 %v86, %v425
  %v427 = vpop.f32.mrb[0].mxu0
  %v428 = vpop.f32.mrb[0].mxu0
  %v429 = vadd.f32 %v86, %v428
  %v430 = vpop.f32.mrb[0].mxu0
  %431 = vmatprep.mubr.bf16.mxu0 0
  %432 = vmatmul.mubr.bf16.gmra.mrb[0].mxu0 %v274
  %v433 = vpop.f32.mrb[0].mxu0
  %v434 = vadd.f32 %v86, %v433
  %v435 = vpop.f32.mrb[0].mxu0
  %v436 = vpop.f32.mrb[0].mxu0
  %v437 = vadd.f32 %v86, %v436
  %v438 = vpop.f32.mrb[0].mxu0
  %439 = vmatprep.mubr.bf16.mxu0 0
  %440 = vmatmul.mubr.bf16.gmra.mrb[0].mxu0 %v277
  %v441 = vpop.f32.mrb[0].mxu0
  %v442 = vadd.f32 %v86, %v441
  %v443 = vpop.f32.mrb[0].mxu0
  %v444 = vpop.f32.mrb[0].mxu0
  %v445 = vadd.f32 %v86, %v444
  %v446 = vpop.f32.mrb[0].mxu0
  %447 = vmatprep.mubr.bf16.mxu0 0
  %448 = vmatmul.mubr.bf16.gmra.mrb[0].mxu0 %v280
  %v449 = vpop.f32.mrb[0].mxu0
  %v450 = vadd.f32 %v86, %v449
  %v451 = vpop.f32.mrb[0].mxu0
  %v452 = vpop.f32.mrb[0].mxu0
  %v453 = vadd.f32 %v86, %v452
  %v454 = vpop.f32.mrb[0].mxu0
  %455 = vmatprep.mubr.bf16.mxu0 0
  %456 = vmatmul.mubr.bf16.gmra.mrb[0].mxu0 %v283
  %v457 = vpop.f32.mrb[0].mxu0
  %v458 = vadd.f32 %v86, %v457
  %v459 = vpop.f32.mrb[0].mxu0
  %v460 = vpop.f32.mrb[0].mxu0
  %v461 = vadd.f32 %v86, %v460
  %v462 = vpop.f32.mrb[0].mxu0
  %463 = vmatprep.mubr.bf16.mxu0 0
  %464 = vmatmul.mubr.bf16.gmra.mrb[0].mxu0 %v286
  %v465 = vpop.f32.mrb[0].mxu0
  %v466 = vadd.f32 %v86, %v465
  %v467 = vpop.f32.mrb[0].mxu0
  %v468 = vpop.f32.mrb[0].mxu0
  %v469 = vadd.f32 %v86, %v468
  %v470 = vpop.f32.mrb[0].mxu0
  %471 = vmatprep.mubr.bf16.mxu0 0
  %472 = vmatmul.mubr.bf16.gmra.mrb[0].mxu0 %v289
  %v473 = vpop.f32.mrb[0].mxu0
  %v474 = vadd.f32 %v86, %v473
  %v475 = vpop.f32.mrb[0].mxu0
  %v476 = vpop.f32.mrb[0].mxu0
  %v477 = vadd.f32 %v86, %v476
  %v478 = vpop.f32.mrb[0].mxu0
  %479 = vmatprep.mubr.bf16.mxu0 0
  %480 = vmatmul.mubr.bf16.gmra.mrb[0].mxu0 %v292
  %v481 = vpop.f32.mrb[0].mxu0
  %v482 = vadd.f32 %v86, %v481
  %v483 = vpop.f32.mrb[0].mxu0
  %v484 = vpop.f32.mrb[0].mxu0
  %v485 = vadd.f32 %v86, %v484
  %v486 = vpop.f32.mrb[0].mxu0
  %487 = vmatprep.mubr.bf16.mxu0 0
  %488 = vmatmul.mubr.bf16.gmra.mrb[0].mxu0 %v295
  %v489 = vpop.f32.mrb[0].mxu0
  %v490 = vadd.f32 %v86, %v489
  %v491 = vpop.f32.mrb[0].mxu0
  %v492 = vpop.f32.mrb[0].mxu0
  %v493 = vadd.f32 %v86, %v492
  %v494 = vpop.f32.mrb[0].mxu0
  %495 = vmatprep.mubr.bf16.mxu0 0
  %496 = vmatmul.mubr.bf16.gmra.mrb[0].mxu0 %v298
  %v497 = vpop.f32.mrb[0].mxu0
  %v498 = vadd.f32 %v86, %v497
  %v499 = vpop.f32.mrb[0].mxu0
  %v500 = vpop.f32.mrb[0].mxu0
  %v501 = vadd.f32 %v86, %v500
  %v502 = vpop.f32.mrb[0].mxu0
  %503 = vmatprep.mubr.bf16.mxu0 0
  %504 = vmatmul.mubr.bf16.gmra.mrb[0].mxu0 %v301
  %v505 = vpop.f32.mrb[0].mxu0
  %v506 = vadd.f32 %v86, %v505
  %v507 = vpop.f32.mrb[0].mxu0
  %v508 = vpop.f32.mrb[0].mxu0
  %v509 = vadd.f32 %v86, %v508
  %v510 = vpop.f32.mrb[0].mxu0
  %511 = vmatprep.mubr.bf16.mxu0 0
  %512 = vmatmul.mubr.bf16.gmra.mrb[0].mxu0 %v304
  %v513 = vpop.f32.mrb[0].mxu0
  %v514 = vadd.f32 %v86, %v513
  %v515 = vpop.f32.mrb[0].mxu0
  %v516 = vpop.f32.mrb[0].mxu0
  %v517 = vadd.f32 %v86, %v516
  %v518 = vpop.f32.mrb[0].mxu0
  %519 = vmatprep.mubr.bf16.mxu0 0
  %520 = vmatmul.mubr.bf16.gmra.mrb[0].mxu0 %v307
  %v521 = vpop.f32.mrb[0].mxu0
  %v522 = vadd.f32 %v86, %v521
  %v523 = vpop.f32.mrb[0].mxu0
  %v524 = vpop.f32.mrb[0].mxu0
  %v525 = vadd.f32 %v86, %v524
  %v526 = vpop.f32.mrb[0].mxu0
  %527 = vmatprep.mubr.bf16.mxu0 0
  %528 = vmatmul.mubr.bf16.gmra.mrb[0].mxu0 %v310
  %v529 = vpop.f32.mrb[0].mxu0
  %v530 = vadd.f32 %v86, %v529
  %v531 = vpop.f32.mrb[0].mxu0
  %v532 = vpop.f32.mrb[0].mxu0
  %v533 = vadd.f32 %v86, %v532
  %v534 = vpop.f32.mrb[0].mxu0
  %535 = vmatprep.mubr.bf16.mxu0 0
  %536 = vmatmul.mubr.bf16.gmra.mrb[0].mxu0 %v313
  %v537 = vpop.f32.mrb[0].mxu0
  %v538 = vadd.f32 %v86, %v537
  %v539 = vpop.f32.mrb[0].mxu0
  %v540 = vpop.f32.mrb[0].mxu0
  %v541 = vadd.f32 %v86, %v540
  %v542 = vpop.f32.mrb[0].mxu0
  %543 = vmatprep.mubr.bf16.mxu0 0
  %544 = vmatmul.mubr.bf16.gmra.mrb[0].mxu0 %v316
  %v545 = vpop.f32.mrb[0].mxu0
  %v546 = vadd.f32 %v86, %v545
  %v547 = vpop.f32.mrb[0].mxu0
  %v548 = vpop.f32.mrb[0].mxu0
  %v549 = vadd.f32 %v86, %v548
  %v550 = vpop.f32.mrb[0].mxu0
  %551 = vmatprep.mubr.bf16.mxu0 0
  %552 = vmatmul.mubr.bf16.gmra.mrb[0].mxu0 %v319
  %v553 = vpop.f32.mrb[0].mxu0
  %v554 = vadd.f32 %v86, %v553
  %v555 = vpop.f32.mrb[0].mxu0
  %v556 = vpop.f32.mrb[0].mxu0
  %v557 = vadd.f32 %v86, %v556
  %v558 = vpop.f32.mrb[0].mxu0
  %559 = vmatprep.mubr.bf16.mxu0 0
  %560 = vmatmul.mubr.bf16.gmra.mrb[0].mxu0 %v322
  %v561 = vpop.f32.mrb[0].mxu0
  %v562 = vadd.f32 %v86, %v561
  %v563 = vpop.f32.mrb[0].mxu0
  %v564 = vpop.f32.mrb[0].mxu0
  %v565 = vadd.f32 %v86, %v564
  %v566 = vpop.f32.mrb[0].mxu0
  %567 = vmatprep.mubr.bf16.mxu0 0
  %568 = vmatmul.mubr.bf16.gmra.mrb[0].mxu0 %v325
  %v569 = vpop.f32.mrb[0].mxu0
  %v570 = vadd.f32 %v86, %v569
  %v571 = vpop.f32.mrb[0].mxu0
  %v572 = vpop.f32.mrb[0].mxu0
  %v573 = vadd.f32 %v86, %v572
  %v574 = vpop.f32.mrb[0].mxu0
  %575 = vmatprep.mubr.bf16.mxu0 0
  %576 = vmatmul.mubr.bf16.gmra.mrb[0].mxu0 %v328
  %v577 = vpop.f32.mrb[0].mxu0
  %v578 = vadd.f32 %v86, %v577
  %v579 = vpop.f32.mrb[0].mxu0
  %v580 = vpop.f32.mrb[0].mxu0
  %v581 = vadd.f32 %v86, %v580
  %v582 = vpop.f32.mrb[0].mxu0
  %583 = vmatprep.mubr.bf16.mxu0 0
  %584 = vmatmul.mubr.bf16.gmra.mrb[0].mxu0 %v331
  %v585 = vpop.f32.mrb[0].mxu0
  %v586 = vadd.f32 %v86, %v585
  %v587 = vpop.f32.mrb[0].mxu0
  %v588 = vpop.f32.mrb[0].mxu0
  %v589 = vadd.f32 %v86, %v588
  %v590 = vpop.f32.mrb[0].mxu0
  %591 = vmatprep.mubr.bf16.mxu0 0
  %592 = vmatmul.mubr.bf16.gmra.mrb[0].mxu0 %v334
  %v593 = vpop.f32.mrb[0].mxu0
  %v594 = vadd.f32 %v86, %v593
  %v595 = vpop.f32.mrb[0].mxu0
  %v596 = vpop.f32.mrb[0].mxu0
  %v597 = vadd.f32 %v86, %v596
  %v598 = vpop.f32.mrb[0].mxu0
  %599 = vmatprep.mubr.bf16.mxu0 0
  %600 = vmatmul.mubr.bf16.gmra.mrb[0].mxu0 %v337
  %v601 = vpop.f32.mrb[0].mxu0
  %v602 = vadd.f32 %v86, %v601
  %v603 = vpop.f32.mrb[0].mxu0
  %v604 = vpop.f32.mrb[0].mxu0
  %v605 = vadd.f32 %v86, %v604
  %v606 = vpop.f32.mrb[0].mxu0
  %607 = vmatprep.mubr.bf16.mxu0 0
  %608 = vmatmul.mubr.bf16.gmra.mrb[0].mxu0 %v340
  %v609 = vpop.f32.mrb[0].mxu0
  %v610 = vadd.f32 %v86, %v609
  %v611 = vpop.f32.mrb[0].mxu0
  %v612 = vpop.f32.mrb[0].mxu0
  %v613 = vadd.f32 %v86, %v612
  %v614 = vpop.f32.mrb[0].mxu0
  %615 = vmatprep.mubr.bf16.mxu0 0
  %616 = vmatmul.mubr.bf16.gmra.mrb[0].mxu0 %v343
  %v617 = vpop.f32.mrb[0].mxu0
  %v618 = vadd.f32 %v86, %v617
  %v619 = vpop.f32.mrb[0].mxu0
  %v620 = vpop.f32.mrb[0].mxu0
  %v621 = vadd.f32 %v86, %v620
  %v622 = vpop.f32.mrb[0].mxu0
  %623 = vmatprep.mubr.bf16.mxu0 0
  %624 = vmatmul.mubr.bf16.gmra.mrb[0].mxu0 %v346
  %v625 = vpop.f32.mrb[0].mxu0
  %v626 = vadd.f32 %v86, %v625
  %v627 = vpop.f32.mrb[0].mxu0
  %v628 = vpop.f32.mrb[0].mxu0
  %v629 = vadd.f32 %v86, %v628
  %v630 = vpop.f32.mrb[0].mxu0
  %631 = vmatprep.mubr.bf16.mxu0 0
  %632 = vmatmul.mubr.bf16.gmra.mrb[0].mxu0 %v349
  %v633 = vpop.f32.mrb[0].mxu0
  %v634 = vadd.f32 %v86, %v633
  %v635 = vpop.f32.mrb[0].mxu0
  %v636 = vpop.f32.mrb[0].mxu0
  %v637 = vadd.f32 %v86, %v636
  %v638 = vpop.f32.mrb[0].mxu0
  %639 = vdwg.mxu0
  %v640 = vmax.f32 %v386, 0.0
  %v641 = vmax.f32 %v389, 0.0
  %v642 = vmax.f32 %v394, 0.0
  %v643 = vmax.f32 %v397, 0.0
  %v644 = vmax.f32 %v402, 0.0
  %v645 = vmax.f32 %v405, 0.0
  %v646 = vmax.f32 %v410, 0.0
  %v647 = vmax.f32 %v413, 0.0
  %v648 = vmax.f32 %v418, 0.0
  %v649 = vmax.f32 %v421, 0.0
  %v650 = vmax.f32 %v426, 0.0
  %v651 = vmax.f32 %v429, 0.0
  %v652 = vmax.f32 %v434, 0.0
  %v653 = vmax.f32 %v437, 0.0
  %v654 = vmax.f32 %v442, 0.0
  %v655 = vmax.f32 %v445, 0.0
  %v656 = vmax.f32 %v450, 0.0
  %v657 = vmax.f32 %v453, 0.0
  %v658 = vmax.f32 %v458, 0.0
  %v659 = vmax.f32 %v461, 0.0
  %v660 = vmax.f32 %v466, 0.0
  %v661 = vmax.f32 %v469, 0.0
  %v662 = vmax.f32 %v474, 0.0
  %v663 = vmax.f32 %v477, 0.0
  %v664 = vmax.f32 %v482, 0.0
  %v665 = vmax.f32 %v485, 0.0
  %v666 = vmax.f32 %v490, 0.0
  %v667 = vmax.f32 %v493, 0.0
  %v668 = vmax.f32 %v498, 0.0
  %v669 = vmax.f32 %v501, 0.0
  %v670 = vmax.f32 %v506, 0.0
  %v671 = vmax.f32 %v509, 0.0
  %v672 = vmax.f32 %v514, 0.0
  %v673 = vmax.f32 %v517, 0.0
  %v674 = vmax.f32 %v522, 0.0
  %v675 = vmax.f32 %v525, 0.0
  %v676 = vmax.f32 %v530, 0.0
  %v677 = vmax.f32 %v533, 0.0
  %v678 = vmax.f32 %v538, 0.0
  %v679 = vmax.f32 %v541, 0.0
  %v680 = vmax.f32 %v546, 0.0
  %v681 = vmax.f32 %v549, 0.0
  %v682 = vmax.f32 %v554, 0.0
  %v683 = vmax.f32 %v557, 0.0
  %v684 = vmax.f32 %v562, 0.0
  %v685 = vmax.f32 %v565, 0.0
  %v686 = vmax.f32 %v570, 0.0
  %v687 = vmax.f32 %v573, 0.0
  %v688 = vmax.f32 %v578, 0.0
  %v689 = vmax.f32 %v581, 0.0
  %v690 = vmax.f32 %v586, 0.0
  %v691 = vmax.f32 %v589, 0.0
  %v692 = vmax.f32 %v594, 0.0
  %v693 = vmax.f32 %v597, 0.0
  %v694 = vmax.f32 %v602, 0.0
  %v695 = vmax.f32 %v605, 0.0
  %v696 = vmax.f32 %v610, 0.0
  %v697 = vmax.f32 %v613, 0.0
  %v698 = vmax.f32 %v618, 0.0
  %v699 = vmax.f32 %v621, 0.0
  %v700 = vmax.f32 %v626, 0.0
  %v701 = vmax.f32 %v629, 0.0
  %v702 = vmax.f32 %v634, 0.0
  %v703 = vmax.f32 %v637, 0.0
  %v704 = vpack.c.bf16 %v641, %v640
  %v705 = vpack.c.bf16 %v643, %v642
  %v706 = vpack.c.bf16 %v645, %v644
  %v707 = vpack.c.bf16 %v647, %v646
  %v708 = vpack.c.bf16 %v649, %v648
  %v709 = vpack.c.bf16 %v651, %v650
  %v710 = vpack.c.bf16 %v653, %v652
  %v711 = vpack.c.bf16 %v655, %v654
  %v712 = vpack.c.bf16 %v657, %v656
  %v713 = vpack.c.bf16 %v659, %v658
  %v714 = vpack.c.bf16 %v661, %v660
  %v715 = vpack.c.bf16 %v663, %v662
  %v716 = vpack.c.bf16 %v665, %v664
  %v717 = vpack.c.bf16 %v667, %v666
  %v718 = vpack.c.bf16 %v669, %v668
  %v719 = vpack.c.bf16 %v671, %v670
  %v720 = vpack.c.bf16 %v673, %v672
  %v721 = vpack.c.bf16 %v675, %v674
  %v722 = vpack.c.bf16 %v677, %v676
  %v723 = vpack.c.bf16 %v679, %v678
  %v724 = vpack.c.bf16 %v681, %v680
  %v725 = vpack.c.bf16 %v683, %v682
  %v726 = vpack.c.bf16 %v685, %v684
  %v727 = vpack.c.bf16 %v687, %v686
  %v728 = vpack.c.bf16 %v689, %v688
  %v729 = vpack.c.bf16 %v691, %v690
  %v730 = vpack.c.bf16 %v693, %v692
  %v731 = vpack.c.bf16 %v695, %v694
  %v732 = vpack.c.bf16 %v697, %v696
  %v733 = vpack.c.bf16 %v699, %v698
  %v734 = vpack.c.bf16 %v701, %v700
  %v735 = vpack.c.bf16 %v703, %v702
  %v768 = vunpack.c.l.b16 %v704
  %v769 = vunpack.c.h.b16 %v704
  %v770 = vunpack.c.l.b16 %v705
  %v771 = vunpack.c.h.b16 %v705
  %v772 = vunpack.c.l.b16 %v706
  %v773 = vunpack.c.h.b16 %v706
  %v774 = vunpack.c.l.b16 %v707
  %v775 = vunpack.c.h.b16 %v707
  %v776 = vunpack.c.l.b16 %v708
  %v777 = vunpack.c.h.b16 %v708
  %v778 = vunpack.c.l.b16 %v709
  %v779 = vunpack.c.h.b16 %v709
  %v780 = vunpack.c.l.b16 %v710
  %v781 = vunpack.c.h.b16 %v710
  %v782 = vunpack.c.l.b16 %v711
  %v783 = vunpack.c.h.b16 %v711
  %v784 = vunpack.c.l.b16 %v712
  %v785 = vunpack.c.h.b16 %v712
  %v786 = vunpack.c.l.b16 %v713
  %v787 = vunpack.c.h.b16 %v713
  %v788 = vunpack.c.l.b16 %v714
  %v789 = vunpack.c.h.b16 %v714
  %v790 = vunpack.c.l.b16 %v715
  %v791 = vunpack.c.h.b16 %v715
  %v792 = vunpack.c.l.b16 %v716
  %v793 = vunpack.c.h.b16 %v716
  %v794 = vunpack.c.l.b16 %v717
  %v795 = vunpack.c.h.b16 %v717
  %v796 = vunpack.c.l.b16 %v718
  %v797 = vunpack.c.h.b16 %v718
  %v798 = vunpack.c.l.b16 %v719
  %v799 = vunpack.c.h.b16 %v719
  %v800 = vunpack.c.l.b16 %v720
  %v801 = vunpack.c.h.b16 %v720
  %v802 = vunpack.c.l.b16 %v721
  %v803 = vunpack.c.h.b16 %v721
  %v804 = vunpack.c.l.b16 %v722
  %v805 = vunpack.c.h.b16 %v722
  %v806 = vunpack.c.l.b16 %v723
  %v807 = vunpack.c.h.b16 %v723
  %v808 = vunpack.c.l.b16 %v724
  %v809 = vunpack.c.h.b16 %v724
  %v810 = vunpack.c.l.b16 %v725
  %v811 = vunpack.c.h.b16 %v725
  %v812 = vunpack.c.l.b16 %v726
  %v813 = vunpack.c.h.b16 %v726
  %v814 = vunpack.c.l.b16 %v727
  %v815 = vunpack.c.h.b16 %v727
  %v816 = vunpack.c.l.b16 %v728
  %v817 = vunpack.c.h.b16 %v728
  %v818 = vunpack.c.l.b16 %v729
  %v819 = vunpack.c.h.b16 %v729
  %v820 = vunpack.c.l.b16 %v730
  %v821 = vunpack.c.h.b16 %v730
  %v822 = vunpack.c.l.b16 %v731
  %v823 = vunpack.c.h.b16 %v731
  %v824 = vunpack.c.l.b16 %v732
  %v825 = vunpack.c.h.b16 %v732
  %v826 = vunpack.c.l.b16 %v733
  %v827 = vunpack.c.h.b16 %v733
  %v828 = vunpack.c.l.b16 %v734
  %v829 = vunpack.c.h.b16 %v734
  %v830 = vunpack.c.l.b16 %v735
  %v831 = vunpack.c.h.b16 %v735
  %v832 = vpack.c.b16 %v768, %v768
  %v833 = vpack.c.b16 %v769, %v769
  %v834 = vpack.c.b16 %v770, %v770
  %v835 = vpack.c.b16 %v771, %v771
  %v836 = vpack.c.b16 %v772, %v772
  %v837 = vpack.c.b16 %v773, %v773
  %v838 = vpack.c.b16 %v774, %v774
  %v839 = vpack.c.b16 %v775, %v775
  %v840 = vpack.c.b16 %v776, %v776
  %v841 = vpack.c.b16 %v777, %v777
  %v842 = vpack.c.b16 %v778, %v778
  %v843 = vpack.c.b16 %v779, %v779
  %v844 = vpack.c.b16 %v780, %v780
  %v845 = vpack.c.b16 %v781, %v781
  %v846 = vpack.c.b16 %v782, %v782
  %v847 = vpack.c.b16 %v783, %v783
  %v848 = vpack.c.b16 %v784, %v784
  %v849 = vpack.c.b16 %v785, %v785
  %v850 = vpack.c.b16 %v786, %v786
  %v851 = vpack.c.b16 %v787, %v787
  %v852 = vpack.c.b16 %v788, %v788
  %v853 = vpack.c.b16 %v789, %v789
  %v854 = vpack.c.b16 %v790, %v790
  %v855 = vpack.c.b16 %v791, %v791
  %v856 = vpack.c.b16 %v792, %v792
  %v857 = vpack.c.b16 %v793, %v793
  %v858 = vpack.c.b16 %v794, %v794
  %v859 = vpack.c.b16 %v795, %v795
  %v860 = vpack.c.b16 %v796, %v796
  %v861 = vpack.c.b16 %v797, %v797
  %v862 = vpack.c.b16 %v798, %v798
  %v863 = vpack.c.b16 %v799, %v799
  %v864 = vpack.c.b16 %v800, %v800
  %v865 = vpack.c.b16 %v801, %v801
  %v866 = vpack.c.b16 %v802, %v802
  %v867 = vpack.c.b16 %v803, %v803
  %v868 = vpack.c.b16 %v804, %v804
  %v869 = vpack.c.b16 %v805, %v805
  %v870 = vpack.c.b16 %v806, %v806
  %v871 = vpack.c.b16 %v807, %v807
  %v872 = vpack.c.b16 %v808, %v808
  %v873 = vpack.c.b16 %v809, %v809
  %v874 = vpack.c.b16 %v810, %v810
  %v875 = vpack.c.b16 %v811, %v811
  %v876 = vpack.c.b16 %v812, %v812
  %v877 = vpack.c.b16 %v813, %v813
  %v878 = vpack.c.b16 %v814, %v814
  %v879 = vpack.c.b16 %v815, %v815
  %v880 = vpack.c.b16 %v816, %v816
  %v881 = vpack.c.b16 %v817, %v817
  %v882 = vpack.c.b16 %v818, %v818
  %v883 = vpack.c.b16 %v819, %v819
  %v884 = vpack.c.b16 %v820, %v820
  %v885 = vpack.c.b16 %v821, %v821
  %v886 = vpack.c.b16 %v822, %v822
  %v887 = vpack.c.b16 %v823, %v823
  %v888 = vpack.c.b16 %v824, %v824
  %v889 = vpack.c.b16 %v825, %v825
  %v890 = vpack.c.b16 %v826, %v826
  %v891 = vpack.c.b16 %v827, %v827
  %v892 = vpack.c.b16 %v828, %v828
  %v893 = vpack.c.b16 %v829, %v829
  %v894 = vpack.c.b16 %v830, %v830
  %v895 = vpack.c.b16 %v831, %v831
  %vm960 = vcmask 257024
  %961 = vst.msk [vmem:[%s3] sm:$0xf] %vm960, %v832
  %962 = vst.msk [vmem:[%s3 + $0x4] sm:$0xf] %vm960, %v833
  %963 = vst.msk [vmem:[%s3 + $0x8] sm:$0xf] %vm960, %v834
  %964 = vst.msk [vmem:[%s3 + $0xc] sm:$0xf] %vm960, %v835
  %965 = vst.msk [vmem:[%s3 + $0x10] sm:$0xf] %vm960, %v836
  %966 = vst.msk [vmem:[%s3 + $0x14] sm:$0xf] %vm960, %v837
  %967 = vst.msk [vmem:[%s3 + $0x18] sm:$0xf] %vm960, %v838
  %968 = vst.msk [vmem:[%s3 + $0x1c] sm:$0xf] %vm960, %v839
  %969 = vst.msk [vmem:[%s3 + $0x20] sm:$0xf] %vm960, %v840
  %970 = vst.msk [vmem:[%s3 + $0x24] sm:$0xf] %vm960, %v841
  %971 = vst.msk [vmem:[%s3 + $0x28] sm:$0xf] %vm960, %v842
  %972 = vst.msk [vmem:[%s3 + $0x2c] sm:$0xf] %vm960, %v843
  %973 = vst.msk [vmem:[%s3 + $0x30] sm:$0xf] %vm960, %v844
  %974 = vst.msk [vmem:[%s3 + $0x34] sm:$0xf] %vm960, %v845
  %975 = vst.msk [vmem:[%s3 + $0x38] sm:$0xf] %vm960, %v846
  %976 = vst.msk [vmem:[%s3 + $0x3c] sm:$0xf] %vm960, %v847
  %977 = vst.msk [vmem:[%s3 + $0x40] sm:$0xf] %vm960, %v848
  %978 = vst.msk [vmem:[%s3 + $0x44] sm:$0xf] %vm960, %v849
  %979 = vst.msk [vmem:[%s3 + $0x48] sm:$0xf] %vm960, %v850
  %980 = vst.msk [vmem:[%s3 + $0x4c] sm:$0xf] %vm960, %v851
  %981 = vst.msk [vmem:[%s3 + $0x50] sm:$0xf] %vm960, %v852
  %982 = vst.msk [vmem:[%s3 + $0x54] sm:$0xf] %vm960, %v853
  %983 = vst.msk [vmem:[%s3 + $0x58] sm:$0xf] %vm960, %v854
  %984 = vst.msk [vmem:[%s3 + $0x5c] sm:$0xf] %vm960, %v855
  %985 = vst.msk [vmem:[%s3 + $0x60] sm:$0xf] %vm960, %v856
  %986 = vst.msk [vmem:[%s3 + $0x64] sm:$0xf] %vm960, %v857
  %987 = vst.msk [vmem:[%s3 + $0x68] sm:$0xf] %vm960, %v858
  %988 = vst.msk [vmem:[%s3 + $0x6c] sm:$0xf] %vm960, %v859
  %989 = vst.msk [vmem:[%s3 + $0x70] sm:$0xf] %vm960, %v860
  %990 = vst.msk [vmem:[%s3 + $0x74] sm:$0xf] %vm960, %v861
  %991 = vst.msk [vmem:[%s3 + $0x78] sm:$0xf] %vm960, %v862
  %992 = vst.msk [vmem:[%s3 + $0x7c] sm:$0xf] %vm960, %v863
  %993 = vst.msk [vmem:[%s3 + $0x80] sm:$0xf] %vm960, %v864
  %994 = vst.msk [vmem:[%s3 + $0x84] sm:$0xf] %vm960, %v865
  %995 = vst.msk [vmem:[%s3 + $0x88] sm:$0xf] %vm960, %v866
  %996 = vst.msk [vmem:[%s3 + $0x8c] sm:$0xf] %vm960, %v867
  %997 = vst.msk [vmem:[%s3 + $0x90] sm:$0xf] %vm960, %v868
  %998 = vst.msk [vmem:[%s3 + $0x94] sm:$0xf] %vm960, %v869
  %999 = vst.msk [vmem:[%s3 + $0x98] sm:$0xf] %vm960, %v870
  %1000 = vst.msk [vmem:[%s3 + $0x9c] sm:$0xf] %vm960, %v871
  %1001 = vst.msk [vmem:[%s3 + $0xa0] sm:$0xf] %vm960, %v872
  %1002 = vst.msk [vmem:[%s3 + $0xa4] sm:$0xf] %vm960, %v873
  %1003 = vst.msk [vmem:[%s3 + $0xa8] sm:$0xf] %vm960, %v874
  %1004 = vst.msk [vmem:[%s3 + $0xac] sm:$0xf] %vm960, %v875
  %1005 = vst.msk [vmem:[%s3 + $0xb0] sm:$0xf] %vm960, %v876
  %1006 = vst.msk [vmem:[%s3 + $0xb4] sm:$0xf] %vm960, %v877
  %1007 = vst.msk [vmem:[%s3 + $0xb8] sm:$0xf] %vm960, %v878
  %1008 = vst.msk [vmem:[%s3 + $0xbc] sm:$0xf] %vm960, %v879
  %1009 = vst.msk [vmem:[%s3 + $0xc0] sm:$0xf] %vm960, %v880
  %1010 = vst.msk [vmem:[%s3 + $0xc4] sm:$0xf] %vm960, %v881
  %1011 = vst.msk [vmem:[%s3 + $0xc8] sm:$0xf] %vm960, %v882
  %1012 = vst.msk [vmem:[%s3 + $0xcc] sm:$0xf] %vm960, %v883
  %1013 = vst.msk [vmem:[%s3 + $0xd0] sm:$0xf] %vm960, %v884
  %1014 = vst.msk [vmem:[%s3 + $0xd4] sm:$0xf] %vm960, %v885
  %1015 = vst.msk [vmem:[%s3 + $0xd8] sm:$0xf] %vm960, %v886
  %1016 = vst.msk [vmem:[%s3 + $0xdc] sm:$0xf] %vm960, %v887
  %1017 = vst.msk [vmem:[%s3 + $0xe0] sm:$0xf] %vm960, %v888
  %1018 = vst.msk [vmem:[%s3 + $0xe4] sm:$0xf] %vm960, %v889
  %1019 = vst.msk [vmem:[%s3 + $0xe8] sm:$0xf] %vm960, %v890
  %1020 = vst.msk [vmem:[%s3 + $0xec] sm:$0xf] %vm960, %v891
  %1021 = vst.msk [vmem:[%s3 + $0xf0] sm:$0xf] %vm960, %v892
  %1022 = vst.msk [vmem:[%s3 + $0xf4] sm:$0xf] %vm960, %v893
  %1023 = vst.msk [vmem:[%s3 + $0xf8] sm:$0xf] %vm960, %v894
  %1024 = vst.msk [vmem:[%s3 + $0xfc] sm:$0xf] %vm960, %v895
  // Predicated region
  $region14: #{forward.5} parent=0 // pred_check
    _
  $region15: #{forward.5} parent=0 // pred_check_branch
    %1026 = sbr.rel (0) target = $region17
  $region16: #{forward.5} parent=0 // pred_region
    _
  $region17: #{forward.5} parent=0 // pred_fallthru
    _
  // Predicated region
  $region18: #{forward.5} parent=0 // pred_check
    _
  $region19: #{forward.5} parent=0 // pred_check_branch
    %1028 = sbr.rel (0) target = $region21
  $region20: #{forward.5} parent=0 // pred_region
    _
  $region21: #{forward.5} parent=0 // pred_fallthru
    _

// kernel: forward.6
$region0: #{forward.6}
  #allocation0 [shape = 'u32[]', space=smem, size = 0x4, offset = 0x4, fixed_abs, tag = 'smem constant byte address 0x4 - core index']
  #allocation1 [shape = 'u32[144,128]{1,0:T(1,128)}', space=vmem, size = 0x12000, scoped, tag = 'internal scratch']
  %s0 = inlined_call_operand.vmem [shape: bf16[128,512], index: 0, kind: input, shape index: {}]
  %s1 = inlined_call_operand.vmem [shape: bf16[512,64], index: 1, kind: input, shape index: {}]
  %s2 = inlined_call_operand.vmem [shape: f32[1,64], index: 2, kind: input, shape index: {}]
  %s3 = inlined_call_operand.vmem [shape: bf16[128,64], index: 3, kind: output, shape index: {}]
  %s4 = sld [smem:[#allocation0]]
  $region45: #{forward.6} parent=0
    _
  %s6 = ssub.s32 1, %s4
  %s7 = scalar_select 0, %s6, %s4
  loop: start=0, step=1, limit=4
  $region2: #{forward.6} parent=0 // loop_pre_header
    _
  $region3: #{forward.6} parent=0 // loop_header
    %s9 = sphi 0, %s13
    %p10 = scmp.ge.s32.totalorder %s9, 4
    %s19 = sphi 0, %s21
    %s22 = sphi 0, %s19
    %s23 = sphi 0, %s22
    %s39 = sphi 0, %s23
    %s43 = sphi 0, %s43
    %s45 = sphi 0, %s43
    %s46 = sphi 0, %s45
    %s60 = sphi 0, %s46
    %s64 = sphi 0, %s64
    %s66 = sphi 0, %s64
    %s67 = sphi 0, %s66
    %s81 = sphi 0, %s67
    %s87 = sphi 0, %s89
    %s90 = sphi 0, %s87
    %s91 = sphi 0, %s90
    %s107 = sphi 0, %s91
  $region4: #{forward.6} parent=0 // loop_header_branch
    %12 = sbr.rel (%p10) target = $region8
  $region5: #{forward.6} parent=0 // loop_body
    %s14 = ssub.s32 %s9, 1
    %s15 = ssub.s32 %s9, 2
    %s16 = sadd.s32 %s9, 1
    %s17 = ssub.s32 %s9, %s16
    %p18 = scmp.eq.s32.totalorder %s17, 0
    %s20 = sadd.s32 %s19, 1
    %s21 = scalar_select %p18, %s19, %s20
    %p24 = pneg %p18
    %p25 = scmp.eq.s32.totalorder %s9, 1
    %p26 = por %p24, %p25
    %p27 = scmp.ne.s32.totalorder %s19, %s22
    %p28 = scmp.eq.s32.totalorder %s9, 0
    %p29 = por %p27, %p28
    %p30 = scmp.ne.s32.totalorder %s19, %s22
    %p31 = scmp.eq.s32.totalorder %s14, 1
    %p32 = por %p30, %p31
    %p33 = scmp.ne.s32.totalorder %s22, %s23
    %p34 = scmp.eq.s32.totalorder %s14, 0
    %p35 = por %p33, %p34
    %p36 = scmp.ne.s32.totalorder %s22, %s23
    %p37 = scmp.eq.s32.totalorder %s15, 1
    %p38 = por %p36, %p37
    %p40 = scmp.ne.s32.totalorder %s23, %s39
    %p41 = scmp.eq.s32.totalorder %s15, 0
    %p42 = por %p40, %p41
    %s44 = sadd.s32 %s43, 1
    %p47 = scmp.eq.s32.totalorder %s9, 1
    %p48 = scmp.ne.s32.totalorder %s43, %s45
    %p49 = scmp.eq.s32.totalorder %s9, 0
    %p50 = por %p48, %p49
    %p51 = scmp.ne.s32.totalorder %s43, %s45
    %p52 = scmp.eq.s32.totalorder %s14, 1
    %p53 = por %p51, %p52
    %p54 = scmp.ne.s32.totalorder %s45, %s46
    %p55 = scmp.eq.s32.totalorder %s14, 0
    %p56 = por %p54, %p55
    %p57 = scmp.ne.s32.totalorder %s45, %s46
    %p58 = scmp.eq.s32.totalorder %s15, 1
    %p59 = por %p57, %p58
    %p61 = scmp.ne.s32.totalorder %s46, %s60
    %p62 = scmp.eq.s32.totalorder %s15, 0
    %p63 = por %p61, %p62
    %s65 = sadd.s32 %s64, 1
    %p68 = scmp.eq.s32.totalorder %s9, 1
    %p69 = scmp.ne.s32.totalorder %s64, %s66
    %p70 = scmp.eq.s32.totalorder %s9, 0
    %p71 = por %p69, %p70
    %p72 = scmp.ne.s32.totalorder %s64, %s66
    %p73 = scmp.eq.s32.totalorder %s14, 1
    %p74 = por %p72, %p73
    %p75 = scmp.ne.s32.totalorder %s66, %s67
    %p76 = scmp.eq.s32.totalorder %s14, 0
    %p77 = por %p75, %p76
    %p78 = scmp.ne.s32.totalorder %s66, %s67
    %p79 = scmp.eq.s32.totalorder %s15, 1
    %p80 = por %p78, %p79
    %p82 = scmp.ne.s32.totalorder %s67, %s81
    %p83 = scmp.eq.s32.totalorder %s15, 0
    %p84 = por %p82, %p83
    %s85 = ssub.s32 %s9, %s16
    %p86 = scmp.eq.s32.totalorder %s85, 0
    %s88 = sadd.s32 %s87, 1
    %s89 = scalar_select %p86, %s87, %s88
    %p92 = pneg %p86
    %p93 = scmp.eq.s32.totalorder %s9, 1
    %p94 = por %p92, %p93
    %p95 = scmp.ne.s32.totalorder %s87, %s90
    %p96 = scmp.eq.s32.totalorder %s9, 0
    %p97 = por %p95, %p96
    %p98 = scmp.ne.s32.totalorder %s87, %s90
    %p99 = scmp.eq.s32.totalorder %s14, 1
    %p100 = por %p98, %p99
    %p101 = scmp.ne.s32.totalorder %s90, %s91
    %p102 = scmp.eq.s32.totalorder %s14, 0
    %p103 = por %p101, %p102
    %p104 = scmp.ne.s32.totalorder %s90, %s91
    %p105 = scmp.eq.s32.totalorder %s15, 1
    %p106 = por %p104, %p105
    %p108 = scmp.ne.s32.totalorder %s91, %s107
    %p109 = scmp.eq.s32.totalorder %s15, 0
    %p110 = por %p108, %p109
    %p111 = scmp.le.s32.totalorder 1, %s9
    %p112 = scmp.lt.s32.totalorder %s9, 3
    %p113 = pnand %p111, %p112
    %p114 = pneg %p113
    // Predicated region
    $region9: #{forward.6} parent=5 // pred_check
      _
    $region10: #{forward.6} parent=5 // pred_check_branch
      %116 = sbr.rel (%p113) target = $region12
    $region11: #{forward.6} parent=5 // pred_region
      %s117 = ssub.s32 %s9, 1
      // Predicated region
      $region13: #{forward.6} parent=11 // pred_check
        %p118 = pneg %p56
      $region14: #{forward.6} parent=11 // pred_check_branch
        %120 = sbr.rel (%p118) target = $region16
      $region15: #{forward.6} parent=11 // pred_region
        _
      $region16: #{forward.6} parent=11 // pred_fallthru
        _
      // Predicated region
      $region17: #{forward.6} parent=11 // pred_check
        %p121 = pneg %p77
      $region18: #{forward.6} parent=11 // pred_check_branch
        %123 = sbr.rel (%p121) target = $region20
      $region19: #{forward.6} parent=11 // pred_region
        _
      $region20: #{forward.6} parent=11 // pred_fallthru
        _
    $region12: #{forward.6} parent=5 // pred_fallthru
      _
    %p124 = scmp.lt.s32.totalorder %s9, 2
    // Predicated region
    $region21: #{forward.6} parent=5 // pred_check
      %p125 = pneg %p124
    $region22: #{forward.6} parent=5 // pred_check_branch
      %127 = sbr.rel (%p125) target = $region24
    $region23: #{forward.6} parent=5 // pred_region
      // Predicated region
      $region25: #{forward.6} parent=23 // pred_check
        %p128 = pneg %p29
      $region26: #{forward.6} parent=23 // pred_check_branch
        %130 = sbr.rel (%p128) target = $region28
      $region27: #{forward.6} parent=23 // pred_region
        %s131 = smul.u32 8, %s9
        %p132 = scmp.lt.s32.totalorder %s131, 15
        %s133 = scalar_select %p132, %s131, 15
        %s134 = smul.addr %s133, 4
        %s135 = smul.addr %s134, 4
        %s136 = scalar_lea.vmem %s0, %s135
        %s137 = smul.u32 8, %s9
      $region28: #{forward.6} parent=23 // pred_fallthru
        _
    $region24: #{forward.6} parent=5 // pred_fallthru
      _
    %p138 = scmp.le.s32.totalorder 1, %s9
    %p139 = scmp.lt.s32.totalorder %s9, 3
    %p140 = pnand %p138, %p139
    %p141 = pneg %p140
    // Predicated region
    $region29: #{forward.6} parent=5 // pred_check
      _
    $region30: #{forward.6} parent=5 // pred_check_branch
      %143 = sbr.rel (%p140) target = $region32
    $region31: #{forward.6} parent=5 // pred_region
      %s144 = ssub.s32 %s9, 1
      %s145 = smul.u32 8, %s14
      %p146 = scmp.lt.s32.totalorder %s145, 15
      %s147 = scalar_select %p146, %s145, 15
      %s148 = smul.addr %s147, 4
      %s149 = smul.addr %s148, 4
      %s150 = scalar_lea.vmem %s0, %s149
      %p151 = pneg %p35
      %p152 = pneg %p32
      %p153 = pneg %p56
      %p154 = pneg %p53
      %p155 = pneg %p77
      %p156 = pneg %p74
      %p157 = pneg %p103
      %p158 = pneg %p100
      %s159 = smul.u32 8, %s14
      %p160 = scmp.lt.s32.totalorder %s159, 15
      %s161 = scalar_select %p160, %s159, 15
      %s162 = smul.addr %s161, 4
      %s163 = scalar_lea.vmem %s3, %s162
      %s164 = smul.u32 8, %s14
      %p165 = scmp.lt.s32.totalorder %s164, 15
      %s166 = scalar_select %p165, %s164, 15
      %s167 = smul.addr %s166, 4
      %s168 = smul.addr %s167, 4
      %s169 = scalar_lea.vmem %s0, %s168
      %s170 = smul.u32 8, %s14
      %s171 = smul.u32 8, %s14
      %p172 = scmp.lt.s32.totalorder %s171, 15
      %s173 = scalar_select %p172, %s171, 15
      %s174 = smul.addr %s173, 4
      %s175 = scalar_lea.vmem %s3, %s174
      %s176 = smul.u32 8, %s14
      %v178 = vld [vmem:[%s169] sm:$0xff]
      %v179 = vld [vmem:[%s169 + $0x8] sm:$0xff]
      %v180 = vld [vmem:[%s169 + $0x10] sm:$0xff]
      %v181 = vld [vmem:[%s169 + $0x18] sm:$0xff]
      %v182 = vld [vmem:[%s169 + $0x20] sm:$0xff]
      %v183 = vld [vmem:[%s169 + $0x28] sm:$0xff]
      %v184 = vld [vmem:[%s169 + $0x30] sm:$0xff]
      %v185 = vld [vmem:[%s169 + $0x38] sm:$0xff]
      %v186 = vld [vmem:[%s169 + $0x40] sm:$0xff]
      %v187 = vld [vmem:[%s169 + $0x48] sm:$0xff]
      %v188 = vld [vmem:[%s169 + $0x50] sm:$0xff]
      %v189 = vld [vmem:[%s169 + $0x58] sm:$0xff]
      %v190 = vld [vmem:[%s169 + $0x60] sm:$0xff]
      %v191 = vld [vmem:[%s169 + $0x68] sm:$0xff]
      %v192 = vld [vmem:[%s169 + $0x70] sm:$0xff]
      %v193 = vld [vmem:[%s169 + $0x78] sm:$0xff]
      %v194 = vld [vmem:[%s1] sm:$0xf]
      %v195 = vld [vmem:[%s1 + $0x4] sm:$0xf]
      %v196 = vld [vmem:[%s1 + $0x8] sm:$0xf]
      %v197 = vld [vmem:[%s1 + $0xc] sm:$0xf]
      %v198 = vld [vmem:[%s1 + $0x10] sm:$0xf]
      %v199 = vld [vmem:[%s1 + $0x14] sm:$0xf]
      %v200 = vld [vmem:[%s1 + $0x18] sm:$0xf]
      %v201 = vld [vmem:[%s1 + $0x1c] sm:$0xf]
      %v202 = vld [vmem:[%s1 + $0x20] sm:$0xf]
      %v203 = vld [vmem:[%s1 + $0x24] sm:$0xf]
      %v204 = vld [vmem:[%s1 + $0x28] sm:$0xf]
      %v205 = vld [vmem:[%s1 + $0x2c] sm:$0xf]
      %v206 = vld [vmem:[%s1 + $0x30] sm:$0xf]
      %v207 = vld [vmem:[%s1 + $0x34] sm:$0xf]
      %v208 = vld [vmem:[%s1 + $0x38] sm:$0xf]
      %v209 = vld [vmem:[%s1 + $0x3c] sm:$0xf]
      %v210 = vld [vmem:[%s1 + $0x40] sm:$0xf]
      %v211 = vld [vmem:[%s1 + $0x44] sm:$0xf]
      %v212 = vld [vmem:[%s1 + $0x48] sm:$0xf]
      %v213 = vld [vmem:[%s1 + $0x4c] sm:$0xf]
      %v214 = vld [vmem:[%s1 + $0x50] sm:$0xf]
      %v215 = vld [vmem:[%s1 + $0x54] sm:$0xf]
      %v216 = vld [vmem:[%s1 + $0x58] sm:$0xf]
      %v217 = vld [vmem:[%s1 + $0x5c] sm:$0xf]
      %v218 = vld [vmem:[%s1 + $0x60] sm:$0xf]
      %v219 = vld [vmem:[%s1 + $0x64] sm:$0xf]
      %v220 = vld [vmem:[%s1 + $0x68] sm:$0xf]
      %v221 = vld [vmem:[%s1 + $0x6c] sm:$0xf]
      %v222 = vld [vmem:[%s1 + $0x70] sm:$0xf]
      %v223 = vld [vmem:[%s1 + $0x74] sm:$0xf]
      %v224 = vld [vmem:[%s1 + $0x78] sm:$0xf]
      %v225 = vld [vmem:[%s1 + $0x7c] sm:$0xf]
      %v226 = vld [vmem:[%s1 + $0x80] sm:$0xf]
      %v227 = vld [vmem:[%s1 + $0x84] sm:$0xf]
      %v228 = vld [vmem:[%s1 + $0x88] sm:$0xf]
      %v229 = vld [vmem:[%s1 + $0x8c] sm:$0xf]
      %v230 = vld [vmem:[%s1 + $0x90] sm:$0xf]
      %v231 = vld [vmem:[%s1 + $0x94] sm:$0xf]
      %v232 = vld [vmem:[%s1 + $0x98] sm:$0xf]
      %v233 = vld [vmem:[%s1 + $0x9c] sm:$0xf]
      %v234 = vld [vmem:[%s1 + $0xa0] sm:$0xf]
      %v235 = vld [vmem:[%s1 + $0xa4] sm:$0xf]
      %v236 = vld [vmem:[%s1 + $0xa8] sm:$0xf]
      %v237 = vld [vmem:[%s1 + $0xac] sm:$0xf]
      %v238 = vld [vmem:[%s1 + $0xb0] sm:$0xf]
      %v239 = vld [vmem:[%s1 + $0xb4] sm:$0xf]
      %v240 = vld [vmem:[%s1 + $0xb8] sm:$0xf]
      %v241 = vld [vmem:[%s1 + $0xbc] sm:$0xf]
      %v242 = vld [vmem:[%s1 + $0xc0] sm:$0xf]
      %v243 = vld [vmem:[%s1 + $0xc4] sm:$0xf]
      %v244 = vld [vmem:[%s1 + $0xc8] sm:$0xf]
      %v245 = vld [vmem:[%s1 + $0xcc] sm:$0xf]
      %v246 = vld [vmem:[%s1 + $0xd0] sm:$0xf]
      %v247 = vld [vmem:[%s1 + $0xd4] sm:$0xf]
      %v248 = vld [vmem:[%s1 + $0xd8] sm:$0xf]
      %v249 = vld [vmem:[%s1 + $0xdc] sm:$0xf]
      %v250 = vld [vmem:[%s1 + $0xe0] sm:$0xf]
      %v251 = vld [vmem:[%s1 + $0xe4] sm:$0xf]
      %v252 = vld [vmem:[%s1 + $0xe8] sm:$0xf]
      %v253 = vld [vmem:[%s1 + $0xec] sm:$0xf]
      %v254 = vld [vmem:[%s1 + $0xf0] sm:$0xf]
      %v255 = vld [vmem:[%s1 + $0xf4] sm:$0xf]
      %v256 = vld [vmem:[%s1 + $0xf8] sm:$0xf]
      %v257 = vld [vmem:[%s1 + $0xfc] sm:$0xf]
      %v258 = vld [vmem:[%s2] sm:$0x1]
      %v260 = vlaneseq
      %v261 = vshrl.u32 %v260, 7
      %v262 = vsub.s32 0, %v261
      %v263 = vrot.slane %v258, %v262
      %v281 = vunpack.c.l.b16 %v178
      %v282 = vunpack.c.h.b16 %v178
      %v283 = vunpack.c.l.b16 %v179
      %v284 = vunpack.c.h.b16 %v179
      %v285 = vunpack.c.l.b16 %v180
      %v286 = vunpack.c.h.b16 %v180
      %v287 = vunpack.c.l.b16 %v181
      %v288 = vunpack.c.h.b16 %v181
      %v289 = vunpack.c.l.b16 %v182
      %v290 = vunpack.c.h.b16 %v182
      %v291 = vunpack.c.l.b16 %v183
      %v292 = vunpack.c.h.b16 %v183
      %v293 = vunpack.c.l.b16 %v184
      %v294 = vunpack.c.h.b16 %v184
      %v295 = vunpack.c.l.b16 %v185
      %v296 = vunpack.c.h.b16 %v185
      %v297 = vunpack.c.l.b16 %v186
      %v298 = vunpack.c.h.b16 %v186
      %v299 = vunpack.c.l.b16 %v187
      %v300 = vunpack.c.h.b16 %v187
      %v301 = vunpack.c.l.b16 %v188
      %v302 = vunpack.c.h.b16 %v188
      %v303 = vunpack.c.l.b16 %v189
      %v304 = vunpack.c.h.b16 %v189
      %v305 = vunpack.c.l.b16 %v190
      %v306 = vunpack.c.h.b16 %v190
      %v307 = vunpack.c.l.b16 %v191
      %v308 = vunpack.c.h.b16 %v191
      %v309 = vunpack.c.l.b16 %v192
      %v310 = vunpack.c.h.b16 %v192
      %v311 = vunpack.c.l.b16 %v193
      %v312 = vunpack.c.h.b16 %v193
      %v313 = vpack.c.b16 %v285, %v281
      %v314 = vpack.c.b16 %v286, %v282
      %v315 = vpack.c.b16 %v287, %v283
      %v316 = vpack.c.b16 %v288, %v284
      %v317 = vpack.c.b16 %v293, %v289
      %v318 = vpack.c.b16 %v294, %v290
      %v319 = vpack.c.b16 %v295, %v291
      %v320 = vpack.c.b16 %v296, %v292
      %v321 = vpack.c.b16 %v301, %v297
      %v322 = vpack.c.b16 %v302, %v298
      %v323 = vpack.c.b16 %v303, %v299
      %v324 = vpack.c.b16 %v304, %v300
      %v325 = vpack.c.b16 %v309, %v305
      %v326 = vpack.c.b16 %v310, %v306
      %v327 = vpack.c.b16 %v311, %v307
      %v328 = vpack.c.b16 %v312, %v308
      %v409 = vunpack.c.l.b16 %v194
      %v410 = vunpack.c.l.b16 %v195
      %v411 = vunpack.c.l.b16 %v196
      %v412 = vunpack.c.l.b16 %v197
      %v413 = vunpack.c.l.b16 %v198
      %v414 = vunpack.c.l.b16 %v199
      %v415 = vunpack.c.l.b16 %v200
      %v416 = vunpack.c.l.b16 %v201
      %v417 = vunpack.c.l.b16 %v202
      %v418 = vunpack.c.l.b16 %v203
      %v419 = vunpack.c.l.b16 %v204
      %v420 = vunpack.c.l.b16 %v205
      %v421 = vunpack.c.l.b16 %v206
      %v422 = vunpack.c.l.b16 %v207
      %v423 = vunpack.c.l.b16 %v208
      %v424 = vunpack.c.l.b16 %v209
      %v425 = vunpack.c.l.b16 %v210
      %v426 = vunpack.c.l.b16 %v211
      %v427 = vunpack.c.l.b16 %v212
      %v428 = vunpack.c.l.b16 %v213
      %v429 = vunpack.c.l.b16 %v214
      %v430 = vunpack.c.l.b16 %v215
      %v431 = vunpack.c.l.b16 %v216
      %v432 = vunpack.c.l.b16 %v217
      %v433 = vunpack.c.l.b16 %v218
      %v434 = vunpack.c.l.b16 %v219
      %v435 = vunpack.c.l.b16 %v220
      %v436 = vunpack.c.l.b16 %v221
      %v437 = vunpack.c.l.b16 %v222
      %v438 = vunpack.c.l.b16 %v223
      %v439 = vunpack.c.l.b16 %v224
      %v440 = vunpack.c.l.b16 %v225
      %v441 = vunpack.c.l.b16 %v226
      %v442 = vunpack.c.l.b16 %v227
      %v443 = vunpack.c.l.b16 %v228
      %v444 = vunpack.c.l.b16 %v229
      %v445 = vunpack.c.l.b16 %v230
      %v446 = vunpack.c.l.b16 %v231
      %v447 = vunpack.c.l.b16 %v232
      %v448 = vunpack.c.l.b16 %v233
      %v449 = vunpack.c.l.b16 %v234
      %v450 = vunpack.c.l.b16 %v235
      %v451 = vunpack.c.l.b16 %v236
      %v452 = vunpack.c.l.b16 %v237
      %v453 = vunpack.c.l.b16 %v238
      %v454 = vunpack.c.l.b16 %v239
      %v455 = vunpack.c.l.b16 %v240
      %v456 = vunpack.c.l.b16 %v241
      %v457 = vunpack.c.l.b16 %v242
      %v458 = vunpack.c.l.b16 %v243
      %v459 = vunpack.c.l.b16 %v244
      %v460 = vunpack.c.l.b16 %v245
      %v461 = vunpack.c.l.b16 %v246
      %v462 = vunpack.c.l.b16 %v247
      %v463 = vunpack.c.l.b16 %v248
      %v464 = vunpack.c.l.b16 %v249
      %v465 = vunpack.c.l.b16 %v250
      %v466 = vunpack.c.l.b16 %v251
      %v467 = vunpack.c.l.b16 %v252
      %v468 = vunpack.c.l.b16 %v253
      %v469 = vunpack.c.l.b16 %v254
      %v470 = vunpack.c.l.b16 %v255
      %v471 = vunpack.c.l.b16 %v256
      %v472 = vunpack.c.l.b16 %v257
      %v473 = vpack.c.b16 %v410, %v409
      %v474 = vpack.c.b16 %v412, %v411
      %v475 = vpack.c.b16 %v414, %v413
      %v476 = vpack.c.b16 %v416, %v415
      %v477 = vpack.c.b16 %v418, %v417
      %v478 = vpack.c.b16 %v420, %v419
      %v479 = vpack.c.b16 %v422, %v421
      %v480 = vpack.c.b16 %v424, %v423
      %v481 = vpack.c.b16 %v426, %v425
      %v482 = vpack.c.b16 %v428, %v427
      %v483 = vpack.c.b16 %v430, %v429
      %v484 = vpack.c.b16 %v432, %v431
      %v485 = vpack.c.b16 %v434, %v433
      %v486 = vpack.c.b16 %v436, %v435
      %v487 = vpack.c.b16 %v438, %v437
      %v488 = vpack.c.b16 %v440, %v439
      %v489 = vpack.c.b16 %v442, %v441
      %v490 = vpack.c.b16 %v444, %v443
      %v491 = vpack.c.b16 %v446, %v445
      %v492 = vpack.c.b16 %v448, %v447
      %v493 = vpack.c.b16 %v450, %v449
      %v494 = vpack.c.b16 %v452, %v451
      %v495 = vpack.c.b16 %v454, %v453
      %v496 = vpack.c.b16 %v456, %v455
      %v497 = vpack.c.b16 %v458, %v457
      %v498 = vpack.c.b16 %v460, %v459
      %v499 = vpack.c.b16 %v462, %v461
      %v500 = vpack.c.b16 %v464, %v463
      %v501 = vpack.c.b16 %v466, %v465
      %v502 = vpack.c.b16 %v468, %v467
      %v503 = vpack.c.b16 %v470, %v469
      %v504 = vpack.c.b16 %v472, %v471
      %537 = vmatprep.subr.bf16.mxu0 0
      %538 = vmatpush1.bf16.msra.mxu0 %v473
      %539 = vmatprep.subr.bf16.mxu0 0
      %540 = vmatpush1.bf16.msra.mxu0 %v474
      %541 = vmatprep.subr.bf16.mxu0 0
      %542 = vmatpush1.bf16.msra.mxu0 %v475
      %543 = vmatprep.subr.bf16.mxu0 0
      %544 = vmatpush1.bf16.msra.mxu0 %v476
      %545 = vmatprep.subr.bf16.mxu0 0
      %546 = vmatpush1.bf16.msra.mxu0 %v477
      %547 = vmatprep.subr.bf16.mxu0 0
      %548 = vmatpush1.bf16.msra.mxu0 %v478
      %549 = vmatprep.subr.bf16.mxu0 0
      %550 = vmatpush1.bf16.msra.mxu0 %v479
      %551 = vmatprep.subr.bf16.mxu0 0
      %552 = vmatpush1.bf16.msra.mxu0 %v480
      %553 = vmatprep.subr.bf16.mxu0 0
      %554 = vmatpush1.bf16.msra.mxu0 %v481
      %555 = vmatprep.subr.bf16.mxu0 0
      %556 = vmatpush1.bf16.msra.mxu0 %v482
      %557 = vmatprep.subr.bf16.mxu0 0
      %558 = vmatpush1.bf16.msra.mxu0 %v483
      %559 = vmatprep.subr.bf16.mxu0 0
      %560 = vmatpush1.bf16.msra.mxu0 %v484
      %561 = vmatprep.subr.bf16.mxu0 0
      %562 = vmatpush1.bf16.msra.mxu0 %v485
      %563 = vmatprep.subr.bf16.mxu0 0
      %564 = vmatpush1.bf16.msra.mxu0 %v486
      %565 = vmatprep.subr.bf16.mxu0 0
      %566 = vmatpush1.bf16.msra.mxu0 %v487
      %567 = vmatprep.subr.bf16.mxu0 0
      %568 = vmatpush1.bf16.msra.mxu0 %v488
      %569 = vmatprep.mubr.bf16.mxu0 %v314
      %570 = vmatmul.mubr.bf16.gmra.mrb[0].mxu0 %v313
      %v571 = vpop.f32.mrb[0].mxu0
      %v572 = vadd.f32 %v263, %v571
      %v573 = vpop.f32.mrb[0].mxu0
      %v574 = vpop.f32.mrb[0].mxu0
      %v575 = vadd.f32 %v263, %v574
      %v576 = vpop.f32.mrb[0].mxu0
      %577 = vmatprep.mubr.bf16.mxu0 %v318
      %578 = vmatmul.mubr.bf16.gmra.mrb[0].mxu0 %v317
      %v579 = vpop.f32.mrb[0].mxu0
      %v580 = vadd.f32 %v263, %v579
      %v581 = vpop.f32.mrb[0].mxu0
      %v582 = vpop.f32.mrb[0].mxu0
      %v583 = vadd.f32 %v263, %v582
      %v584 = vpop.f32.mrb[0].mxu0
      %585 = vmatprep.mubr.bf16.mxu0 %v322
      %586 = vmatmul.mubr.bf16.gmra.mrb[0].mxu0 %v321
      %v587 = vpop.f32.mrb[0].mxu0
      %v588 = vadd.f32 %v263, %v587
      %v589 = vpop.f32.mrb[0].mxu0
      %v590 = vpop.f32.mrb[0].mxu0
      %v591 = vadd.f32 %v263, %v590
      %v592 = vpop.f32.mrb[0].mxu0
      %593 = vmatprep.mubr.bf16.mxu0 %v326
      %594 = vmatmul.mubr.bf16.gmra.mrb[0].mxu0 %v325
      %v595 = vpop.f32.mrb[0].mxu0
      %v596 = vadd.f32 %v263, %v595
      %v597 = vpop.f32.mrb[0].mxu0
      %v598 = vpop.f32.mrb[0].mxu0
      %v599 = vadd.f32 %v263, %v598
      %v600 = vpop.f32.mrb[0].mxu0
      %601 = vdwg.mxu0
      %602 = vmatprep.subr.bf16.mxu0 0
      %603 = vmatpush1.bf16.msra.mxu0 %v489
      %604 = vmatprep.subr.bf16.mxu0 0
      %605 = vmatpush1.bf16.msra.mxu0 %v490
      %606 = vmatprep.subr.bf16.mxu0 0
      %607 = vmatpush1.bf16.msra.mxu0 %v491
      %608 = vmatprep.subr.bf16.mxu0 0
      %609 = vmatpush1.bf16.msra.mxu0 %v492
      %610 = vmatprep.subr.bf16.mxu0 0
      %611 = vmatpush1.bf16.msra.mxu0 %v493
      %612 = vmatprep.subr.bf16.mxu0 0
      %613 = vmatpush1.bf16.msra.mxu0 %v494
      %614 = vmatprep.subr.bf16.mxu0 0
      %615 = vmatpush1.bf16.msra.mxu0 %v495
      %616 = vmatprep.subr.bf16.mxu0 0
      %617 = vmatpush1.bf16.msra.mxu0 %v496
      %618 = vmatprep.subr.bf16.mxu0 0
      %619 = vmatpush1.bf16.msra.mxu0 %v497
      %620 = vmatprep.subr.bf16.mxu0 0
      %621 = vmatpush1.bf16.msra.mxu0 %v498
      %622 = vmatprep.subr.bf16.mxu0 0
      %623 = vmatpush1.bf16.msra.mxu0 %v499
      %624 = vmatprep.subr.bf16.mxu0 0
      %625 = vmatpush1.bf16.msra.mxu0 %v500
      %626 = vmatprep.subr.bf16.mxu0 0
      %627 = vmatpush1.bf16.msra.mxu0 %v501
      %628 = vmatprep.subr.bf16.mxu0 0
      %629 = vmatpush1.bf16.msra.mxu0 %v502
      %630 = vmatprep.subr.bf16.mxu0 0
      %631 = vmatpush1.bf16.msra.mxu0 %v503
      %632 = vmatprep.subr.bf16.mxu0 0
      %633 = vmatpush1.bf16.msra.mxu0 %v504
      %634 = vmatprep.mubr.bf16.mxu0 %v316
      %635 = vmatmul.mubr.bf16.gmra.mrb[0].mxu0 %v315
      %v636 = vpop.f32.mrb[0].mxu0
      %v637 = vadd.f32 %v572, %v636
      %v638 = vpop.f32.mrb[0].mxu0
      %v639 = vpop.f32.mrb[0].mxu0
      %v640 = vadd.f32 %v575, %v639
      %v641 = vpop.f32.mrb[0].mxu0
      %642 = vmatprep.mubr.bf16.mxu0 %v320
      %643 = vmatmul.mubr.bf16.gmra.mrb[0].mxu0 %v319
      %v644 = vpop.f32.mrb[0].mxu0
      %v645 = vadd.f32 %v580, %v644
      %v646 = vpop.f32.mrb[0].mxu0
      %v647 = vpop.f32.mrb[0].mxu0
      %v648 = vadd.f32 %v583, %v647
      %v649 = vpop.f32.mrb[0].mxu0
      %650 = vmatprep.mubr.bf16.mxu0 %v324
      %651 = vmatmul.mubr.bf16.gmra.mrb[0].mxu0 %v323
      %v652 = vpop.f32.mrb[0].mxu0
      %v653 = vadd.f32 %v588, %v652
      %v654 = vpop.f32.mrb[0].mxu0
      %v655 = vpop.f32.mrb[0].mxu0
      %v656 = vadd.f32 %v591, %v655
      %v657 = vpop.f32.mrb[0].mxu0
      %658 = vmatprep.mubr.bf16.mxu0 %v328
      %659 = vmatmul.mubr.bf16.gmra.mrb[0].mxu0 %v327
      %v660 = vpop.f32.mrb[0].mxu0
      %v661 = vadd.f32 %v596, %v660
      %v662 = vpop.f32.mrb[0].mxu0
      %v663 = vpop.f32.mrb[0].mxu0
      %v664 = vadd.f32 %v599, %v663
      %v665 = vpop.f32.mrb[0].mxu0
      %666 = vdwg.mxu0
      %v667 = vmax.f32 %v637, 0.0
      %v668 = vmax.f32 %v640, 0.0
      %v669 = vmax.f32 %v645, 0.0
      %v670 = vmax.f32 %v648, 0.0
      %v671 = vmax.f32 %v653, 0.0
      %v672 = vmax.f32 %v656, 0.0
      %v673 = vmax.f32 %v661, 0.0
      %v674 = vmax.f32 %v664, 0.0
      %v675 = vpack.c.bf16 %v668, %v667
      %v676 = vpack.c.bf16 %v670, %v669
      %v677 = vpack.c.bf16 %v672, %v671
      %v678 = vpack.c.bf16 %v674, %v673
      %v683 = vunpack.c.l.b16 %v675
      %v684 = vunpack.c.h.b16 %v675
      %v685 = vunpack.c.l.b16 %v676
      %v686 = vunpack.c.h.b16 %v676
      %v687 = vunpack.c.l.b16 %v677
      %v688 = vunpack.c.h.b16 %v677
      %v689 = vunpack.c.l.b16 %v678
      %v690 = vunpack.c.h.b16 %v678
      %v691 = vpack.c.b16 %v683, %v683
      %v692 = vpack.c.b16 %v684, %v684
      %v693 = vpack.c.b16 %v685, %v685
      %v694 = vpack.c.b16 %v686, %v686
      %v695 = vpack.c.b16 %v687, %v687
      %v696 = vpack.c.b16 %v688, %v688
      %v697 = vpack.c.b16 %v689, %v689
      %v698 = vpack.c.b16 %v690, %v690
      %vm707 = vcmask 519168
      %708 = vst.msk [vmem:[%s175] sm:$0xf] %vm707, %v691
      %709 = vst.msk [vmem:[%s175 + $0x4] sm:$0xf] %vm707, %v692
      %710 = vst.msk [vmem:[%s175 + $0x8] sm:$0xf] %vm707, %v693
      %711 = vst.msk [vmem:[%s175 + $0xc] sm:$0xf] %vm707, %v694
      %712 = vst.msk [vmem:[%s175 + $0x10] sm:$0xf] %vm707, %v695
      %713 = vst.msk [vmem:[%s175 + $0x14] sm:$0xf] %vm707, %v696
      %714 = vst.msk [vmem:[%s175 + $0x18] sm:$0xf] %vm707, %v697
      %715 = vst.msk [vmem:[%s175 + $0x1c] sm:$0xf] %vm707, %v698
      %s716 = smul.u32 8, %s14
      %p717 = scmp.lt.s32.totalorder %s716, 15
      %s718 = scalar_select %p717, %s716, 15
      %s719 = smul.addr %s718, 4
      %s720 = scalar_lea.vmem %s3, %s719
      // Predicated region
      $region33: #{forward.6} parent=31 // pred_check
        %p721 = pneg %p100
      $region34: #{forward.6} parent=31 // pred_check_branch
        %723 = sbr.rel (%p721) target = $region36
      $region35: #{forward.6} parent=31 // pred_region
        %s724 = smul.u32 8, %s14
      $region36: #{forward.6} parent=31 // pred_fallthru
        _
    $region32: #{forward.6} parent=5 // pred_fallthru
      _
    %p725 = scmp.le.s32.totalorder 2, %s9
    // Predicated region
    $region37: #{forward.6} parent=5 // pred_check
      %p726 = pneg %p725
    $region38: #{forward.6} parent=5 // pred_check_branch
      %728 = sbr.rel (%p726) target = $region40
    $region39: #{forward.6} parent=5 // pred_region
      %s729 = ssub.s32 %s9, 2
      // Predicated region
      $region41: #{forward.6} parent=39 // pred_check
        %p730 = pneg %p106
      $region42: #{forward.6} parent=39 // pred_check_branch
        %732 = sbr.rel (%p730) target = $region44
      $region43: #{forward.6} parent=39 // pred_region
        %s733 = smul.u32 8, %s15
        %p734 = scmp.lt.s32.totalorder %s733, 15
        %s735 = scalar_select %p734, %s733, 15
        %s736 = smul.addr %s735, 4
        %s737 = scalar_lea.vmem %s3, %s736
      $region44: #{forward.6} parent=39 // pred_fallthru
        _
    $region40: #{forward.6} parent=5 // pred_fallthru
      _
  $region6: #{forward.6} parent=0 // loop_footer
    %s13 = sadd.s32 1, %s9
  $region7: #{forward.6} parent=0 // loop_footer_branch
    %8 = sbr.rel target = $region3
  $region8: #{forward.6} parent=0 // loop_exit
    _

// kernel: forward.8
$region0: #{forward.8}
  #allocation0 [shape = 'u32[]', space=smem, size = 0x4, offset = 0x4, fixed_abs, tag = 'smem constant byte address 0x4 - core index']
  #allocation1 [shape = 'u32[144,128]{1,0:T(1,128)}', space=vmem, size = 0x12000, scoped, tag = 'internal scratch']
  %s0 = inlined_call_operand.vmem [shape: bf16[128,576], index: 0, kind: input, shape index: {}]
  %s1 = inlined_call_operand.vmem [shape: bf16[576,128], index: 1, kind: input, shape index: {}]
  %s2 = inlined_call_operand.vmem [shape: f32[1,128], index: 2, kind: input, shape index: {}]
  %s3 = inlined_call_operand.vmem [shape: bf16[128,128], index: 3, kind: output, shape index: {}]
  %s4 = sld [smem:[#allocation0]]
  $region45: #{forward.8} parent=0
    _
  %s6 = ssub.s32 1, %s4
  %s7 = scalar_select 0, %s6, %s4
  loop: start=0, step=1, limit=4
  $region2: #{forward.8} parent=0 // loop_pre_header
    _
  $region3: #{forward.8} parent=0 // loop_header
    %s9 = sphi 0, %s13
    %p10 = scmp.ge.s32.totalorder %s9, 4
    %s19 = sphi 0, %s21
    %s22 = sphi 0, %s19
    %s23 = sphi 0, %s22
    %s39 = sphi 0, %s23
    %s43 = sphi 0, %s43
    %s45 = sphi 0, %s43
    %s46 = sphi 0, %s45
    %s60 = sphi 0, %s46
    %s64 = sphi 0, %s64
    %s66 = sphi 0, %s64
    %s67 = sphi 0, %s66
    %s81 = sphi 0, %s67
    %s87 = sphi 0, %s89
    %s90 = sphi 0, %s87
    %s91 = sphi 0, %s90
    %s107 = sphi 0, %s91
  $region4: #{forward.8} parent=0 // loop_header_branch
    %12 = sbr.rel (%p10) target = $region8
  $region5: #{forward.8} parent=0 // loop_body
    %s14 = ssub.s32 %s9, 1
    %s15 = ssub.s32 %s9, 2
    %s16 = sadd.s32 %s9, 1
    %s17 = ssub.s32 %s9, %s16
    %p18 = scmp.eq.s32.totalorder %s17, 0
    %s20 = sadd.s32 %s19, 1
    %s21 = scalar_select %p18, %s19, %s20
    %p24 = pneg %p18
    %p25 = scmp.eq.s32.totalorder %s9, 1
    %p26 = por %p24, %p25
    %p27 = scmp.ne.s32.totalorder %s19, %s22
    %p28 = scmp.eq.s32.totalorder %s9, 0
    %p29 = por %p27, %p28
    %p30 = scmp.ne.s32.totalorder %s19, %s22
    %p31 = scmp.eq.s32.totalorder %s14, 1
    %p32 = por %p30, %p31
    %p33 = scmp.ne.s32.totalorder %s22, %s23
    %p34 = scmp.eq.s32.totalorder %s14, 0
    %p35 = por %p33, %p34
    %p36 = scmp.ne.s32.totalorder %s22, %s23
    %p37 = scmp.eq.s32.totalorder %s15, 1
    %p38 = por %p36, %p37
    %p40 = scmp.ne.s32.totalorder %s23, %s39
    %p41 = scmp.eq.s32.totalorder %s15, 0
    %p42 = por %p40, %p41
    %s44 = sadd.s32 %s43, 1
    %p47 = scmp.eq.s32.totalorder %s9, 1
    %p48 = scmp.ne.s32.totalorder %s43, %s45
    %p49 = scmp.eq.s32.totalorder %s9, 0
    %p50 = por %p48, %p49
    %p51 = scmp.ne.s32.totalorder %s43, %s45
    %p52 = scmp.eq.s32.totalorder %s14, 1
    %p53 = por %p51, %p52
    %p54 = scmp.ne.s32.totalorder %s45, %s46
    %p55 = scmp.eq.s32.totalorder %s14, 0
    %p56 = por %p54, %p55
    %p57 = scmp.ne.s32.totalorder %s45, %s46
    %p58 = scmp.eq.s32.totalorder %s15, 1
    %p59 = por %p57, %p58
    %p61 = scmp.ne.s32.totalorder %s46, %s60
    %p62 = scmp.eq.s32.totalorder %s15, 0
    %p63 = por %p61, %p62
    %s65 = sadd.s32 %s64, 1
    %p68 = scmp.eq.s32.totalorder %s9, 1
    %p69 = scmp.ne.s32.totalorder %s64, %s66
    %p70 = scmp.eq.s32.totalorder %s9, 0
    %p71 = por %p69, %p70
    %p72 = scmp.ne.s32.totalorder %s64, %s66
    %p73 = scmp.eq.s32.totalorder %s14, 1
    %p74 = por %p72, %p73
    %p75 = scmp.ne.s32.totalorder %s66, %s67
    %p76 = scmp.eq.s32.totalorder %s14, 0
    %p77 = por %p75, %p76
    %p78 = scmp.ne.s32.totalorder %s66, %s67
    %p79 = scmp.eq.s32.totalorder %s15, 1
    %p80 = por %p78, %p79
    %p82 = scmp.ne.s32.totalorder %s67, %s81
    %p83 = scmp.eq.s32.totalorder %s15, 0
    %p84 = por %p82, %p83
    %s85 = ssub.s32 %s9, %s16
    %p86 = scmp.eq.s32.totalorder %s85, 0
    %s88 = sadd.s32 %s87, 1
    %s89 = scalar_select %p86, %s87, %s88
    %p92 = pneg %p86
    %p93 = scmp.eq.s32.totalorder %s9, 1
    %p94 = por %p92, %p93
    %p95 = scmp.ne.s32.totalorder %s87, %s90
    %p96 = scmp.eq.s32.totalorder %s9, 0
    %p97 = por %p95, %p96
    %p98 = scmp.ne.s32.totalorder %s87, %s90
    %p99 = scmp.eq.s32.totalorder %s14, 1
    %p100 = por %p98, %p99
    %p101 = scmp.ne.s32.totalorder %s90, %s91
    %p102 = scmp.eq.s32.totalorder %s14, 0
    %p103 = por %p101, %p102
    %p104 = scmp.ne.s32.totalorder %s90, %s91
    %p105 = scmp.eq.s32.totalorder %s15, 1
    %p106 = por %p104, %p105
    %p108 = scmp.ne.s32.totalorder %s91, %s107
    %p109 = scmp.eq.s32.totalorder %s15, 0
    %p110 = por %p108, %p109
    %p111 = scmp.le.s32.totalorder 1, %s9
    %p112 = scmp.lt.s32.totalorder %s9, 3
    %p113 = pnand %p111, %p112
    %p114 = pneg %p113
    // Predicated region
    $region9: #{forward.8} parent=5 // pred_check
      _
    $region10: #{forward.8} parent=5 // pred_check_branch
      %116 = sbr.rel (%p113) target = $region12
    $region11: #{forward.8} parent=5 // pred_region
      %s117 = ssub.s32 %s9, 1
      // Predicated region
      $region13: #{forward.8} parent=11 // pred_check
        %p118 = pneg %p56
      $region14: #{forward.8} parent=11 // pred_check_branch
        %120 = sbr.rel (%p118) target = $region16
      $region15: #{forward.8} parent=11 // pred_region
        _
      $region16: #{forward.8} parent=11 // pred_fallthru
        _
      // Predicated region
      $region17: #{forward.8} parent=11 // pred_check
        %p121 = pneg %p77
      $region18: #{forward.8} parent=11 // pred_check_branch
        %123 = sbr.rel (%p121) target = $region20
      $region19: #{forward.8} parent=11 // pred_region
        _
      $region20: #{forward.8} parent=11 // pred_fallthru
        _
    $region12: #{forward.8} parent=5 // pred_fallthru
      _
    %p124 = scmp.lt.s32.totalorder %s9, 2
    // Predicated region
    $region21: #{forward.8} parent=5 // pred_check
      %p125 = pneg %p124
    $region22: #{forward.8} parent=5 // pred_check_branch
      %127 = sbr.rel (%p125) target = $region24
    $region23: #{forward.8} parent=5 // pred_region
      // Predicated region
      $region25: #{forward.8} parent=23 // pred_check
        %p128 = pneg %p29
      $region26: #{forward.8} parent=23 // pred_check_branch
        %130 = sbr.rel (%p128) target = $region28
      $region27: #{forward.8} parent=23 // pred_region
        %s131 = smul.u32 8, %s9
        %p132 = scmp.lt.s32.totalorder %s131, 15
        %s133 = scalar_select %p132, %s131, 15
        %s134 = smul.addr %s133, 5
        %s135 = smul.addr %s134, 4
        %s136 = scalar_lea.vmem %s0, %s135
        %s137 = smul.u32 8, %s9
      $region28: #{forward.8} parent=23 // pred_fallthru
        _
    $region24: #{forward.8} parent=5 // pred_fallthru
      _
    %p138 = scmp.le.s32.totalorder 1, %s9
    %p139 = scmp.lt.s32.totalorder %s9, 3
    %p140 = pnand %p138, %p139
    %p141 = pneg %p140
    // Predicated region
    $region29: #{forward.8} parent=5 // pred_check
      _
    $region30: #{forward.8} parent=5 // pred_check_branch
      %143 = sbr.rel (%p140) target = $region32
    $region31: #{forward.8} parent=5 // pred_region
      %s144 = ssub.s32 %s9, 1
      %s145 = smul.u32 8, %s14
      %p146 = scmp.lt.s32.totalorder %s145, 15
      %s147 = scalar_select %p146, %s145, 15
      %s148 = smul.addr %s147, 5
      %s149 = smul.addr %s148, 4
      %s150 = scalar_lea.vmem %s0, %s149
      %p151 = pneg %p35
      %p152 = pneg %p32
      %p153 = pneg %p56
      %p154 = pneg %p53
      %p155 = pneg %p77
      %p156 = pneg %p74
      %p157 = pneg %p103
      %p158 = pneg %p100
      %s159 = smul.u32 8, %s14
      %p160 = scmp.lt.s32.totalorder %s159, 15
      %s161 = scalar_select %p160, %s159, 15
      %s162 = smul.addr %s161, 4
      %s163 = scalar_lea.vmem %s3, %s162
      %s164 = smul.u32 8, %s14
      %p165 = scmp.lt.s32.totalorder %s164, 15
      %s166 = scalar_select %p165, %s164, 15
      %s167 = smul.addr %s166, 5
      %s168 = smul.addr %s167, 4
      %s169 = scalar_lea.vmem %s0, %s168
      %s170 = smul.u32 8, %s14
      %s171 = smul.u32 8, %s14
      %p172 = scmp.lt.s32.totalorder %s171, 15
      %s173 = scalar_select %p172, %s171, 15
      %s174 = smul.addr %s173, 4
      %s175 = scalar_lea.vmem %s3, %s174
      %s176 = smul.u32 8, %s14
      %v178 = vld [vmem:[%s169] sm:$0xff]
      %v179 = vld [vmem:[%s169 + $0x8] sm:$0xff]
      %v180 = vld [vmem:[%s169 + $0x10] sm:$0xf]
      %v181 = vld [vmem:[%s169 + $0x14] sm:$0xff]
      %v182 = vld [vmem:[%s169 + $0x1c] sm:$0xff]
      %v183 = vld [vmem:[%s169 + $0x24] sm:$0xf]
      %v184 = vld [vmem:[%s169 + $0x28] sm:$0xff]
      %v185 = vld [vmem:[%s169 + $0x30] sm:$0xff]
      %v186 = vld [vmem:[%s169 + $0x38] sm:$0xf]
      %v187 = vld [vmem:[%s169 + $0x3c] sm:$0xff]
      %v188 = vld [vmem:[%s169 + $0x44] sm:$0xff]
      %v189 = vld [vmem:[%s169 + $0x4c] sm:$0xf]
      %v190 = vld [vmem:[%s169 + $0x50] sm:$0xff]
      %v191 = vld [vmem:[%s169 + $0x58] sm:$0xff]
      %v192 = vld [vmem:[%s169 + $0x60] sm:$0xf]
      %v193 = vld [vmem:[%s169 + $0x64] sm:$0xff]
      %v194 = vld [vmem:[%s169 + $0x6c] sm:$0xff]
      %v195 = vld [vmem:[%s169 + $0x74] sm:$0xf]
      %v196 = vld [vmem:[%s169 + $0x78] sm:$0xff]
      %v197 = vld [vmem:[%s169 + $0x80] sm:$0xff]
      %v198 = vld [vmem:[%s169 + $0x88] sm:$0xf]
      %v199 = vld [vmem:[%s169 + $0x8c] sm:$0xff]
      %v200 = vld [vmem:[%s169 + $0x94] sm:$0xff]
      %v201 = vld [vmem:[%s169 + $0x9c] sm:$0xf]
      %v202 = vld [vmem:[%s1] sm:$0xf]
      %v203 = vld [vmem:[%s1 + $0x4] sm:$0xf]
      %v204 = vld [vmem:[%s1 + $0x8] sm:$0xf]
      %v205 = vld [vmem:[%s1 + $0xc] sm:$0xf]
      %v206 = vld [vmem:[%s1 + $0x10] sm:$0xf]
      %v207 = vld [vmem:[%s1 + $0x14] sm:$0xf]
      %v208 = vld [vmem:[%s1 + $0x18] sm:$0xf]
      %v209 = vld [vmem:[%s1 + $0x1c] sm:$0xf]
      %v210 = vld [vmem:[%s1 + $0x20] sm:$0xf]
      %v211 = vld [vmem:[%s1 + $0x24] sm:$0xf]
      %v212 = vld [vmem:[%s1 + $0x28] sm:$0xf]
      %v213 = vld [vmem:[%s1 + $0x2c] sm:$0xf]
      %v214 = vld [vmem:[%s1 + $0x30] sm:$0xf]
      %v215 = vld [vmem:[%s1 + $0x34] sm:$0xf]
      %v216 = vld [vmem:[%s1 + $0x38] sm:$0xf]
      %v217 = vld [vmem:[%s1 + $0x3c] sm:$0xf]
      %v218 = vld [vmem:[%s1 + $0x40] sm:$0xf]
      %v219 = vld [vmem:[%s1 + $0x44] sm:$0xf]
      %v220 = vld [vmem:[%s1 + $0x48] sm:$0xf]
      %v221 = vld [vmem:[%s1 + $0x4c] sm:$0xf]
      %v222 = vld [vmem:[%s1 + $0x50] sm:$0xf]
      %v223 = vld [vmem:[%s1 + $0x54] sm:$0xf]
      %v224 = vld [vmem:[%s1 + $0x58] sm:$0xf]
      %v225 = vld [vmem:[%s1 + $0x5c] sm:$0xf]
      %v226 = vld [vmem:[%s1 + $0x60] sm:$0xf]
      %v227 = vld [vmem:[%s1 + $0x64] sm:$0xf]
      %v228 = vld [vmem:[%s1 + $0x68] sm:$0xf]
      %v229 = vld [vmem:[%s1 + $0x6c] sm:$0xf]
      %v230 = vld [vmem:[%s1 + $0x70] sm:$0xf]
      %v231 = vld [vmem:[%s1 + $0x74] sm:$0xf]
      %v232 = vld [vmem:[%s1 + $0x78] sm:$0xf]
      %v233 = vld [vmem:[%s1 + $0x7c] sm:$0xf]
      %v234 = vld [vmem:[%s1 + $0x80] sm:$0xf]
      %v235 = vld [vmem:[%s1 + $0x84] sm:$0xf]
      %v236 = vld [vmem:[%s1 + $0x88] sm:$0xf]
      %v237 = vld [vmem:[%s1 + $0x8c] sm:$0xf]
      %v238 = vld [vmem:[%s1 + $0x90] sm:$0xf]
      %v239 = vld [vmem:[%s1 + $0x94] sm:$0xf]
      %v240 = vld [vmem:[%s1 + $0x98] sm:$0xf]
      %v241 = vld [vmem:[%s1 + $0x9c] sm:$0xf]
      %v242 = vld [vmem:[%s1 + $0xa0] sm:$0xf]
      %v243 = vld [vmem:[%s1 + $0xa4] sm:$0xf]
      %v244 = vld [vmem:[%s1 + $0xa8] sm:$0xf]
      %v245 = vld [vmem:[%s1 + $0xac] sm:$0xf]
      %v246 = vld [vmem:[%s1 + $0xb0] sm:$0xf]
      %v247 = vld [vmem:[%s1 + $0xb4] sm:$0xf]
      %v248 = vld [vmem:[%s1 + $0xb8] sm:$0xf]
      %v249 = vld [vmem:[%s1 + $0xbc] sm:$0xf]
      %v250 = vld [vmem:[%s1 + $0xc0] sm:$0xf]
      %v251 = vld [vmem:[%s1 + $0xc4] sm:$0xf]
      %v252 = vld [vmem:[%s1 + $0xc8] sm:$0xf]
      %v253 = vld [vmem:[%s1 + $0xcc] sm:$0xf]
      %v254 = vld [vmem:[%s1 + $0xd0] sm:$0xf]
      %v255 = vld [vmem:[%s1 + $0xd4] sm:$0xf]
      %v256 = vld [vmem:[%s1 + $0xd8] sm:$0xf]
      %v257 = vld [vmem:[%s1 + $0xdc] sm:$0xf]
      %v258 = vld [vmem:[%s1 + $0xe0] sm:$0xf]
      %v259 = vld [vmem:[%s1 + $0xe4] sm:$0xf]
      %v260 = vld [vmem:[%s1 + $0xe8] sm:$0xf]
      %v261 = vld [vmem:[%s1 + $0xec] sm:$0xf]
      %v262 = vld [vmem:[%s1 + $0xf0] sm:$0xf]
      %v263 = vld [vmem:[%s1 + $0xf4] sm:$0xf]
      %v264 = vld [vmem:[%s1 + $0xf8] sm:$0xf]
      %v265 = vld [vmem:[%s1 + $0xfc] sm:$0xf]
      %v266 = vld [vmem:[%s1 + $0x100] sm:$0xf]
      %v267 = vld [vmem:[%s1 + $0x104] sm:$0xf]
      %v268 = vld [vmem:[%s1 + $0x108] sm:$0xf]
      %v269 = vld [vmem:[%s1 + $0x10c] sm:$0xf]
      %v270 = vld [vmem:[%s1 + $0x110] sm:$0xf]
      %v271 = vld [vmem:[%s1 + $0x114] sm:$0xf]
      %v272 = vld [vmem:[%s1 + $0x118] sm:$0xf]
      %v273 = vld [vmem:[%s1 + $0x11c] sm:$0xf]
      %v274 = vld [vmem:[%s2] sm:$0x1]
      %v276 = vlaneseq
      %v277 = vshrl.u32 %v276, 7
      %v278 = vsub.s32 0, %v277
      %v279 = vrot.slane %v274, %v278
      %v305 = vunpack.c.l.b16 %v178
      %v306 = vunpack.c.h.b16 %v178
      %v307 = vunpack.c.l.b16 %v179
      %v308 = vunpack.c.h.b16 %v179
      %v309 = vunpack.c.l.b16 %v180
      %v310 = vunpack.c.l.b16 %v181
      %v311 = vunpack.c.h.b16 %v181
      %v312 = vunpack.c.l.b16 %v182
      %v313 = vunpack.c.h.b16 %v182
      %v314 = vunpack.c.l.b16 %v183
      %v315 = vunpack.c.l.b16 %v184
      %v316 = vunpack.c.h.b16 %v184
      %v317 = vunpack.c.l.b16 %v185
      %v318 = vunpack.c.h.b16 %v185
      %v319 = vunpack.c.l.b16 %v186
      %v320 = vunpack.c.l.b16 %v187
      %v321 = vunpack.c.h.b16 %v187
      %v322 = vunpack.c.l.b16 %v188
      %v323 = vunpack.c.h.b16 %v188
      %v324 = vunpack.c.l.b16 %v189
      %v325 = vunpack.c.l.b16 %v190
      %v326 = vunpack.c.h.b16 %v190
      %v327 = vunpack.c.l.b16 %v191
      %v328 = vunpack.c.h.b16 %v191
      %v329 = vunpack.c.l.b16 %v192
      %v330 = vunpack.c.l.b16 %v193
      %v331 = vunpack.c.h.b16 %v193
      %v332 = vunpack.c.l.b16 %v194
      %v333 = vunpack.c.h.b16 %v194
      %v334 = vunpack.c.l.b16 %v195
      %v335 = vunpack.c.l.b16 %v196
      %v336 = vunpack.c.h.b16 %v196
      %v337 = vunpack.c.l.b16 %v197
      %v338 = vunpack.c.h.b16 %v197
      %v339 = vunpack.c.l.b16 %v198
      %v340 = vunpack.c.l.b16 %v199
      %v341 = vunpack.c.h.b16 %v199
      %v342 = vunpack.c.l.b16 %v200
      %v343 = vunpack.c.h.b16 %v200
      %v344 = vunpack.c.l.b16 %v201
      %v345 = vpack.c.b16 %v310, %v305
      %v346 = vpack.c.b16 %v311, %v306
      %v347 = vpack.c.b16 %v312, %v307
      %v348 = vpack.c.b16 %v313, %v308
      %v349 = vpack.c.b16 %v314, %v309
      %v350 = vpack.c.b16 %v320, %v315
      %v351 = vpack.c.b16 %v321, %v316
      %v352 = vpack.c.b16 %v322, %v317
      %v353 = vpack.c.b16 %v323, %v318
      %v354 = vpack.c.b16 %v324, %v319
      %v355 = vpack.c.b16 %v330, %v325
      %v356 = vpack.c.b16 %v331, %v326
      %v357 = vpack.c.b16 %v332, %v327
      %v358 = vpack.c.b16 %v333, %v328
      %v359 = vpack.c.b16 %v334, %v329
      %v360 = vpack.c.b16 %v340, %v335
      %v361 = vpack.c.b16 %v341, %v336
      %v362 = vpack.c.b16 %v342, %v337
      %v363 = vpack.c.b16 %v343, %v338
      %v364 = vpack.c.b16 %v344, %v339
      %v453 = vunpack.c.l.b16 %v202
      %v454 = vunpack.c.l.b16 %v203
      %v455 = vunpack.c.l.b16 %v204
      %v456 = vunpack.c.l.b16 %v205
      %v457 = vunpack.c.l.b16 %v206
      %v458 = vunpack.c.l.b16 %v207
      %v459 = vunpack.c.l.b16 %v208
      %v460 = vunpack.c.l.b16 %v209
      %v461 = vunpack.c.l.b16 %v210
      %v462 = vunpack.c.l.b16 %v211
      %v463 = vunpack.c.l.b16 %v212
      %v464 = vunpack.c.l.b16 %v213
      %v465 = vunpack.c.l.b16 %v214
      %v466 = vunpack.c.l.b16 %v215
      %v467 = vunpack.c.l.b16 %v216
      %v468 = vunpack.c.l.b16 %v217
      %v469 = vunpack.c.l.b16 %v218
      %v470 = vunpack.c.l.b16 %v219
      %v471 = vunpack.c.l.b16 %v220
      %v472 = vunpack.c.l.b16 %v221
      %v473 = vunpack.c.l.b16 %v222
      %v474 = vunpack.c.l.b16 %v223
      %v475 = vunpack.c.l.b16 %v224
      %v476 = vunpack.c.l.b16 %v225
      %v477 = vunpack.c.l.b16 %v226
      %v478 = vunpack.c.l.b16 %v227
      %v479 = vunpack.c.l.b16 %v228
      %v480 = vunpack.c.l.b16 %v229
      %v481 = vunpack.c.l.b16 %v230
      %v482 = vunpack.c.l.b16 %v231
      %v483 = vunpack.c.l.b16 %v232
      %v484 = vunpack.c.l.b16 %v233
      %v485 = vunpack.c.l.b16 %v234
      %v486 = vunpack.c.l.b16 %v235
      %v487 = vunpack.c.l.b16 %v236
      %v488 = vunpack.c.l.b16 %v237
      %v489 = vunpack.c.l.b16 %v238
      %v490 = vunpack.c.l.b16 %v239
      %v491 = vunpack.c.l.b16 %v240
      %v492 = vunpack.c.l.b16 %v241
      %v493 = vunpack.c.l.b16 %v242
      %v494 = vunpack.c.l.b16 %v243
      %v495 = vunpack.c.l.b16 %v244
      %v496 = vunpack.c.l.b16 %v245
      %v497 = vunpack.c.l.b16 %v246
      %v498 = vunpack.c.l.b16 %v247
      %v499 = vunpack.c.l.b16 %v248
      %v500 = vunpack.c.l.b16 %v249
      %v501 = vunpack.c.l.b16 %v250
      %v502 = vunpack.c.l.b16 %v251
      %v503 = vunpack.c.l.b16 %v252
      %v504 = vunpack.c.l.b16 %v253
      %v505 = vunpack.c.l.b16 %v254
      %v506 = vunpack.c.l.b16 %v255
      %v507 = vunpack.c.l.b16 %v256
      %v508 = vunpack.c.l.b16 %v257
      %v509 = vunpack.c.l.b16 %v258
      %v510 = vunpack.c.l.b16 %v259
      %v511 = vunpack.c.l.b16 %v260
      %v512 = vunpack.c.l.b16 %v261
      %v513 = vunpack.c.l.b16 %v262
      %v514 = vunpack.c.l.b16 %v263
      %v515 = vunpack.c.l.b16 %v264
      %v516 = vunpack.c.l.b16 %v265
      %v517 = vunpack.c.l.b16 %v266
      %v518 = vunpack.c.l.b16 %v267
      %v519 = vunpack.c.l.b16 %v268
      %v520 = vunpack.c.l.b16 %v269
      %v521 = vunpack.c.l.b16 %v270
      %v522 = vunpack.c.l.b16 %v271
      %v523 = vunpack.c.l.b16 %v272
      %v524 = vunpack.c.l.b16 %v273
      %v525 = vpack.c.b16 %v454, %v453
      %v526 = vpack.c.b16 %v456, %v455
      %v527 = vpack.c.b16 %v458, %v457
      %v528 = vpack.c.b16 %v460, %v459
      %v529 = vpack.c.b16 %v462, %v461
      %v530 = vpack.c.b16 %v464, %v463
      %v531 = vpack.c.b16 %v466, %v465
      %v532 = vpack.c.b16 %v468, %v467
      %v533 = vpack.c.b16 %v470, %v469
      %v534 = vpack.c.b16 %v472, %v471
      %v535 = vpack.c.b16 %v474, %v473
      %v536 = vpack.c.b16 %v476, %v475
      %v537 = vpack.c.b16 %v478, %v477
      %v538 = vpack.c.b16 %v480, %v479
      %v539 = vpack.c.b16 %v482, %v481
      %v540 = vpack.c.b16 %v484, %v483
      %v541 = vpack.c.b16 %v486, %v485
      %v542 = vpack.c.b16 %v488, %v487
      %v543 = vpack.c.b16 %v490, %v489
      %v544 = vpack.c.b16 %v492, %v491
      %v545 = vpack.c.b16 %v494, %v493
      %v546 = vpack.c.b16 %v496, %v495
      %v547 = vpack.c.b16 %v498, %v497
      %v548 = vpack.c.b16 %v500, %v499
      %v549 = vpack.c.b16 %v502, %v501
      %v550 = vpack.c.b16 %v504, %v503
      %v551 = vpack.c.b16 %v506, %v505
      %v552 = vpack.c.b16 %v508, %v507
      %v553 = vpack.c.b16 %v510, %v509
      %v554 = vpack.c.b16 %v512, %v511
      %v555 = vpack.c.b16 %v514, %v513
      %v556 = vpack.c.b16 %v516, %v515
      %v557 = vpack.c.b16 %v518, %v517
      %v558 = vpack.c.b16 %v520, %v519
      %v559 = vpack.c.b16 %v522, %v521
      %v560 = vpack.c.b16 %v524, %v523
      %vm597 = vcmask 523264
      %v599 = vsel %vm597, %v349, 0
      %v602 = vsel %vm597, %v354, 0
      %v605 = vsel %vm597, %v359, 0
      %v608 = vsel %vm597, %v364, 0
      %610 = vmatprep.subr.bf16.mxu0 0
      %611 = vmatpush1.bf16.msra.mxu0 %v525
      %612 = vmatprep.subr.bf16.mxu0 0
      %613 = vmatpush1.bf16.msra.mxu0 %v526
      %614 = vmatprep.subr.bf16.mxu0 0
      %615 = vmatpush1.bf16.msra.mxu0 %v527
      %616 = vmatprep.subr.bf16.mxu0 0
      %617 = vmatpush1.bf16.msra.mxu0 %v528
      %618 = vmatprep.subr.bf16.mxu0 0
      %619 = vmatpush1.bf16.msra.mxu0 %v529
      %620 = vmatprep.subr.bf16.mxu0 0
      %621 = vmatpush1.bf16.msra.mxu0 %v530
      %622 = vmatprep.subr.bf16.mxu0 0
      %623 = vmatpush1.bf16.msra.mxu0 %v531
      %624 = vmatprep.subr.bf16.mxu0 0
      %625 = vmatpush1.bf16.msra.mxu0 %v532
      %626 = vmatprep.subr.bf16.mxu0 0
      %627 = vmatpush1.bf16.msra.mxu0 %v533
      %628 = vmatprep.subr.bf16.mxu0 0
      %629 = vmatpush1.bf16.msra.mxu0 %v534
      %630 = vmatprep.subr.bf16.mxu0 0
      %631 = vmatpush1.bf16.msra.mxu0 %v535
      %632 = vmatprep.subr.bf16.mxu0 0
      %633 = vmatpush1.bf16.msra.mxu0 %v536
      %634 = vmatprep.subr.bf16.mxu0 0
      %635 = vmatpush1.bf16.msra.mxu0 %v537
      %636 = vmatprep.subr.bf16.mxu0 0
      %637 = vmatpush1.bf16.msra.mxu0 %v538
      %638 = vmatprep.subr.bf16.mxu0 0
      %639 = vmatpush1.bf16.msra.mxu0 %v539
      %640 = vmatprep.subr.bf16.mxu0 0
      %641 = vmatpush1.bf16.msra.mxu0 %v540
      %642 = vmatprep.mubr.bf16.mxu0 %v346
      %643 = vmatmul.mubr.bf16.gmra.mrb[0].mxu0 %v345
      %v644 = vpop.f32.mrb[0].mxu0
      %v645 = vadd.f32 %v279, %v644
      %v646 = vpop.f32.mrb[0].mxu0
      %v647 = vpop.f32.mrb[0].mxu0
      %v648 = vadd.f32 %v279, %v647
      %v649 = vpop.f32.mrb[0].mxu0
      %650 = vmatprep.mubr.bf16.mxu0 %v351
      %651 = vmatmul.mubr.bf16.gmra.mrb[0].mxu0 %v350
      %v652 = vpop.f32.mrb[0].mxu0
      %v653 = vadd.f32 %v279, %v652
      %v654 = vpop.f32.mrb[0].mxu0
      %v655 = vpop.f32.mrb[0].mxu0
      %v656 = vadd.f32 %v279, %v655
      %v657 = vpop.f32.mrb[0].mxu0
      %658 = vmatprep.mubr.bf16.mxu0 %v356
      %659 = vmatmul.mubr.bf16.gmra.mrb[0].mxu0 %v355
      %v660 = vpop.f32.mrb[0].mxu0
      %v661 = vadd.f32 %v279, %v660
      %v662 = vpop.f32.mrb[0].mxu0
      %v663 = vpop.f32.mrb[0].mxu0
      %v664 = vadd.f32 %v279, %v663
      %v665 = vpop.f32.mrb[0].mxu0
      %666 = vmatprep.mubr.bf16.mxu0 %v361
      %667 = vmatmul.mubr.bf16.gmra.mrb[0].mxu0 %v360
      %v668 = vpop.f32.mrb[0].mxu0
      %v669 = vadd.f32 %v279, %v668
      %v670 = vpop.f32.mrb[0].mxu0
      %v671 = vpop.f32.mrb[0].mxu0
      %v672 = vadd.f32 %v279, %v671
      %v673 = vpop.f32.mrb[0].mxu0
      %674 = vdwg.mxu0
      %675 = vmatprep.subr.bf16.mxu0 0
      %676 = vmatpush1.bf16.msra.mxu0 %v541
      %677 = vmatprep.subr.bf16.mxu0 0
      %678 = vmatpush1.bf16.msra.mxu0 %v542
      %679 = vmatprep.subr.bf16.mxu0 0
      %680 = vmatpush1.bf16.msra.mxu0 %v543
      %681 = vmatprep.subr.bf16.mxu0 0
      %682 = vmatpush1.bf16.msra.mxu0 %v544
      %683 = vmatprep.subr.bf16.mxu0 0
      %684 = vmatpush1.bf16.msra.mxu0 %v545
      %685 = vmatprep.subr.bf16.mxu0 0
      %686 = vmatpush1.bf16.msra.mxu0 %v546
      %687 = vmatprep.subr.bf16.mxu0 0
      %688 = vmatpush1.bf16.msra.mxu0 %v547
      %689 = vmatprep.subr.bf16.mxu0 0
      %690 = vmatpush1.bf16.msra.mxu0 %v548
      %691 = vmatprep.subr.bf16.mxu0 0
      %692 = vmatpush1.bf16.msra.mxu0 %v549
      %693 = vmatprep.subr.bf16.mxu0 0
      %694 = vmatpush1.bf16.msra.mxu0 %v550
      %695 = vmatprep.subr.bf16.mxu0 0
      %696 = vmatpush1.bf16.msra.mxu0 %v551
      %697 = vmatprep.subr.bf16.mxu0 0
      %698 = vmatpush1.bf16.msra.mxu0 %v552
      %699 = vmatprep.subr.bf16.mxu0 0
      %700 = vmatpush1.bf16.msra.mxu0 %v553
      %701 = vmatprep.subr.bf16.mxu0 0
      %702 = vmatpush1.bf16.msra.mxu0 %v554
      %703 = vmatprep.subr.bf16.mxu0 0
      %704 = vmatpush1.bf16.msra.mxu0 %v555
      %705 = vmatprep.subr.bf16.mxu0 0
      %706 = vmatpush1.bf16.msra.mxu0 %v556
      %707 = vmatprep.mubr.bf16.mxu0 %v348
      %708 = vmatmul.mubr.bf16.gmra.mrb[0].mxu0 %v347
      %v709 = vpop.f32.mrb[0].mxu0
      %v710 = vadd.f32 %v645, %v709
      %v711 = vpop.f32.mrb[0].mxu0
      %v712 = vpop.f32.mrb[0].mxu0
      %v713 = vadd.f32 %v648, %v712
      %v714 = vpop.f32.mrb[0].mxu0
      %715 = vmatprep.mubr.bf16.mxu0 %v353
      %716 = vmatmul.mubr.bf16.gmra.mrb[0].mxu0 %v352
      %v717 = vpop.f32.mrb[0].mxu0
      %v718 = vadd.f32 %v653, %v717
      %v719 = vpop.f32.mrb[0].mxu0
      %v720 = vpop.f32.mrb[0].mxu0
      %v721 = vadd.f32 %v656, %v720
      %v722 = vpop.f32.mrb[0].mxu0
      %723 = vmatprep.mubr.bf16.mxu0 %v358
      %724 = vmatmul.mubr.bf16.gmra.mrb[0].mxu0 %v357
      %v725 = vpop.f32.mrb[0].mxu0
      %v726 = vadd.f32 %v661, %v725
      %v727 = vpop.f32.mrb[0].mxu0
      %v728 = vpop.f32.mrb[0].mxu0
      %v729 = vadd.f32 %v664, %v728
      %v730 = vpop.f32.mrb[0].mxu0
      %731 = vmatprep.mubr.bf16.mxu0 %v363
      %732 = vmatmul.mubr.bf16.gmra.mrb[0].mxu0 %v362
      %v733 = vpop.f32.mrb[0].mxu0
      %v734 = vadd.f32 %v669, %v733
      %v735 = vpop.f32.mrb[0].mxu0
      %v736 = vpop.f32.mrb[0].mxu0
      %v737 = vadd.f32 %v672, %v736
      %v738 = vpop.f32.mrb[0].mxu0
      %739 = vdwg.mxu0
      %740 = vmatprep.subr.bf16.mxu0 0
      %741 = vmatpush1.bf16.msra.mxu0 %v557
      %742 = vmatprep.subr.bf16.mxu0 0
      %743 = vmatpush1.bf16.msra.mxu0 %v558
      %744 = vmatprep.subr.bf16.mxu0 0
      %745 = vmatpush1.bf16.msra.mxu0 %v559
      %746 = vmatprep.subr.bf16.mxu0 0
      %747 = vmatpush1.bf16.msra.mxu0 %v560
      %748 = vmatprep.subr.bf16.mxu0 0
      %749 = vmatpush1.bf16.msra.mxu0 0
      %750 = vmatprep.subr.bf16.mxu0 0
      %751 = vmatpush1.bf16.msra.mxu0 0
      %752 = vmatprep.subr.bf16.mxu0 0
      %753 = vmatpush1.bf16.msra.mxu0 0
      %754 = vmatprep.subr.bf16.mxu0 0
      %755 = vmatpush1.bf16.msra.mxu0 0
      %756 = vmatprep.subr.bf16.mxu0 0
      %757 = vmatpush1.bf16.msra.mxu0 0
      %758 = vmatprep.subr.bf16.mxu0 0
      %759 = vmatpush1.bf16.msra.mxu0 0
      %760 = vmatprep.subr.bf16.mxu0 0
      %761 = vmatpush1.bf16.msra.mxu0 0
      %762 = vmatprep.subr.bf16.mxu0 0
      %763 = vmatpush1.bf16.msra.mxu0 0
      %764 = vmatprep.subr.bf16.mxu0 0
      %765 = vmatpush1.bf16.msra.mxu0 0
      %766 = vmatprep.subr.bf16.mxu0 0
      %767 = vmatpush1.bf16.msra.mxu0 0
      %768 = vmatprep.subr.bf16.mxu0 0
      %769 = vmatpush1.bf16.msra.mxu0 0
      %770 = vmatprep.subr.bf16.mxu0 0
      %771 = vmatpush1.bf16.msra.mxu0 0
      %772 = vmatprep.mubr.bf16.mxu0 0
      %773 = vmatmul.mubr.bf16.gmra.mrb[0].mxu0 %v599
      %v774 = vpop.f32.mrb[0].mxu0
      %v775 = vadd.f32 %v710, %v774
      %v776 = vpop.f32.mrb[0].mxu0
      %v777 = vpop.f32.mrb[0].mxu0
      %v778 = vadd.f32 %v713, %v777
      %v779 = vpop.f32.mrb[0].mxu0
      %780 = vmatprep.mubr.bf16.mxu0 0
      %781 = vmatmul.mubr.bf16.gmra.mrb[0].mxu0 %v602
      %v782 = vpop.f32.mrb[0].mxu0
      %v783 = vadd.f32 %v718, %v782
      %v784 = vpop.f32.mrb[0].mxu0
      %v785 = vpop.f32.mrb[0].mxu0
      %v786 = vadd.f32 %v721, %v785
      %v787 = vpop.f32.mrb[0].mxu0
      %788 = vmatprep.mubr.bf16.mxu0 0
      %789 = vmatmul.mubr.bf16.gmra.mrb[0].mxu0 %v605
      %v790 = vpop.f32.mrb[0].mxu0
      %v791 = vadd.f32 %v726, %v790
      %v792 = vpop.f32.mrb[0].mxu0
      %v793 = vpop.f32.mrb[0].mxu0
      %v794 = vadd.f32 %v729, %v793
      %v795 = vpop.f32.mrb[0].mxu0
      %796 = vmatprep.mubr.bf16.mxu0 0
      %797 = vmatmul.mubr.bf16.gmra.mrb[0].mxu0 %v608
      %v798 = vpop.f32.mrb[0].mxu0
      %v799 = vadd.f32 %v734, %v798
      %v800 = vpop.f32.mrb[0].mxu0
      %v801 = vpop.f32.mrb[0].mxu0
      %v802 = vadd.f32 %v737, %v801
      %v803 = vpop.f32.mrb[0].mxu0
      %804 = vdwg.mxu0
      %v805 = vmax.f32 %v775, 0.0
      %v806 = vmax.f32 %v778, 0.0
      %v807 = vmax.f32 %v783, 0.0
      %v808 = vmax.f32 %v786, 0.0
      %v809 = vmax.f32 %v791, 0.0
      %v810 = vmax.f32 %v794, 0.0
      %v811 = vmax.f32 %v799, 0.0
      %v812 = vmax.f32 %v802, 0.0
      %v813 = vpack.c.bf16 %v806, %v805
      %v814 = vpack.c.bf16 %v808, %v807
      %v815 = vpack.c.bf16 %v810, %v809
      %v816 = vpack.c.bf16 %v812, %v811
      %v821 = vunpack.c.l.b16 %v813
      %v822 = vunpack.c.h.b16 %v813
      %v823 = vunpack.c.l.b16 %v814
      %v824 = vunpack.c.h.b16 %v814
      %v825 = vunpack.c.l.b16 %v815
      %v826 = vunpack.c.h.b16 %v815
      %v827 = vunpack.c.l.b16 %v816
      %v828 = vunpack.c.h.b16 %v816
      %v829 = vpack.c.b16 %v821, %v821
      %v830 = vpack.c.b16 %v822, %v822
      %v831 = vpack.c.b16 %v823, %v823
      %v832 = vpack.c.b16 %v824, %v824
      %v833 = vpack.c.b16 %v825, %v825
      %v834 = vpack.c.b16 %v826, %v826
      %v835 = vpack.c.b16 %v827, %v827
      %v836 = vpack.c.b16 %v828, %v828
      %845 = vst [vmem:[%s175] sm:$0xf] %v829
      %846 = vst [vmem:[%s175 + $0x4] sm:$0xf] %v830
      %847 = vst [vmem:[%s175 + $0x8] sm:$0xf] %v831
      %848 = vst [vmem:[%s175 + $0xc] sm:$0xf] %v832
      %849 = vst [vmem:[%s175 + $0x10] sm:$0xf] %v833
      %850 = vst [vmem:[%s175 + $0x14] sm:$0xf] %v834
      %851 = vst [vmem:[%s175 + $0x18] sm:$0xf] %v835
      %852 = vst [vmem:[%s175 + $0x1c] sm:$0xf] %v836
      %s853 = smul.u32 8, %s14
      %p854 = scmp.lt.s32.totalorder %s853, 15
      %s855 = scalar_select %p854, %s853, 15
      %s856 = smul.addr %s855, 4
      %s857 = scalar_lea.vmem %s3, %s856
      // Predicated region
      $region33: #{forward.8} parent=31 // pred_check
        %p858 = pneg %p100
      $region34: #{forward.8} parent=31 // pred_check_branch
        %860 = sbr.rel (%p858) target = $region36
      $region35: #{forward.8} parent=31 // pred_region
        %s861 = smul.u32 8, %s14
      $region36: #{forward.8} parent=31 // pred_fallthru
        _
    $region32: #{forward.8} parent=5 // pred_fallthru
      _
    %p862 = scmp.le.s32.totalorder 2, %s9
    // Predicated region
    $region37: #{forward.8} parent=5 // pred_check
      %p863 = pneg %p862
    $region38: #{forward.8} parent=5 // pred_check_branch
      %865 = sbr.rel (%p863) target = $region40
    $region39: #{forward.8} parent=5 // pred_region
      %s866 = ssub.s32 %s9, 2
      // Predicated region
      $region41: #{forward.8} parent=39 // pred_check
        %p867 = pneg %p106
      $region42: #{forward.8} parent=39 // pred_check_branch
        %869 = sbr.rel (%p867) target = $region44
      $region43: #{forward.8} parent=39 // pred_region
        %s870 = smul.u32 8, %s15
        %p871 = scmp.lt.s32.totalorder %s870, 15
        %s872 = scalar_select %p871, %s870, 15
        %s873 = smul.addr %s872, 4
        %s874 = scalar_lea.vmem %s3, %s873
      $region44: #{forward.8} parent=39 // pred_fallthru
        _
    $region40: #{forward.8} parent=5 // pred_fallthru
      _
  $region6: #{forward.8} parent=0 // loop_footer
    %s13 = sadd.s32 1, %s9
  $region7: #{forward.8} parent=0 // loop_footer_branch
    %8 = sbr.rel target = $region3
  $region8: #{forward.8} parent=0 // loop_exit
    _

// kernel: forward.9
$region0: #{forward.9}
  #allocation0 [shape = 'u32[]', space=smem, size = 0x4, offset = 0x4, fixed_abs, tag = 'smem constant byte address 0x4 - core index']
  #allocation1 [shape = 'u32[144,128]{1,0:T(1,128)}', space=vmem, size = 0x12000, scoped, tag = 'internal scratch']
  %s0 = inlined_call_operand.vmem [shape: bf16[512,288], index: 0, kind: input, shape index: {}]
  %s1 = inlined_call_operand.vmem [shape: bf16[288,4], index: 1, kind: input, shape index: {}]
  %s2 = inlined_call_operand.vmem [shape: f32[1,4], index: 2, kind: input, shape index: {}]
  %s3 = inlined_call_operand.vmem [shape: f32[512,4], index: 3, kind: output, shape index: {}]
  %s4 = sld [smem:[#allocation0]]
  $region45: #{forward.9} parent=0
    _
  %s6 = ssub.s32 1, %s4
  %s7 = scalar_select 0, %s6, %s4
  loop: start=0, step=1, limit=4
  $region2: #{forward.9} parent=0 // loop_pre_header
    _
  $region3: #{forward.9} parent=0 // loop_header
    %s9 = sphi 0, %s13
    %p10 = scmp.ge.s32.totalorder %s9, 4
    %s19 = sphi 0, %s21
    %s22 = sphi 0, %s19
    %s23 = sphi 0, %s22
    %s39 = sphi 0, %s23
    %s43 = sphi 0, %s43
    %s45 = sphi 0, %s43
    %s46 = sphi 0, %s45
    %s60 = sphi 0, %s46
    %s64 = sphi 0, %s64
    %s66 = sphi 0, %s64
    %s67 = sphi 0, %s66
    %s81 = sphi 0, %s67
    %s87 = sphi 0, %s89
    %s90 = sphi 0, %s87
    %s91 = sphi 0, %s90
    %s107 = sphi 0, %s91
  $region4: #{forward.9} parent=0 // loop_header_branch
    %12 = sbr.rel (%p10) target = $region8
  $region5: #{forward.9} parent=0 // loop_body
    %s14 = ssub.s32 %s9, 1
    %s15 = ssub.s32 %s9, 2
    %s16 = sadd.s32 %s9, 1
    %s17 = ssub.s32 %s9, %s16
    %p18 = scmp.eq.s32.totalorder %s17, 0
    %s20 = sadd.s32 %s19, 1
    %s21 = scalar_select %p18, %s19, %s20
    %p24 = pneg %p18
    %p25 = scmp.eq.s32.totalorder %s9, 1
    %p26 = por %p24, %p25
    %p27 = scmp.ne.s32.totalorder %s19, %s22
    %p28 = scmp.eq.s32.totalorder %s9, 0
    %p29 = por %p27, %p28
    %p30 = scmp.ne.s32.totalorder %s19, %s22
    %p31 = scmp.eq.s32.totalorder %s14, 1
    %p32 = por %p30, %p31
    %p33 = scmp.ne.s32.totalorder %s22, %s23
    %p34 = scmp.eq.s32.totalorder %s14, 0
    %p35 = por %p33, %p34
    %p36 = scmp.ne.s32.totalorder %s22, %s23
    %p37 = scmp.eq.s32.totalorder %s15, 1
    %p38 = por %p36, %p37
    %p40 = scmp.ne.s32.totalorder %s23, %s39
    %p41 = scmp.eq.s32.totalorder %s15, 0
    %p42 = por %p40, %p41
    %s44 = sadd.s32 %s43, 1
    %p47 = scmp.eq.s32.totalorder %s9, 1
    %p48 = scmp.ne.s32.totalorder %s43, %s45
    %p49 = scmp.eq.s32.totalorder %s9, 0
    %p50 = por %p48, %p49
    %p51 = scmp.ne.s32.totalorder %s43, %s45
    %p52 = scmp.eq.s32.totalorder %s14, 1
    %p53 = por %p51, %p52
    %p54 = scmp.ne.s32.totalorder %s45, %s46
    %p55 = scmp.eq.s32.totalorder %s14, 0
    %p56 = por %p54, %p55
    %p57 = scmp.ne.s32.totalorder %s45, %s46
    %p58 = scmp.eq.s32.totalorder %s15, 1
    %p59 = por %p57, %p58
    %p61 = scmp.ne.s32.totalorder %s46, %s60
    %p62 = scmp.eq.s32.totalorder %s15, 0
    %p63 = por %p61, %p62
    %s65 = sadd.s32 %s64, 1
    %p68 = scmp.eq.s32.totalorder %s9, 1
    %p69 = scmp.ne.s32.totalorder %s64, %s66
    %p70 = scmp.eq.s32.totalorder %s9, 0
    %p71 = por %p69, %p70
    %p72 = scmp.ne.s32.totalorder %s64, %s66
    %p73 = scmp.eq.s32.totalorder %s14, 1
    %p74 = por %p72, %p73
    %p75 = scmp.ne.s32.totalorder %s66, %s67
    %p76 = scmp.eq.s32.totalorder %s14, 0
    %p77 = por %p75, %p76
    %p78 = scmp.ne.s32.totalorder %s66, %s67
    %p79 = scmp.eq.s32.totalorder %s15, 1
    %p80 = por %p78, %p79
    %p82 = scmp.ne.s32.totalorder %s67, %s81
    %p83 = scmp.eq.s32.totalorder %s15, 0
    %p84 = por %p82, %p83
    %s85 = ssub.s32 %s9, %s16
    %p86 = scmp.eq.s32.totalorder %s85, 0
    %s88 = sadd.s32 %s87, 1
    %s89 = scalar_select %p86, %s87, %s88
    %p92 = pneg %p86
    %p93 = scmp.eq.s32.totalorder %s9, 1
    %p94 = por %p92, %p93
    %p95 = scmp.ne.s32.totalorder %s87, %s90
    %p96 = scmp.eq.s32.totalorder %s9, 0
    %p97 = por %p95, %p96
    %p98 = scmp.ne.s32.totalorder %s87, %s90
    %p99 = scmp.eq.s32.totalorder %s14, 1
    %p100 = por %p98, %p99
    %p101 = scmp.ne.s32.totalorder %s90, %s91
    %p102 = scmp.eq.s32.totalorder %s14, 0
    %p103 = por %p101, %p102
    %p104 = scmp.ne.s32.totalorder %s90, %s91
    %p105 = scmp.eq.s32.totalorder %s15, 1
    %p106 = por %p104, %p105
    %p108 = scmp.ne.s32.totalorder %s91, %s107
    %p109 = scmp.eq.s32.totalorder %s15, 0
    %p110 = por %p108, %p109
    %p111 = scmp.le.s32.totalorder 1, %s9
    %p112 = scmp.lt.s32.totalorder %s9, 3
    %p113 = pnand %p111, %p112
    %p114 = pneg %p113
    // Predicated region
    $region9: #{forward.9} parent=5 // pred_check
      _
    $region10: #{forward.9} parent=5 // pred_check_branch
      %116 = sbr.rel (%p113) target = $region12
    $region11: #{forward.9} parent=5 // pred_region
      %s117 = ssub.s32 %s9, 1
      // Predicated region
      $region13: #{forward.9} parent=11 // pred_check
        %p118 = pneg %p56
      $region14: #{forward.9} parent=11 // pred_check_branch
        %120 = sbr.rel (%p118) target = $region16
      $region15: #{forward.9} parent=11 // pred_region
        _
      $region16: #{forward.9} parent=11 // pred_fallthru
        _
      // Predicated region
      $region17: #{forward.9} parent=11 // pred_check
        %p121 = pneg %p77
      $region18: #{forward.9} parent=11 // pred_check_branch
        %123 = sbr.rel (%p121) target = $region20
      $region19: #{forward.9} parent=11 // pred_region
        _
      $region20: #{forward.9} parent=11 // pred_fallthru
        _
    $region12: #{forward.9} parent=5 // pred_fallthru
      _
    %p124 = scmp.lt.s32.totalorder %s9, 2
    // Predicated region
    $region21: #{forward.9} parent=5 // pred_check
      %p125 = pneg %p124
    $region22: #{forward.9} parent=5 // pred_check_branch
      %127 = sbr.rel (%p125) target = $region24
    $region23: #{forward.9} parent=5 // pred_region
      // Predicated region
      $region25: #{forward.9} parent=23 // pred_check
        %p128 = pneg %p29
      $region26: #{forward.9} parent=23 // pred_check_branch
        %130 = sbr.rel (%p128) target = $region28
      $region27: #{forward.9} parent=23 // pred_region
        %s131 = smul.u32 32, %s9
        %p132 = scmp.lt.s32.totalorder %s131, 63
        %s133 = scalar_select %p132, %s131, 63
        %s134 = smul.addr %s133, 3
        %s135 = smul.addr %s134, 4
        %s136 = scalar_lea.vmem %s0, %s135
        %s137 = smul.u32 32, %s9
      $region28: #{forward.9} parent=23 // pred_fallthru
        _
    $region24: #{forward.9} parent=5 // pred_fallthru
      _
    %p138 = scmp.le.s32.totalorder 1, %s9
    %p139 = scmp.lt.s32.totalorder %s9, 3
    %p140 = pnand %p138, %p139
    %p141 = pneg %p140
    // Predicated region
    $region29: #{forward.9} parent=5 // pred_check
      _
    $region30: #{forward.9} parent=5 // pred_check_branch
      %143 = sbr.rel (%p140) target = $region32
    $region31: #{forward.9} parent=5 // pred_region
      %s144 = ssub.s32 %s9, 1
      %s145 = smul.u32 32, %s14
      %p146 = scmp.lt.s32.totalorder %s145, 63
      %s147 = scalar_select %p146, %s145, 63
      %s148 = smul.addr %s147, 3
      %s149 = smul.addr %s148, 4
      %s150 = scalar_lea.vmem %s0, %s149
      %p151 = pneg %p35
      %p152 = pneg %p32
      %p153 = pneg %p56
      %p154 = pneg %p53
      %p155 = pneg %p77
      %p156 = pneg %p74
      %p157 = pneg %p103
      %p158 = pneg %p100
      %s159 = smul.u32 32, %s14
      %p160 = scmp.lt.s32.totalorder %s159, 63
      %s161 = scalar_select %p160, %s159, 63
      %s162 = smul.addr %s161, 8
      %s163 = scalar_lea.vmem %s3, %s162
      %s164 = smul.u32 32, %s14
      %p165 = scmp.lt.s32.totalorder %s164, 63
      %s166 = scalar_select %p165, %s164, 63
      %s167 = smul.addr %s166, 3
      %s168 = smul.addr %s167, 4
      %s169 = scalar_lea.vmem %s0, %s168
      %s170 = smul.u32 32, %s14
      %s171 = smul.u32 32, %s14
      %p172 = scmp.lt.s32.totalorder %s171, 63
      %s173 = scalar_select %p172, %s171, 63
      %s174 = smul.addr %s173, 8
      %s175 = scalar_lea.vmem %s3, %s174
      %s176 = smul.u32 32, %s14
      %v178 = vld [vmem:[%s169] sm:$0xff]
      %v179 = vld [vmem:[%s169 + $0x8] sm:$0xf]
      %v180 = vld [vmem:[%s169 + $0xc] sm:$0xff]
      %v181 = vld [vmem:[%s169 + $0x14] sm:$0xf]
      %v182 = vld [vmem:[%s169 + $0x18] sm:$0xff]
      %v183 = vld [vmem:[%s169 + $0x20] sm:$0xf]
      %v184 = vld [vmem:[%s169 + $0x24] sm:$0xff]
      %v185 = vld [vmem:[%s169 + $0x2c] sm:$0xf]
      %v186 = vld [vmem:[%s169 + $0x30] sm:$0xff]
      %v187 = vld [vmem:[%s169 + $0x38] sm:$0xf]
      %v188 = vld [vmem:[%s169 + $0x3c] sm:$0xff]
      %v189 = vld [vmem:[%s169 + $0x44] sm:$0xf]
      %v190 = vld [vmem:[%s169 + $0x48] sm:$0xff]
      %v191 = vld [vmem:[%s169 + $0x50] sm:$0xf]
      %v192 = vld [vmem:[%s169 + $0x54] sm:$0xff]
      %v193 = vld [vmem:[%s169 + $0x5c] sm:$0xf]
      %v194 = vld [vmem:[%s169 + $0x60] sm:$0xff]
      %v195 = vld [vmem:[%s169 + $0x68] sm:$0xf]
      %v196 = vld [vmem:[%s169 + $0x6c] sm:$0xff]
      %v197 = vld [vmem:[%s169 + $0x74] sm:$0xf]
      %v198 = vld [vmem:[%s169 + $0x78] sm:$0xff]
      %v199 = vld [vmem:[%s169 + $0x80] sm:$0xf]
      %v200 = vld [vmem:[%s169 + $0x84] sm:$0xff]
      %v201 = vld [vmem:[%s169 + $0x8c] sm:$0xf]
      %v202 = vld [vmem:[%s169 + $0x90] sm:$0xff]
      %v203 = vld [vmem:[%s169 + $0x98] sm:$0xf]
      %v204 = vld [vmem:[%s169 + $0x9c] sm:$0xff]
      %v205 = vld [vmem:[%s169 + $0xa4] sm:$0xf]
      %v206 = vld [vmem:[%s169 + $0xa8] sm:$0xff]
      %v207 = vld [vmem:[%s169 + $0xb0] sm:$0xf]
      %v208 = vld [vmem:[%s169 + $0xb4] sm:$0xff]
      %v209 = vld [vmem:[%s169 + $0xbc] sm:$0xf]
      %v210 = vld [vmem:[%s169 + $0xc0] sm:$0xff]
      %v211 = vld [vmem:[%s169 + $0xc8] sm:$0xf]
      %v212 = vld [vmem:[%s169 + $0xcc] sm:$0xff]
      %v213 = vld [vmem:[%s169 + $0xd4] sm:$0xf]
      %v214 = vld [vmem:[%s169 + $0xd8] sm:$0xff]
      %v215 = vld [vmem:[%s169 + $0xe0] sm:$0xf]
      %v216 = vld [vmem:[%s169 + $0xe4] sm:$0xff]
      %v217 = vld [vmem:[%s169 + $0xec] sm:$0xf]
      %v218 = vld [vmem:[%s169 + $0xf0] sm:$0xff]
      %v219 = vld [vmem:[%s169 + $0xf8] sm:$0xf]
      %v220 = vld [vmem:[%s169 + $0xfc] sm:$0xff]
      %v221 = vld [vmem:[%s169 + $0x104] sm:$0xf]
      %v222 = vld [vmem:[%s169 + $0x108] sm:$0xff]
      %v223 = vld [vmem:[%s169 + $0x110] sm:$0xf]
      %v224 = vld [vmem:[%s169 + $0x114] sm:$0xff]
      %v225 = vld [vmem:[%s169 + $0x11c] sm:$0xf]
      %v226 = vld [vmem:[%s169 + $0x120] sm:$0xff]
      %v227 = vld [vmem:[%s169 + $0x128] sm:$0xf]
      %v228 = vld [vmem:[%s169 + $0x12c] sm:$0xff]
      %v229 = vld [vmem:[%s169 + $0x134] sm:$0xf]
      %v230 = vld [vmem:[%s169 + $0x138] sm:$0xff]
      %v231 = vld [vmem:[%s169 + $0x140] sm:$0xf]
      %v232 = vld [vmem:[%s169 + $0x144] sm:$0xff]
      %v233 = vld [vmem:[%s169 + $0x14c] sm:$0xf]
      %v234 = vld [vmem:[%s169 + $0x150] sm:$0xff]
      %v235 = vld [vmem:[%s169 + $0x158] sm:$0xf]
      %v236 = vld [vmem:[%s169 + $0x15c] sm:$0xff]
      %v237 = vld [vmem:[%s169 + $0x164] sm:$0xf]
      %v238 = vld [vmem:[%s169 + $0x168] sm:$0xff]
      %v239 = vld [vmem:[%s169 + $0x170] sm:$0xf]
      %v240 = vld [vmem:[%s169 + $0x174] sm:$0xff]
      %v241 = vld [vmem:[%s169 + $0x17c] sm:$0xf]
      %v242 = vld [vmem:[%s1] sm:$0xf]
      %v243 = vld [vmem:[%s1 + $0x4] sm:$0xf]
      %v244 = vld [vmem:[%s1 + $0x8] sm:$0xf]
      %v245 = vld [vmem:[%s1 + $0xc] sm:$0xf]
      %v246 = vld [vmem:[%s1 + $0x10] sm:$0xf]
      %v247 = vld [vmem:[%s1 + $0x14] sm:$0xf]
      %v248 = vld [vmem:[%s1 + $0x18] sm:$0xf]
      %v249 = vld [vmem:[%s1 + $0x1c] sm:$0xf]
      %v250 = vld [vmem:[%s1 + $0x20] sm:$0xf]
      %v251 = vld [vmem:[%s1 + $0x24] sm:$0xf]
      %v252 = vld [vmem:[%s1 + $0x28] sm:$0xf]
      %v253 = vld [vmem:[%s1 + $0x2c] sm:$0xf]
      %v254 = vld [vmem:[%s1 + $0x30] sm:$0xf]
      %v255 = vld [vmem:[%s1 + $0x34] sm:$0xf]
      %v256 = vld [vmem:[%s1 + $0x38] sm:$0xf]
      %v257 = vld [vmem:[%s1 + $0x3c] sm:$0xf]
      %v258 = vld [vmem:[%s1 + $0x40] sm:$0xf]
      %v259 = vld [vmem:[%s1 + $0x44] sm:$0xf]
      %v260 = vld [vmem:[%s1 + $0x48] sm:$0xf]
      %v261 = vld [vmem:[%s1 + $0x4c] sm:$0xf]
      %v262 = vld [vmem:[%s1 + $0x50] sm:$0xf]
      %v263 = vld [vmem:[%s1 + $0x54] sm:$0xf]
      %v264 = vld [vmem:[%s1 + $0x58] sm:$0xf]
      %v265 = vld [vmem:[%s1 + $0x5c] sm:$0xf]
      %v266 = vld [vmem:[%s1 + $0x60] sm:$0xf]
      %v267 = vld [vmem:[%s1 + $0x64] sm:$0xf]
      %v268 = vld [vmem:[%s1 + $0x68] sm:$0xf]
      %v269 = vld [vmem:[%s1 + $0x6c] sm:$0xf]
      %v270 = vld [vmem:[%s1 + $0x70] sm:$0xf]
      %v271 = vld [vmem:[%s1 + $0x74] sm:$0xf]
      %v272 = vld [vmem:[%s1 + $0x78] sm:$0xf]
      %v273 = vld [vmem:[%s1 + $0x7c] sm:$0xf]
      %v274 = vld [vmem:[%s1 + $0x80] sm:$0xf]
      %v275 = vld [vmem:[%s1 + $0x84] sm:$0xf]
      %v276 = vld [vmem:[%s1 + $0x88] sm:$0xf]
      %v277 = vld [vmem:[%s1 + $0x8c] sm:$0xf]
      %v278 = vld [vmem:[%s2] sm:$0x1]
      %v280 = vlaneseq
      %v281 = vshrl.u32 %v280, 7
      %v282 = vsub.s32 0, %v281
      %v283 = vrot.slane %v278, %v282
      %v349 = vunpack.c.l.b16 %v178
      %v350 = vunpack.c.h.b16 %v178
      %v351 = vunpack.c.l.b16 %v179
      %v352 = vunpack.c.l.b16 %v180
      %v353 = vunpack.c.h.b16 %v180
      %v354 = vunpack.c.l.b16 %v181
      %v355 = vunpack.c.l.b16 %v182
      %v356 = vunpack.c.h.b16 %v182
      %v357 = vunpack.c.l.b16 %v183
      %v358 = vunpack.c.l.b16 %v184
      %v359 = vunpack.c.h.b16 %v184
      %v360 = vunpack.c.l.b16 %v185
      %v361 = vunpack.c.l.b16 %v186
      %v362 = vunpack.c.h.b16 %v186
      %v363 = vunpack.c.l.b16 %v187
      %v364 = vunpack.c.l.b16 %v188
      %v365 = vunpack.c.h.b16 %v188
      %v366 = vunpack.c.l.b16 %v189
      %v367 = vunpack.c.l.b16 %v190
      %v368 = vunpack.c.h.b16 %v190
      %v369 = vunpack.c.l.b16 %v191
      %v370 = vunpack.c.l.b16 %v192
      %v371 = vunpack.c.h.b16 %v192
      %v372 = vunpack.c.l.b16 %v193
      %v373 = vunpack.c.l.b16 %v194
      %v374 = vunpack.c.h.b16 %v194
      %v375 = vunpack.c.l.b16 %v195
      %v376 = vunpack.c.l.b16 %v196
      %v377 = vunpack.c.h.b16 %v196
      %v378 = vunpack.c.l.b16 %v197
      %v379 = vunpack.c.l.b16 %v198
      %v380 = vunpack.c.h.b16 %v198
      %v381 = vunpack.c.l.b16 %v199
      %v382 = vunpack.c.l.b16 %v200
      %v383 = vunpack.c.h.b16 %v200
      %v384 = vunpack.c.l.b16 %v201
      %v385 = vunpack.c.l.b16 %v202
      %v386 = vunpack.c.h.b16 %v202
      %v387 = vunpack.c.l.b16 %v203
      %v388 = vunpack.c.l.b16 %v204
      %v389 = vunpack.c.h.b16 %v204
      %v390 = vunpack.c.l.b16 %v205
      %v391 = vunpack.c.l.b16 %v206
      %v392 = vunpack.c.h.b16 %v206
      %v393 = vunpack.c.l.b16 %v207
      %v394 = vunpack.c.l.b16 %v208
      %v395 = vunpack.c.h.b16 %v208
      %v396 = vunpack.c.l.b16 %v209
      %v397 = vunpack.c.l.b16 %v210
      %v398 = vunpack.c.h.b16 %v210
      %v399 = vunpack.c.l.b16 %v211
      %v400 = vunpack.c.l.b16 %v212
      %v401 = vunpack.c.h.b16 %v212
      %v402 = vunpack.c.l.b16 %v213
      %v403 = vunpack.c.l.b16 %v214
      %v404 = vunpack.c.h.b16 %v214
      %v405 = vunpack.c.l.b16 %v215
      %v406 = vunpack.c.l.b16 %v216
      %v407 = vunpack.c.h.b16 %v216
      %v408 = vunpack.c.l.b16 %v217
      %v409 = vunpack.c.l.b16 %v218
      %v410 = vunpack.c.h.b16 %v218
      %v411 = vunpack.c.l.b16 %v219
      %v412 = vunpack.c.l.b16 %v220
      %v413 = vunpack.c.h.b16 %v220
      %v414 = vunpack.c.l.b16 %v221
      %v415 = vunpack.c.l.b16 %v222
      %v416 = vunpack.c.h.b16 %v222
      %v417 = vunpack.c.l.b16 %v223
      %v418 = vunpack.c.l.b16 %v224
      %v419 = vunpack.c.h.b16 %v224
      %v420 = vunpack.c.l.b16 %v225
      %v421 = vunpack.c.l.b16 %v226
      %v422 = vunpack.c.h.b16 %v226
      %v423 = vunpack.c.l.b16 %v227
      %v424 = vunpack.c.l.b16 %v228
      %v425 = vunpack.c.h.b16 %v228
      %v426 = vunpack.c.l.b16 %v229
      %v427 = vunpack.c.l.b16 %v230
      %v428 = vunpack.c.h.b16 %v230
      %v429 = vunpack.c.l.b16 %v231
      %v430 = vunpack.c.l.b16 %v232
      %v431 = vunpack.c.h.b16 %v232
      %v432 = vunpack.c.l.b16 %v233
      %v433 = vunpack.c.l.b16 %v234
      %v434 = vunpack.c.h.b16 %v234
      %v435 = vunpack.c.l.b16 %v235
      %v436 = vunpack.c.l.b16 %v236
      %v437 = vunpack.c.h.b16 %v236
      %v438 = vunpack.c.l.b16 %v237
      %v439 = vunpack.c.l.b16 %v238
      %v440 = vunpack.c.h.b16 %v238
      %v441 = vunpack.c.l.b16 %v239
      %v442 = vunpack.c.l.b16 %v240
      %v443 = vunpack.c.h.b16 %v240
      %v444 = vunpack.c.l.b16 %v241
      %v445 = vpack.c.b16 %v352, %v349
      %v446 = vpack.c.b16 %v353, %v350
      %v447 = vpack.c.b16 %v354, %v351
      %v448 = vpack.c.b16 %v358, %v355
      %v449 = vpack.c.b16 %v359, %v356
      %v450 = vpack.c.b16 %v360, %v357
      %v451 = vpack.c.b16 %v364, %v361
      %v452 = vpack.c.b16 %v365, %v362
      %v453 = vpack.c.b16 %v366, %v363
      %v454 = vpack.c.b16 %v370, %v367
      %v455 = vpack.c.b16 %v371, %v368
      %v456 = vpack.c.b16 %v372, %v369
      %v457 = vpack.c.b16 %v376, %v373
      %v458 = vpack.c.b16 %v377, %v374
      %v459 = vpack.c.b16 %v378, %v375
      %v460 = vpack.c.b16 %v382, %v379
      %v461 = vpack.c.b16 %v383, %v380
      %v462 = vpack.c.b16 %v384, %v381
      %v463 = vpack.c.b16 %v388, %v385
      %v464 = vpack.c.b16 %v389, %v386
      %v465 = vpack.c.b16 %v390, %v387
      %v466 = vpack.c.b16 %v394, %v391
      %v467 = vpack.c.b16 %v395, %v392
      %v468 = vpack.c.b16 %v396, %v393
      %v469 = vpack.c.b16 %v400, %v397
      %v470 = vpack.c.b16 %v401, %v398
      %v471 = vpack.c.b16 %v402, %v399
      %v472 = vpack.c.b16 %v406, %v403
      %v473 = vpack.c.b16 %v407, %v404
      %v474 = vpack.c.b16 %v408, %v405
      %v475 = vpack.c.b16 %v412, %v409
      %v476 = vpack.c.b16 %v413, %v410
      %v477 = vpack.c.b16 %v414, %v411
      %v478 = vpack.c.b16 %v418, %v415
      %v479 = vpack.c.b16 %v419, %v416
      %v480 = vpack.c.b16 %v420, %v417
      %v481 = vpack.c.b16 %v424, %v421
      %v482 = vpack.c.b16 %v425, %v422
      %v483 = vpack.c.b16 %v426, %v423
      %v484 = vpack.c.b16 %v430, %v427
      %v485 = vpack.c.b16 %v431, %v428
      %v486 = vpack.c.b16 %v432, %v429
      %v487 = vpack.c.b16 %v436, %v433
      %v488 = vpack.c.b16 %v437, %v434
      %v489 = vpack.c.b16 %v438, %v435
      %v490 = vpack.c.b16 %v442, %v439
      %v491 = vpack.c.b16 %v443, %v440
      %v492 = vpack.c.b16 %v444, %v441
      %v561 = vunpack.c.l.b16 %v242
      %v562 = vunpack.c.l.b16 %v243
      %v563 = vunpack.c.l.b16 %v244
      %v564 = vunpack.c.l.b16 %v245
      %v565 = vunpack.c.l.b16 %v246
      %v566 = vunpack.c.l.b16 %v247
      %v567 = vunpack.c.l.b16 %v248
      %v568 = vunpack.c.l.b16 %v249
      %v569 = vunpack.c.l.b16 %v250
      %v570 = vunpack.c.l.b16 %v251
      %v571 = vunpack.c.l.b16 %v252
      %v572 = vunpack.c.l.b16 %v253
      %v573 = vunpack.c.l.b16 %v254
      %v574 = vunpack.c.l.b16 %v255
      %v575 = vunpack.c.l.b16 %v256
      %v576 = vunpack.c.l.b16 %v257
      %v577 = vunpack.c.l.b16 %v258
      %v578 = vunpack.c.l.b16 %v259
      %v579 = vunpack.c.l.b16 %v260
      %v580 = vunpack.c.l.b16 %v261
      %v581 = vunpack.c.l.b16 %v262
      %v582 = vunpack.c.l.b16 %v263
      %v583 = vunpack.c.l.b16 %v264
      %v584 = vunpack.c.l.b16 %v265
      %v585 = vunpack.c.l.b16 %v266
      %v586 = vunpack.c.l.b16 %v267
      %v587 = vunpack.c.l.b16 %v268
      %v588 = vunpack.c.l.b16 %v269
      %v589 = vunpack.c.l.b16 %v270
      %v590 = vunpack.c.l.b16 %v271
      %v591 = vunpack.c.l.b16 %v272
      %v592 = vunpack.c.l.b16 %v273
      %v593 = vunpack.c.l.b16 %v274
      %v594 = vunpack.c.l.b16 %v275
      %v595 = vunpack.c.l.b16 %v276
      %v596 = vunpack.c.l.b16 %v277
      %v597 = vpack.c.b16 %v562, %v561
      %v598 = vpack.c.b16 %v564, %v563
      %v599 = vpack.c.b16 %v566, %v565
      %v600 = vpack.c.b16 %v568, %v567
      %v601 = vpack.c.b16 %v570, %v569
      %v602 = vpack.c.b16 %v572, %v571
      %v603 = vpack.c.b16 %v574, %v573
      %v604 = vpack.c.b16 %v576, %v575
      %v605 = vpack.c.b16 %v578, %v577
      %v606 = vpack.c.b16 %v580, %v579
      %v607 = vpack.c.b16 %v582, %v581
      %v608 = vpack.c.b16 %v584, %v583
      %v609 = vpack.c.b16 %v586, %v585
      %v610 = vpack.c.b16 %v588, %v587
      %v611 = vpack.c.b16 %v590, %v589
      %v612 = vpack.c.b16 %v592, %v591
      %v613 = vpack.c.b16 %v594, %v593
      %v614 = vpack.c.b16 %v596, %v595
      %vm633 = vcmask 261120
      %v635 = vsel %vm633, %v447, 0
      %v638 = vsel %vm633, %v450, 0
      %v641 = vsel %vm633, %v453, 0
      %v644 = vsel %vm633, %v456, 0
      %v647 = vsel %vm633, %v459, 0
      %v650 = vsel %vm633, %v462, 0
      %v653 = vsel %vm633, %v465, 0
      %v656 = vsel %vm633, %v468, 0
      %v659 = vsel %vm633, %v471, 0
      %v662 = vsel %vm633, %v474, 0
      %v665 = vsel %vm633, %v477, 0
      %v668 = vsel %vm633, %v480, 0
      %v671 = vsel %vm633, %v483, 0
      %v674 = vsel %vm633, %v486, 0
      %v677 = vsel %vm633, %v489, 0
      %v680 = vsel %vm633, %v492, 0
      %682 = vmatprep.subr.bf16.mxu0 0
      %683 = vmatpush1.bf16.msra.mxu0 %v597
      %684 = vmatprep.subr.bf16.mxu0 0
      %685 = vmatpush1.bf16.msra.mxu0 %v598
      %686 = vmatprep.subr.bf16.mxu0 0
      %687 = vmatpush1.bf16.msra.mxu0 %v599
      %688 = vmatprep.subr.bf16.mxu0 0
      %689 = vmatpush1.bf16.msra.mxu0 %v600
      %690 = vmatprep.subr.bf16.mxu0 0
      %691 = vmatpush1.bf16.msra.mxu0 %v601
      %692 = vmatprep.subr.bf16.mxu0 0
      %693 = vmatpush1.bf16.msra.mxu0 %v602
      %694 = vmatprep.subr.bf16.mxu0 0
      %695 = vmatpush1.bf16.msra.mxu0 %v603
      %696 = vmatprep.subr.bf16.mxu0 0
      %697 = vmatpush1.bf16.msra.mxu0 %v604
      %698 = vmatprep.subr.bf16.mxu0 0
      %699 = vmatpush1.bf16.msra.mxu0 %v605
      %700 = vmatprep.subr.bf16.mxu0 0
      %701 = vmatpush1.bf16.msra.mxu0 %v606
      %702 = vmatprep.subr.bf16.mxu0 0
      %703 = vmatpush1.bf16.msra.mxu0 %v607
      %704 = vmatprep.subr.bf16.mxu0 0
      %705 = vmatpush1.bf16.msra.mxu0 %v608
      %706 = vmatprep.subr.bf16.mxu0 0
      %707 = vmatpush1.bf16.msra.mxu0 %v609
      %708 = vmatprep.subr.bf16.mxu0 0
      %709 = vmatpush1.bf16.msra.mxu0 %v610
      %710 = vmatprep.subr.bf16.mxu0 0
      %711 = vmatpush1.bf16.msra.mxu0 %v611
      %712 = vmatprep.subr.bf16.mxu0 0
      %713 = vmatpush1.bf16.msra.mxu0 %v612
      %714 = vmatprep.mubr.bf16.mxu0 %v446
      %715 = vmatmul.mubr.bf16.gmra.mrb[0].mxu0 %v445
      %v716 = vpop.f32.mrb[0].mxu0
      %v717 = vadd.f32 %v283, %v716
      %v718 = vpop.f32.mrb[0].mxu0
      %v719 = vpop.f32.mrb[0].mxu0
      %v720 = vadd.f32 %v283, %v719
      %v721 = vpop.f32.mrb[0].mxu0
      %722 = vmatprep.mubr.bf16.mxu0 %v449
      %723 = vmatmul.mubr.bf16.gmra.mrb[0].mxu0 %v448
      %v724 = vpop.f32.mrb[0].mxu0
      %v725 = vadd.f32 %v283, %v724
      %v726 = vpop.f32.mrb[0].mxu0
      %v727 = vpop.f32.mrb[0].mxu0
      %v728 = vadd.f32 %v283, %v727
      %v729 = vpop.f32.mrb[0].mxu0
      %730 = vmatprep.mubr.bf16.mxu0 %v452
      %731 = vmatmul.mubr.bf16.gmra.mrb[0].mxu0 %v451
      %v732 = vpop.f32.mrb[0].mxu0
      %v733 = vadd.f32 %v283, %v732
      %v734 = vpop.f32.mrb[0].mxu0
      %v735 = vpop.f32.mrb[0].mxu0
      %v736 = vadd.f32 %v283, %v735
      %v737 = vpop.f32.mrb[0].mxu0
      %738 = vmatprep.mubr.bf16.mxu0 %v455
      %739 = vmatmul.mubr.bf16.gmra.mrb[0].mxu0 %v454
      %v740 = vpop.f32.mrb[0].mxu0
      %v741 = vadd.f32 %v283, %v740
      %v742 = vpop.f32.mrb[0].mxu0
      %v743 = vpop.f32.mrb[0].mxu0
      %v744 = vadd.f32 %v283, %v743
      %v745 = vpop.f32.mrb[0].mxu0
      %746 = vmatprep.mubr.bf16.mxu0 %v458
      %747 = vmatmul.mubr.bf16.gmra.mrb[0].mxu0 %v457
      %v748 = vpop.f32.mrb[0].mxu0
      %v749 = vadd.f32 %v283, %v748
      %v750 = vpop.f32.mrb[0].mxu0
      %v751 = vpop.f32.mrb[0].mxu0
      %v752 = vadd.f32 %v283, %v751
      %v753 = vpop.f32.mrb[0].mxu0
      %754 = vmatprep.mubr.bf16.mxu0 %v461
      %755 = vmatmul.mubr.bf16.gmra.mrb[0].mxu0 %v460
      %v756 = vpop.f32.mrb[0].mxu0
      %v757 = vadd.f32 %v283, %v756
      %v758 = vpop.f32.mrb[0].mxu0
      %v759 = vpop.f32.mrb[0].mxu0
      %v760 = vadd.f32 %v283, %v759
      %v761 = vpop.f32.mrb[0].mxu0
      %762 = vmatprep.mubr.bf16.mxu0 %v464
      %763 = vmatmul.mubr.bf16.gmra.mrb[0].mxu0 %v463
      %v764 = vpop.f32.mrb[0].mxu0
      %v765 = vadd.f32 %v283, %v764
      %v766 = vpop.f32.mrb[0].mxu0
      %v767 = vpop.f32.mrb[0].mxu0
      %v768 = vadd.f32 %v283, %v767
      %v769 = vpop.f32.mrb[0].mxu0
      %770 = vmatprep.mubr.bf16.mxu0 %v467
      %771 = vmatmul.mubr.bf16.gmra.mrb[0].mxu0 %v466
      %v772 = vpop.f32.mrb[0].mxu0
      %v773 = vadd.f32 %v283, %v772
      %v774 = vpop.f32.mrb[0].mxu0
      %v775 = vpop.f32.mrb[0].mxu0
      %v776 = vadd.f32 %v283, %v775
      %v777 = vpop.f32.mrb[0].mxu0
      %778 = vmatprep.mubr.bf16.mxu0 %v470
      %779 = vmatmul.mubr.bf16.gmra.mrb[0].mxu0 %v469
      %v780 = vpop.f32.mrb[0].mxu0
      %v781 = vadd.f32 %v283, %v780
      %v782 = vpop.f32.mrb[0].mxu0
      %v783 = vpop.f32.mrb[0].mxu0
      %v784 = vadd.f32 %v283, %v783
      %v785 = vpop.f32.mrb[0].mxu0
      %786 = vmatprep.mubr.bf16.mxu0 %v473
      %787 = vmatmul.mubr.bf16.gmra.mrb[0].mxu0 %v472
      %v788 = vpop.f32.mrb[0].mxu0
      %v789 = vadd.f32 %v283, %v788
      %v790 = vpop.f32.mrb[0].mxu0
      %v791 = vpop.f32.mrb[0].mxu0
      %v792 = vadd.f32 %v283, %v791
      %v793 = vpop.f32.mrb[0].mxu0
      %794 = vmatprep.mubr.bf16.mxu0 %v476
      %795 = vmatmul.mubr.bf16.gmra.mrb[0].mxu0 %v475
      %v796 = vpop.f32.mrb[0].mxu0
      %v797 = vadd.f32 %v283, %v796
      %v798 = vpop.f32.mrb[0].mxu0
      %v799 = vpop.f32.mrb[0].mxu0
      %v800 = vadd.f32 %v283, %v799
      %v801 = vpop.f32.mrb[0].mxu0
      %802 = vmatprep.mubr.bf16.mxu0 %v479
      %803 = vmatmul.mubr.bf16.gmra.mrb[0].mxu0 %v478
      %v804 = vpop.f32.mrb[0].mxu0
      %v805 = vadd.f32 %v283, %v804
      %v806 = vpop.f32.mrb[0].mxu0
      %v807 = vpop.f32.mrb[0].mxu0
      %v808 = vadd.f32 %v283, %v807
      %v809 = vpop.f32.mrb[0].mxu0
      %810 = vmatprep.mubr.bf16.mxu0 %v482
      %811 = vmatmul.mubr.bf16.gmra.mrb[0].mxu0 %v481
      %v812 = vpop.f32.mrb[0].mxu0
      %v813 = vadd.f32 %v283, %v812
      %v814 = vpop.f32.mrb[0].mxu0
      %v815 = vpop.f32.mrb[0].mxu0
      %v816 = vadd.f32 %v283, %v815
      %v817 = vpop.f32.mrb[0].mxu0
      %818 = vmatprep.mubr.bf16.mxu0 %v485
      %819 = vmatmul.mubr.bf16.gmra.mrb[0].mxu0 %v484
      %v820 = vpop.f32.mrb[0].mxu0
      %v821 = vadd.f32 %v283, %v820
      %v822 = vpop.f32.mrb[0].mxu0
      %v823 = vpop.f32.mrb[0].mxu0
      %v824 = vadd.f32 %v283, %v823
      %v825 = vpop.f32.mrb[0].mxu0
      %826 = vmatprep.mubr.bf16.mxu0 %v488
      %827 = vmatmul.mubr.bf16.gmra.mrb[0].mxu0 %v487
      %v828 = vpop.f32.mrb[0].mxu0
      %v829 = vadd.f32 %v283, %v828
      %v830 = vpop.f32.mrb[0].mxu0
      %v831 = vpop.f32.mrb[0].mxu0
      %v832 = vadd.f32 %v283, %v831
      %v833 = vpop.f32.mrb[0].mxu0
      %834 = vmatprep.mubr.bf16.mxu0 %v491
      %835 = vmatmul.mubr.bf16.gmra.mrb[0].mxu0 %v490
      %v836 = vpop.f32.mrb[0].mxu0
      %v837 = vadd.f32 %v283, %v836
      %v838 = vpop.f32.mrb[0].mxu0
      %v839 = vpop.f32.mrb[0].mxu0
      %v840 = vadd.f32 %v283, %v839
      %v841 = vpop.f32.mrb[0].mxu0
      %842 = vdwg.mxu0
      %843 = vmatprep.subr.bf16.mxu0 0
      %844 = vmatpush1.bf16.msra.mxu0 %v613
      %845 = vmatprep.subr.bf16.mxu0 0
      %846 = vmatpush1.bf16.msra.mxu0 %v614
      %847 = vmatprep.subr.bf16.mxu0 0
      %848 = vmatpush1.bf16.msra.mxu0 0
      %849 = vmatprep.subr.bf16.mxu0 0
      %850 = vmatpush1.bf16.msra.mxu0 0
      %851 = vmatprep.subr.bf16.mxu0 0
      %852 = vmatpush1.bf16.msra.mxu0 0
      %853 = vmatprep.subr.bf16.mxu0 0
      %854 = vmatpush1.bf16.msra.mxu0 0
      %855 = vmatprep.subr.bf16.mxu0 0
      %856 = vmatpush1.bf16.msra.mxu0 0
      %857 = vmatprep.subr.bf16.mxu0 0
      %858 = vmatpush1.bf16.msra.mxu0 0
      %859 = vmatprep.subr.bf16.mxu0 0
      %860 = vmatpush1.bf16.msra.mxu0 0
      %861 = vmatprep.subr.bf16.mxu0 0
      %862 = vmatpush1.bf16.msra.mxu0 0
      %863 = vmatprep.subr.bf16.mxu0 0
      %864 = vmatpush1.bf16.msra.mxu0 0
      %865 = vmatprep.subr.bf16.mxu0 0
      %866 = vmatpush1.bf16.msra.mxu0 0
      %867 = vmatprep.subr.bf16.mxu0 0
      %868 = vmatpush1.bf16.msra.mxu0 0
      %869 = vmatprep.subr.bf16.mxu0 0
      %870 = vmatpush1.bf16.msra.mxu0 0
      %871 = vmatprep.subr.bf16.mxu0 0
      %872 = vmatpush1.bf16.msra.mxu0 0
      %873 = vmatprep.subr.bf16.mxu0 0
      %874 = vmatpush1.bf16.msra.mxu0 0
      %875 = vmatprep.mubr.bf16.mxu0 0
      %876 = vmatmul.mubr.bf16.gmra.mrb[0].mxu0 %v635
      %v877 = vpop.f32.mrb[0].mxu0
      %v878 = vadd.f32 %v717, %v877
      %v879 = vpop.f32.mrb[0].mxu0
      %v880 = vpop.f32.mrb[0].mxu0
      %v881 = vadd.f32 %v720, %v880
      %v882 = vpop.f32.mrb[0].mxu0
      %883 = vmatprep.mubr.bf16.mxu0 0
      %884 = vmatmul.mubr.bf16.gmra.mrb[0].mxu0 %v638
      %v885 = vpop.f32.mrb[0].mxu0
      %v886 = vadd.f32 %v725, %v885
      %v887 = vpop.f32.mrb[0].mxu0
      %v888 = vpop.f32.mrb[0].mxu0
      %v889 = vadd.f32 %v728, %v888
      %v890 = vpop.f32.mrb[0].mxu0
      %891 = vmatprep.mubr.bf16.mxu0 0
      %892 = vmatmul.mubr.bf16.gmra.mrb[0].mxu0 %v641
      %v893 = vpop.f32.mrb[0].mxu0
      %v894 = vadd.f32 %v733, %v893
      %v895 = vpop.f32.mrb[0].mxu0
      %v896 = vpop.f32.mrb[0].mxu0
      %v897 = vadd.f32 %v736, %v896
      %v898 = vpop.f32.mrb[0].mxu0
      %899 = vmatprep.mubr.bf16.mxu0 0
      %900 = vmatmul.mubr.bf16.gmra.mrb[0].mxu0 %v644
      %v901 = vpop.f32.mrb[0].mxu0
      %v902 = vadd.f32 %v741, %v901
      %v903 = vpop.f32.mrb[0].mxu0
      %v904 = vpop.f32.mrb[0].mxu0
      %v905 = vadd.f32 %v744, %v904
      %v906 = vpop.f32.mrb[0].mxu0
      %907 = vmatprep.mubr.bf16.mxu0 0
      %908 = vmatmul.mubr.bf16.gmra.mrb[0].mxu0 %v647
      %v909 = vpop.f32.mrb[0].mxu0
      %v910 = vadd.f32 %v749, %v909
      %v911 = vpop.f32.mrb[0].mxu0
      %v912 = vpop.f32.mrb[0].mxu0
      %v913 = vadd.f32 %v752, %v912
      %v914 = vpop.f32.mrb[0].mxu0
      %915 = vmatprep.mubr.bf16.mxu0 0
      %916 = vmatmul.mubr.bf16.gmra.mrb[0].mxu0 %v650
      %v917 = vpop.f32.mrb[0].mxu0
      %v918 = vadd.f32 %v757, %v917
      %v919 = vpop.f32.mrb[0].mxu0
      %v920 = vpop.f32.mrb[0].mxu0
      %v921 = vadd.f32 %v760, %v920
      %v922 = vpop.f32.mrb[0].mxu0
      %923 = vmatprep.mubr.bf16.mxu0 0
      %924 = vmatmul.mubr.bf16.gmra.mrb[0].mxu0 %v653
      %v925 = vpop.f32.mrb[0].mxu0
      %v926 = vadd.f32 %v765, %v925
      %v927 = vpop.f32.mrb[0].mxu0
      %v928 = vpop.f32.mrb[0].mxu0
      %v929 = vadd.f32 %v768, %v928
      %v930 = vpop.f32.mrb[0].mxu0
      %931 = vmatprep.mubr.bf16.mxu0 0
      %932 = vmatmul.mubr.bf16.gmra.mrb[0].mxu0 %v656
      %v933 = vpop.f32.mrb[0].mxu0
      %v934 = vadd.f32 %v773, %v933
      %v935 = vpop.f32.mrb[0].mxu0
      %v936 = vpop.f32.mrb[0].mxu0
      %v937 = vadd.f32 %v776, %v936
      %v938 = vpop.f32.mrb[0].mxu0
      %939 = vmatprep.mubr.bf16.mxu0 0
      %940 = vmatmul.mubr.bf16.gmra.mrb[0].mxu0 %v659
      %v941 = vpop.f32.mrb[0].mxu0
      %v942 = vadd.f32 %v781, %v941
      %v943 = vpop.f32.mrb[0].mxu0
      %v944 = vpop.f32.mrb[0].mxu0
      %v945 = vadd.f32 %v784, %v944
      %v946 = vpop.f32.mrb[0].mxu0
      %947 = vmatprep.mubr.bf16.mxu0 0
      %948 = vmatmul.mubr.bf16.gmra.mrb[0].mxu0 %v662
      %v949 = vpop.f32.mrb[0].mxu0
      %v950 = vadd.f32 %v789, %v949
      %v951 = vpop.f32.mrb[0].mxu0
      %v952 = vpop.f32.mrb[0].mxu0
      %v953 = vadd.f32 %v792, %v952
      %v954 = vpop.f32.mrb[0].mxu0
      %955 = vmatprep.mubr.bf16.mxu0 0
      %956 = vmatmul.mubr.bf16.gmra.mrb[0].mxu0 %v665
      %v957 = vpop.f32.mrb[0].mxu0
      %v958 = vadd.f32 %v797, %v957
      %v959 = vpop.f32.mrb[0].mxu0
      %v960 = vpop.f32.mrb[0].mxu0
      %v961 = vadd.f32 %v800, %v960
      %v962 = vpop.f32.mrb[0].mxu0
      %963 = vmatprep.mubr.bf16.mxu0 0
      %964 = vmatmul.mubr.bf16.gmra.mrb[0].mxu0 %v668
      %v965 = vpop.f32.mrb[0].mxu0
      %v966 = vadd.f32 %v805, %v965
      %v967 = vpop.f32.mrb[0].mxu0
      %v968 = vpop.f32.mrb[0].mxu0
      %v969 = vadd.f32 %v808, %v968
      %v970 = vpop.f32.mrb[0].mxu0
      %971 = vmatprep.mubr.bf16.mxu0 0
      %972 = vmatmul.mubr.bf16.gmra.mrb[0].mxu0 %v671
      %v973 = vpop.f32.mrb[0].mxu0
      %v974 = vadd.f32 %v813, %v973
      %v975 = vpop.f32.mrb[0].mxu0
      %v976 = vpop.f32.mrb[0].mxu0
      %v977 = vadd.f32 %v816, %v976
      %v978 = vpop.f32.mrb[0].mxu0
      %979 = vmatprep.mubr.bf16.mxu0 0
      %980 = vmatmul.mubr.bf16.gmra.mrb[0].mxu0 %v674
      %v981 = vpop.f32.mrb[0].mxu0
      %v982 = vadd.f32 %v821, %v981
      %v983 = vpop.f32.mrb[0].mxu0
      %v984 = vpop.f32.mrb[0].mxu0
      %v985 = vadd.f32 %v824, %v984
      %v986 = vpop.f32.mrb[0].mxu0
      %987 = vmatprep.mubr.bf16.mxu0 0
      %988 = vmatmul.mubr.bf16.gmra.mrb[0].mxu0 %v677
      %v989 = vpop.f32.mrb[0].mxu0
      %v990 = vadd.f32 %v829, %v989
      %v991 = vpop.f32.mrb[0].mxu0
      %v992 = vpop.f32.mrb[0].mxu0
      %v993 = vadd.f32 %v832, %v992
      %v994 = vpop.f32.mrb[0].mxu0
      %995 = vmatprep.mubr.bf16.mxu0 0
      %996 = vmatmul.mubr.bf16.gmra.mrb[0].mxu0 %v680
      %v997 = vpop.f32.mrb[0].mxu0
      %v998 = vadd.f32 %v837, %v997
      %v999 = vpop.f32.mrb[0].mxu0
      %v1000 = vpop.f32.mrb[0].mxu0
      %v1001 = vadd.f32 %v840, %v1000
      %v1002 = vpop.f32.mrb[0].mxu0
      %1003 = vdwg.mxu0
      %v1004 = vxor.u32 %v878, 2147483648
      %v1005 = vxor.u32 %v881, 2147483648
      %v1006 = vxor.u32 %v886, 2147483648
      %v1007 = vxor.u32 %v889, 2147483648
      %v1008 = vxor.u32 %v894, 2147483648
      %v1009 = vxor.u32 %v897, 2147483648
      %v1010 = vxor.u32 %v902, 2147483648
      %v1011 = vxor.u32 %v905, 2147483648
      %v1012 = vxor.u32 %v910, 2147483648
      %v1013 = vxor.u32 %v913, 2147483648
      %v1014 = vxor.u32 %v918, 2147483648
      %v1015 = vxor.u32 %v921, 2147483648
      %v1016 = vxor.u32 %v926, 2147483648
      %v1017 = vxor.u32 %v929, 2147483648
      %v1018 = vxor.u32 %v934, 2147483648
      %v1019 = vxor.u32 %v937, 2147483648
      %v1020 = vxor.u32 %v942, 2147483648
      %v1021 = vxor.u32 %v945, 2147483648
      %v1022 = vxor.u32 %v950, 2147483648
      %v1023 = vxor.u32 %v953, 2147483648
      %v1024 = vxor.u32 %v958, 2147483648
      %v1025 = vxor.u32 %v961, 2147483648
      %v1026 = vxor.u32 %v966, 2147483648
      %v1027 = vxor.u32 %v969, 2147483648
      %v1028 = vxor.u32 %v974, 2147483648
      %v1029 = vxor.u32 %v977, 2147483648
      %v1030 = vxor.u32 %v982, 2147483648
      %v1031 = vxor.u32 %v985, 2147483648
      %v1032 = vxor.u32 %v990, 2147483648
      %v1033 = vxor.u32 %v993, 2147483648
      %v1034 = vxor.u32 %v998, 2147483648
      %v1035 = vxor.u32 %v1001, 2147483648
      %v1036 = vmul.f32 %v1004, 1.442695
      %v1037 = vpow.pop %v1036
      %v1038 = vmul.f32 %v1005, 1.442695
      %v1039 = vpow.pop %v1038
      %v1040 = vmul.f32 %v1006, 1.442695
      %v1041 = vpow.pop %v1040
      %v1042 = vmul.f32 %v1007, 1.442695
      %v1043 = vpow.pop %v1042
      %v1044 = vmul.f32 %v1008, 1.442695
      %v1045 = vpow.pop %v1044
      %v1046 = vmul.f32 %v1009, 1.442695
      %v1047 = vpow.pop %v1046
      %v1048 = vmul.f32 %v1010, 1.442695
      %v1049 = vpow.pop %v1048
      %v1050 = vmul.f32 %v1011, 1.442695
      %v1051 = vpow.pop %v1050
      %v1052 = vmul.f32 %v1012, 1.442695
      %v1053 = vpow.pop %v1052
      %v1054 = vmul.f32 %v1013, 1.442695
      %v1055 = vpow.pop %v1054
      %v1056 = vmul.f32 %v1014, 1.442695
      %v1057 = vpow.pop %v1056
      %v1058 = vmul.f32 %v1015, 1.442695
      %v1059 = vpow.pop %v1058
      %v1060 = vmul.f32 %v1016, 1.442695
      %v1061 = vpow.pop %v1060
      %v1062 = vmul.f32 %v1017, 1.442695
      %v1063 = vpow.pop %v1062
      %v1064 = vmul.f32 %v1018, 1.442695
      %v1065 = vpow.pop %v1064
      %v1066 = vmul.f32 %v1019, 1.442695
      %v1067 = vpow.pop %v1066
      %v1068 = vmul.f32 %v1020, 1.442695
      %v1069 = vpow.pop %v1068
      %v1070 = vmul.f32 %v1021, 1.442695
      %v1071 = vpow.pop %v1070
      %v1072 = vmul.f32 %v1022, 1.442695
      %v1073 = vpow.pop %v1072
      %v1074 = vmul.f32 %v1023, 1.442695
      %v1075 = vpow.pop %v1074
      %v1076 = vmul.f32 %v1024, 1.442695
      %v1077 = vpow.pop %v1076
      %v1078 = vmul.f32 %v1025, 1.442695
      %v1079 = vpow.pop %v1078
      %v1080 = vmul.f32 %v1026, 1.442695
      %v1081 = vpow.pop %v1080
      %v1082 = vmul.f32 %v1027, 1.442695
      %v1083 = vpow.pop %v1082
      %v1084 = vmul.f32 %v1028, 1.442695
      %v1085 = vpow.pop %v1084
      %v1086 = vmul.f32 %v1029, 1.442695
      %v1087 = vpow.pop %v1086
      %v1088 = vmul.f32 %v1030, 1.442695
      %v1089 = vpow.pop %v1088
      %v1090 = vmul.f32 %v1031, 1.442695
      %v1091 = vpow.pop %v1090
      %v1092 = vmul.f32 %v1032, 1.442695
      %v1093 = vpow.pop %v1092
      %v1094 = vmul.f32 %v1033, 1.442695
      %v1095 = vpow.pop %v1094
      %v1096 = vmul.f32 %v1034, 1.442695
      %v1097 = vpow.pop %v1096
      %v1098 = vmul.f32 %v1035, 1.442695
      %v1099 = vpow.pop %v1098
      %v1100 = vadd.f32 %v1037, 1.0
      %v1101 = vadd.f32 %v1039, 1.0
      %v1102 = vadd.f32 %v1041, 1.0
      %v1103 = vadd.f32 %v1043, 1.0
      %v1104 = vadd.f32 %v1045, 1.0
      %v1105 = vadd.f32 %v1047, 1.0
      %v1106 = vadd.f32 %v1049, 1.0
      %v1107 = vadd.f32 %v1051, 1.0
      %v1108 = vadd.f32 %v1053, 1.0
      %v1109 = vadd.f32 %v1055, 1.0
      %v1110 = vadd.f32 %v1057, 1.0
      %v1111 = vadd.f32 %v1059, 1.0
      %v1112 = vadd.f32 %v1061, 1.0
      %v1113 = vadd.f32 %v1063, 1.0
      %v1114 = vadd.f32 %v1065, 1.0
      %v1115 = vadd.f32 %v1067, 1.0
      %v1116 = vadd.f32 %v1069, 1.0
      %v1117 = vadd.f32 %v1071, 1.0
      %v1118 = vadd.f32 %v1073, 1.0
      %v1119 = vadd.f32 %v1075, 1.0
      %v1120 = vadd.f32 %v1077, 1.0
      %v1121 = vadd.f32 %v1079, 1.0
      %v1122 = vadd.f32 %v1081, 1.0
      %v1123 = vadd.f32 %v1083, 1.0
      %v1124 = vadd.f32 %v1085, 1.0
      %v1125 = vadd.f32 %v1087, 1.0
      %v1126 = vadd.f32 %v1089, 1.0
      %v1127 = vadd.f32 %v1091, 1.0
      %v1128 = vadd.f32 %v1093, 1.0
      %v1129 = vadd.f32 %v1095, 1.0
      %v1130 = vadd.f32 %v1097, 1.0
      %v1131 = vadd.f32 %v1099, 1.0
      %v1132 = vrcp.pop %v1100
      %v1133 = vmul.f32 1.0, %v1132
      %v1134 = vrcp.pop %v1101
      %v1135 = vmul.f32 1.0, %v1134
      %v1136 = vrcp.pop %v1102
      %v1137 = vmul.f32 1.0, %v1136
      %v1138 = vrcp.pop %v1103
      %v1139 = vmul.f32 1.0, %v1138
      %v1140 = vrcp.pop %v1104
      %v1141 = vmul.f32 1.0, %v1140
      %v1142 = vrcp.pop %v1105
      %v1143 = vmul.f32 1.0, %v1142
      %v1144 = vrcp.pop %v1106
      %v1145 = vmul.f32 1.0, %v1144
      %v1146 = vrcp.pop %v1107
      %v1147 = vmul.f32 1.0, %v1146
      %v1148 = vrcp.pop %v1108
      %v1149 = vmul.f32 1.0, %v1148
      %v1150 = vrcp.pop %v1109
      %v1151 = vmul.f32 1.0, %v1150
      %v1152 = vrcp.pop %v1110
      %v1153 = vmul.f32 1.0, %v1152
      %v1154 = vrcp.pop %v1111
      %v1155 = vmul.f32 1.0, %v1154
      %v1156 = vrcp.pop %v1112
      %v1157 = vmul.f32 1.0, %v1156
      %v1158 = vrcp.pop %v1113
      %v1159 = vmul.f32 1.0, %v1158
      %v1160 = vrcp.pop %v1114
      %v1161 = vmul.f32 1.0, %v1160
      %v1162 = vrcp.pop %v1115
      %v1163 = vmul.f32 1.0, %v1162
      %v1164 = vrcp.pop %v1116
      %v1165 = vmul.f32 1.0, %v1164
      %v1166 = vrcp.pop %v1117
      %v1167 = vmul.f32 1.0, %v1166
      %v1168 = vrcp.pop %v1118
      %v1169 = vmul.f32 1.0, %v1168
      %v1170 = vrcp.pop %v1119
      %v1171 = vmul.f32 1.0, %v1170
      %v1172 = vrcp.pop %v1120
      %v1173 = vmul.f32 1.0, %v1172
      %v1174 = vrcp.pop %v1121
      %v1175 = vmul.f32 1.0, %v1174
      %v1176 = vrcp.pop %v1122
      %v1177 = vmul.f32 1.0, %v1176
      %v1178 = vrcp.pop %v1123
      %v1179 = vmul.f32 1.0, %v1178
      %v1180 = vrcp.pop %v1124
      %v1181 = vmul.f32 1.0, %v1180
      %v1182 = vrcp.pop %v1125
      %v1183 = vmul.f32 1.0, %v1182
      %v1184 = vrcp.pop %v1126
      %v1185 = vmul.f32 1.0, %v1184
      %v1186 = vrcp.pop %v1127
      %v1187 = vmul.f32 1.0, %v1186
      %v1188 = vrcp.pop %v1128
      %v1189 = vmul.f32 1.0, %v1188
      %v1190 = vrcp.pop %v1129
      %v1191 = vmul.f32 1.0, %v1190
      %v1192 = vrcp.pop %v1130
      %v1193 = vmul.f32 1.0, %v1192
      %v1194 = vrcp.pop %v1131
      %v1195 = vmul.f32 1.0, %v1194
      %vm1196 = vcmask 31744
      %1197 = vst.msk [vmem:[%s175] sm:$0xff] %vm1196, %v1133
      %1198 = vst.msk [vmem:[%s175 + $0x8] sm:$0xff] %vm1196, %v1135
      %1199 = vst.msk [vmem:[%s175 + $0x10] sm:$0xff] %vm1196, %v1137
      %1200 = vst.msk [vmem:[%s175 + $0x18] sm:$0xff] %vm1196, %v1139
      %1201 = vst.msk [vmem:[%s175 + $0x20] sm:$0xff] %vm1196, %v1141
      %1202 = vst.msk [vmem:[%s175 + $0x28] sm:$0xff] %vm1196, %v1143
      %1203 = vst.msk [vmem:[%s175 + $0x30] sm:$0xff] %vm1196, %v1145
      %1204 = vst.msk [vmem:[%s175 + $0x38] sm:$0xff] %vm1196, %v1147
      %1205 = vst.msk [vmem:[%s175 + $0x40] sm:$0xff] %vm1196, %v1149
      %1206 = vst.msk [vmem:[%s175 + $0x48] sm:$0xff] %vm1196, %v1151
      %1207 = vst.msk [vmem:[%s175 + $0x50] sm:$0xff] %vm1196, %v1153
      %1208 = vst.msk [vmem:[%s175 + $0x58] sm:$0xff] %vm1196, %v1155
      %1209 = vst.msk [vmem:[%s175 + $0x60] sm:$0xff] %vm1196, %v1157
      %1210 = vst.msk [vmem:[%s175 + $0x68] sm:$0xff] %vm1196, %v1159
      %1211 = vst.msk [vmem:[%s175 + $0x70] sm:$0xff] %vm1196, %v1161
      %1212 = vst.msk [vmem:[%s175 + $0x78] sm:$0xff] %vm1196, %v1163
      %1213 = vst.msk [vmem:[%s175 + $0x80] sm:$0xff] %vm1196, %v1165
      %1214 = vst.msk [vmem:[%s175 + $0x88] sm:$0xff] %vm1196, %v1167
      %1215 = vst.msk [vmem:[%s175 + $0x90] sm:$0xff] %vm1196, %v1169
      %1216 = vst.msk [vmem:[%s175 + $0x98] sm:$0xff] %vm1196, %v1171
      %1217 = vst.msk [vmem:[%s175 + $0xa0] sm:$0xff] %vm1196, %v1173
      %1218 = vst.msk [vmem:[%s175 + $0xa8] sm:$0xff] %vm1196, %v1175
      %1219 = vst.msk [vmem:[%s175 + $0xb0] sm:$0xff] %vm1196, %v1177
      %1220 = vst.msk [vmem:[%s175 + $0xb8] sm:$0xff] %vm1196, %v1179
      %1221 = vst.msk [vmem:[%s175 + $0xc0] sm:$0xff] %vm1196, %v1181
      %1222 = vst.msk [vmem:[%s175 + $0xc8] sm:$0xff] %vm1196, %v1183
      %1223 = vst.msk [vmem:[%s175 + $0xd0] sm:$0xff] %vm1196, %v1185
      %1224 = vst.msk [vmem:[%s175 + $0xd8] sm:$0xff] %vm1196, %v1187
      %1225 = vst.msk [vmem:[%s175 + $0xe0] sm:$0xff] %vm1196, %v1189
      %1226 = vst.msk [vmem:[%s175 + $0xe8] sm:$0xff] %vm1196, %v1191
      %1227 = vst.msk [vmem:[%s175 + $0xf0] sm:$0xff] %vm1196, %v1193
      %1228 = vst.msk [vmem:[%s175 + $0xf8] sm:$0xff] %vm1196, %v1195
      %s1229 = smul.u32 32, %s14
      %p1230 = scmp.lt.s32.totalorder %s1229, 63
      %s1231 = scalar_select %p1230, %s1229, 63
      %s1232 = smul.addr %s1231, 8
      %s1233 = scalar_lea.vmem %s3, %s1232
      // Predicated region
      $region33: #{forward.9} parent=31 // pred_check
        %p1234 = pneg %p100
      $region34: #{forward.9} parent=31 // pred_check_branch
        %1236 = sbr.rel (%p1234) target = $region36
      $region35: #{forward.9} parent=31 // pred_region
        %s1237 = smul.u32 32, %s14
      $region36: #{forward.9} parent=31 // pred_fallthru
        _
    $region32: #{forward.9} parent=5 // pred_fallthru
      _
    %p1238 = scmp.le.s32.totalorder 2, %s9
    // Predicated region
    $region37: #{forward.9} parent=5 // pred_check
      %p1239 = pneg %p1238
    $region38: #{forward.9} parent=5 // pred_check_branch
      %1241 = sbr.rel (%p1239) target = $region40
    $region39: #{forward.9} parent=5 // pred_region
      %s1242 = ssub.s32 %s9, 2
      // Predicated region
      $region41: #{forward.9} parent=39 // pred_check
        %p1243 = pneg %p106
      $region42: #{forward.9} parent=39 // pred_check_branch
        %1245 = sbr.rel (%p1243) target = $region44
      $region43: #{forward.9} parent=39 // pred_region
        %s1246 = smul.u32 32, %s15
        %p1247 = scmp.lt.s32.totalorder %s1246, 63
        %s1248 = scalar_select %p1247, %s1246, 63
        %s1249 = smul.addr %s1248, 8
        %s1250 = scalar_lea.vmem %s3, %s1249
      $region44: #{forward.9} parent=39 // pred_fallthru
        _
    $region40: #{forward.9} parent=5 // pred_fallthru
      _
  $region6: #{forward.9} parent=0 // loop_footer
    %s13 = sadd.s32 1, %s9
  $region7: #{forward.9} parent=0 // loop_footer_branch
    %8 = sbr.rel target = $region3
  $region8: #{forward.9} parent=0 // loop_exit
    _

// kernel: forward.7
$region0: #{forward.7}
  #allocation0 [shape = 'u32[]', space=smem, size = 0x4, offset = 0x4, fixed_abs, tag = 'smem constant byte address 0x4 - core index']
  #allocation1 [shape = 'u32[144,128]{1,0:T(1,128)}', space=vmem, size = 0x12000, scoped, tag = 'internal scratch']
  #allocation2 [shape = 'bf16[16,2048]{1,0:T(16,128)(2,1)}', space=vmem, size = 0x10000, scoped, tag = 'scratch operand']
  #allocation3 [shape = 'bf16[32,1152]{1,0:T(16,128)(2,1)}', space=vmem, size = 0x12000, scoped, tag = 'scratch operand']
  %s0 = inlined_call_operand.vmem [shape: bf16[32,1024], index: 0, kind: input, shape index: {}]
  %s1 = inlined_call_operand.vmem [shape: f32[16,16], index: 1, kind: input, shape index: {}]
  %s2 = inlined_call_operand.vmem [shape: bf16[16,16], index: 2, kind: input, shape index: {}]
  %s3 = inlined_call_operand.vmem [shape: bf16[1024,128], index: 3, kind: input, shape index: {}]
  %s4 = inlined_call_operand.vmem [shape: f32[1,128], index: 4, kind: input, shape index: {}]
  %s5 = inlined_call_operand.vmem [shape: bf16[2048,256], index: 5, kind: input, shape index: {}]
  %s6 = inlined_call_operand.vmem [shape: f32[1,256], index: 6, kind: input, shape index: {}]
  %s7 = inlined_call_operand.vmem [shape: bf16[256,32], index: 7, kind: input, shape index: {}]
  %s8 = inlined_call_operand.vmem [shape: f32[1,32], index: 8, kind: input, shape index: {}]
  %s9 = inlined_call_operand.vmem [shape: bf16[16,256], index: 9, kind: input, shape index: {}]
  %s10 = inlined_call_operand.vmem [shape: bf16[16,256], index: 10, kind: input, shape index: {}]
  %s11 = inlined_call_operand.vmem [shape: f32[1,256], index: 11, kind: input, shape index: {}]
  %s12 = inlined_call_operand.vmem [shape: bf16[256,2048], index: 12, kind: input, shape index: {}]
  %s13 = inlined_call_operand.vmem [shape: f32[1,2048], index: 13, kind: input, shape index: {}]
  %s14 = inlined_call_operand.vmem [shape: bf16[1152,256], index: 14, kind: input, shape index: {}]
  %s15 = inlined_call_operand.vmem [shape: f32[1,256], index: 15, kind: input, shape index: {}]
  %s16 = inlined_call_operand.vmem [shape: f32[16,32], index: 16, kind: output, shape index: {0}]
  %s17 = inlined_call_operand.vmem [shape: bf16[32,256], index: 17, kind: output, shape index: {1}]
  %18 = xla_tuple %s16, %s17
  %s19 = sld [smem:[#allocation0]]
  $region82: #{forward.7} parent=0
    _
  %s21 = ssub.s32 1, %s19
  %s22 = scalar_select 0, %s21, %s19
  // Predicated region
  $region2: #{forward.7} parent=0 // pred_check
    _
  $region3: #{forward.7} parent=0 // pred_check_branch
    %24 = sbr.rel (0) target = $region5
  $region4: #{forward.7} parent=0 // pred_region
    _
  $region5: #{forward.7} parent=0 // pred_fallthru
    _
  // Predicated region
  $region6: #{forward.7} parent=0 // pred_check
    _
  $region7: #{forward.7} parent=0 // pred_check_branch
    %26 = sbr.rel (0) target = $region9
  $region8: #{forward.7} parent=0 // pred_region
    _
  $region9: #{forward.7} parent=0 // pred_fallthru
    _
  // Predicated region
  $region10: #{forward.7} parent=0 // pred_check
    _
  $region11: #{forward.7} parent=0 // pred_check_branch
    %28 = sbr.rel (0) target = $region13
  $region12: #{forward.7} parent=0 // pred_region
    _
  $region13: #{forward.7} parent=0 // pred_fallthru
    _
  // Predicated region
  $region14: #{forward.7} parent=0 // pred_check
    _
  $region15: #{forward.7} parent=0 // pred_check_branch
    %30 = sbr.rel (0) target = $region17
  $region16: #{forward.7} parent=0 // pred_region
    _
  $region17: #{forward.7} parent=0 // pred_fallthru
    _
  // Predicated region
  $region18: #{forward.7} parent=0 // pred_check
    _
  $region19: #{forward.7} parent=0 // pred_check_branch
    %32 = sbr.rel (0) target = $region21
  $region20: #{forward.7} parent=0 // pred_region
    _
  $region21: #{forward.7} parent=0 // pred_fallthru
    _
  // Predicated region
  $region22: #{forward.7} parent=0 // pred_check
    _
  $region23: #{forward.7} parent=0 // pred_check_branch
    %34 = sbr.rel (0) target = $region25
  $region24: #{forward.7} parent=0 // pred_region
    _
  $region25: #{forward.7} parent=0 // pred_fallthru
    _
  // Predicated region
  $region26: #{forward.7} parent=0 // pred_check
    _
  $region27: #{forward.7} parent=0 // pred_check_branch
    %36 = sbr.rel (0) target = $region29
  $region28: #{forward.7} parent=0 // pred_region
    _
  $region29: #{forward.7} parent=0 // pred_fallthru
    _
  // Predicated region
  $region30: #{forward.7} parent=0 // pred_check
    _
  $region31: #{forward.7} parent=0 // pred_check_branch
    %38 = sbr.rel (0) target = $region33
  $region32: #{forward.7} parent=0 // pred_region
    _
  $region33: #{forward.7} parent=0 // pred_fallthru
    _
  // Predicated region
  $region34: #{forward.7} parent=0 // pred_check
    _
  $region35: #{forward.7} parent=0 // pred_check_branch
    %40 = sbr.rel (0) target = $region37
  $region36: #{forward.7} parent=0 // pred_region
    _
  $region37: #{forward.7} parent=0 // pred_fallthru
    _
  // Predicated region
  $region38: #{forward.7} parent=0 // pred_check
    _
  $region39: #{forward.7} parent=0 // pred_check_branch
    %42 = sbr.rel (0) target = $region41
  $region40: #{forward.7} parent=0 // pred_region
    _
  $region41: #{forward.7} parent=0 // pred_fallthru
    _
  // Predicated region
  $region42: #{forward.7} parent=0 // pred_check
    _
  $region43: #{forward.7} parent=0 // pred_check_branch
    %44 = sbr.rel (0) target = $region45
  $region44: #{forward.7} parent=0 // pred_region
    _
  $region45: #{forward.7} parent=0 // pred_fallthru
    _
  // Predicated region
  $region46: #{forward.7} parent=0 // pred_check
    _
  $region47: #{forward.7} parent=0 // pred_check_branch
    %46 = sbr.rel (0) target = $region49
  $region48: #{forward.7} parent=0 // pred_region
    _
  $region49: #{forward.7} parent=0 // pred_fallthru
    _
  // Predicated region
  $region50: #{forward.7} parent=0 // pred_check
    _
  $region51: #{forward.7} parent=0 // pred_check_branch
    %48 = sbr.rel (0) target = $region53
  $region52: #{forward.7} parent=0 // pred_region
    _
  $region53: #{forward.7} parent=0 // pred_fallthru
    _
  // Predicated region
  $region54: #{forward.7} parent=0 // pred_check
    _
  $region55: #{forward.7} parent=0 // pred_check_branch
    %50 = sbr.rel (0) target = $region57
  $region56: #{forward.7} parent=0 // pred_region
    _
  $region57: #{forward.7} parent=0 // pred_fallthru
    _
  // Predicated region
  $region58: #{forward.7} parent=0 // pred_check
    _
  $region59: #{forward.7} parent=0 // pred_check_branch
    %52 = sbr.rel (0) target = $region61
  $region60: #{forward.7} parent=0 // pred_region
    _
  $region61: #{forward.7} parent=0 // pred_fallthru
    _
  // Predicated region
  $region62: #{forward.7} parent=0 // pred_check
    _
  $region63: #{forward.7} parent=0 // pred_check_branch
    %54 = sbr.rel (0) target = $region65
  $region64: #{forward.7} parent=0 // pred_region
    _
  $region65: #{forward.7} parent=0 // pred_fallthru
    _
  %v56 = vld [vmem:[%s0] sm:$0xff]
  %v57 = vld [vmem:[%s0 + $0x8] sm:$0xff]
  %v58 = vld [vmem:[%s0 + $0x10] sm:$0xff]
  %v59 = vld [vmem:[%s0 + $0x18] sm:$0xff]
  %v60 = vld [vmem:[%s0 + $0x20] sm:$0xff]
  %v61 = vld [vmem:[%s0 + $0x28] sm:$0xff]
  %v62 = vld [vmem:[%s0 + $0x30] sm:$0xff]
  %v63 = vld [vmem:[%s0 + $0x38] sm:$0xff]
  %v64 = vld [vmem:[%s0 + $0x40] sm:$0xff]
  %v65 = vld [vmem:[%s0 + $0x48] sm:$0xff]
  %v66 = vld [vmem:[%s0 + $0x50] sm:$0xff]
  %v67 = vld [vmem:[%s0 + $0x58] sm:$0xff]
  %v68 = vld [vmem:[%s0 + $0x60] sm:$0xff]
  %v69 = vld [vmem:[%s0 + $0x68] sm:$0xff]
  %v70 = vld [vmem:[%s0 + $0x70] sm:$0xff]
  %v71 = vld [vmem:[%s0 + $0x78] sm:$0xff]
  %v72 = vld [vmem:[%s3] sm:$0xf]
  %v73 = vld [vmem:[%s3 + $0x4] sm:$0xf]
  %v74 = vld [vmem:[%s3 + $0x8] sm:$0xf]
  %v75 = vld [vmem:[%s3 + $0xc] sm:$0xf]
  %v76 = vld [vmem:[%s3 + $0x10] sm:$0xf]
  %v77 = vld [vmem:[%s3 + $0x14] sm:$0xf]
  %v78 = vld [vmem:[%s3 + $0x18] sm:$0xf]
  %v79 = vld [vmem:[%s3 + $0x1c] sm:$0xf]
  %v80 = vld [vmem:[%s3 + $0x20] sm:$0xf]
  %v81 = vld [vmem:[%s3 + $0x24] sm:$0xf]
  %v82 = vld [vmem:[%s3 + $0x28] sm:$0xf]
  %v83 = vld [vmem:[%s3 + $0x2c] sm:$0xf]
  %v84 = vld [vmem:[%s3 + $0x30] sm:$0xf]
  %v85 = vld [vmem:[%s3 + $0x34] sm:$0xf]
  %v86 = vld [vmem:[%s3 + $0x38] sm:$0xf]
  %v87 = vld [vmem:[%s3 + $0x3c] sm:$0xf]
  %v88 = vld [vmem:[%s3 + $0x40] sm:$0xf]
  %v89 = vld [vmem:[%s3 + $0x44] sm:$0xf]
  %v90 = vld [vmem:[%s3 + $0x48] sm:$0xf]
  %v91 = vld [vmem:[%s3 + $0x4c] sm:$0xf]
  %v92 = vld [vmem:[%s3 + $0x50] sm:$0xf]
  %v93 = vld [vmem:[%s3 + $0x54] sm:$0xf]
  %v94 = vld [vmem:[%s3 + $0x58] sm:$0xf]
  %v95 = vld [vmem:[%s3 + $0x5c] sm:$0xf]
  %v96 = vld [vmem:[%s3 + $0x60] sm:$0xf]
  %v97 = vld [vmem:[%s3 + $0x64] sm:$0xf]
  %v98 = vld [vmem:[%s3 + $0x68] sm:$0xf]
  %v99 = vld [vmem:[%s3 + $0x6c] sm:$0xf]
  %v100 = vld [vmem:[%s3 + $0x70] sm:$0xf]
  %v101 = vld [vmem:[%s3 + $0x74] sm:$0xf]
  %v102 = vld [vmem:[%s3 + $0x78] sm:$0xf]
  %v103 = vld [vmem:[%s3 + $0x7c] sm:$0xf]
  %v104 = vld [vmem:[%s3 + $0x80] sm:$0xf]
  %v105 = vld [vmem:[%s3 + $0x84] sm:$0xf]
  %v106 = vld [vmem:[%s3 + $0x88] sm:$0xf]
  %v107 = vld [vmem:[%s3 + $0x8c] sm:$0xf]
  %v108 = vld [vmem:[%s3 + $0x90] sm:$0xf]
  %v109 = vld [vmem:[%s3 + $0x94] sm:$0xf]
  %v110 = vld [vmem:[%s3 + $0x98] sm:$0xf]
  %v111 = vld [vmem:[%s3 + $0x9c] sm:$0xf]
  %v112 = vld [vmem:[%s3 + $0xa0] sm:$0xf]
  %v113 = vld [vmem:[%s3 + $0xa4] sm:$0xf]
  %v114 = vld [vmem:[%s3 + $0xa8] sm:$0xf]
  %v115 = vld [vmem:[%s3 + $0xac] sm:$0xf]
  %v116 = vld [vmem:[%s3 + $0xb0] sm:$0xf]
  %v117 = vld [vmem:[%s3 + $0xb4] sm:$0xf]
  %v118 = vld [vmem:[%s3 + $0xb8] sm:$0xf]
  %v119 = vld [vmem:[%s3 + $0xbc] sm:$0xf]
  %v120 = vld [vmem:[%s3 + $0xc0] sm:$0xf]
  %v121 = vld [vmem:[%s3 + $0xc4] sm:$0xf]
  %v122 = vld [vmem:[%s3 + $0xc8] sm:$0xf]
  %v123 = vld [vmem:[%s3 + $0xcc] sm:$0xf]
  %v124 = vld [vmem:[%s3 + $0xd0] sm:$0xf]
  %v125 = vld [vmem:[%s3 + $0xd4] sm:$0xf]
  %v126 = vld [vmem:[%s3 + $0xd8] sm:$0xf]
  %v127 = vld [vmem:[%s3 + $0xdc] sm:$0xf]
  %v128 = vld [vmem:[%s3 + $0xe0] sm:$0xf]
  %v129 = vld [vmem:[%s3 + $0xe4] sm:$0xf]
  %v130 = vld [vmem:[%s3 + $0xe8] sm:$0xf]
  %v131 = vld [vmem:[%s3 + $0xec] sm:$0xf]
  %v132 = vld [vmem:[%s3 + $0xf0] sm:$0xf]
  %v133 = vld [vmem:[%s3 + $0xf4] sm:$0xf]
  %v134 = vld [vmem:[%s3 + $0xf8] sm:$0xf]
  %v135 = vld [vmem:[%s3 + $0xfc] sm:$0xf]
  %v136 = vld [vmem:[%s3 + $0x100] sm:$0xf]
  %v137 = vld [vmem:[%s3 + $0x104] sm:$0xf]
  %v138 = vld [vmem:[%s3 + $0x108] sm:$0xf]
  %v139 = vld [vmem:[%s3 + $0x10c] sm:$0xf]
  %v140 = vld [vmem:[%s3 + $0x110] sm:$0xf]
  %v141 = vld [vmem:[%s3 + $0x114] sm:$0xf]
  %v142 = vld [vmem:[%s3 + $0x118] sm:$0xf]
  %v143 = vld [vmem:[%s3 + $0x11c] sm:$0xf]
  %v144 = vld [vmem:[%s3 + $0x120] sm:$0xf]
  %v145 = vld [vmem:[%s3 + $0x124] sm:$0xf]
  %v146 = vld [vmem:[%s3 + $0x128] sm:$0xf]
  %v147 = vld [vmem:[%s3 + $0x12c] sm:$0xf]
  %v148 = vld [vmem:[%s3 + $0x130] sm:$0xf]
  %v149 = vld [vmem:[%s3 + $0x134] sm:$0xf]
  %v150 = vld [vmem:[%s3 + $0x138] sm:$0xf]
  %v151 = vld [vmem:[%s3 + $0x13c] sm:$0xf]
  %v152 = vld [vmem:[%s3 + $0x140] sm:$0xf]
  %v153 = vld [vmem:[%s3 + $0x144] sm:$0xf]
  %v154 = vld [vmem:[%s3 + $0x148] sm:$0xf]
  %v155 = vld [vmem:[%s3 + $0x14c] sm:$0xf]
  %v156 = vld [vmem:[%s3 + $0x150] sm:$0xf]
  %v157 = vld [vmem:[%s3 + $0x154] sm:$0xf]
  %v158 = vld [vmem:[%s3 + $0x158] sm:$0xf]
  %v159 = vld [vmem:[%s3 + $0x15c] sm:$0xf]
  %v160 = vld [vmem:[%s3 + $0x160] sm:$0xf]
  %v161 = vld [vmem:[%s3 + $0x164] sm:$0xf]
  %v162 = vld [vmem:[%s3 + $0x168] sm:$0xf]
  %v163 = vld [vmem:[%s3 + $0x16c] sm:$0xf]
  %v164 = vld [vmem:[%s3 + $0x170] sm:$0xf]
  %v165 = vld [vmem:[%s3 + $0x174] sm:$0xf]
  %v166 = vld [vmem:[%s3 + $0x178] sm:$0xf]
  %v167 = vld [vmem:[%s3 + $0x17c] sm:$0xf]
  %v168 = vld [vmem:[%s3 + $0x180] sm:$0xf]
  %v169 = vld [vmem:[%s3 + $0x184] sm:$0xf]
  %v170 = vld [vmem:[%s3 + $0x188] sm:$0xf]
  %v171 = vld [vmem:[%s3 + $0x18c] sm:$0xf]
  %v172 = vld [vmem:[%s3 + $0x190] sm:$0xf]
  %v173 = vld [vmem:[%s3 + $0x194] sm:$0xf]
  %v174 = vld [vmem:[%s3 + $0x198] sm:$0xf]
  %v175 = vld [vmem:[%s3 + $0x19c] sm:$0xf]
  %v176 = vld [vmem:[%s3 + $0x1a0] sm:$0xf]
  %v177 = vld [vmem:[%s3 + $0x1a4] sm:$0xf]
  %v178 = vld [vmem:[%s3 + $0x1a8] sm:$0xf]
  %v179 = vld [vmem:[%s3 + $0x1ac] sm:$0xf]
  %v180 = vld [vmem:[%s3 + $0x1b0] sm:$0xf]
  %v181 = vld [vmem:[%s3 + $0x1b4] sm:$0xf]
  %v182 = vld [vmem:[%s3 + $0x1b8] sm:$0xf]
  %v183 = vld [vmem:[%s3 + $0x1bc] sm:$0xf]
  %v184 = vld [vmem:[%s3 + $0x1c0] sm:$0xf]
  %v185 = vld [vmem:[%s3 + $0x1c4] sm:$0xf]
  %v186 = vld [vmem:[%s3 + $0x1c8] sm:$0xf]
  %v187 = vld [vmem:[%s3 + $0x1cc] sm:$0xf]
  %v188 = vld [vmem:[%s3 + $0x1d0] sm:$0xf]
  %v189 = vld [vmem:[%s3 + $0x1d4] sm:$0xf]
  %v190 = vld [vmem:[%s3 + $0x1d8] sm:$0xf]
  %v191 = vld [vmem:[%s3 + $0x1dc] sm:$0xf]
  %v192 = vld [vmem:[%s3 + $0x1e0] sm:$0xf]
  %v193 = vld [vmem:[%s3 + $0x1e4] sm:$0xf]
  %v194 = vld [vmem:[%s3 + $0x1e8] sm:$0xf]
  %v195 = vld [vmem:[%s3 + $0x1ec] sm:$0xf]
  %v196 = vld [vmem:[%s3 + $0x1f0] sm:$0xf]
  %v197 = vld [vmem:[%s3 + $0x1f4] sm:$0xf]
  %v198 = vld [vmem:[%s3 + $0x1f8] sm:$0xf]
  %v199 = vld [vmem:[%s3 + $0x1fc] sm:$0xf]
  %v200 = vld [vmem:[%s4] sm:$0x1]
  %v202 = vlaneseq
  %v203 = vshrl.u32 %v202, 7
  %v204 = vsub.s32 0, %v203
  %v205 = vrot.slane %v200, %v204
  %v223 = vunpack.c.l.b16 %v56
  %v224 = vunpack.c.h.b16 %v56
  %v225 = vunpack.c.l.b16 %v57
  %v226 = vunpack.c.h.b16 %v57
  %v227 = vunpack.c.l.b16 %v58
  %v228 = vunpack.c.h.b16 %v58
  %v229 = vunpack.c.l.b16 %v59
  %v230 = vunpack.c.h.b16 %v59
  %v231 = vunpack.c.l.b16 %v60
  %v232 = vunpack.c.h.b16 %v60
  %v233 = vunpack.c.l.b16 %v61
  %v234 = vunpack.c.h.b16 %v61
  %v235 = vunpack.c.l.b16 %v62
  %v236 = vunpack.c.h.b16 %v62
  %v237 = vunpack.c.l.b16 %v63
  %v238 = vunpack.c.h.b16 %v63
  %v239 = vunpack.c.l.b16 %v64
  %v240 = vunpack.c.h.b16 %v64
  %v241 = vunpack.c.l.b16 %v65
  %v242 = vunpack.c.h.b16 %v65
  %v243 = vunpack.c.l.b16 %v66
  %v244 = vunpack.c.h.b16 %v66
  %v245 = vunpack.c.l.b16 %v67
  %v246 = vunpack.c.h.b16 %v67
  %v247 = vunpack.c.l.b16 %v68
  %v248 = vunpack.c.h.b16 %v68
  %v249 = vunpack.c.l.b16 %v69
  %v250 = vunpack.c.h.b16 %v69
  %v251 = vunpack.c.l.b16 %v70
  %v252 = vunpack.c.h.b16 %v70
  %v253 = vunpack.c.l.b16 %v71
  %v254 = vunpack.c.h.b16 %v71
  %v255 = vpack.c.b16 %v231, %v223
  %v256 = vpack.c.b16 %v232, %v224
  %v257 = vpack.c.b16 %v233, %v225
  %v258 = vpack.c.b16 %v234, %v226
  %v259 = vpack.c.b16 %v235, %v227
  %v260 = vpack.c.b16 %v236, %v228
  %v261 = vpack.c.b16 %v237, %v229
  %v262 = vpack.c.b16 %v238, %v230
  %v263 = vpack.c.b16 %v247, %v239
  %v264 = vpack.c.b16 %v248, %v240
  %v265 = vpack.c.b16 %v249, %v241
  %v266 = vpack.c.b16 %v250, %v242
  %v267 = vpack.c.b16 %v251, %v243
  %v268 = vpack.c.b16 %v252, %v244
  %v269 = vpack.c.b16 %v253, %v245
  %v270 = vpack.c.b16 %v254, %v246
  %v415 = vunpack.c.l.b16 %v72
  %v416 = vunpack.c.l.b16 %v73
  %v417 = vunpack.c.l.b16 %v74
  %v418 = vunpack.c.l.b16 %v75
  %v419 = vunpack.c.l.b16 %v76
  %v420 = vunpack.c.l.b16 %v77
  %v421 = vunpack.c.l.b16 %v78
  %v422 = vunpack.c.l.b16 %v79
  %v423 = vunpack.c.l.b16 %v80
  %v424 = vunpack.c.l.b16 %v81
  %v425 = vunpack.c.l.b16 %v82
  %v426 = vunpack.c.l.b16 %v83
  %v427 = vunpack.c.l.b16 %v84
  %v428 = vunpack.c.l.b16 %v85
  %v429 = vunpack.c.l.b16 %v86
  %v430 = vunpack.c.l.b16 %v87
  %v431 = vunpack.c.l.b16 %v88
  %v432 = vunpack.c.l.b16 %v89
  %v433 = vunpack.c.l.b16 %v90
  %v434 = vunpack.c.l.b16 %v91
  %v435 = vunpack.c.l.b16 %v92
  %v436 = vunpack.c.l.b16 %v93
  %v437 = vunpack.c.l.b16 %v94
  %v438 = vunpack.c.l.b16 %v95
  %v439 = vunpack.c.l.b16 %v96
  %v440 = vunpack.c.l.b16 %v97
  %v441 = vunpack.c.l.b16 %v98
  %v442 = vunpack.c.l.b16 %v99
  %v443 = vunpack.c.l.b16 %v100
  %v444 = vunpack.c.l.b16 %v101
  %v445 = vunpack.c.l.b16 %v102
  %v446 = vunpack.c.l.b16 %v103
  %v447 = vunpack.c.l.b16 %v104
  %v448 = vunpack.c.l.b16 %v105
  %v449 = vunpack.c.l.b16 %v106
  %v450 = vunpack.c.l.b16 %v107
  %v451 = vunpack.c.l.b16 %v108
  %v452 = vunpack.c.l.b16 %v109
  %v453 = vunpack.c.l.b16 %v110
  %v454 = vunpack.c.l.b16 %v111
  %v455 = vunpack.c.l.b16 %v112
  %v456 = vunpack.c.l.b16 %v113
  %v457 = vunpack.c.l.b16 %v114
  %v458 = vunpack.c.l.b16 %v115
  %v459 = vunpack.c.l.b16 %v116
  %v460 = vunpack.c.l.b16 %v117
  %v461 = vunpack.c.l.b16 %v118
  %v462 = vunpack.c.l.b16 %v119
  %v463 = vunpack.c.l.b16 %v120
  %v464 = vunpack.c.l.b16 %v121
  %v465 = vunpack.c.l.b16 %v122
  %v466 = vunpack.c.l.b16 %v123
  %v467 = vunpack.c.l.b16 %v124
  %v468 = vunpack.c.l.b16 %v125
  %v469 = vunpack.c.l.b16 %v126
  %v470 = vunpack.c.l.b16 %v127
  %v471 = vunpack.c.l.b16 %v128
  %v472 = vunpack.c.l.b16 %v129
  %v473 = vunpack.c.l.b16 %v130
  %v474 = vunpack.c.l.b16 %v131
  %v475 = vunpack.c.l.b16 %v132
  %v476 = vunpack.c.l.b16 %v133
  %v477 = vunpack.c.l.b16 %v134
  %v478 = vunpack.c.l.b16 %v135
  %v479 = vunpack.c.l.b16 %v136
  %v480 = vunpack.c.l.b16 %v137
  %v481 = vunpack.c.l.b16 %v138
  %v482 = vunpack.c.l.b16 %v139
  %v483 = vunpack.c.l.b16 %v140
  %v484 = vunpack.c.l.b16 %v141
  %v485 = vunpack.c.l.b16 %v142
  %v486 = vunpack.c.l.b16 %v143
  %v487 = vunpack.c.l.b16 %v144
  %v488 = vunpack.c.l.b16 %v145
  %v489 = vunpack.c.l.b16 %v146
  %v490 = vunpack.c.l.b16 %v147
  %v491 = vunpack.c.l.b16 %v148
  %v492 = vunpack.c.l.b16 %v149
  %v493 = vunpack.c.l.b16 %v150
  %v494 = vunpack.c.l.b16 %v151
  %v495 = vunpack.c.l.b16 %v152
  %v496 = vunpack.c.l.b16 %v153
  %v497 = vunpack.c.l.b16 %v154
  %v498 = vunpack.c.l.b16 %v155
  %v499 = vunpack.c.l.b16 %v156
  %v500 = vunpack.c.l.b16 %v157
  %v501 = vunpack.c.l.b16 %v158
  %v502 = vunpack.c.l.b16 %v159
  %v503 = vunpack.c.l.b16 %v160
  %v504 = vunpack.c.l.b16 %v161
  %v505 = vunpack.c.l.b16 %v162
  %v506 = vunpack.c.l.b16 %v163
  %v507 = vunpack.c.l.b16 %v164
  %v508 = vunpack.c.l.b16 %v165
  %v509 = vunpack.c.l.b16 %v166
  %v510 = vunpack.c.l.b16 %v167
  %v511 = vunpack.c.l.b16 %v168
  %v512 = vunpack.c.l.b16 %v169
  %v513 = vunpack.c.l.b16 %v170
  %v514 = vunpack.c.l.b16 %v171
  %v515 = vunpack.c.l.b16 %v172
  %v516 = vunpack.c.l.b16 %v173
  %v517 = vunpack.c.l.b16 %v174
  %v518 = vunpack.c.l.b16 %v175
  %v519 = vunpack.c.l.b16 %v176
  %v520 = vunpack.c.l.b16 %v177
  %v521 = vunpack.c.l.b16 %v178
  %v522 = vunpack.c.l.b16 %v179
  %v523 = vunpack.c.l.b16 %v180
  %v524 = vunpack.c.l.b16 %v181
  %v525 = vunpack.c.l.b16 %v182
  %v526 = vunpack.c.l.b16 %v183
  %v527 = vunpack.c.l.b16 %v184
  %v528 = vunpack.c.l.b16 %v185
  %v529 = vunpack.c.l.b16 %v186
  %v530 = vunpack.c.l.b16 %v187
  %v531 = vunpack.c.l.b16 %v188
  %v532 = vunpack.c.l.b16 %v189
  %v533 = vunpack.c.l.b16 %v190
  %v534 = vunpack.c.l.b16 %v191
  %v535 = vunpack.c.l.b16 %v192
  %v536 = vunpack.c.l.b16 %v193
  %v537 = vunpack.c.l.b16 %v194
  %v538 = vunpack.c.l.b16 %v195
  %v539 = vunpack.c.l.b16 %v196
  %v540 = vunpack.c.l.b16 %v197
  %v541 = vunpack.c.l.b16 %v198
  %v542 = vunpack.c.l.b16 %v199
  %v543 = vpack.c.b16 %v416, %v415
  %v544 = vpack.c.b16 %v418, %v417
  %v545 = vpack.c.b16 %v420, %v419
  %v546 = vpack.c.b16 %v422, %v421
  %v547 = vpack.c.b16 %v424, %v423
  %v548 = vpack.c.b16 %v426, %v425
  %v549 = vpack.c.b16 %v428, %v427
  %v550 = vpack.c.b16 %v430, %v429
  %v551 = vpack.c.b16 %v432, %v431
  %v552 = vpack.c.b16 %v434, %v433
  %v553 = vpack.c.b16 %v436, %v435
  %v554 = vpack.c.b16 %v438, %v437
  %v555 = vpack.c.b16 %v440, %v439
  %v556 = vpack.c.b16 %v442, %v441
  %v557 = vpack.c.b16 %v444, %v443
  %v558 = vpack.c.b16 %v446, %v445
  %v559 = vpack.c.b16 %v448, %v447
  %v560 = vpack.c.b16 %v450, %v449
  %v561 = vpack.c.b16 %v452, %v451
  %v562 = vpack.c.b16 %v454, %v453
  %v563 = vpack.c.b16 %v456, %v455
  %v564 = vpack.c.b16 %v458, %v457
  %v565 = vpack.c.b16 %v460, %v459
  %v566 = vpack.c.b16 %v462, %v461
  %v567 = vpack.c.b16 %v464, %v463
  %v568 = vpack.c.b16 %v466, %v465
  %v569 = vpack.c.b16 %v468, %v467
  %v570 = vpack.c.b16 %v470, %v469
  %v571 = vpack.c.b16 %v472, %v471
  %v572 = vpack.c.b16 %v474, %v473
  %v573 = vpack.c.b16 %v476, %v475
  %v574 = vpack.c.b16 %v478, %v477
  %v575 = vpack.c.b16 %v480, %v479
  %v576 = vpack.c.b16 %v482, %v481
  %v577 = vpack.c.b16 %v484, %v483
  %v578 = vpack.c.b16 %v486, %v485
  %v579 = vpack.c.b16 %v488, %v487
  %v580 = vpack.c.b16 %v490, %v489
  %v581 = vpack.c.b16 %v492, %v491
  %v582 = vpack.c.b16 %v494, %v493
  %v583 = vpack.c.b16 %v496, %v495
  %v584 = vpack.c.b16 %v498, %v497
  %v585 = vpack.c.b16 %v500, %v499
  %v586 = vpack.c.b16 %v502, %v501
  %v587 = vpack.c.b16 %v504, %v503
  %v588 = vpack.c.b16 %v506, %v505
  %v589 = vpack.c.b16 %v508, %v507
  %v590 = vpack.c.b16 %v510, %v509
  %v591 = vpack.c.b16 %v512, %v511
  %v592 = vpack.c.b16 %v514, %v513
  %v593 = vpack.c.b16 %v516, %v515
  %v594 = vpack.c.b16 %v518, %v517
  %v595 = vpack.c.b16 %v520, %v519
  %v596 = vpack.c.b16 %v522, %v521
  %v597 = vpack.c.b16 %v524, %v523
  %v598 = vpack.c.b16 %v526, %v525
  %v599 = vpack.c.b16 %v528, %v527
  %v600 = vpack.c.b16 %v530, %v529
  %v601 = vpack.c.b16 %v532, %v531
  %v602 = vpack.c.b16 %v534, %v533
  %v603 = vpack.c.b16 %v536, %v535
  %v604 = vpack.c.b16 %v538, %v537
  %v605 = vpack.c.b16 %v540, %v539
  %v606 = vpack.c.b16 %v542, %v541
  %671 = vmatprep.subr.bf16.mxu0 0
  %672 = vmatpush1.bf16.msra.mxu0 %v543
  %673 = vmatprep.subr.bf16.mxu0 0
  %674 = vmatpush1.bf16.msra.mxu0 %v544
  %675 = vmatprep.subr.bf16.mxu0 0
  %676 = vmatpush1.bf16.msra.mxu0 %v545
  %677 = vmatprep.subr.bf16.mxu0 0
  %678 = vmatpush1.bf16.msra.mxu0 %v546
  %679 = vmatprep.subr.bf16.mxu0 0
  %680 = vmatpush1.bf16.msra.mxu0 %v547
  %681 = vmatprep.subr.bf16.mxu0 0
  %682 = vmatpush1.bf16.msra.mxu0 %v548
  %683 = vmatprep.subr.bf16.mxu0 0
  %684 = vmatpush1.bf16.msra.mxu0 %v549
  %685 = vmatprep.subr.bf16.mxu0 0
  %686 = vmatpush1.bf16.msra.mxu0 %v550
  %687 = vmatprep.subr.bf16.mxu0 0
  %688 = vmatpush1.bf16.msra.mxu0 %v551
  %689 = vmatprep.subr.bf16.mxu0 0
  %690 = vmatpush1.bf16.msra.mxu0 %v552
  %691 = vmatprep.subr.bf16.mxu0 0
  %692 = vmatpush1.bf16.msra.mxu0 %v553
  %693 = vmatprep.subr.bf16.mxu0 0
  %694 = vmatpush1.bf16.msra.mxu0 %v554
  %695 = vmatprep.subr.bf16.mxu0 0
  %696 = vmatpush1.bf16.msra.mxu0 %v555
  %697 = vmatprep.subr.bf16.mxu0 0
  %698 = vmatpush1.bf16.msra.mxu0 %v556
  %699 = vmatprep.subr.bf16.mxu0 0
  %700 = vmatpush1.bf16.msra.mxu0 %v557
  %701 = vmatprep.subr.bf16.mxu0 0
  %702 = vmatpush1.bf16.msra.mxu0 %v558
  %703 = vmatprep.mubr.bf16.mxu0 %v256
  %704 = vmatmul.mubr.bf16.gmra.mrb[0].mxu0 %v255
  %v705 = vpop.f32.mrb[0].mxu0
  %v706 = vadd.f32 %v205, %v705
  %v707 = vpop.f32.mrb[0].mxu0
  %v708 = vpop.f32.mrb[0].mxu0
  %v709 = vadd.f32 %v205, %v708
  %v710 = vpop.f32.mrb[0].mxu0
  %711 = vmatprep.mubr.bf16.mxu0 %v264
  %712 = vmatmul.mubr.bf16.gmra.mrb[0].mxu0 %v263
  %v713 = vpop.f32.mrb[0].mxu0
  %v714 = vadd.f32 %v205, %v713
  %v715 = vpop.f32.mrb[0].mxu0
  %v716 = vpop.f32.mrb[0].mxu0
  %v717 = vadd.f32 %v205, %v716
  %v718 = vpop.f32.mrb[0].mxu0
  %719 = vdwg.mxu0
  %720 = vmatprep.subr.bf16.mxu0 0
  %721 = vmatpush1.bf16.msra.mxu0 %v559
  %722 = vmatprep.subr.bf16.mxu0 0
  %723 = vmatpush1.bf16.msra.mxu0 %v560
  %724 = vmatprep.subr.bf16.mxu0 0
  %725 = vmatpush1.bf16.msra.mxu0 %v561
  %726 = vmatprep.subr.bf16.mxu0 0
  %727 = vmatpush1.bf16.msra.mxu0 %v562
  %728 = vmatprep.subr.bf16.mxu0 0
  %729 = vmatpush1.bf16.msra.mxu0 %v563
  %730 = vmatprep.subr.bf16.mxu0 0
  %731 = vmatpush1.bf16.msra.mxu0 %v564
  %732 = vmatprep.subr.bf16.mxu0 0
  %733 = vmatpush1.bf16.msra.mxu0 %v565
  %734 = vmatprep.subr.bf16.mxu0 0
  %735 = vmatpush1.bf16.msra.mxu0 %v566
  %736 = vmatprep.subr.bf16.mxu0 0
  %737 = vmatpush1.bf16.msra.mxu0 %v567
  %738 = vmatprep.subr.bf16.mxu0 0
  %739 = vmatpush1.bf16.msra.mxu0 %v568
  %740 = vmatprep.subr.bf16.mxu0 0
  %741 = vmatpush1.bf16.msra.mxu0 %v569
  %742 = vmatprep.subr.bf16.mxu0 0
  %743 = vmatpush1.bf16.msra.mxu0 %v570
  %744 = vmatprep.subr.bf16.mxu0 0
  %745 = vmatpush1.bf16.msra.mxu0 %v571
  %746 = vmatprep.subr.bf16.mxu0 0
  %747 = vmatpush1.bf16.msra.mxu0 %v572
  %748 = vmatprep.subr.bf16.mxu0 0
  %749 = vmatpush1.bf16.msra.mxu0 %v573
  %750 = vmatprep.subr.bf16.mxu0 0
  %751 = vmatpush1.bf16.msra.mxu0 %v574
  %752 = vmatprep.mubr.bf16.mxu0 %v258
  %753 = vmatmul.mubr.bf16.gmra.mrb[0].mxu0 %v257
  %v754 = vpop.f32.mrb[0].mxu0
  %v755 = vadd.f32 %v706, %v754
  %v756 = vpop.f32.mrb[0].mxu0
  %v757 = vpop.f32.mrb[0].mxu0
  %v758 = vadd.f32 %v709, %v757
  %v759 = vpop.f32.mrb[0].mxu0
  %760 = vmatprep.mubr.bf16.mxu0 %v266
  %761 = vmatmul.mubr.bf16.gmra.mrb[0].mxu0 %v265
  %v762 = vpop.f32.mrb[0].mxu0
  %v763 = vadd.f32 %v714, %v762
  %v764 = vpop.f32.mrb[0].mxu0
  %v765 = vpop.f32.mrb[0].mxu0
  %v766 = vadd.f32 %v717, %v765
  %v767 = vpop.f32.mrb[0].mxu0
  %768 = vdwg.mxu0
  %769 = vmatprep.subr.bf16.mxu0 0
  %770 = vmatpush1.bf16.msra.mxu0 %v575
  %771 = vmatprep.subr.bf16.mxu0 0
  %772 = vmatpush1.bf16.msra.mxu0 %v576
  %773 = vmatprep.subr.bf16.mxu0 0
  %774 = vmatpush1.bf16.msra.mxu0 %v577
  %775 = vmatprep.subr.bf16.mxu0 0
  %776 = vmatpush1.bf16.msra.mxu0 %v578
  %777 = vmatprep.subr.bf16.mxu0 0
  %778 = vmatpush1.bf16.msra.mxu0 %v579
  %779 = vmatprep.subr.bf16.mxu0 0
  %780 = vmatpush1.bf16.msra.mxu0 %v580
  %781 = vmatprep.subr.bf16.mxu0 0
  %782 = vmatpush1.bf16.msra.mxu0 %v581
  %783 = vmatprep.subr.bf16.mxu0 0
  %784 = vmatpush1.bf16.msra.mxu0 %v582
  %785 = vmatprep.subr.bf16.mxu0 0
  %786 = vmatpush1.bf16.msra.mxu0 %v583
  %787 = vmatprep.subr.bf16.mxu0 0
  %788 = vmatpush1.bf16.msra.mxu0 %v584
  %789 = vmatprep.subr.bf16.mxu0 0
  %790 = vmatpush1.bf16.msra.mxu0 %v585
  %791 = vmatprep.subr.bf16.mxu0 0
  %792 = vmatpush1.bf16.msra.mxu0 %v586
  %793 = vmatprep.subr.bf16.mxu0 0
  %794 = vmatpush1.bf16.msra.mxu0 %v587
  %795 = vmatprep.subr.bf16.mxu0 0
  %796 = vmatpush1.bf16.msra.mxu0 %v588
  %797 = vmatprep.subr.bf16.mxu0 0
  %798 = vmatpush1.bf16.msra.mxu0 %v589
  %799 = vmatprep.subr.bf16.mxu0 0
  %800 = vmatpush1.bf16.msra.mxu0 %v590
  %801 = vmatprep.mubr.bf16.mxu0 %v260
  %802 = vmatmul.mubr.bf16.gmra.mrb[0].mxu0 %v259
  %v803 = vpop.f32.mrb[0].mxu0
  %v804 = vadd.f32 %v755, %v803
  %v805 = vpop.f32.mrb[0].mxu0
  %v806 = vpop.f32.mrb[0].mxu0
  %v807 = vadd.f32 %v758, %v806
  %v808 = vpop.f32.mrb[0].mxu0
  %809 = vmatprep.mubr.bf16.mxu0 %v268
  %810 = vmatmul.mubr.bf16.gmra.mrb[0].mxu0 %v267
  %v811 = vpop.f32.mrb[0].mxu0
  %v812 = vadd.f32 %v763, %v811
  %v813 = vpop.f32.mrb[0].mxu0
  %v814 = vpop.f32.mrb[0].mxu0
  %v815 = vadd.f32 %v766, %v814
  %v816 = vpop.f32.mrb[0].mxu0
  %817 = vdwg.mxu0
  %818 = vmatprep.subr.bf16.mxu0 0
  %819 = vmatpush1.bf16.msra.mxu0 %v591
  %820 = vmatprep.subr.bf16.mxu0 0
  %821 = vmatpush1.bf16.msra.mxu0 %v592
  %822 = vmatprep.subr.bf16.mxu0 0
  %823 = vmatpush1.bf16.msra.mxu0 %v593
  %824 = vmatprep.subr.bf16.mxu0 0
  %825 = vmatpush1.bf16.msra.mxu0 %v594
  %826 = vmatprep.subr.bf16.mxu0 0
  %827 = vmatpush1.bf16.msra.mxu0 %v595
  %828 = vmatprep.subr.bf16.mxu0 0
  %829 = vmatpush1.bf16.msra.mxu0 %v596
  %830 = vmatprep.subr.bf16.mxu0 0
  %831 = vmatpush1.bf16.msra.mxu0 %v597
  %832 = vmatprep.subr.bf16.mxu0 0
  %833 = vmatpush1.bf16.msra.mxu0 %v598
  %834 = vmatprep.subr.bf16.mxu0 0
  %835 = vmatpush1.bf16.msra.mxu0 %v599
  %836 = vmatprep.subr.bf16.mxu0 0
  %837 = vmatpush1.bf16.msra.mxu0 %v600
  %838 = vmatprep.subr.bf16.mxu0 0
  %839 = vmatpush1.bf16.msra.mxu0 %v601
  %840 = vmatprep.subr.bf16.mxu0 0
  %841 = vmatpush1.bf16.msra.mxu0 %v602
  %842 = vmatprep.subr.bf16.mxu0 0
  %843 = vmatpush1.bf16.msra.mxu0 %v603
  %844 = vmatprep.subr.bf16.mxu0 0
  %845 = vmatpush1.bf16.msra.mxu0 %v604
  %846 = vmatprep.subr.bf16.mxu0 0
  %847 = vmatpush1.bf16.msra.mxu0 %v605
  %848 = vmatprep.subr.bf16.mxu0 0
  %849 = vmatpush1.bf16.msra.mxu0 %v606
  %850 = vmatprep.mubr.bf16.mxu0 %v262
  %851 = vmatmul.mubr.bf16.gmra.mrb[0].mxu0 %v261
  %v852 = vpop.f32.mrb[0].mxu0
  %v853 = vadd.f32 %v804, %v852
  %v854 = vpop.f32.mrb[0].mxu0
  %v855 = vpop.f32.mrb[0].mxu0
  %v856 = vadd.f32 %v807, %v855
  %v857 = vpop.f32.mrb[0].mxu0
  %858 = vmatprep.mubr.bf16.mxu0 %v270
  %859 = vmatmul.mubr.bf16.gmra.mrb[0].mxu0 %v269
  %v860 = vpop.f32.mrb[0].mxu0
  %v861 = vadd.f32 %v812, %v860
  %v862 = vpop.f32.mrb[0].mxu0
  %v863 = vpop.f32.mrb[0].mxu0
  %v864 = vadd.f32 %v815, %v863
  %v865 = vpop.f32.mrb[0].mxu0
  %866 = vdwg.mxu0
  %v867 = vmax.f32 %v853, 0.0
  %v868 = vmax.f32 %v856, 0.0
  %v869 = vmax.f32 %v861, 0.0
  %v870 = vmax.f32 %v864, 0.0
  %v871 = vpack.c.bf16 %v868, %v867
  %v872 = vpack.c.bf16 %v870, %v869
  %873 = vst [vmem:[#allocation2] sm:$0xff] 0
  %874 = vst [vmem:[#allocation2 + $0x8] sm:$0xff] 0
  %875 = vst [vmem:[#allocation2 + $0x10] sm:$0xff] 0
  %876 = vst [vmem:[#allocation2 + $0x18] sm:$0xff] 0
  %877 = vst [vmem:[#allocation2 + $0x20] sm:$0xff] 0
  %878 = vst [vmem:[#allocation2 + $0x28] sm:$0xff] 0
  %879 = vst [vmem:[#allocation2 + $0x30] sm:$0xff] 0
  %880 = vst [vmem:[#allocation2 + $0x38] sm:$0xff] 0
  %881 = vst [vmem:[#allocation2 + $0x40] sm:$0xff] 0
  %882 = vst [vmem:[#allocation2 + $0x48] sm:$0xff] 0
  %883 = vst [vmem:[#allocation2 + $0x50] sm:$0xff] 0
  %884 = vst [vmem:[#allocation2 + $0x58] sm:$0xff] 0
  %885 = vst [vmem:[#allocation2 + $0x60] sm:$0xff] 0
  %886 = vst [vmem:[#allocation2 + $0x68] sm:$0xff] 0
  %887 = vst [vmem:[#allocation2 + $0x70] sm:$0xff] 0
  %888 = vst [vmem:[#allocation2 + $0x78] sm:$0xff] 0
  %889 = vst [vmem:[#allocation2] sm:$0x1] %v871
  %v891 = vrot.slane %v871, 1
  %893 = vst [vmem:[#allocation2 + $0x8] sm:$0x1] %v891
  %v894 = vrot.slane %v871, 2
  %896 = vst [vmem:[#allocation2 + $0x10] sm:$0x1] %v894
  %v897 = vrot.slane %v871, 3
  %899 = vst [vmem:[#allocation2 + $0x18] sm:$0x1] %v897
  %v900 = vrot.slane %v871, 4
  %902 = vst [vmem:[#allocation2 + $0x20] sm:$0x1] %v900
  %v903 = vrot.slane %v871, 5
  %905 = vst [vmem:[#allocation2 + $0x28] sm:$0x1] %v903
  %v906 = vrot.slane %v871, 6
  %908 = vst [vmem:[#allocation2 + $0x30] sm:$0x1] %v906
  %v909 = vrot.slane %v871, 7
  %911 = vst [vmem:[#allocation2 + $0x38] sm:$0x1] %v909
  %912 = vst [vmem:[#allocation2 + $0x40] sm:$0x1] %v872
  %v914 = vrot.slane %v872, 1
  %916 = vst [vmem:[#allocation2 + $0x48] sm:$0x1] %v914
  %v917 = vrot.slane %v872, 2
  %919 = vst [vmem:[#allocation2 + $0x50] sm:$0x1] %v917
  %v920 = vrot.slane %v872, 3
  %922 = vst [vmem:[#allocation2 + $0x58] sm:$0x1] %v920
  %v923 = vrot.slane %v872, 4
  %925 = vst [vmem:[#allocation2 + $0x60] sm:$0x1] %v923
  %v926 = vrot.slane %v872, 5
  %928 = vst [vmem:[#allocation2 + $0x68] sm:$0x1] %v926
  %v929 = vrot.slane %v872, 6
  %931 = vst [vmem:[#allocation2 + $0x70] sm:$0x1] %v929
  %v932 = vrot.slane %v872, 7
  %934 = vst [vmem:[#allocation2 + $0x78] sm:$0x1] %v932
  %v935 = vld [vmem:[#allocation2] sm:$0xff]
  %v936 = vld [vmem:[#allocation2 + $0x8] sm:$0xff]
  %v937 = vld [vmem:[#allocation2 + $0x10] sm:$0xff]
  %v938 = vld [vmem:[#allocation2 + $0x18] sm:$0xff]
  %v939 = vld [vmem:[#allocation2 + $0x20] sm:$0xff]
  %v940 = vld [vmem:[#allocation2 + $0x28] sm:$0xff]
  %v941 = vld [vmem:[#allocation2 + $0x30] sm:$0xff]
  %v942 = vld [vmem:[#allocation2 + $0x38] sm:$0xff]
  %v943 = vld [vmem:[#allocation2 + $0x40] sm:$0xff]
  %v944 = vld [vmem:[#allocation2 + $0x48] sm:$0xff]
  %v945 = vld [vmem:[#allocation2 + $0x50] sm:$0xff]
  %v946 = vld [vmem:[#allocation2 + $0x58] sm:$0xff]
  %v947 = vld [vmem:[#allocation2 + $0x60] sm:$0xff]
  %v948 = vld [vmem:[#allocation2 + $0x68] sm:$0xff]
  %v949 = vld [vmem:[#allocation2 + $0x70] sm:$0xff]
  %v950 = vld [vmem:[#allocation2 + $0x78] sm:$0xff]
  %v951 = vld [vmem:[%s5] sm:$0xff]
  %v952 = vld [vmem:[%s5 + $0x8] sm:$0xff]
  %v953 = vld [vmem:[%s5 + $0x10] sm:$0xff]
  %v954 = vld [vmem:[%s5 + $0x18] sm:$0xff]
  %v955 = vld [vmem:[%s5 + $0x20] sm:$0xff]
  %v956 = vld [vmem:[%s5 + $0x28] sm:$0xff]
  %v957 = vld [vmem:[%s5 + $0x30] sm:$0xff]
  %v958 = vld [vmem:[%s5 + $0x38] sm:$0xff]
  %v959 = vld [vmem:[%s5 + $0x40] sm:$0xff]
  %v960 = vld [vmem:[%s5 + $0x48] sm:$0xff]
  %v961 = vld [vmem:[%s5 + $0x50] sm:$0xff]
  %v962 = vld [vmem:[%s5 + $0x58] sm:$0xff]
  %v963 = vld [vmem:[%s5 + $0x60] sm:$0xff]
  %v964 = vld [vmem:[%s5 + $0x68] sm:$0xff]
  %v965 = vld [vmem:[%s5 + $0x70] sm:$0xff]
  %v966 = vld [vmem:[%s5 + $0x78] sm:$0xff]
  %v967 = vld [vmem:[%s5 + $0x80] sm:$0xff]
  %v968 = vld [vmem:[%s5 + $0x88] sm:$0xff]
  %v969 = vld [vmem:[%s5 + $0x90] sm:$0xff]
  %v970 = vld [vmem:[%s5 + $0x98] sm:$0xff]
  %v971 = vld [vmem:[%s5 + $0xa0] sm:$0xff]
  %v972 = vld [vmem:[%s5 + $0xa8] sm:$0xff]
  %v973 = vld [vmem:[%s5 + $0xb0] sm:$0xff]
  %v974 = vld [vmem:[%s5 + $0xb8] sm:$0xff]
  %v975 = vld [vmem:[%s5 + $0xc0] sm:$0xff]
  %v976 = vld [vmem:[%s5 + $0xc8] sm:$0xff]
  %v977 = vld [vmem:[%s5 + $0xd0] sm:$0xff]
  %v978 = vld [vmem:[%s5 + $0xd8] sm:$0xff]
  %v979 = vld [vmem:[%s5 + $0xe0] sm:$0xff]
  %v980 = vld [vmem:[%s5 + $0xe8] sm:$0xff]
  %v981 = vld [vmem:[%s5 + $0xf0] sm:$0xff]
  %v982 = vld [vmem:[%s5 + $0xf8] sm:$0xff]
  %v983 = vld [vmem:[%s5 + $0x100] sm:$0xff]
  %v984 = vld [vmem:[%s5 + $0x108] sm:$0xff]
  %v985 = vld [vmem:[%s5 + $0x110] sm:$0xff]
  %v986 = vld [vmem:[%s5 + $0x118] sm:$0xff]
  %v987 = vld [vmem:[%s5 + $0x120] sm:$0xff]
  %v988 = vld [vmem:[%s5 + $0x128] sm:$0xff]
  %v989 = vld [vmem:[%s5 + $0x130] sm:$0xff]
  %v990 = vld [vmem:[%s5 + $0x138] sm:$0xff]
  %v991 = vld [vmem:[%s5 + $0x140] sm:$0xff]
  %v992 = vld [vmem:[%s5 + $0x148] sm:$0xff]
  %v993 = vld [vmem:[%s5 + $0x150] sm:$0xff]
  %v994 = vld [vmem:[%s5 + $0x158] sm:$0xff]
  %v995 = vld [vmem:[%s5 + $0x160] sm:$0xff]
  %v996 = vld [vmem:[%s5 + $0x168] sm:$0xff]
  %v997 = vld [vmem:[%s5 + $0x170] sm:$0xff]
  %v998 = vld [vmem:[%s5 + $0x178] sm:$0xff]
  %v999 = vld [vmem:[%s5 + $0x180] sm:$0xff]
  %v1000 = vld [vmem:[%s5 + $0x188] sm:$0xff]
  %v1001 = vld [vmem:[%s5 + $0x190] sm:$0xff]
  %v1002 = vld [vmem:[%s5 + $0x198] sm:$0xff]
  %v1003 = vld [vmem:[%s5 + $0x1a0] sm:$0xff]
  %v1004 = vld [vmem:[%s5 + $0x1a8] sm:$0xff]
  %v1005 = vld [vmem:[%s5 + $0x1b0] sm:$0xff]
  %v1006 = vld [vmem:[%s5 + $0x1b8] sm:$0xff]
  %v1007 = vld [vmem:[%s5 + $0x1c0] sm:$0xff]
  %v1008 = vld [vmem:[%s5 + $0x1c8] sm:$0xff]
  %v1009 = vld [vmem:[%s5 + $0x1d0] sm:$0xff]
  %v1010 = vld [vmem:[%s5 + $0x1d8] sm:$0xff]
  %v1011 = vld [vmem:[%s5 + $0x1e0] sm:$0xff]
  %v1012 = vld [vmem:[%s5 + $0x1e8] sm:$0xff]
  %v1013 = vld [vmem:[%s5 + $0x1f0] sm:$0xff]
  %v1014 = vld [vmem:[%s5 + $0x1f8] sm:$0xff]
  %v1015 = vld [vmem:[%s5 + $0x200] sm:$0xff]
  %v1016 = vld [vmem:[%s5 + $0x208] sm:$0xff]
  %v1017 = vld [vmem:[%s5 + $0x210] sm:$0xff]
  %v1018 = vld [vmem:[%s5 + $0x218] sm:$0xff]
  %v1019 = vld [vmem:[%s5 + $0x220] sm:$0xff]
  %v1020 = vld [vmem:[%s5 + $0x228] sm:$0xff]
  %v1021 = vld [vmem:[%s5 + $0x230] sm:$0xff]
  %v1022 = vld [vmem:[%s5 + $0x238] sm:$0xff]
  %v1023 = vld [vmem:[%s5 + $0x240] sm:$0xff]
  %v1024 = vld [vmem:[%s5 + $0x248] sm:$0xff]
  %v1025 = vld [vmem:[%s5 + $0x250] sm:$0xff]
  %v1026 = vld [vmem:[%s5 + $0x258] sm:$0xff]
  %v1027 = vld [vmem:[%s5 + $0x260] sm:$0xff]
  %v1028 = vld [vmem:[%s5 + $0x268] sm:$0xff]
  %v1029 = vld [vmem:[%s5 + $0x270] sm:$0xff]
  %v1030 = vld [vmem:[%s5 + $0x278] sm:$0xff]
  %v1031 = vld [vmem:[%s5 + $0x280] sm:$0xff]
  %v1032 = vld [vmem:[%s5 + $0x288] sm:$0xff]
  %v1033 = vld [vmem:[%s5 + $0x290] sm:$0xff]
  %v1034 = vld [vmem:[%s5 + $0x298] sm:$0xff]
  %v1035 = vld [vmem:[%s5 + $0x2a0] sm:$0xff]
  %v1036 = vld [vmem:[%s5 + $0x2a8] sm:$0xff]
  %v1037 = vld [vmem:[%s5 + $0x2b0] sm:$0xff]
  %v1038 = vld [vmem:[%s5 + $0x2b8] sm:$0xff]
  %v1039 = vld [vmem:[%s5 + $0x2c0] sm:$0xff]
  %v1040 = vld [vmem:[%s5 + $0x2c8] sm:$0xff]
  %v1041 = vld [vmem:[%s5 + $0x2d0] sm:$0xff]
  %v1042 = vld [vmem:[%s5 + $0x2d8] sm:$0xff]
  %v1043 = vld [vmem:[%s5 + $0x2e0] sm:$0xff]
  %v1044 = vld [vmem:[%s5 + $0x2e8] sm:$0xff]
  %v1045 = vld [vmem:[%s5 + $0x2f0] sm:$0xff]
  %v1046 = vld [vmem:[%s5 + $0x2f8] sm:$0xff]
  %v1047 = vld [vmem:[%s5 + $0x300] sm:$0xff]
  %v1048 = vld [vmem:[%s5 + $0x308] sm:$0xff]
  %v1049 = vld [vmem:[%s5 + $0x310] sm:$0xff]
  %v1050 = vld [vmem:[%s5 + $0x318] sm:$0xff]
  %v1051 = vld [vmem:[%s5 + $0x320] sm:$0xff]
  %v1052 = vld [vmem:[%s5 + $0x328] sm:$0xff]
  %v1053 = vld [vmem:[%s5 + $0x330] sm:$0xff]
  %v1054 = vld [vmem:[%s5 + $0x338] sm:$0xff]
  %v1055 = vld [vmem:[%s5 + $0x340] sm:$0xff]
  %v1056 = vld [vmem:[%s5 + $0x348] sm:$0xff]
  %v1057 = vld [vmem:[%s5 + $0x350] sm:$0xff]
  %v1058 = vld [vmem:[%s5 + $0x358] sm:$0xff]
  %v1059 = vld [vmem:[%s5 + $0x360] sm:$0xff]
  %v1060 = vld [vmem:[%s5 + $0x368] sm:$0xff]
  %v1061 = vld [vmem:[%s5 + $0x370] sm:$0xff]
  %v1062 = vld [vmem:[%s5 + $0x378] sm:$0xff]
  %v1063 = vld [vmem:[%s5 + $0x380] sm:$0xff]
  %v1064 = vld [vmem:[%s5 + $0x388] sm:$0xff]
  %v1065 = vld [vmem:[%s5 + $0x390] sm:$0xff]
  %v1066 = vld [vmem:[%s5 + $0x398] sm:$0xff]
  %v1067 = vld [vmem:[%s5 + $0x3a0] sm:$0xff]
  %v1068 = vld [vmem:[%s5 + $0x3a8] sm:$0xff]
  %v1069 = vld [vmem:[%s5 + $0x3b0] sm:$0xff]
  %v1070 = vld [vmem:[%s5 + $0x3b8] sm:$0xff]
  %v1071 = vld [vmem:[%s5 + $0x3c0] sm:$0xff]
  %v1072 = vld [vmem:[%s5 + $0x3c8] sm:$0xff]
  %v1073 = vld [vmem:[%s5 + $0x3d0] sm:$0xff]
  %v1074 = vld [vmem:[%s5 + $0x3d8] sm:$0xff]
  %v1075 = vld [vmem:[%s5 + $0x3e0] sm:$0xff]
  %v1076 = vld [vmem:[%s5 + $0x3e8] sm:$0xff]
  %v1077 = vld [vmem:[%s5 + $0x3f0] sm:$0xff]
  %v1078 = vld [vmem:[%s5 + $0x3f8] sm:$0xff]
  %v1079 = vld [vmem:[%s5 + $0x400] sm:$0xff]
  %v1080 = vld [vmem:[%s5 + $0x408] sm:$0xff]
  %v1081 = vld [vmem:[%s5 + $0x410] sm:$0xff]
  %v1082 = vld [vmem:[%s5 + $0x418] sm:$0xff]
  %v1083 = vld [vmem:[%s5 + $0x420] sm:$0xff]
  %v1084 = vld [vmem:[%s5 + $0x428] sm:$0xff]
  %v1085 = vld [vmem:[%s5 + $0x430] sm:$0xff]
  %v1086 = vld [vmem:[%s5 + $0x438] sm:$0xff]
  %v1087 = vld [vmem:[%s5 + $0x440] sm:$0xff]
  %v1088 = vld [vmem:[%s5 + $0x448] sm:$0xff]
  %v1089 = vld [vmem:[%s5 + $0x450] sm:$0xff]
  %v1090 = vld [vmem:[%s5 + $0x458] sm:$0xff]
  %v1091 = vld [vmem:[%s5 + $0x460] sm:$0xff]
  %v1092 = vld [vmem:[%s5 + $0x468] sm:$0xff]
  %v1093 = vld [vmem:[%s5 + $0x470] sm:$0xff]
  %v1094 = vld [vmem:[%s5 + $0x478] sm:$0xff]
  %v1095 = vld [vmem:[%s5 + $0x480] sm:$0xff]
  %v1096 = vld [vmem:[%s5 + $0x488] sm:$0xff]
  %v1097 = vld [vmem:[%s5 + $0x490] sm:$0xff]
  %v1098 = vld [vmem:[%s5 + $0x498] sm:$0xff]
  %v1099 = vld [vmem:[%s5 + $0x4a0] sm:$0xff]
  %v1100 = vld [vmem:[%s5 + $0x4a8] sm:$0xff]
  %v1101 = vld [vmem:[%s5 + $0x4b0] sm:$0xff]
  %v1102 = vld [vmem:[%s5 + $0x4b8] sm:$0xff]
  %v1103 = vld [vmem:[%s5 + $0x4c0] sm:$0xff]
  %v1104 = vld [vmem:[%s5 + $0x4c8] sm:$0xff]
  %v1105 = vld [vmem:[%s5 + $0x4d0] sm:$0xff]
  %v1106 = vld [vmem:[%s5 + $0x4d8] sm:$0xff]
  %v1107 = vld [vmem:[%s5 + $0x4e0] sm:$0xff]
  %v1108 = vld [vmem:[%s5 + $0x4e8] sm:$0xff]
  %v1109 = vld [vmem:[%s5 + $0x4f0] sm:$0xff]
  %v1110 = vld [vmem:[%s5 + $0x4f8] sm:$0xff]
  %v1111 = vld [vmem:[%s5 + $0x500] sm:$0xff]
  %v1112 = vld [vmem:[%s5 + $0x508] sm:$0xff]
  %v1113 = vld [vmem:[%s5 + $0x510] sm:$0xff]
  %v1114 = vld [vmem:[%s5 + $0x518] sm:$0xff]
  %v1115 = vld [vmem:[%s5 + $0x520] sm:$0xff]
  %v1116 = vld [vmem:[%s5 + $0x528] sm:$0xff]
  %v1117 = vld [vmem:[%s5 + $0x530] sm:$0xff]
  %v1118 = vld [vmem:[%s5 + $0x538] sm:$0xff]
  %v1119 = vld [vmem:[%s5 + $0x540] sm:$0xff]
  %v1120 = vld [vmem:[%s5 + $0x548] sm:$0xff]
  %v1121 = vld [vmem:[%s5 + $0x550] sm:$0xff]
  %v1122 = vld [vmem:[%s5 + $0x558] sm:$0xff]
  %v1123 = vld [vmem:[%s5 + $0x560] sm:$0xff]
  %v1124 = vld [vmem:[%s5 + $0x568] sm:$0xff]
  %v1125 = vld [vmem:[%s5 + $0x570] sm:$0xff]
  %v1126 = vld [vmem:[%s5 + $0x578] sm:$0xff]
  %v1127 = vld [vmem:[%s5 + $0x580] sm:$0xff]
  %v1128 = vld [vmem:[%s5 + $0x588] sm:$0xff]
  %v1129 = vld [vmem:[%s5 + $0x590] sm:$0xff]
  %v1130 = vld [vmem:[%s5 + $0x598] sm:$0xff]
  %v1131 = vld [vmem:[%s5 + $0x5a0] sm:$0xff]
  %v1132 = vld [vmem:[%s5 + $0x5a8] sm:$0xff]
  %v1133 = vld [vmem:[%s5 + $0x5b0] sm:$0xff]
  %v1134 = vld [vmem:[%s5 + $0x5b8] sm:$0xff]
  %v1135 = vld [vmem:[%s5 + $0x5c0] sm:$0xff]
  %v1136 = vld [vmem:[%s5 + $0x5c8] sm:$0xff]
  %v1137 = vld [vmem:[%s5 + $0x5d0] sm:$0xff]
  %v1138 = vld [vmem:[%s5 + $0x5d8] sm:$0xff]
  %v1139 = vld [vmem:[%s5 + $0x5e0] sm:$0xff]
  %v1140 = vld [vmem:[%s5 + $0x5e8] sm:$0xff]
  %v1141 = vld [vmem:[%s5 + $0x5f0] sm:$0xff]
  %v1142 = vld [vmem:[%s5 + $0x5f8] sm:$0xff]
  %v1143 = vld [vmem:[%s5 + $0x600] sm:$0xff]
  %v1144 = vld [vmem:[%s5 + $0x608] sm:$0xff]
  %v1145 = vld [vmem:[%s5 + $0x610] sm:$0xff]
  %v1146 = vld [vmem:[%s5 + $0x618] sm:$0xff]
  %v1147 = vld [vmem:[%s5 + $0x620] sm:$0xff]
  %v1148 = vld [vmem:[%s5 + $0x628] sm:$0xff]
  %v1149 = vld [vmem:[%s5 + $0x630] sm:$0xff]
  %v1150 = vld [vmem:[%s5 + $0x638] sm:$0xff]
  %v1151 = vld [vmem:[%s5 + $0x640] sm:$0xff]
  %v1152 = vld [vmem:[%s5 + $0x648] sm:$0xff]
  %v1153 = vld [vmem:[%s5 + $0x650] sm:$0xff]
  %v1154 = vld [vmem:[%s5 + $0x658] sm:$0xff]
  %v1155 = vld [vmem:[%s5 + $0x660] sm:$0xff]
  %v1156 = vld [vmem:[%s5 + $0x668] sm:$0xff]
  %v1157 = vld [vmem:[%s5 + $0x670] sm:$0xff]
  %v1158 = vld [vmem:[%s5 + $0x678] sm:$0xff]
  %v1159 = vld [vmem:[%s5 + $0x680] sm:$0xff]
  %v1160 = vld [vmem:[%s5 + $0x688] sm:$0xff]
  %v1161 = vld [vmem:[%s5 + $0x690] sm:$0xff]
  %v1162 = vld [vmem:[%s5 + $0x698] sm:$0xff]
  %v1163 = vld [vmem:[%s5 + $0x6a0] sm:$0xff]
  %v1164 = vld [vmem:[%s5 + $0x6a8] sm:$0xff]
  %v1165 = vld [vmem:[%s5 + $0x6b0] sm:$0xff]
  %v1166 = vld [vmem:[%s5 + $0x6b8] sm:$0xff]
  %v1167 = vld [vmem:[%s5 + $0x6c0] sm:$0xff]
  %v1168 = vld [vmem:[%s5 + $0x6c8] sm:$0xff]
  %v1169 = vld [vmem:[%s5 + $0x6d0] sm:$0xff]
  %v1170 = vld [vmem:[%s5 + $0x6d8] sm:$0xff]
  %v1171 = vld [vmem:[%s5 + $0x6e0] sm:$0xff]
  %v1172 = vld [vmem:[%s5 + $0x6e8] sm:$0xff]
  %v1173 = vld [vmem:[%s5 + $0x6f0] sm:$0xff]
  %v1174 = vld [vmem:[%s5 + $0x6f8] sm:$0xff]
  %v1175 = vld [vmem:[%s5 + $0x700] sm:$0xff]
  %v1176 = vld [vmem:[%s5 + $0x708] sm:$0xff]
  %v1177 = vld [vmem:[%s5 + $0x710] sm:$0xff]
  %v1178 = vld [vmem:[%s5 + $0x718] sm:$0xff]
  %v1179 = vld [vmem:[%s5 + $0x720] sm:$0xff]
  %v1180 = vld [vmem:[%s5 + $0x728] sm:$0xff]
  %v1181 = vld [vmem:[%s5 + $0x730] sm:$0xff]
  %v1182 = vld [vmem:[%s5 + $0x738] sm:$0xff]
  %v1183 = vld [vmem:[%s5 + $0x740] sm:$0xff]
  %v1184 = vld [vmem:[%s5 + $0x748] sm:$0xff]
  %v1185 = vld [vmem:[%s5 + $0x750] sm:$0xff]
  %v1186 = vld [vmem:[%s5 + $0x758] sm:$0xff]
  %v1187 = vld [vmem:[%s5 + $0x760] sm:$0xff]
  %v1188 = vld [vmem:[%s5 + $0x768] sm:$0xff]
  %v1189 = vld [vmem:[%s5 + $0x770] sm:$0xff]
  %v1190 = vld [vmem:[%s5 + $0x778] sm:$0xff]
  %v1191 = vld [vmem:[%s5 + $0x780] sm:$0xff]
  %v1192 = vld [vmem:[%s5 + $0x788] sm:$0xff]
  %v1193 = vld [vmem:[%s5 + $0x790] sm:$0xff]
  %v1194 = vld [vmem:[%s5 + $0x798] sm:$0xff]
  %v1195 = vld [vmem:[%s5 + $0x7a0] sm:$0xff]
  %v1196 = vld [vmem:[%s5 + $0x7a8] sm:$0xff]
  %v1197 = vld [vmem:[%s5 + $0x7b0] sm:$0xff]
  %v1198 = vld [vmem:[%s5 + $0x7b8] sm:$0xff]
  %v1199 = vld [vmem:[%s5 + $0x7c0] sm:$0xff]
  %v1200 = vld [vmem:[%s5 + $0x7c8] sm:$0xff]
  %v1201 = vld [vmem:[%s5 + $0x7d0] sm:$0xff]
  %v1202 = vld [vmem:[%s5 + $0x7d8] sm:$0xff]
  %v1203 = vld [vmem:[%s5 + $0x7e0] sm:$0xff]
  %v1204 = vld [vmem:[%s5 + $0x7e8] sm:$0xff]
  %v1205 = vld [vmem:[%s5 + $0x7f0] sm:$0xff]
  %v1206 = vld [vmem:[%s5 + $0x7f8] sm:$0xff]
  %v1207 = vld [vmem:[%s6] sm:$0x3]
  %v1209 = vlaneseq
  %v1210 = vshrl.u32 %v1209, 7
  %v1211 = vsub.s32 0, %v1210
  %v1212 = vrot.slane %v1207, %v1211
  %v1213 = vlaneseq
  %v1214 = vshrl.u32 %v1213, 7
  %v1215 = vsub.s32 1, %v1214
  %v1216 = vrot.slane %v1207, %v1215
  %v1475 = vunpack.c.l.b16 %v951
  %v1476 = vunpack.c.h.b16 %v951
  %v1477 = vunpack.c.l.b16 %v952
  %v1478 = vunpack.c.h.b16 %v952
  %v1479 = vunpack.c.l.b16 %v953
  %v1480 = vunpack.c.h.b16 %v953
  %v1481 = vunpack.c.l.b16 %v954
  %v1482 = vunpack.c.h.b16 %v954
  %v1483 = vunpack.c.l.b16 %v955
  %v1484 = vunpack.c.h.b16 %v955
  %v1485 = vunpack.c.l.b16 %v956
  %v1486 = vunpack.c.h.b16 %v956
  %v1487 = vunpack.c.l.b16 %v957
  %v1488 = vunpack.c.h.b16 %v957
  %v1489 = vunpack.c.l.b16 %v958
  %v1490 = vunpack.c.h.b16 %v958
  %v1491 = vunpack.c.l.b16 %v959
  %v1492 = vunpack.c.h.b16 %v959
  %v1493 = vunpack.c.l.b16 %v960
  %v1494 = vunpack.c.h.b16 %v960
  %v1495 = vunpack.c.l.b16 %v961
  %v1496 = vunpack.c.h.b16 %v961
  %v1497 = vunpack.c.l.b16 %v962
  %v1498 = vunpack.c.h.b16 %v962
  %v1499 = vunpack.c.l.b16 %v963
  %v1500 = vunpack.c.h.b16 %v963
  %v1501 = vunpack.c.l.b16 %v964
  %v1502 = vunpack.c.h.b16 %v964
  %v1503 = vunpack.c.l.b16 %v965
  %v1504 = vunpack.c.h.b16 %v965
  %v1505 = vunpack.c.l.b16 %v966
  %v1506 = vunpack.c.h.b16 %v966
  %v1507 = vunpack.c.l.b16 %v967
  %v1508 = vunpack.c.h.b16 %v967
  %v1509 = vunpack.c.l.b16 %v968
  %v1510 = vunpack.c.h.b16 %v968
  %v1511 = vunpack.c.l.b16 %v969
  %v1512 = vunpack.c.h.b16 %v969
  %v1513 = vunpack.c.l.b16 %v970
  %v1514 = vunpack.c.h.b16 %v970
  %v1515 = vunpack.c.l.b16 %v971
  %v1516 = vunpack.c.h.b16 %v971
  %v1517 = vunpack.c.l.b16 %v972
  %v1518 = vunpack.c.h.b16 %v972
  %v1519 = vunpack.c.l.b16 %v973
  %v1520 = vunpack.c.h.b16 %v973
  %v1521 = vunpack.c.l.b16 %v974
  %v1522 = vunpack.c.h.b16 %v974
  %v1523 = vunpack.c.l.b16 %v975
  %v1524 = vunpack.c.h.b16 %v975
  %v1525 = vunpack.c.l.b16 %v976
  %v1526 = vunpack.c.h.b16 %v976
  %v1527 = vunpack.c.l.b16 %v977
  %v1528 = vunpack.c.h.b16 %v977
  %v1529 = vunpack.c.l.b16 %v978
  %v1530 = vunpack.c.h.b16 %v978
  %v1531 = vunpack.c.l.b16 %v979
  %v1532 = vunpack.c.h.b16 %v979
  %v1533 = vunpack.c.l.b16 %v980
  %v1534 = vunpack.c.h.b16 %v980
  %v1535 = vunpack.c.l.b16 %v981
  %v1536 = vunpack.c.h.b16 %v981
  %v1537 = vunpack.c.l.b16 %v982
  %v1538 = vunpack.c.h.b16 %v982
  %v1539 = vunpack.c.l.b16 %v983
  %v1540 = vunpack.c.h.b16 %v983
  %v1541 = vunpack.c.l.b16 %v984
  %v1542 = vunpack.c.h.b16 %v984
  %v1543 = vunpack.c.l.b16 %v985
  %v1544 = vunpack.c.h.b16 %v985
  %v1545 = vunpack.c.l.b16 %v986
  %v1546 = vunpack.c.h.b16 %v986
  %v1547 = vunpack.c.l.b16 %v987
  %v1548 = vunpack.c.h.b16 %v987
  %v1549 = vunpack.c.l.b16 %v988
  %v1550 = vunpack.c.h.b16 %v988
  %v1551 = vunpack.c.l.b16 %v989
  %v1552 = vunpack.c.h.b16 %v989
  %v1553 = vunpack.c.l.b16 %v990
  %v1554 = vunpack.c.h.b16 %v990
  %v1555 = vunpack.c.l.b16 %v991
  %v1556 = vunpack.c.h.b16 %v991
  %v1557 = vunpack.c.l.b16 %v992
  %v1558 = vunpack.c.h.b16 %v992
  %v1559 = vunpack.c.l.b16 %v993
  %v1560 = vunpack.c.h.b16 %v993
  %v1561 = vunpack.c.l.b16 %v994
  %v1562 = vunpack.c.h.b16 %v994
  %v1563 = vunpack.c.l.b16 %v995
  %v1564 = vunpack.c.h.b16 %v995
  %v1565 = vunpack.c.l.b16 %v996
  %v1566 = vunpack.c.h.b16 %v996
  %v1567 = vunpack.c.l.b16 %v997
  %v1568 = vunpack.c.h.b16 %v997
  %v1569 = vunpack.c.l.b16 %v998
  %v1570 = vunpack.c.h.b16 %v998
  %v1571 = vunpack.c.l.b16 %v999
  %v1572 = vunpack.c.h.b16 %v999
  %v1573 = vunpack.c.l.b16 %v1000
  %v1574 = vunpack.c.h.b16 %v1000
  %v1575 = vunpack.c.l.b16 %v1001
  %v1576 = vunpack.c.h.b16 %v1001
  %v1577 = vunpack.c.l.b16 %v1002
  %v1578 = vunpack.c.h.b16 %v1002
  %v1579 = vunpack.c.l.b16 %v1003
  %v1580 = vunpack.c.h.b16 %v1003
  %v1581 = vunpack.c.l.b16 %v1004
  %v1582 = vunpack.c.h.b16 %v1004
  %v1583 = vunpack.c.l.b16 %v1005
  %v1584 = vunpack.c.h.b16 %v1005
  %v1585 = vunpack.c.l.b16 %v1006
  %v1586 = vunpack.c.h.b16 %v1006
  %v1587 = vunpack.c.l.b16 %v1007
  %v1588 = vunpack.c.h.b16 %v1007
  %v1589 = vunpack.c.l.b16 %v1008
  %v1590 = vunpack.c.h.b16 %v1008
  %v1591 = vunpack.c.l.b16 %v1009
  %v1592 = vunpack.c.h.b16 %v1009
  %v1593 = vunpack.c.l.b16 %v1010
  %v1594 = vunpack.c.h.b16 %v1010
  %v1595 = vunpack.c.l.b16 %v1011
  %v1596 = vunpack.c.h.b16 %v1011
  %v1597 = vunpack.c.l.b16 %v1012
  %v1598 = vunpack.c.h.b16 %v1012
  %v1599 = vunpack.c.l.b16 %v1013
  %v1600 = vunpack.c.h.b16 %v1013
  %v1601 = vunpack.c.l.b16 %v1014
  %v1602 = vunpack.c.h.b16 %v1014
  %v1603 = vunpack.c.l.b16 %v1015
  %v1604 = vunpack.c.h.b16 %v1015
  %v1605 = vunpack.c.l.b16 %v1016
  %v1606 = vunpack.c.h.b16 %v1016
  %v1607 = vunpack.c.l.b16 %v1017
  %v1608 = vunpack.c.h.b16 %v1017
  %v1609 = vunpack.c.l.b16 %v1018
  %v1610 = vunpack.c.h.b16 %v1018
  %v1611 = vunpack.c.l.b16 %v1019
  %v1612 = vunpack.c.h.b16 %v1019
  %v1613 = vunpack.c.l.b16 %v1020
  %v1614 = vunpack.c.h.b16 %v1020
  %v1615 = vunpack.c.l.b16 %v1021
  %v1616 = vunpack.c.h.b16 %v1021
  %v1617 = vunpack.c.l.b16 %v1022
  %v1618 = vunpack.c.h.b16 %v1022
  %v1619 = vunpack.c.l.b16 %v1023
  %v1620 = vunpack.c.h.b16 %v1023
  %v1621 = vunpack.c.l.b16 %v1024
  %v1622 = vunpack.c.h.b16 %v1024
  %v1623 = vunpack.c.l.b16 %v1025
  %v1624 = vunpack.c.h.b16 %v1025
  %v1625 = vunpack.c.l.b16 %v1026
  %v1626 = vunpack.c.h.b16 %v1026
  %v1627 = vunpack.c.l.b16 %v1027
  %v1628 = vunpack.c.h.b16 %v1027
  %v1629 = vunpack.c.l.b16 %v1028
  %v1630 = vunpack.c.h.b16 %v1028
  %v1631 = vunpack.c.l.b16 %v1029
  %v1632 = vunpack.c.h.b16 %v1029
  %v1633 = vunpack.c.l.b16 %v1030
  %v1634 = vunpack.c.h.b16 %v1030
  %v1635 = vunpack.c.l.b16 %v1031
  %v1636 = vunpack.c.h.b16 %v1031
  %v1637 = vunpack.c.l.b16 %v1032
  %v1638 = vunpack.c.h.b16 %v1032
  %v1639 = vunpack.c.l.b16 %v1033
  %v1640 = vunpack.c.h.b16 %v1033
  %v1641 = vunpack.c.l.b16 %v1034
  %v1642 = vunpack.c.h.b16 %v1034
  %v1643 = vunpack.c.l.b16 %v1035
  %v1644 = vunpack.c.h.b16 %v1035
  %v1645 = vunpack.c.l.b16 %v1036
  %v1646 = vunpack.c.h.b16 %v1036
  %v1647 = vunpack.c.l.b16 %v1037
  %v1648 = vunpack.c.h.b16 %v1037
  %v1649 = vunpack.c.l.b16 %v1038
  %v1650 = vunpack.c.h.b16 %v1038
  %v1651 = vunpack.c.l.b16 %v1039
  %v1652 = vunpack.c.h.b16 %v1039
  %v1653 = vunpack.c.l.b16 %v1040
  %v1654 = vunpack.c.h.b16 %v1040
  %v1655 = vunpack.c.l.b16 %v1041
  %v1656 = vunpack.c.h.b16 %v1041
  %v1657 = vunpack.c.l.b16 %v1042
  %v1658 = vunpack.c.h.b16 %v1042
  %v1659 = vunpack.c.l.b16 %v1043
  %v1660 = vunpack.c.h.b16 %v1043
  %v1661 = vunpack.c.l.b16 %v1044
  %v1662 = vunpack.c.h.b16 %v1044
  %v1663 = vunpack.c.l.b16 %v1045
  %v1664 = vunpack.c.h.b16 %v1045
  %v1665 = vunpack.c.l.b16 %v1046
  %v1666 = vunpack.c.h.b16 %v1046
  %v1667 = vunpack.c.l.b16 %v1047
  %v1668 = vunpack.c.h.b16 %v1047
  %v1669 = vunpack.c.l.b16 %v1048
  %v1670 = vunpack.c.h.b16 %v1048
  %v1671 = vunpack.c.l.b16 %v1049
  %v1672 = vunpack.c.h.b16 %v1049
  %v1673 = vunpack.c.l.b16 %v1050
  %v1674 = vunpack.c.h.b16 %v1050
  %v1675 = vunpack.c.l.b16 %v1051
  %v1676 = vunpack.c.h.b16 %v1051
  %v1677 = vunpack.c.l.b16 %v1052
  %v1678 = vunpack.c.h.b16 %v1052
  %v1679 = vunpack.c.l.b16 %v1053
  %v1680 = vunpack.c.h.b16 %v1053
  %v1681 = vunpack.c.l.b16 %v1054
  %v1682 = vunpack.c.h.b16 %v1054
  %v1683 = vunpack.c.l.b16 %v1055
  %v1684 = vunpack.c.h.b16 %v1055
  %v1685 = vunpack.c.l.b16 %v1056
  %v1686 = vunpack.c.h.b16 %v1056
  %v1687 = vunpack.c.l.b16 %v1057
  %v1688 = vunpack.c.h.b16 %v1057
  %v1689 = vunpack.c.l.b16 %v1058
  %v1690 = vunpack.c.h.b16 %v1058
  %v1691 = vunpack.c.l.b16 %v1059
  %v1692 = vunpack.c.h.b16 %v1059
  %v1693 = vunpack.c.l.b16 %v1060
  %v1694 = vunpack.c.h.b16 %v1060
  %v1695 = vunpack.c.l.b16 %v1061
  %v1696 = vunpack.c.h.b16 %v1061
  %v1697 = vunpack.c.l.b16 %v1062
  %v1698 = vunpack.c.h.b16 %v1062
  %v1699 = vunpack.c.l.b16 %v1063
  %v1700 = vunpack.c.h.b16 %v1063
  %v1701 = vunpack.c.l.b16 %v1064
  %v1702 = vunpack.c.h.b16 %v1064
  %v1703 = vunpack.c.l.b16 %v1065
  %v1704 = vunpack.c.h.b16 %v1065
  %v1705 = vunpack.c.l.b16 %v1066
  %v1706 = vunpack.c.h.b16 %v1066
  %v1707 = vunpack.c.l.b16 %v1067
  %v1708 = vunpack.c.h.b16 %v1067
  %v1709 = vunpack.c.l.b16 %v1068
  %v1710 = vunpack.c.h.b16 %v1068
  %v1711 = vunpack.c.l.b16 %v1069
  %v1712 = vunpack.c.h.b16 %v1069
  %v1713 = vunpack.c.l.b16 %v1070
  %v1714 = vunpack.c.h.b16 %v1070
  %v1715 = vunpack.c.l.b16 %v1071
  %v1716 = vunpack.c.h.b16 %v1071
  %v1717 = vunpack.c.l.b16 %v1072
  %v1718 = vunpack.c.h.b16 %v1072
  %v1719 = vunpack.c.l.b16 %v1073
  %v1720 = vunpack.c.h.b16 %v1073
  %v1721 = vunpack.c.l.b16 %v1074
  %v1722 = vunpack.c.h.b16 %v1074
  %v1723 = vunpack.c.l.b16 %v1075
  %v1724 = vunpack.c.h.b16 %v1075
  %v1725 = vunpack.c.l.b16 %v1076
  %v1726 = vunpack.c.h.b16 %v1076
  %v1727 = vunpack.c.l.b16 %v1077
  %v1728 = vunpack.c.h.b16 %v1077
  %v1729 = vunpack.c.l.b16 %v1078
  %v1730 = vunpack.c.h.b16 %v1078
  %v1731 = vunpack.c.l.b16 %v1079
  %v1732 = vunpack.c.h.b16 %v1079
  %v1733 = vunpack.c.l.b16 %v1080
  %v1734 = vunpack.c.h.b16 %v1080
  %v1735 = vunpack.c.l.b16 %v1081
  %v1736 = vunpack.c.h.b16 %v1081
  %v1737 = vunpack.c.l.b16 %v1082
  %v1738 = vunpack.c.h.b16 %v1082
  %v1739 = vunpack.c.l.b16 %v1083
  %v1740 = vunpack.c.h.b16 %v1083
  %v1741 = vunpack.c.l.b16 %v1084
  %v1742 = vunpack.c.h.b16 %v1084
  %v1743 = vunpack.c.l.b16 %v1085
  %v1744 = vunpack.c.h.b16 %v1085
  %v1745 = vunpack.c.l.b16 %v1086
  %v1746 = vunpack.c.h.b16 %v1086
  %v1747 = vunpack.c.l.b16 %v1087
  %v1748 = vunpack.c.h.b16 %v1087
  %v1749 = vunpack.c.l.b16 %v1088
  %v1750 = vunpack.c.h.b16 %v1088
  %v1751 = vunpack.c.l.b16 %v1089
  %v1752 = vunpack.c.h.b16 %v1089
  %v1753 = vunpack.c.l.b16 %v1090
  %v1754 = vunpack.c.h.b16 %v1090
  %v1755 = vunpack.c.l.b16 %v1091
  %v1756 = vunpack.c.h.b16 %v1091
  %v1757 = vunpack.c.l.b16 %v1092
  %v1758 = vunpack.c.h.b16 %v1092
  %v1759 = vunpack.c.l.b16 %v1093
  %v1760 = vunpack.c.h.b16 %v1093
  %v1761 = vunpack.c.l.b16 %v1094
  %v1762 = vunpack.c.h.b16 %v1094
  %v1763 = vunpack.c.l.b16 %v1095
  %v1764 = vunpack.c.h.b16 %v1095
  %v1765 = vunpack.c.l.b16 %v1096
  %v1766 = vunpack.c.h.b16 %v1096
  %v1767 = vunpack.c.l.b16 %v1097
  %v1768 = vunpack.c.h.b16 %v1097
  %v1769 = vunpack.c.l.b16 %v1098
  %v1770 = vunpack.c.h.b16 %v1098
  %v1771 = vunpack.c.l.b16 %v1099
  %v1772 = vunpack.c.h.b16 %v1099
  %v1773 = vunpack.c.l.b16 %v1100
  %v1774 = vunpack.c.h.b16 %v1100
  %v1775 = vunpack.c.l.b16 %v1101
  %v1776 = vunpack.c.h.b16 %v1101
  %v1777 = vunpack.c.l.b16 %v1102
  %v1778 = vunpack.c.h.b16 %v1102
  %v1779 = vunpack.c.l.b16 %v1103
  %v1780 = vunpack.c.h.b16 %v1103
  %v1781 = vunpack.c.l.b16 %v1104
  %v1782 = vunpack.c.h.b16 %v1104
  %v1783 = vunpack.c.l.b16 %v1105
  %v1784 = vunpack.c.h.b16 %v1105
  %v1785 = vunpack.c.l.b16 %v1106
  %v1786 = vunpack.c.h.b16 %v1106
  %v1787 = vunpack.c.l.b16 %v1107
  %v1788 = vunpack.c.h.b16 %v1107
  %v1789 = vunpack.c.l.b16 %v1108
  %v1790 = vunpack.c.h.b16 %v1108
  %v1791 = vunpack.c.l.b16 %v1109
  %v1792 = vunpack.c.h.b16 %v1109
  %v1793 = vunpack.c.l.b16 %v1110
  %v1794 = vunpack.c.h.b16 %v1110
  %v1795 = vunpack.c.l.b16 %v1111
  %v1796 = vunpack.c.h.b16 %v1111
  %v1797 = vunpack.c.l.b16 %v1112
  %v1798 = vunpack.c.h.b16 %v1112
  %v1799 = vunpack.c.l.b16 %v1113
  %v1800 = vunpack.c.h.b16 %v1113
  %v1801 = vunpack.c.l.b16 %v1114
  %v1802 = vunpack.c.h.b16 %v1114
  %v1803 = vunpack.c.l.b16 %v1115
  %v1804 = vunpack.c.h.b16 %v1115
  %v1805 = vunpack.c.l.b16 %v1116
  %v1806 = vunpack.c.h.b16 %v1116
  %v1807 = vunpack.c.l.b16 %v1117
  %v1808 = vunpack.c.h.b16 %v1117
  %v1809 = vunpack.c.l.b16 %v1118
  %v1810 = vunpack.c.h.b16 %v1118
  %v1811 = vunpack.c.l.b16 %v1119
  %v1812 = vunpack.c.h.b16 %v1119
  %v1813 = vunpack.c.l.b16 %v1120
  %v1814 = vunpack.c.h.b16 %v1120
  %v1815 = vunpack.c.l.b16 %v1121
  %v1816 = vunpack.c.h.b16 %v1121
  %v1817 = vunpack.c.l.b16 %v1122
  %v1818 = vunpack.c.h.b16 %v1122
  %v1819 = vunpack.c.l.b16 %v1123
  %v1820 = vunpack.c.h.b16 %v1123
  %v1821 = vunpack.c.l.b16 %v1124
  %v1822 = vunpack.c.h.b16 %v1124
  %v1823 = vunpack.c.l.b16 %v1125
  %v1824 = vunpack.c.h.b16 %v1125
  %v1825 = vunpack.c.l.b16 %v1126
  %v1826 = vunpack.c.h.b16 %v1126
  %v1827 = vunpack.c.l.b16 %v1127
  %v1828 = vunpack.c.h.b16 %v1127
  %v1829 = vunpack.c.l.b16 %v1128
  %v1830 = vunpack.c.h.b16 %v1128
  %v1831 = vunpack.c.l.b16 %v1129
  %v1832 = vunpack.c.h.b16 %v1129
  %v1833 = vunpack.c.l.b16 %v1130
  %v1834 = vunpack.c.h.b16 %v1130
  %v1835 = vunpack.c.l.b16 %v1131
  %v1836 = vunpack.c.h.b16 %v1131
  %v1837 = vunpack.c.l.b16 %v1132
  %v1838 = vunpack.c.h.b16 %v1132
  %v1839 = vunpack.c.l.b16 %v1133
  %v1840 = vunpack.c.h.b16 %v1133
  %v1841 = vunpack.c.l.b16 %v1134
  %v1842 = vunpack.c.h.b16 %v1134
  %v1843 = vunpack.c.l.b16 %v1135
  %v1844 = vunpack.c.h.b16 %v1135
  %v1845 = vunpack.c.l.b16 %v1136
  %v1846 = vunpack.c.h.b16 %v1136
  %v1847 = vunpack.c.l.b16 %v1137
  %v1848 = vunpack.c.h.b16 %v1137
  %v1849 = vunpack.c.l.b16 %v1138
  %v1850 = vunpack.c.h.b16 %v1138
  %v1851 = vunpack.c.l.b16 %v1139
  %v1852 = vunpack.c.h.b16 %v1139
  %v1853 = vunpack.c.l.b16 %v1140
  %v1854 = vunpack.c.h.b16 %v1140
  %v1855 = vunpack.c.l.b16 %v1141
  %v1856 = vunpack.c.h.b16 %v1141
  %v1857 = vunpack.c.l.b16 %v1142
  %v1858 = vunpack.c.h.b16 %v1142
  %v1859 = vunpack.c.l.b16 %v1143
  %v1860 = vunpack.c.h.b16 %v1143
  %v1861 = vunpack.c.l.b16 %v1144
  %v1862 = vunpack.c.h.b16 %v1144
  %v1863 = vunpack.c.l.b16 %v1145
  %v1864 = vunpack.c.h.b16 %v1145
  %v1865 = vunpack.c.l.b16 %v1146
  %v1866 = vunpack.c.h.b16 %v1146
  %v1867 = vunpack.c.l.b16 %v1147
  %v1868 = vunpack.c.h.b16 %v1147
  %v1869 = vunpack.c.l.b16 %v1148
  %v1870 = vunpack.c.h.b16 %v1148
  %v1871 = vunpack.c.l.b16 %v1149
  %v1872 = vunpack.c.h.b16 %v1149
  %v1873 = vunpack.c.l.b16 %v1150
  %v1874 = vunpack.c.h.b16 %v1150
  %v1875 = vunpack.c.l.b16 %v1151
  %v1876 = vunpack.c.h.b16 %v1151
  %v1877 = vunpack.c.l.b16 %v1152
  %v1878 = vunpack.c.h.b16 %v1152
  %v1879 = vunpack.c.l.b16 %v1153
  %v1880 = vunpack.c.h.b16 %v1153
  %v1881 = vunpack.c.l.b16 %v1154
  %v1882 = vunpack.c.h.b16 %v1154
  %v1883 = vunpack.c.l.b16 %v1155
  %v1884 = vunpack.c.h.b16 %v1155
  %v1885 = vunpack.c.l.b16 %v1156
  %v1886 = vunpack.c.h.b16 %v1156
  %v1887 = vunpack.c.l.b16 %v1157
  %v1888 = vunpack.c.h.b16 %v1157
  %v1889 = vunpack.c.l.b16 %v1158
  %v1890 = vunpack.c.h.b16 %v1158
  %v1891 = vunpack.c.l.b16 %v1159
  %v1892 = vunpack.c.h.b16 %v1159
  %v1893 = vunpack.c.l.b16 %v1160
  %v1894 = vunpack.c.h.b16 %v1160
  %v1895 = vunpack.c.l.b16 %v1161
  %v1896 = vunpack.c.h.b16 %v1161
  %v1897 = vunpack.c.l.b16 %v1162
  %v1898 = vunpack.c.h.b16 %v1162
  %v1899 = vunpack.c.l.b16 %v1163
  %v1900 = vunpack.c.h.b16 %v1163
  %v1901 = vunpack.c.l.b16 %v1164
  %v1902 = vunpack.c.h.b16 %v1164
  %v1903 = vunpack.c.l.b16 %v1165
  %v1904 = vunpack.c.h.b16 %v1165
  %v1905 = vunpack.c.l.b16 %v1166
  %v1906 = vunpack.c.h.b16 %v1166
  %v1907 = vunpack.c.l.b16 %v1167
  %v1908 = vunpack.c.h.b16 %v1167
  %v1909 = vunpack.c.l.b16 %v1168
  %v1910 = vunpack.c.h.b16 %v1168
  %v1911 = vunpack.c.l.b16 %v1169
  %v1912 = vunpack.c.h.b16 %v1169
  %v1913 = vunpack.c.l.b16 %v1170
  %v1914 = vunpack.c.h.b16 %v1170
  %v1915 = vunpack.c.l.b16 %v1171
  %v1916 = vunpack.c.h.b16 %v1171
  %v1917 = vunpack.c.l.b16 %v1172
  %v1918 = vunpack.c.h.b16 %v1172
  %v1919 = vunpack.c.l.b16 %v1173
  %v1920 = vunpack.c.h.b16 %v1173
  %v1921 = vunpack.c.l.b16 %v1174
  %v1922 = vunpack.c.h.b16 %v1174
  %v1923 = vunpack.c.l.b16 %v1175
  %v1924 = vunpack.c.h.b16 %v1175
  %v1925 = vunpack.c.l.b16 %v1176
  %v1926 = vunpack.c.h.b16 %v1176
  %v1927 = vunpack.c.l.b16 %v1177
  %v1928 = vunpack.c.h.b16 %v1177
  %v1929 = vunpack.c.l.b16 %v1178
  %v1930 = vunpack.c.h.b16 %v1178
  %v1931 = vunpack.c.l.b16 %v1179
  %v1932 = vunpack.c.h.b16 %v1179
  %v1933 = vunpack.c.l.b16 %v1180
  %v1934 = vunpack.c.h.b16 %v1180
  %v1935 = vunpack.c.l.b16 %v1181
  %v1936 = vunpack.c.h.b16 %v1181
  %v1937 = vunpack.c.l.b16 %v1182
  %v1938 = vunpack.c.h.b16 %v1182
  %v1939 = vunpack.c.l.b16 %v1183
  %v1940 = vunpack.c.h.b16 %v1183
  %v1941 = vunpack.c.l.b16 %v1184
  %v1942 = vunpack.c.h.b16 %v1184
  %v1943 = vunpack.c.l.b16 %v1185
  %v1944 = vunpack.c.h.b16 %v1185
  %v1945 = vunpack.c.l.b16 %v1186
  %v1946 = vunpack.c.h.b16 %v1186
  %v1947 = vunpack.c.l.b16 %v1187
  %v1948 = vunpack.c.h.b16 %v1187
  %v1949 = vunpack.c.l.b16 %v1188
  %v1950 = vunpack.c.h.b16 %v1188
  %v1951 = vunpack.c.l.b16 %v1189
  %v1952 = vunpack.c.h.b16 %v1189
  %v1953 = vunpack.c.l.b16 %v1190
  %v1954 = vunpack.c.h.b16 %v1190
  %v1955 = vunpack.c.l.b16 %v1191
  %v1956 = vunpack.c.h.b16 %v1191
  %v1957 = vunpack.c.l.b16 %v1192
  %v1958 = vunpack.c.h.b16 %v1192
  %v1959 = vunpack.c.l.b16 %v1193
  %v1960 = vunpack.c.h.b16 %v1193
  %v1961 = vunpack.c.l.b16 %v1194
  %v1962 = vunpack.c.h.b16 %v1194
  %v1963 = vunpack.c.l.b16 %v1195
  %v1964 = vunpack.c.h.b16 %v1195
  %v1965 = vunpack.c.l.b16 %v1196
  %v1966 = vunpack.c.h.b16 %v1196
  %v1967 = vunpack.c.l.b16 %v1197
  %v1968 = vunpack.c.h.b16 %v1197
  %v1969 = vunpack.c.l.b16 %v1198
  %v1970 = vunpack.c.h.b16 %v1198
  %v1971 = vunpack.c.l.b16 %v1199
  %v1972 = vunpack.c.h.b16 %v1199
  %v1973 = vunpack.c.l.b16 %v1200
  %v1974 = vunpack.c.h.b16 %v1200
  %v1975 = vunpack.c.l.b16 %v1201
  %v1976 = vunpack.c.h.b16 %v1201
  %v1977 = vunpack.c.l.b16 %v1202
  %v1978 = vunpack.c.h.b16 %v1202
  %v1979 = vunpack.c.l.b16 %v1203
  %v1980 = vunpack.c.h.b16 %v1203
  %v1981 = vunpack.c.l.b16 %v1204
  %v1982 = vunpack.c.h.b16 %v1204
  %v1983 = vunpack.c.l.b16 %v1205
  %v1984 = vunpack.c.h.b16 %v1205
  %v1985 = vunpack.c.l.b16 %v1206
  %v1986 = vunpack.c.h.b16 %v1206
  %v1987 = vpack.c.b16 %v1477, %v1475
  %v1988 = vpack.c.b16 %v1478, %v1476
  %v1989 = vpack.c.b16 %v1481, %v1479
  %v1990 = vpack.c.b16 %v1482, %v1480
  %v1991 = vpack.c.b16 %v1485, %v1483
  %v1992 = vpack.c.b16 %v1486, %v1484
  %v1993 = vpack.c.b16 %v1489, %v1487
  %v1994 = vpack.c.b16 %v1490, %v1488
  %v1995 = vpack.c.b16 %v1493, %v1491
  %v1996 = vpack.c.b16 %v1494, %v1492
  %v1997 = vpack.c.b16 %v1497, %v1495
  %v1998 = vpack.c.b16 %v1498, %v1496
  %v1999 = vpack.c.b16 %v1501, %v1499
  %v2000 = vpack.c.b16 %v1502, %v1500
  %v2001 = vpack.c.b16 %v1505, %v1503
  %v2002 = vpack.c.b16 %v1506, %v1504
  %v2003 = vpack.c.b16 %v1509, %v1507
  %v2004 = vpack.c.b16 %v1510, %v1508
  %v2005 = vpack.c.b16 %v1513, %v1511
  %v2006 = vpack.c.b16 %v1514, %v1512
  %v2007 = vpack.c.b16 %v1517, %v1515
  %v2008 = vpack.c.b16 %v1518, %v1516
  %v2009 = vpack.c.b16 %v1521, %v1519
  %v2010 = vpack.c.b16 %v1522, %v1520
  %v2011 = vpack.c.b16 %v1525, %v1523
  %v2012 = vpack.c.b16 %v1526, %v1524
  %v2013 = vpack.c.b16 %v1529, %v1527
  %v2014 = vpack.c.b16 %v1530, %v1528
  %v2015 = vpack.c.b16 %v1533, %v1531
  %v2016 = vpack.c.b16 %v1534, %v1532
  %v2017 = vpack.c.b16 %v1537, %v1535
  %v2018 = vpack.c.b16 %v1538, %v1536
  %v2019 = vpack.c.b16 %v1541, %v1539
  %v2020 = vpack.c.b16 %v1542, %v1540
  %v2021 = vpack.c.b16 %v1545, %v1543
  %v2022 = vpack.c.b16 %v1546, %v1544
  %v2023 = vpack.c.b16 %v1549, %v1547
  %v2024 = vpack.c.b16 %v1550, %v1548
  %v2025 = vpack.c.b16 %v1553, %v1551
  %v2026 = vpack.c.b16 %v1554, %v1552
  %v2027 = vpack.c.b16 %v1557, %v1555
  %v2028 = vpack.c.b16 %v1558, %v1556
  %v2029 = vpack.c.b16 %v1561, %v1559
  %v2030 = vpack.c.b16 %v1562, %v1560
  %v2031 = vpack.c.b16 %v1565, %v1563
  %v2032 = vpack.c.b16 %v1566, %v1564
  %v2033 = vpack.c.b16 %v1569, %v1567
  %v2034 = vpack.c.b16 %v1570, %v1568
  %v2035 = vpack.c.b16 %v1573, %v1571
  %v2036 = vpack.c.b16 %v1574, %v1572
  %v2037 = vpack.c.b16 %v1577, %v1575
  %v2038 = vpack.c.b16 %v1578, %v1576
  %v2039 = vpack.c.b16 %v1581, %v1579
  %v2040 = vpack.c.b16 %v1582, %v1580
  %v2041 = vpack.c.b16 %v1585, %v1583
  %v2042 = vpack.c.b16 %v1586, %v1584
  %v2043 = vpack.c.b16 %v1589, %v1587
  %v2044 = vpack.c.b16 %v1590, %v1588
  %v2045 = vpack.c.b16 %v1593, %v1591
  %v2046 = vpack.c.b16 %v1594, %v1592
  %v2047 = vpack.c.b16 %v1597, %v1595
  %v2048 = vpack.c.b16 %v1598, %v1596
  %v2049 = vpack.c.b16 %v1601, %v1599
  %v2050 = vpack.c.b16 %v1602, %v1600
  %v2051 = vpack.c.b16 %v1605, %v1603
  %v2052 = vpack.c.b16 %v1606, %v1604
  %v2053 = vpack.c.b16 %v1609, %v1607
  %v2054 = vpack.c.b16 %v1610, %v1608
  %v2055 = vpack.c.b16 %v1613, %v1611
  %v2056 = vpack.c.b16 %v1614, %v1612
  %v2057 = vpack.c.b16 %v1617, %v1615
  %v2058 = vpack.c.b16 %v1618, %v1616
  %v2059 = vpack.c.b16 %v1621, %v1619
  %v2060 = vpack.c.b16 %v1622, %v1620
  %v2061 = vpack.c.b16 %v1625, %v1623
  %v2062 = vpack.c.b16 %v1626, %v1624
  %v2063 = vpack.c.b16 %v1629, %v1627
  %v2064 = vpack.c.b16 %v1630, %v1628
  %v2065 = vpack.c.b16 %v1633, %v1631
  %v2066 = vpack.c.b16 %v1634, %v1632
  %v2067 = vpack.c.b16 %v1637, %v1635
  %v2068 = vpack.c.b16 %v1638, %v1636
  %v2069 = vpack.c.b16 %v1641, %v1639
  %v2070 = vpack.c.b16 %v1642, %v1640
  %v2071 = vpack.c.b16 %v1645, %v1643
  %v2072 = vpack.c.b16 %v1646, %v1644
  %v2073 = vpack.c.b16 %v1649, %v1647
  %v2074 = vpack.c.b16 %v1650, %v1648
  %v2075 = vpack.c.b16 %v1653, %v1651
  %v2076 = vpack.c.b16 %v1654, %v1652
  %v2077 = vpack.c.b16 %v1657, %v1655
  %v2078 = vpack.c.b16 %v1658, %v1656
  %v2079 = vpack.c.b16 %v1661, %v1659
  %v2080 = vpack.c.b16 %v1662, %v1660
  %v2081 = vpack.c.b16 %v1665, %v1663
  %v2082 = vpack.c.b16 %v1666, %v1664
  %v2083 = vpack.c.b16 %v1669, %v1667
  %v2084 = vpack.c.b16 %v1670, %v1668
  %v2085 = vpack.c.b16 %v1673, %v1671
  %v2086 = vpack.c.b16 %v1674, %v1672
  %v2087 = vpack.c.b16 %v1677, %v1675
  %v2088 = vpack.c.b16 %v1678, %v1676
  %v2089 = vpack.c.b16 %v1681, %v1679
  %v2090 = vpack.c.b16 %v1682, %v1680
  %v2091 = vpack.c.b16 %v1685, %v1683
  %v2092 = vpack.c.b16 %v1686, %v1684
  %v2093 = vpack.c.b16 %v1689, %v1687
  %v2094 = vpack.c.b16 %v1690, %v1688
  %v2095 = vpack.c.b16 %v1693, %v1691
  %v2096 = vpack.c.b16 %v1694, %v1692
  %v2097 = vpack.c.b16 %v1697, %v1695
  %v2098 = vpack.c.b16 %v1698, %v1696
  %v2099 = vpack.c.b16 %v1701, %v1699
  %v2100 = vpack.c.b16 %v1702, %v1700
  %v2101 = vpack.c.b16 %v1705, %v1703
  %v2102 = vpack.c.b16 %v1706, %v1704
  %v2103 = vpack.c.b16 %v1709, %v1707
  %v2104 = vpack.c.b16 %v1710, %v1708
  %v2105 = vpack.c.b16 %v1713, %v1711
  %v2106 = vpack.c.b16 %v1714, %v1712
  %v2107 = vpack.c.b16 %v1717, %v1715
  %v2108 = vpack.c.b16 %v1718, %v1716
  %v2109 = vpack.c.b16 %v1721, %v1719
  %v2110 = vpack.c.b16 %v1722, %v1720
  %v2111 = vpack.c.b16 %v1725, %v1723
  %v2112 = vpack.c.b16 %v1726, %v1724
  %v2113 = vpack.c.b16 %v1729, %v1727
  %v2114 = vpack.c.b16 %v1730, %v1728
  %v2115 = vpack.c.b16 %v1733, %v1731
  %v2116 = vpack.c.b16 %v1734, %v1732
  %v2117 = vpack.c.b16 %v1737, %v1735
  %v2118 = vpack.c.b16 %v1738, %v1736
  %v2119 = vpack.c.b16 %v1741, %v1739
  %v2120 = vpack.c.b16 %v1742, %v1740
  %v2121 = vpack.c.b16 %v1745, %v1743
  %v2122 = vpack.c.b16 %v1746, %v1744
  %v2123 = vpack.c.b16 %v1749, %v1747
  %v2124 = vpack.c.b16 %v1750, %v1748
  %v2125 = vpack.c.b16 %v1753, %v1751
  %v2126 = vpack.c.b16 %v1754, %v1752
  %v2127 = vpack.c.b16 %v1757, %v1755
  %v2128 = vpack.c.b16 %v1758, %v1756
  %v2129 = vpack.c.b16 %v1761, %v1759
  %v2130 = vpack.c.b16 %v1762, %v1760
  %v2131 = vpack.c.b16 %v1765, %v1763
  %v2132 = vpack.c.b16 %v1766, %v1764
  %v2133 = vpack.c.b16 %v1769, %v1767
  %v2134 = vpack.c.b16 %v1770, %v1768
  %v2135 = vpack.c.b16 %v1773, %v1771
  %v2136 = vpack.c.b16 %v1774, %v1772
  %v2137 = vpack.c.b16 %v1777, %v1775
  %v2138 = vpack.c.b16 %v1778, %v1776
  %v2139 = vpack.c.b16 %v1781, %v1779
  %v2140 = vpack.c.b16 %v1782, %v1780
  %v2141 = vpack.c.b16 %v1785, %v1783
  %v2142 = vpack.c.b16 %v1786, %v1784
  %v2143 = vpack.c.b16 %v1789, %v1787
  %v2144 = vpack.c.b16 %v1790, %v1788
  %v2145 = vpack.c.b16 %v1793, %v1791
  %v2146 = vpack.c.b16 %v1794, %v1792
  %v2147 = vpack.c.b16 %v1797, %v1795
  %v2148 = vpack.c.b16 %v1798, %v1796
  %v2149 = vpack.c.b16 %v1801, %v1799
  %v2150 = vpack.c.b16 %v1802, %v1800
  %v2151 = vpack.c.b16 %v1805, %v1803
  %v2152 = vpack.c.b16 %v1806, %v1804
  %v2153 = vpack.c.b16 %v1809, %v1807
  %v2154 = vpack.c.b16 %v1810, %v1808
  %v2155 = vpack.c.b16 %v1813, %v1811
  %v2156 = vpack.c.b16 %v1814, %v1812
  %v2157 = vpack.c.b16 %v1817, %v1815
  %v2158 = vpack.c.b16 %v1818, %v1816
  %v2159 = vpack.c.b16 %v1821, %v1819
  %v2160 = vpack.c.b16 %v1822, %v1820
  %v2161 = vpack.c.b16 %v1825, %v1823
  %v2162 = vpack.c.b16 %v1826, %v1824
  %v2163 = vpack.c.b16 %v1829, %v1827
  %v2164 = vpack.c.b16 %v1830, %v1828
  %v2165 = vpack.c.b16 %v1833, %v1831
  %v2166 = vpack.c.b16 %v1834, %v1832
  %v2167 = vpack.c.b16 %v1837, %v1835
  %v2168 = vpack.c.b16 %v1838, %v1836
  %v2169 = vpack.c.b16 %v1841, %v1839
  %v2170 = vpack.c.b16 %v1842, %v1840
  %v2171 = vpack.c.b16 %v1845, %v1843
  %v2172 = vpack.c.b16 %v1846, %v1844
  %v2173 = vpack.c.b16 %v1849, %v1847
  %v2174 = vpack.c.b16 %v1850, %v1848
  %v2175 = vpack.c.b16 %v1853, %v1851
  %v2176 = vpack.c.b16 %v1854, %v1852
  %v2177 = vpack.c.b16 %v1857, %v1855
  %v2178 = vpack.c.b16 %v1858, %v1856
  %v2179 = vpack.c.b16 %v1861, %v1859
  %v2180 = vpack.c.b16 %v1862, %v1860
  %v2181 = vpack.c.b16 %v1865, %v1863
  %v2182 = vpack.c.b16 %v1866, %v1864
  %v2183 = vpack.c.b16 %v1869, %v1867
  %v2184 = vpack.c.b16 %v1870, %v1868
  %v2185 = vpack.c.b16 %v1873, %v1871
  %v2186 = vpack.c.b16 %v1874, %v1872
  %v2187 = vpack.c.b16 %v1877, %v1875
  %v2188 = vpack.c.b16 %v1878, %v1876
  %v2189 = vpack.c.b16 %v1881, %v1879
  %v2190 = vpack.c.b16 %v1882, %v1880
  %v2191 = vpack.c.b16 %v1885, %v1883
  %v2192 = vpack.c.b16 %v1886, %v1884
  %v2193 = vpack.c.b16 %v1889, %v1887
  %v2194 = vpack.c.b16 %v1890, %v1888
  %v2195 = vpack.c.b16 %v1893, %v1891
  %v2196 = vpack.c.b16 %v1894, %v1892
  %v2197 = vpack.c.b16 %v1897, %v1895
  %v2198 = vpack.c.b16 %v1898, %v1896
  %v2199 = vpack.c.b16 %v1901, %v1899
  %v2200 = vpack.c.b16 %v1902, %v1900
  %v2201 = vpack.c.b16 %v1905, %v1903
  %v2202 = vpack.c.b16 %v1906, %v1904
  %v2203 = vpack.c.b16 %v1909, %v1907
  %v2204 = vpack.c.b16 %v1910, %v1908
  %v2205 = vpack.c.b16 %v1913, %v1911
  %v2206 = vpack.c.b16 %v1914, %v1912
  %v2207 = vpack.c.b16 %v1917, %v1915
  %v2208 = vpack.c.b16 %v1918, %v1916
  %v2209 = vpack.c.b16 %v1921, %v1919
  %v2210 = vpack.c.b16 %v1922, %v1920
  %v2211 = vpack.c.b16 %v1925, %v1923
  %v2212 = vpack.c.b16 %v1926, %v1924
  %v2213 = vpack.c.b16 %v1929, %v1927
  %v2214 = vpack.c.b16 %v1930, %v1928
  %v2215 = vpack.c.b16 %v1933, %v1931
  %v2216 = vpack.c.b16 %v1934, %v1932
  %v2217 = vpack.c.b16 %v1937, %v1935
  %v2218 = vpack.c.b16 %v1938, %v1936
  %v2219 = vpack.c.b16 %v1941, %v1939
  %v2220 = vpack.c.b16 %v1942, %v1940
  %v2221 = vpack.c.b16 %v1945, %v1943
  %v2222 = vpack.c.b16 %v1946, %v1944
  %v2223 = vpack.c.b16 %v1949, %v1947
  %v2224 = vpack.c.b16 %v1950, %v1948
  %v2225 = vpack.c.b16 %v1953, %v1951
  %v2226 = vpack.c.b16 %v1954, %v1952
  %v2227 = vpack.c.b16 %v1957, %v1955
  %v2228 = vpack.c.b16 %v1958, %v1956
  %v2229 = vpack.c.b16 %v1961, %v1959
  %v2230 = vpack.c.b16 %v1962, %v1960
  %v2231 = vpack.c.b16 %v1965, %v1963
  %v2232 = vpack.c.b16 %v1966, %v1964
  %v2233 = vpack.c.b16 %v1969, %v1967
  %v2234 = vpack.c.b16 %v1970, %v1968
  %v2235 = vpack.c.b16 %v1973, %v1971
  %v2236 = vpack.c.b16 %v1974, %v1972
  %v2237 = vpack.c.b16 %v1977, %v1975
  %v2238 = vpack.c.b16 %v1978, %v1976
  %v2239 = vpack.c.b16 %v1981, %v1979
  %v2240 = vpack.c.b16 %v1982, %v1980
  %v2241 = vpack.c.b16 %v1985, %v1983
  %v2242 = vpack.c.b16 %v1986, %v1984
  %2499 = vmatprep.subr.bf16.mxu0 %v1988
  %2500 = vmatpush1.bf16.msra.mxu0 %v1987
  %2501 = vmatprep.subr.bf16.mxu0 %v1990
  %2502 = vmatpush1.bf16.msra.mxu0 %v1989
  %2503 = vmatprep.subr.bf16.mxu0 %v1992
  %2504 = vmatpush1.bf16.msra.mxu0 %v1991
  %2505 = vmatprep.subr.bf16.mxu0 %v1994
  %2506 = vmatpush1.bf16.msra.mxu0 %v1993
  %2507 = vmatprep.subr.bf16.mxu0 %v1996
  %2508 = vmatpush1.bf16.msra.mxu0 %v1995
  %2509 = vmatprep.subr.bf16.mxu0 %v1998
  %2510 = vmatpush1.bf16.msra.mxu0 %v1997
  %2511 = vmatprep.subr.bf16.mxu0 %v2000
  %2512 = vmatpush1.bf16.msra.mxu0 %v1999
  %2513 = vmatprep.subr.bf16.mxu0 %v2002
  %2514 = vmatpush1.bf16.msra.mxu0 %v2001
  %2515 = vmatprep.subr.bf16.mxu0 %v2004
  %2516 = vmatpush1.bf16.msra.mxu0 %v2003
  %2517 = vmatprep.subr.bf16.mxu0 %v2006
  %2518 = vmatpush1.bf16.msra.mxu0 %v2005
  %2519 = vmatprep.subr.bf16.mxu0 %v2008
  %2520 = vmatpush1.bf16.msra.mxu0 %v2007
  %2521 = vmatprep.subr.bf16.mxu0 %v2010
  %2522 = vmatpush1.bf16.msra.mxu0 %v2009
  %2523 = vmatprep.subr.bf16.mxu0 %v2012
  %2524 = vmatpush1.bf16.msra.mxu0 %v2011
  %2525 = vmatprep.subr.bf16.mxu0 %v2014
  %2526 = vmatpush1.bf16.msra.mxu0 %v2013
  %2527 = vmatprep.subr.bf16.mxu0 %v2016
  %2528 = vmatpush1.bf16.msra.mxu0 %v2015
  %2529 = vmatprep.subr.bf16.mxu0 %v2018
  %2530 = vmatpush1.bf16.msra.mxu0 %v2017
  %2531 = vmatprep.mubr.bf16.mxu0 %v936
  %2532 = vmatmul.mubr.bf16.gmra.mrb[0].mxu0 %v935
  %v2533 = vpop.f32.mrb[0].mxu0
  %v2534 = vadd.f32 %v1212, %v2533
  %v2535 = vpop.f32.mrb[0].mxu0
  %v2536 = vadd.f32 %v1216, %v2535
  %v2537 = vpop.f32.mrb[0].mxu0
  %v2538 = vadd.f32 %v1212, %v2537
  %v2539 = vpop.f32.mrb[0].mxu0
  %v2540 = vadd.f32 %v1216, %v2539
  %2541 = vdwg.mxu0
  %2542 = vmatprep.subr.bf16.mxu0 %v2020
  %2543 = vmatpush1.bf16.msra.mxu0 %v2019
  %2544 = vmatprep.subr.bf16.mxu0 %v2022
  %2545 = vmatpush1.bf16.msra.mxu0 %v2021
  %2546 = vmatprep.subr.bf16.mxu0 %v2024
  %2547 = vmatpush1.bf16.msra.mxu0 %v2023
  %2548 = vmatprep.subr.bf16.mxu0 %v2026
  %2549 = vmatpush1.bf16.msra.mxu0 %v2025
  %2550 = vmatprep.subr.bf16.mxu0 %v2028
  %2551 = vmatpush1.bf16.msra.mxu0 %v2027
  %2552 = vmatprep.subr.bf16.mxu0 %v2030
  %2553 = vmatpush1.bf16.msra.mxu0 %v2029
  %2554 = vmatprep.subr.bf16.mxu0 %v2032
  %2555 = vmatpush1.bf16.msra.mxu0 %v2031
  %2556 = vmatprep.subr.bf16.mxu0 %v2034
  %2557 = vmatpush1.bf16.msra.mxu0 %v2033
  %2558 = vmatprep.subr.bf16.mxu0 %v2036
  %2559 = vmatpush1.bf16.msra.mxu0 %v2035
  %2560 = vmatprep.subr.bf16.mxu0 %v2038
  %2561 = vmatpush1.bf16.msra.mxu0 %v2037
  %2562 = vmatprep.subr.bf16.mxu0 %v2040
  %2563 = vmatpush1.bf16.msra.mxu0 %v2039
  %2564 = vmatprep.subr.bf16.mxu0 %v2042
  %2565 = vmatpush1.bf16.msra.mxu0 %v2041
  %2566 = vmatprep.subr.bf16.mxu0 %v2044
  %2567 = vmatpush1.bf16.msra.mxu0 %v2043
  %2568 = vmatprep.subr.bf16.mxu0 %v2046
  %2569 = vmatpush1.bf16.msra.mxu0 %v2045
  %2570 = vmatprep.subr.bf16.mxu0 %v2048
  %2571 = vmatpush1.bf16.msra.mxu0 %v2047
  %2572 = vmatprep.subr.bf16.mxu0 %v2050
  %2573 = vmatpush1.bf16.msra.mxu0 %v2049
  %2574 = vmatprep.mubr.bf16.mxu0 %v938
  %2575 = vmatmul.mubr.bf16.gmra.mrb[0].mxu0 %v937
  %v2576 = vpop.f32.mrb[0].mxu0
  %v2577 = vadd.f32 %v2534, %v2576
  %v2578 = vpop.f32.mrb[0].mxu0
  %v2579 = vadd.f32 %v2536, %v2578
  %v2580 = vpop.f32.mrb[0].mxu0
  %v2581 = vadd.f32 %v2538, %v2580
  %v2582 = vpop.f32.mrb[0].mxu0
  %v2583 = vadd.f32 %v2540, %v2582
  %2584 = vdwg.mxu0
  %2585 = vmatprep.subr.bf16.mxu0 %v2052
  %2586 = vmatpush1.bf16.msra.mxu0 %v2051
  %2587 = vmatprep.subr.bf16.mxu0 %v2054
  %2588 = vmatpush1.bf16.msra.mxu0 %v2053
  %2589 = vmatprep.subr.bf16.mxu0 %v2056
  %2590 = vmatpush1.bf16.msra.mxu0 %v2055
  %2591 = vmatprep.subr.bf16.mxu0 %v2058
  %2592 = vmatpush1.bf16.msra.mxu0 %v2057
  %2593 = vmatprep.subr.bf16.mxu0 %v2060
  %2594 = vmatpush1.bf16.msra.mxu0 %v2059
  %2595 = vmatprep.subr.bf16.mxu0 %v2062
  %2596 = vmatpush1.bf16.msra.mxu0 %v2061
  %2597 = vmatprep.subr.bf16.mxu0 %v2064
  %2598 = vmatpush1.bf16.msra.mxu0 %v2063
  %2599 = vmatprep.subr.bf16.mxu0 %v2066
  %2600 = vmatpush1.bf16.msra.mxu0 %v2065
  %2601 = vmatprep.subr.bf16.mxu0 %v2068
  %2602 = vmatpush1.bf16.msra.mxu0 %v2067
  %2603 = vmatprep.subr.bf16.mxu0 %v2070
  %2604 = vmatpush1.bf16.msra.mxu0 %v2069
  %2605 = vmatprep.subr.bf16.mxu0 %v2072
  %2606 = vmatpush1.bf16.msra.mxu0 %v2071
  %2607 = vmatprep.subr.bf16.mxu0 %v2074
  %2608 = vmatpush1.bf16.msra.mxu0 %v2073
  %2609 = vmatprep.subr.bf16.mxu0 %v2076
  %2610 = vmatpush1.bf16.msra.mxu0 %v2075
  %2611 = vmatprep.subr.bf16.mxu0 %v2078
  %2612 = vmatpush1.bf16.msra.mxu0 %v2077
  %2613 = vmatprep.subr.bf16.mxu0 %v2080
  %2614 = vmatpush1.bf16.msra.mxu0 %v2079
  %2615 = vmatprep.subr.bf16.mxu0 %v2082
  %2616 = vmatpush1.bf16.msra.mxu0 %v2081
  %2617 = vmatprep.mubr.bf16.mxu0 %v940
  %2618 = vmatmul.mubr.bf16.gmra.mrb[0].mxu0 %v939
  %v2619 = vpop.f32.mrb[0].mxu0
  %v2620 = vadd.f32 %v2577, %v2619
  %v2621 = vpop.f32.mrb[0].mxu0
  %v2622 = vadd.f32 %v2579, %v2621
  %v2623 = vpop.f32.mrb[0].mxu0
  %v2624 = vadd.f32 %v2581, %v2623
  %v2625 = vpop.f32.mrb[0].mxu0
  %v2626 = vadd.f32 %v2583, %v2625
  %2627 = vdwg.mxu0
  %2628 = vmatprep.subr.bf16.mxu0 %v2084
  %2629 = vmatpush1.bf16.msra.mxu0 %v2083
  %2630 = vmatprep.subr.bf16.mxu0 %v2086
  %2631 = vmatpush1.bf16.msra.mxu0 %v2085
  %2632 = vmatprep.subr.bf16.mxu0 %v2088
  %2633 = vmatpush1.bf16.msra.mxu0 %v2087
  %2634 = vmatprep.subr.bf16.mxu0 %v2090
  %2635 = vmatpush1.bf16.msra.mxu0 %v2089
  %2636 = vmatprep.subr.bf16.mxu0 %v2092
  %2637 = vmatpush1.bf16.msra.mxu0 %v2091
  %2638 = vmatprep.subr.bf16.mxu0 %v2094
  %2639 = vmatpush1.bf16.msra.mxu0 %v2093
  %2640 = vmatprep.subr.bf16.mxu0 %v2096
  %2641 = vmatpush1.bf16.msra.mxu0 %v2095
  %2642 = vmatprep.subr.bf16.mxu0 %v2098
  %2643 = vmatpush1.bf16.msra.mxu0 %v2097
  %2644 = vmatprep.subr.bf16.mxu0 %v2100
  %2645 = vmatpush1.bf16.msra.mxu0 %v2099
  %2646 = vmatprep.subr.bf16.mxu0 %v2102
  %2647 = vmatpush1.bf16.msra.mxu0 %v2101
  %2648 = vmatprep.subr.bf16.mxu0 %v2104
  %2649 = vmatpush1.bf16.msra.mxu0 %v2103
  %2650 = vmatprep.subr.bf16.mxu0 %v2106
  %2651 = vmatpush1.bf16.msra.mxu0 %v2105
  %2652 = vmatprep.subr.bf16.mxu0 %v2108
  %2653 = vmatpush1.bf16.msra.mxu0 %v2107
  %2654 = vmatprep.subr.bf16.mxu0 %v2110
  %2655 = vmatpush1.bf16.msra.mxu0 %v2109
  %2656 = vmatprep.subr.bf16.mxu0 %v2112
  %2657 = vmatpush1.bf16.msra.mxu0 %v2111
  %2658 = vmatprep.subr.bf16.mxu0 %v2114
  %2659 = vmatpush1.bf16.msra.mxu0 %v2113
  %2660 = vmatprep.mubr.bf16.mxu0 %v942
  %2661 = vmatmul.mubr.bf16.gmra.mrb[0].mxu0 %v941
  %v2662 = vpop.f32.mrb[0].mxu0
  %v2663 = vadd.f32 %v2620, %v2662
  %v2664 = vpop.f32.mrb[0].mxu0
  %v2665 = vadd.f32 %v2622, %v2664
  %v2666 = vpop.f32.mrb[0].mxu0
  %v2667 = vadd.f32 %v2624, %v2666
  %v2668 = vpop.f32.mrb[0].mxu0
  %v2669 = vadd.f32 %v2626, %v2668
  %2670 = vdwg.mxu0
  %2671 = vmatprep.subr.bf16.mxu0 %v2116
  %2672 = vmatpush1.bf16.msra.mxu0 %v2115
  %2673 = vmatprep.subr.bf16.mxu0 %v2118
  %2674 = vmatpush1.bf16.msra.mxu0 %v2117
  %2675 = vmatprep.subr.bf16.mxu0 %v2120
  %2676 = vmatpush1.bf16.msra.mxu0 %v2119
  %2677 = vmatprep.subr.bf16.mxu0 %v2122
  %2678 = vmatpush1.bf16.msra.mxu0 %v2121
  %2679 = vmatprep.subr.bf16.mxu0 %v2124
  %2680 = vmatpush1.bf16.msra.mxu0 %v2123
  %2681 = vmatprep.subr.bf16.mxu0 %v2126
  %2682 = vmatpush1.bf16.msra.mxu0 %v2125
  %2683 = vmatprep.subr.bf16.mxu0 %v2128
  %2684 = vmatpush1.bf16.msra.mxu0 %v2127
  %2685 = vmatprep.subr.bf16.mxu0 %v2130
  %2686 = vmatpush1.bf16.msra.mxu0 %v2129
  %2687 = vmatprep.subr.bf16.mxu0 %v2132
  %2688 = vmatpush1.bf16.msra.mxu0 %v2131
  %2689 = vmatprep.subr.bf16.mxu0 %v2134
  %2690 = vmatpush1.bf16.msra.mxu0 %v2133
  %2691 = vmatprep.subr.bf16.mxu0 %v2136
  %2692 = vmatpush1.bf16.msra.mxu0 %v2135
  %2693 = vmatprep.subr.bf16.mxu0 %v2138
  %2694 = vmatpush1.bf16.msra.mxu0 %v2137
  %2695 = vmatprep.subr.bf16.mxu0 %v2140
  %2696 = vmatpush1.bf16.msra.mxu0 %v2139
  %2697 = vmatprep.subr.bf16.mxu0 %v2142
  %2698 = vmatpush1.bf16.msra.mxu0 %v2141
  %2699 = vmatprep.subr.bf16.mxu0 %v2144
  %2700 = vmatpush1.bf16.msra.mxu0 %v2143
  %2701 = vmatprep.subr.bf16.mxu0 %v2146
  %2702 = vmatpush1.bf16.msra.mxu0 %v2145
  %2703 = vmatprep.mubr.bf16.mxu0 %v944
  %2704 = vmatmul.mubr.bf16.gmra.mrb[0].mxu0 %v943
  %v2705 = vpop.f32.mrb[0].mxu0
  %v2706 = vadd.f32 %v2663, %v2705
  %v2707 = vpop.f32.mrb[0].mxu0
  %v2708 = vadd.f32 %v2665, %v2707
  %v2709 = vpop.f32.mrb[0].mxu0
  %v2710 = vadd.f32 %v2667, %v2709
  %v2711 = vpop.f32.mrb[0].mxu0
  %v2712 = vadd.f32 %v2669, %v2711
  %2713 = vdwg.mxu0
  %2714 = vmatprep.subr.bf16.mxu0 %v2148
  %2715 = vmatpush1.bf16.msra.mxu0 %v2147
  %2716 = vmatprep.subr.bf16.mxu0 %v2150
  %2717 = vmatpush1.bf16.msra.mxu0 %v2149
  %2718 = vmatprep.subr.bf16.mxu0 %v2152
  %2719 = vmatpush1.bf16.msra.mxu0 %v2151
  %2720 = vmatprep.subr.bf16.mxu0 %v2154
  %2721 = vmatpush1.bf16.msra.mxu0 %v2153
  %2722 = vmatprep.subr.bf16.mxu0 %v2156
  %2723 = vmatpush1.bf16.msra.mxu0 %v2155
  %2724 = vmatprep.subr.bf16.mxu0 %v2158
  %2725 = vmatpush1.bf16.msra.mxu0 %v2157
  %2726 = vmatprep.subr.bf16.mxu0 %v2160
  %2727 = vmatpush1.bf16.msra.mxu0 %v2159
  %2728 = vmatprep.subr.bf16.mxu0 %v2162
  %2729 = vmatpush1.bf16.msra.mxu0 %v2161
  %2730 = vmatprep.subr.bf16.mxu0 %v2164
  %2731 = vmatpush1.bf16.msra.mxu0 %v2163
  %2732 = vmatprep.subr.bf16.mxu0 %v2166
  %2733 = vmatpush1.bf16.msra.mxu0 %v2165
  %2734 = vmatprep.subr.bf16.mxu0 %v2168
  %2735 = vmatpush1.bf16.msra.mxu0 %v2167
  %2736 = vmatprep.subr.bf16.mxu0 %v2170
  %2737 = vmatpush1.bf16.msra.mxu0 %v2169
  %2738 = vmatprep.subr.bf16.mxu0 %v2172
  %2739 = vmatpush1.bf16.msra.mxu0 %v2171
  %2740 = vmatprep.subr.bf16.mxu0 %v2174
  %2741 = vmatpush1.bf16.msra.mxu0 %v2173
  %2742 = vmatprep.subr.bf16.mxu0 %v2176
  %2743 = vmatpush1.bf16.msra.mxu0 %v2175
  %2744 = vmatprep.subr.bf16.mxu0 %v2178
  %2745 = vmatpush1.bf16.msra.mxu0 %v2177
  %2746 = vmatprep.mubr.bf16.mxu0 %v946
  %2747 = vmatmul.mubr.bf16.gmra.mrb[0].mxu0 %v945
  %v2748 = vpop.f32.mrb[0].mxu0
  %v2749 = vadd.f32 %v2706, %v2748
  %v2750 = vpop.f32.mrb[0].mxu0
  %v2751 = vadd.f32 %v2708, %v2750
  %v2752 = vpop.f32.mrb[0].mxu0
  %v2753 = vadd.f32 %v2710, %v2752
  %v2754 = vpop.f32.mrb[0].mxu0
  %v2755 = vadd.f32 %v2712, %v2754
  %2756 = vdwg.mxu0
  %2757 = vmatprep.subr.bf16.mxu0 %v2180
  %2758 = vmatpush1.bf16.msra.mxu0 %v2179
  %2759 = vmatprep.subr.bf16.mxu0 %v2182
  %2760 = vmatpush1.bf16.msra.mxu0 %v2181
  %2761 = vmatprep.subr.bf16.mxu0 %v2184
  %2762 = vmatpush1.bf16.msra.mxu0 %v2183
  %2763 = vmatprep.subr.bf16.mxu0 %v2186
  %2764 = vmatpush1.bf16.msra.mxu0 %v2185
  %2765 = vmatprep.subr.bf16.mxu0 %v2188
  %2766 = vmatpush1.bf16.msra.mxu0 %v2187
  %2767 = vmatprep.subr.bf16.mxu0 %v2190
  %2768 = vmatpush1.bf16.msra.mxu0 %v2189
  %2769 = vmatprep.subr.bf16.mxu0 %v2192
  %2770 = vmatpush1.bf16.msra.mxu0 %v2191
  %2771 = vmatprep.subr.bf16.mxu0 %v2194
  %2772 = vmatpush1.bf16.msra.mxu0 %v2193
  %2773 = vmatprep.subr.bf16.mxu0 %v2196
  %2774 = vmatpush1.bf16.msra.mxu0 %v2195
  %2775 = vmatprep.subr.bf16.mxu0 %v2198
  %2776 = vmatpush1.bf16.msra.mxu0 %v2197
  %2777 = vmatprep.subr.bf16.mxu0 %v2200
  %2778 = vmatpush1.bf16.msra.mxu0 %v2199
  %2779 = vmatprep.subr.bf16.mxu0 %v2202
  %2780 = vmatpush1.bf16.msra.mxu0 %v2201
  %2781 = vmatprep.subr.bf16.mxu0 %v2204
  %2782 = vmatpush1.bf16.msra.mxu0 %v2203
  %2783 = vmatprep.subr.bf16.mxu0 %v2206
  %2784 = vmatpush1.bf16.msra.mxu0 %v2205
  %2785 = vmatprep.subr.bf16.mxu0 %v2208
  %2786 = vmatpush1.bf16.msra.mxu0 %v2207
  %2787 = vmatprep.subr.bf16.mxu0 %v2210
  %2788 = vmatpush1.bf16.msra.mxu0 %v2209
  %2789 = vmatprep.mubr.bf16.mxu0 %v948
  %2790 = vmatmul.mubr.bf16.gmra.mrb[0].mxu0 %v947
  %v2791 = vpop.f32.mrb[0].mxu0
  %v2792 = vadd.f32 %v2749, %v2791
  %v2793 = vpop.f32.mrb[0].mxu0
  %v2794 = vadd.f32 %v2751, %v2793
  %v2795 = vpop.f32.mrb[0].mxu0
  %v2796 = vadd.f32 %v2753, %v2795
  %v2797 = vpop.f32.mrb[0].mxu0
  %v2798 = vadd.f32 %v2755, %v2797
  %2799 = vdwg.mxu0
  %2800 = vmatprep.subr.bf16.mxu0 %v2212
  %2801 = vmatpush1.bf16.msra.mxu0 %v2211
  %2802 = vmatprep.subr.bf16.mxu0 %v2214
  %2803 = vmatpush1.bf16.msra.mxu0 %v2213
  %2804 = vmatprep.subr.bf16.mxu0 %v2216
  %2805 = vmatpush1.bf16.msra.mxu0 %v2215
  %2806 = vmatprep.subr.bf16.mxu0 %v2218
  %2807 = vmatpush1.bf16.msra.mxu0 %v2217
  %2808 = vmatprep.subr.bf16.mxu0 %v2220
  %2809 = vmatpush1.bf16.msra.mxu0 %v2219
  %2810 = vmatprep.subr.bf16.mxu0 %v2222
  %2811 = vmatpush1.bf16.msra.mxu0 %v2221
  %2812 = vmatprep.subr.bf16.mxu0 %v2224
  %2813 = vmatpush1.bf16.msra.mxu0 %v2223
  %2814 = vmatprep.subr.bf16.mxu0 %v2226
  %2815 = vmatpush1.bf16.msra.mxu0 %v2225
  %2816 = vmatprep.subr.bf16.mxu0 %v2228
  %2817 = vmatpush1.bf16.msra.mxu0 %v2227
  %2818 = vmatprep.subr.bf16.mxu0 %v2230
  %2819 = vmatpush1.bf16.msra.mxu0 %v2229
  %2820 = vmatprep.subr.bf16.mxu0 %v2232
  %2821 = vmatpush1.bf16.msra.mxu0 %v2231
  %2822 = vmatprep.subr.bf16.mxu0 %v2234
  %2823 = vmatpush1.bf16.msra.mxu0 %v2233
  %2824 = vmatprep.subr.bf16.mxu0 %v2236
  %2825 = vmatpush1.bf16.msra.mxu0 %v2235
  %2826 = vmatprep.subr.bf16.mxu0 %v2238
  %2827 = vmatpush1.bf16.msra.mxu0 %v2237
  %2828 = vmatprep.subr.bf16.mxu0 %v2240
  %2829 = vmatpush1.bf16.msra.mxu0 %v2239
  %2830 = vmatprep.subr.bf16.mxu0 %v2242
  %2831 = vmatpush1.bf16.msra.mxu0 %v2241
  %2832 = vmatprep.mubr.bf16.mxu0 %v950
  %2833 = vmatmul.mubr.bf16.gmra.mrb[0].mxu0 %v949
  %v2834 = vpop.f32.mrb[0].mxu0
  %v2835 = vadd.f32 %v2792, %v2834
  %v2836 = vpop.f32.mrb[0].mxu0
  %v2837 = vadd.f32 %v2794, %v2836
  %v2838 = vpop.f32.mrb[0].mxu0
  %v2839 = vadd.f32 %v2796, %v2838
  %v2840 = vpop.f32.mrb[0].mxu0
  %v2841 = vadd.f32 %v2798, %v2840
  %2842 = vdwg.mxu0
  %v2843 = vmax.f32 %v2835, 0.0
  %v2844 = vmax.f32 %v2837, 0.0
  %v2845 = vmax.f32 %v2839, 0.0
  %v2846 = vmax.f32 %v2841, 0.0
  %v2847 = vpack.c.bf16 %v2845, %v2843
  %v2848 = vpack.c.bf16 %v2846, %v2844
  %v2849 = vld [vmem:[%s7] sm:$0xf]
  %v2850 = vld [vmem:[%s7 + $0x4] sm:$0xf]
  %v2851 = vld [vmem:[%s7 + $0x8] sm:$0xf]
  %v2852 = vld [vmem:[%s7 + $0xc] sm:$0xf]
  %v2853 = vld [vmem:[%s7 + $0x10] sm:$0xf]
  %v2854 = vld [vmem:[%s7 + $0x14] sm:$0xf]
  %v2855 = vld [vmem:[%s7 + $0x18] sm:$0xf]
  %v2856 = vld [vmem:[%s7 + $0x1c] sm:$0xf]
  %v2857 = vld [vmem:[%s7 + $0x20] sm:$0xf]
  %v2858 = vld [vmem:[%s7 + $0x24] sm:$0xf]
  %v2859 = vld [vmem:[%s7 + $0x28] sm:$0xf]
  %v2860 = vld [vmem:[%s7 + $0x2c] sm:$0xf]
  %v2861 = vld [vmem:[%s7 + $0x30] sm:$0xf]
  %v2862 = vld [vmem:[%s7 + $0x34] sm:$0xf]
  %v2863 = vld [vmem:[%s7 + $0x38] sm:$0xf]
  %v2864 = vld [vmem:[%s7 + $0x3c] sm:$0xf]
  %v2865 = vld [vmem:[%s7 + $0x40] sm:$0xf]
  %v2866 = vld [vmem:[%s7 + $0x44] sm:$0xf]
  %v2867 = vld [vmem:[%s7 + $0x48] sm:$0xf]
  %v2868 = vld [vmem:[%s7 + $0x4c] sm:$0xf]
  %v2869 = vld [vmem:[%s7 + $0x50] sm:$0xf]
  %v2870 = vld [vmem:[%s7 + $0x54] sm:$0xf]
  %v2871 = vld [vmem:[%s7 + $0x58] sm:$0xf]
  %v2872 = vld [vmem:[%s7 + $0x5c] sm:$0xf]
  %v2873 = vld [vmem:[%s7 + $0x60] sm:$0xf]
  %v2874 = vld [vmem:[%s7 + $0x64] sm:$0xf]
  %v2875 = vld [vmem:[%s7 + $0x68] sm:$0xf]
  %v2876 = vld [vmem:[%s7 + $0x6c] sm:$0xf]
  %v2877 = vld [vmem:[%s7 + $0x70] sm:$0xf]
  %v2878 = vld [vmem:[%s7 + $0x74] sm:$0xf]
  %v2879 = vld [vmem:[%s7 + $0x78] sm:$0xf]
  %v2880 = vld [vmem:[%s7 + $0x7c] sm:$0xf]
  %v2881 = vld [vmem:[%s8] sm:$0x1]
  %v2883 = vlaneseq
  %v2884 = vshrl.u32 %v2883, 7
  %v2885 = vsub.s32 0, %v2884
  %v2886 = vrot.slane %v2881, %v2885
  %v2920 = vunpack.c.l.b16 %v2849
  %v2921 = vunpack.c.l.b16 %v2850
  %v2922 = vunpack.c.l.b16 %v2851
  %v2923 = vunpack.c.l.b16 %v2852
  %v2924 = vunpack.c.l.b16 %v2853
  %v2925 = vunpack.c.l.b16 %v2854
  %v2926 = vunpack.c.l.b16 %v2855
  %v2927 = vunpack.c.l.b16 %v2856
  %v2928 = vunpack.c.l.b16 %v2857
  %v2929 = vunpack.c.l.b16 %v2858
  %v2930 = vunpack.c.l.b16 %v2859
  %v2931 = vunpack.c.l.b16 %v2860
  %v2932 = vunpack.c.l.b16 %v2861
  %v2933 = vunpack.c.l.b16 %v2862
  %v2934 = vunpack.c.l.b16 %v2863
  %v2935 = vunpack.c.l.b16 %v2864
  %v2936 = vunpack.c.l.b16 %v2865
  %v2937 = vunpack.c.l.b16 %v2866
  %v2938 = vunpack.c.l.b16 %v2867
  %v2939 = vunpack.c.l.b16 %v2868
  %v2940 = vunpack.c.l.b16 %v2869
  %v2941 = vunpack.c.l.b16 %v2870
  %v2942 = vunpack.c.l.b16 %v2871
  %v2943 = vunpack.c.l.b16 %v2872
  %v2944 = vunpack.c.l.b16 %v2873
  %v2945 = vunpack.c.l.b16 %v2874
  %v2946 = vunpack.c.l.b16 %v2875
  %v2947 = vunpack.c.l.b16 %v2876
  %v2948 = vunpack.c.l.b16 %v2877
  %v2949 = vunpack.c.l.b16 %v2878
  %v2950 = vunpack.c.l.b16 %v2879
  %v2951 = vunpack.c.l.b16 %v2880
  %v2952 = vpack.c.b16 %v2921, %v2920
  %v2953 = vpack.c.b16 %v2923, %v2922
  %v2954 = vpack.c.b16 %v2925, %v2924
  %v2955 = vpack.c.b16 %v2927, %v2926
  %v2956 = vpack.c.b16 %v2929, %v2928
  %v2957 = vpack.c.b16 %v2931, %v2930
  %v2958 = vpack.c.b16 %v2933, %v2932
  %v2959 = vpack.c.b16 %v2935, %v2934
  %v2960 = vpack.c.b16 %v2937, %v2936
  %v2961 = vpack.c.b16 %v2939, %v2938
  %v2962 = vpack.c.b16 %v2941, %v2940
  %v2963 = vpack.c.b16 %v2943, %v2942
  %v2964 = vpack.c.b16 %v2945, %v2944
  %v2965 = vpack.c.b16 %v2947, %v2946
  %v2966 = vpack.c.b16 %v2949, %v2948
  %v2967 = vpack.c.b16 %v2951, %v2950
  %2984 = vmatprep.subr.bf16.mxu0 0
  %2985 = vmatpush1.bf16.msra.mxu0 %v2952
  %2986 = vmatprep.subr.bf16.mxu0 0
  %2987 = vmatpush1.bf16.msra.mxu0 %v2953
  %2988 = vmatprep.subr.bf16.mxu0 0
  %2989 = vmatpush1.bf16.msra.mxu0 %v2954
  %2990 = vmatprep.subr.bf16.mxu0 0
  %2991 = vmatpush1.bf16.msra.mxu0 %v2955
  %2992 = vmatprep.subr.bf16.mxu0 0
  %2993 = vmatpush1.bf16.msra.mxu0 %v2956
  %2994 = vmatprep.subr.bf16.mxu0 0
  %2995 = vmatpush1.bf16.msra.mxu0 %v2957
  %2996 = vmatprep.subr.bf16.mxu0 0
  %2997 = vmatpush1.bf16.msra.mxu0 %v2958
  %2998 = vmatprep.subr.bf16.mxu0 0
  %2999 = vmatpush1.bf16.msra.mxu0 %v2959
  %3000 = vmatprep.subr.bf16.mxu0 0
  %3001 = vmatpush1.bf16.msra.mxu0 %v2960
  %3002 = vmatprep.subr.bf16.mxu0 0
  %3003 = vmatpush1.bf16.msra.mxu0 %v2961
  %3004 = vmatprep.subr.bf16.mxu0 0
  %3005 = vmatpush1.bf16.msra.mxu0 %v2962
  %3006 = vmatprep.subr.bf16.mxu0 0
  %3007 = vmatpush1.bf16.msra.mxu0 %v2963
  %3008 = vmatprep.subr.bf16.mxu0 0
  %3009 = vmatpush1.bf16.msra.mxu0 %v2964
  %3010 = vmatprep.subr.bf16.mxu0 0
  %3011 = vmatpush1.bf16.msra.mxu0 %v2965
  %3012 = vmatprep.subr.bf16.mxu0 0
  %3013 = vmatpush1.bf16.msra.mxu0 %v2966
  %3014 = vmatprep.subr.bf16.mxu0 0
  %3015 = vmatpush1.bf16.msra.mxu0 %v2967
  %3016 = vmatprep.mubr.bf16.mxu0 %v2848
  %3017 = vmatmul.mubr.bf16.gmra.mrb[0].mxu0 %v2847
  %v3018 = vpop.f32.mrb[0].mxu0
  %v3019 = vadd.f32 %v2886, %v3018
  %v3020 = vpop.f32.mrb[0].mxu0
  %v3021 = vpop.f32.mrb[0].mxu0
  %v3022 = vadd.f32 %v2886, %v3021
  %v3023 = vpop.f32.mrb[0].mxu0
  %3024 = vdwg.mxu0
  %vm3025 = vcmask 261120
  %3026 = vst.msk [vmem:[%s16] sm:$0xff] %vm3025, %v3019
  %3027 = vst.msk [vmem:[%s16 + $0x8] sm:$0xff] %vm3025, %v3022
  %v3028 = vld [vmem:[%s1] sm:$0xff]
  %v3029 = vld [vmem:[%s1 + $0x8] sm:$0xff]
  %v3030 = vmul.f32 %v3019, 0.5
  %v3031 = vmul.f32 %v3022, 0.5
  %v3032 = vmul.f32 %v3030, 1.442695
  %v3033 = vpow.pop %v3032
  %v3034 = vmul.f32 %v3031, 1.442695
  %v3035 = vpow.pop %v3034
  %3038 = vrot.lane.b32.xlu0 %v3033, 112
  %v3039 = vpop.permute.xlu0 %3038
  %3040 = vrot.lane.b32.xlu0 %v3035, 112
  %v3041 = vpop.permute.xlu0 %3040
  %v3044 = vmul.f32 %v3028, %v3039
  %v3045 = vmul.f32 %v3029, %v3041
  %v3046 = vadd.f32 %v3044, %v3019
  %v3047 = vadd.f32 %v3045, %v3022
  %v3048 = vpack.c.bf16 %v3047, %v3046
  %v3049 = vld [vmem:[%s9] sm:$0xff]
  %v3050 = vld [vmem:[%s9 + $0x8] sm:$0xff]
  %v3051 = vld [vmem:[%s2] sm:$0xf]
  %v3052 = vld [vmem:[%s2 + $0x4] sm:$0xf]
  %v3053 = vld [vmem:[%s10] sm:$0xff]
  %v3054 = vld [vmem:[%s10 + $0x8] sm:$0xff]
  %v3057 = vunpack.c.l.b16 %v3051
  %v3058 = vunpack.c.l.b16 %v3052
  %v3059 = vpack.c.b16 %v3058, %v3057
  %v3062 = vunpack.c.l.b16 %v3053
  %v3063 = vunpack.c.h.b16 %v3053
  %v3064 = vunpack.c.l.b16 %v3054
  %v3065 = vunpack.c.h.b16 %v3054
  %v3066 = vpack.c.b16 %v3064, %v3062
  %v3067 = vpack.c.b16 %v3065, %v3063
  %vm3070 = vcmask 130048
  %v3072 = vsel %vm3070, %v3059, 0
  %3074 = vmatprep.subr.bf16.mxu0 %v3067
  %3075 = vmatpush1.bf16.msra.mxu0 %v3066
  %3076 = vmatprep.subr.bf16.mxu0 0
  %3077 = vmatpush1.bf16.msra.mxu0 0
  %3078 = vmatprep.subr.bf16.mxu0 0
  %3079 = vmatpush1.bf16.msra.mxu0 0
  %3080 = vmatprep.subr.bf16.mxu0 0
  %3081 = vmatpush1.bf16.msra.mxu0 0
  %3082 = vmatprep.subr.bf16.mxu0 0
  %3083 = vmatpush1.bf16.msra.mxu0 0
  %3084 = vmatprep.subr.bf16.mxu0 0
  %3085 = vmatpush1.bf16.msra.mxu0 0
  %3086 = vmatprep.subr.bf16.mxu0 0
  %3087 = vmatpush1.bf16.msra.mxu0 0
  %3088 = vmatprep.subr.bf16.mxu0 0
  %3089 = vmatpush1.bf16.msra.mxu0 0
  %3090 = vmatprep.subr.bf16.mxu0 0
  %3091 = vmatpush1.bf16.msra.mxu0 0
  %3092 = vmatprep.subr.bf16.mxu0 0
  %3093 = vmatpush1.bf16.msra.mxu0 0
  %3094 = vmatprep.subr.bf16.mxu0 0
  %3095 = vmatpush1.bf16.msra.mxu0 0
  %3096 = vmatprep.subr.bf16.mxu0 0
  %3097 = vmatpush1.bf16.msra.mxu0 0
  %3098 = vmatprep.subr.bf16.mxu0 0
  %3099 = vmatpush1.bf16.msra.mxu0 0
  %3100 = vmatprep.subr.bf16.mxu0 0
  %3101 = vmatpush1.bf16.msra.mxu0 0
  %3102 = vmatprep.subr.bf16.mxu0 0
  %3103 = vmatpush1.bf16.msra.mxu0 0
  %3104 = vmatprep.subr.bf16.mxu0 0
  %3105 = vmatpush1.bf16.msra.mxu0 0
  %3106 = vmatprep.mubr.bf16.mxu0 0
  %3107 = vmatmul.mubr.bf16.gmra.mrb[0].mxu0 %v3072
  %v3108 = vpop.f32.mrb[0].mxu0
  %v3109 = vadd.f32 0.0, %v3108
  %v3110 = vpop.f32.mrb[0].mxu0
  %v3111 = vadd.f32 0.0, %v3110
  %v3112 = vpop.f32.mrb[0].mxu0
  %v3113 = vadd.f32 0.0, %v3112
  %v3114 = vpop.f32.mrb[0].mxu0
  %v3115 = vadd.f32 0.0, %v3114
  %3116 = vdwg.mxu0
  %v3119 = vunpack.c.l.b16 %v3049
  %v3120 = vunpack.c.h.b16 %v3049
  %v3121 = vunpack.c.l.b16 %v3050
  %v3122 = vunpack.c.h.b16 %v3050
  %v3123 = vpack.c.b16 %v3121, %v3119
  %v3124 = vpack.c.b16 %v3122, %v3120
  %v3128 = vsel %vm3070, %v3048, 0
  %3130 = vmatprep.subr.bf16.mxu0 %v3124
  %3131 = vmatpush1.bf16.msra.mxu0 %v3123
  %3132 = vmatprep.subr.bf16.mxu0 0
  %3133 = vmatpush1.bf16.msra.mxu0 0
  %3134 = vmatprep.subr.bf16.mxu0 0
  %3135 = vmatpush1.bf16.msra.mxu0 0
  %3136 = vmatprep.subr.bf16.mxu0 0
  %3137 = vmatpush1.bf16.msra.mxu0 0
  %3138 = vmatprep.subr.bf16.mxu0 0
  %3139 = vmatpush1.bf16.msra.mxu0 0
  %3140 = vmatprep.subr.bf16.mxu0 0
  %3141 = vmatpush1.bf16.msra.mxu0 0
  %3142 = vmatprep.subr.bf16.mxu0 0
  %3143 = vmatpush1.bf16.msra.mxu0 0
  %3144 = vmatprep.subr.bf16.mxu0 0
  %3145 = vmatpush1.bf16.msra.mxu0 0
  %3146 = vmatprep.subr.bf16.mxu0 0
  %3147 = vmatpush1.bf16.msra.mxu0 0
  %3148 = vmatprep.subr.bf16.mxu0 0
  %3149 = vmatpush1.bf16.msra.mxu0 0
  %3150 = vmatprep.subr.bf16.mxu0 0
  %3151 = vmatpush1.bf16.msra.mxu0 0
  %3152 = vmatprep.subr.bf16.mxu0 0
  %3153 = vmatpush1.bf16.msra.mxu0 0
  %3154 = vmatprep.subr.bf16.mxu0 0
  %3155 = vmatpush1.bf16.msra.mxu0 0
  %3156 = vmatprep.subr.bf16.mxu0 0
  %3157 = vmatpush1.bf16.msra.mxu0 0
  %3158 = vmatprep.subr.bf16.mxu0 0
  %3159 = vmatpush1.bf16.msra.mxu0 0
  %3160 = vmatprep.subr.bf16.mxu0 0
  %3161 = vmatpush1.bf16.msra.mxu0 0
  %3162 = vmatprep.mubr.bf16.mxu0 0
  %3163 = vmatmul.mubr.bf16.gmra.mrb[0].mxu0 %v3128
  %v3164 = vpop.f32.mrb[0].mxu0
  %v3165 = vadd.f32 %v3109, %v3164
  %v3166 = vpop.f32.mrb[0].mxu0
  %v3167 = vadd.f32 %v3111, %v3166
  %v3168 = vpop.f32.mrb[0].mxu0
  %v3169 = vadd.f32 %v3113, %v3168
  %v3170 = vpop.f32.mrb[0].mxu0
  %v3171 = vadd.f32 %v3115, %v3170
  %3172 = vdwg.mxu0
  %v3173 = vld [vmem:[%s11] sm:$0x3]
  %v3175 = vlaneseq
  %v3176 = vshrl.u32 %v3175, 7
  %v3177 = vsub.s32 0, %v3176
  %v3178 = vrot.slane %v3173, %v3177
  %v3179 = vlaneseq
  %v3180 = vshrl.u32 %v3179, 7
  %v3181 = vsub.s32 1, %v3180
  %v3182 = vrot.slane %v3173, %v3181
  %v3185 = vadd.f32 %v3165, %v3178
  %v3186 = vadd.f32 %v3167, %v3182
  %v3187 = vadd.f32 %v3169, %v3178
  %v3188 = vadd.f32 %v3171, %v3182
  %v3189 = vmax.f32 %v3185, 0.0
  %v3190 = vmax.f32 %v3186, 0.0
  %v3191 = vmax.f32 %v3187, 0.0
  %v3192 = vmax.f32 %v3188, 0.0
  %v3193 = vpack.c.bf16 %v3191, %v3189
  %v3194 = vpack.c.bf16 %v3192, %v3190
  %v3195 = vld [vmem:[%s12] sm:$0xff]
  %v3196 = vld [vmem:[%s12 + $0x8] sm:$0xff]
  %v3197 = vld [vmem:[%s12 + $0x10] sm:$0xff]
  %v3198 = vld [vmem:[%s12 + $0x18] sm:$0xff]
  %v3199 = vld [vmem:[%s12 + $0x20] sm:$0xff]
  %v3200 = vld [vmem:[%s12 + $0x28] sm:$0xff]
  %v3201 = vld [vmem:[%s12 + $0x30] sm:$0xff]
  %v3202 = vld [vmem:[%s12 + $0x38] sm:$0xff]
  %v3203 = vld [vmem:[%s12 + $0x40] sm:$0xff]
  %v3204 = vld [vmem:[%s12 + $0x48] sm:$0xff]
  %v3205 = vld [vmem:[%s12 + $0x50] sm:$0xff]
  %v3206 = vld [vmem:[%s12 + $0x58] sm:$0xff]
  %v3207 = vld [vmem:[%s12 + $0x60] sm:$0xff]
  %v3208 = vld [vmem:[%s12 + $0x68] sm:$0xff]
  %v3209 = vld [vmem:[%s12 + $0x70] sm:$0xff]
  %v3210 = vld [vmem:[%s12 + $0x78] sm:$0xff]
  %v3211 = vld [vmem:[%s12 + $0x80] sm:$0xff]
  %v3212 = vld [vmem:[%s12 + $0x88] sm:$0xff]
  %v3213 = vld [vmem:[%s12 + $0x90] sm:$0xff]
  %v3214 = vld [vmem:[%s12 + $0x98] sm:$0xff]
  %v3215 = vld [vmem:[%s12 + $0xa0] sm:$0xff]
  %v3216 = vld [vmem:[%s12 + $0xa8] sm:$0xff]
  %v3217 = vld [vmem:[%s12 + $0xb0] sm:$0xff]
  %v3218 = vld [vmem:[%s12 + $0xb8] sm:$0xff]
  %v3219 = vld [vmem:[%s12 + $0xc0] sm:$0xff]
  %v3220 = vld [vmem:[%s12 + $0xc8] sm:$0xff]
  %v3221 = vld [vmem:[%s12 + $0xd0] sm:$0xff]
  %v3222 = vld [vmem:[%s12 + $0xd8] sm:$0xff]
  %v3223 = vld [vmem:[%s12 + $0xe0] sm:$0xff]
  %v3224 = vld [vmem:[%s12 + $0xe8] sm:$0xff]
  %v3225 = vld [vmem:[%s12 + $0xf0] sm:$0xff]
  %v3226 = vld [vmem:[%s12 + $0xf8] sm:$0xff]
  %v3227 = vld [vmem:[%s12 + $0x100] sm:$0xff]
  %v3228 = vld [vmem:[%s12 + $0x108] sm:$0xff]
  %v3229 = vld [vmem:[%s12 + $0x110] sm:$0xff]
  %v3230 = vld [vmem:[%s12 + $0x118] sm:$0xff]
  %v3231 = vld [vmem:[%s12 + $0x120] sm:$0xff]
  %v3232 = vld [vmem:[%s12 + $0x128] sm:$0xff]
  %v3233 = vld [vmem:[%s12 + $0x130] sm:$0xff]
  %v3234 = vld [vmem:[%s12 + $0x138] sm:$0xff]
  %v3235 = vld [vmem:[%s12 + $0x140] sm:$0xff]
  %v3236 = vld [vmem:[%s12 + $0x148] sm:$0xff]
  %v3237 = vld [vmem:[%s12 + $0x150] sm:$0xff]
  %v3238 = vld [vmem:[%s12 + $0x158] sm:$0xff]
  %v3239 = vld [vmem:[%s12 + $0x160] sm:$0xff]
  %v3240 = vld [vmem:[%s12 + $0x168] sm:$0xff]
  %v3241 = vld [vmem:[%s12 + $0x170] sm:$0xff]
  %v3242 = vld [vmem:[%s12 + $0x178] sm:$0xff]
  %v3243 = vld [vmem:[%s12 + $0x180] sm:$0xff]
  %v3244 = vld [vmem:[%s12 + $0x188] sm:$0xff]
  %v3245 = vld [vmem:[%s12 + $0x190] sm:$0xff]
  %v3246 = vld [vmem:[%s12 + $0x198] sm:$0xff]
  %v3247 = vld [vmem:[%s12 + $0x1a0] sm:$0xff]
  %v3248 = vld [vmem:[%s12 + $0x1a8] sm:$0xff]
  %v3249 = vld [vmem:[%s12 + $0x1b0] sm:$0xff]
  %v3250 = vld [vmem:[%s12 + $0x1b8] sm:$0xff]
  %v3251 = vld [vmem:[%s12 + $0x1c0] sm:$0xff]
  %v3252 = vld [vmem:[%s12 + $0x1c8] sm:$0xff]
  %v3253 = vld [vmem:[%s12 + $0x1d0] sm:$0xff]
  %v3254 = vld [vmem:[%s12 + $0x1d8] sm:$0xff]
  %v3255 = vld [vmem:[%s12 + $0x1e0] sm:$0xff]
  %v3256 = vld [vmem:[%s12 + $0x1e8] sm:$0xff]
  %v3257 = vld [vmem:[%s12 + $0x1f0] sm:$0xff]
  %v3258 = vld [vmem:[%s12 + $0x1f8] sm:$0xff]
  %v3259 = vld [vmem:[%s12 + $0x200] sm:$0xff]
  %v3260 = vld [vmem:[%s12 + $0x208] sm:$0xff]
  %v3261 = vld [vmem:[%s12 + $0x210] sm:$0xff]
  %v3262 = vld [vmem:[%s12 + $0x218] sm:$0xff]
  %v3263 = vld [vmem:[%s12 + $0x220] sm:$0xff]
  %v3264 = vld [vmem:[%s12 + $0x228] sm:$0xff]
  %v3265 = vld [vmem:[%s12 + $0x230] sm:$0xff]
  %v3266 = vld [vmem:[%s12 + $0x238] sm:$0xff]
  %v3267 = vld [vmem:[%s12 + $0x240] sm:$0xff]
  %v3268 = vld [vmem:[%s12 + $0x248] sm:$0xff]
  %v3269 = vld [vmem:[%s12 + $0x250] sm:$0xff]
  %v3270 = vld [vmem:[%s12 + $0x258] sm:$0xff]
  %v3271 = vld [vmem:[%s12 + $0x260] sm:$0xff]
  %v3272 = vld [vmem:[%s12 + $0x268] sm:$0xff]
  %v3273 = vld [vmem:[%s12 + $0x270] sm:$0xff]
  %v3274 = vld [vmem:[%s12 + $0x278] sm:$0xff]
  %v3275 = vld [vmem:[%s12 + $0x280] sm:$0xff]
  %v3276 = vld [vmem:[%s12 + $0x288] sm:$0xff]
  %v3277 = vld [vmem:[%s12 + $0x290] sm:$0xff]
  %v3278 = vld [vmem:[%s12 + $0x298] sm:$0xff]
  %v3279 = vld [vmem:[%s12 + $0x2a0] sm:$0xff]
  %v3280 = vld [vmem:[%s12 + $0x2a8] sm:$0xff]
  %v3281 = vld [vmem:[%s12 + $0x2b0] sm:$0xff]
  %v3282 = vld [vmem:[%s12 + $0x2b8] sm:$0xff]
  %v3283 = vld [vmem:[%s12 + $0x2c0] sm:$0xff]
  %v3284 = vld [vmem:[%s12 + $0x2c8] sm:$0xff]
  %v3285 = vld [vmem:[%s12 + $0x2d0] sm:$0xff]
  %v3286 = vld [vmem:[%s12 + $0x2d8] sm:$0xff]
  %v3287 = vld [vmem:[%s12 + $0x2e0] sm:$0xff]
  %v3288 = vld [vmem:[%s12 + $0x2e8] sm:$0xff]
  %v3289 = vld [vmem:[%s12 + $0x2f0] sm:$0xff]
  %v3290 = vld [vmem:[%s12 + $0x2f8] sm:$0xff]
  %v3291 = vld [vmem:[%s12 + $0x300] sm:$0xff]
  %v3292 = vld [vmem:[%s12 + $0x308] sm:$0xff]
  %v3293 = vld [vmem:[%s12 + $0x310] sm:$0xff]
  %v3294 = vld [vmem:[%s12 + $0x318] sm:$0xff]
  %v3295 = vld [vmem:[%s12 + $0x320] sm:$0xff]
  %v3296 = vld [vmem:[%s12 + $0x328] sm:$0xff]
  %v3297 = vld [vmem:[%s12 + $0x330] sm:$0xff]
  %v3298 = vld [vmem:[%s12 + $0x338] sm:$0xff]
  %v3299 = vld [vmem:[%s12 + $0x340] sm:$0xff]
  %v3300 = vld [vmem:[%s12 + $0x348] sm:$0xff]
  %v3301 = vld [vmem:[%s12 + $0x350] sm:$0xff]
  %v3302 = vld [vmem:[%s12 + $0x358] sm:$0xff]
  %v3303 = vld [vmem:[%s12 + $0x360] sm:$0xff]
  %v3304 = vld [vmem:[%s12 + $0x368] sm:$0xff]
  %v3305 = vld [vmem:[%s12 + $0x370] sm:$0xff]
  %v3306 = vld [vmem:[%s12 + $0x378] sm:$0xff]
  %v3307 = vld [vmem:[%s12 + $0x380] sm:$0xff]
  %v3308 = vld [vmem:[%s12 + $0x388] sm:$0xff]
  %v3309 = vld [vmem:[%s12 + $0x390] sm:$0xff]
  %v3310 = vld [vmem:[%s12 + $0x398] sm:$0xff]
  %v3311 = vld [vmem:[%s12 + $0x3a0] sm:$0xff]
  %v3312 = vld [vmem:[%s12 + $0x3a8] sm:$0xff]
  %v3313 = vld [vmem:[%s12 + $0x3b0] sm:$0xff]
  %v3314 = vld [vmem:[%s12 + $0x3b8] sm:$0xff]
  %v3315 = vld [vmem:[%s12 + $0x3c0] sm:$0xff]
  %v3316 = vld [vmem:[%s12 + $0x3c8] sm:$0xff]
  %v3317 = vld [vmem:[%s12 + $0x3d0] sm:$0xff]
  %v3318 = vld [vmem:[%s12 + $0x3d8] sm:$0xff]
  %v3319 = vld [vmem:[%s12 + $0x3e0] sm:$0xff]
  %v3320 = vld [vmem:[%s12 + $0x3e8] sm:$0xff]
  %v3321 = vld [vmem:[%s12 + $0x3f0] sm:$0xff]
  %v3322 = vld [vmem:[%s12 + $0x3f8] sm:$0xff]
  %v3323 = vld [vmem:[%s12 + $0x400] sm:$0xff]
  %v3324 = vld [vmem:[%s12 + $0x408] sm:$0xff]
  %v3325 = vld [vmem:[%s12 + $0x410] sm:$0xff]
  %v3326 = vld [vmem:[%s12 + $0x418] sm:$0xff]
  %v3327 = vld [vmem:[%s12 + $0x420] sm:$0xff]
  %v3328 = vld [vmem:[%s12 + $0x428] sm:$0xff]
  %v3329 = vld [vmem:[%s12 + $0x430] sm:$0xff]
  %v3330 = vld [vmem:[%s12 + $0x438] sm:$0xff]
  %v3331 = vld [vmem:[%s12 + $0x440] sm:$0xff]
  %v3332 = vld [vmem:[%s12 + $0x448] sm:$0xff]
  %v3333 = vld [vmem:[%s12 + $0x450] sm:$0xff]
  %v3334 = vld [vmem:[%s12 + $0x458] sm:$0xff]
  %v3335 = vld [vmem:[%s12 + $0x460] sm:$0xff]
  %v3336 = vld [vmem:[%s12 + $0x468] sm:$0xff]
  %v3337 = vld [vmem:[%s12 + $0x470] sm:$0xff]
  %v3338 = vld [vmem:[%s12 + $0x478] sm:$0xff]
  %v3339 = vld [vmem:[%s12 + $0x480] sm:$0xff]
  %v3340 = vld [vmem:[%s12 + $0x488] sm:$0xff]
  %v3341 = vld [vmem:[%s12 + $0x490] sm:$0xff]
  %v3342 = vld [vmem:[%s12 + $0x498] sm:$0xff]
  %v3343 = vld [vmem:[%s12 + $0x4a0] sm:$0xff]
  %v3344 = vld [vmem:[%s12 + $0x4a8] sm:$0xff]
  %v3345 = vld [vmem:[%s12 + $0x4b0] sm:$0xff]
  %v3346 = vld [vmem:[%s12 + $0x4b8] sm:$0xff]
  %v3347 = vld [vmem:[%s12 + $0x4c0] sm:$0xff]
  %v3348 = vld [vmem:[%s12 + $0x4c8] sm:$0xff]
  %v3349 = vld [vmem:[%s12 + $0x4d0] sm:$0xff]
  %v3350 = vld [vmem:[%s12 + $0x4d8] sm:$0xff]
  %v3351 = vld [vmem:[%s12 + $0x4e0] sm:$0xff]
  %v3352 = vld [vmem:[%s12 + $0x4e8] sm:$0xff]
  %v3353 = vld [vmem:[%s12 + $0x4f0] sm:$0xff]
  %v3354 = vld [vmem:[%s12 + $0x4f8] sm:$0xff]
  %v3355 = vld [vmem:[%s12 + $0x500] sm:$0xff]
  %v3356 = vld [vmem:[%s12 + $0x508] sm:$0xff]
  %v3357 = vld [vmem:[%s12 + $0x510] sm:$0xff]
  %v3358 = vld [vmem:[%s12 + $0x518] sm:$0xff]
  %v3359 = vld [vmem:[%s12 + $0x520] sm:$0xff]
  %v3360 = vld [vmem:[%s12 + $0x528] sm:$0xff]
  %v3361 = vld [vmem:[%s12 + $0x530] sm:$0xff]
  %v3362 = vld [vmem:[%s12 + $0x538] sm:$0xff]
  %v3363 = vld [vmem:[%s12 + $0x540] sm:$0xff]
  %v3364 = vld [vmem:[%s12 + $0x548] sm:$0xff]
  %v3365 = vld [vmem:[%s12 + $0x550] sm:$0xff]
  %v3366 = vld [vmem:[%s12 + $0x558] sm:$0xff]
  %v3367 = vld [vmem:[%s12 + $0x560] sm:$0xff]
  %v3368 = vld [vmem:[%s12 + $0x568] sm:$0xff]
  %v3369 = vld [vmem:[%s12 + $0x570] sm:$0xff]
  %v3370 = vld [vmem:[%s12 + $0x578] sm:$0xff]
  %v3371 = vld [vmem:[%s12 + $0x580] sm:$0xff]
  %v3372 = vld [vmem:[%s12 + $0x588] sm:$0xff]
  %v3373 = vld [vmem:[%s12 + $0x590] sm:$0xff]
  %v3374 = vld [vmem:[%s12 + $0x598] sm:$0xff]
  %v3375 = vld [vmem:[%s12 + $0x5a0] sm:$0xff]
  %v3376 = vld [vmem:[%s12 + $0x5a8] sm:$0xff]
  %v3377 = vld [vmem:[%s12 + $0x5b0] sm:$0xff]
  %v3378 = vld [vmem:[%s12 + $0x5b8] sm:$0xff]
  %v3379 = vld [vmem:[%s12 + $0x5c0] sm:$0xff]
  %v3380 = vld [vmem:[%s12 + $0x5c8] sm:$0xff]
  %v3381 = vld [vmem:[%s12 + $0x5d0] sm:$0xff]
  %v3382 = vld [vmem:[%s12 + $0x5d8] sm:$0xff]
  %v3383 = vld [vmem:[%s12 + $0x5e0] sm:$0xff]
  %v3384 = vld [vmem:[%s12 + $0x5e8] sm:$0xff]
  %v3385 = vld [vmem:[%s12 + $0x5f0] sm:$0xff]
  %v3386 = vld [vmem:[%s12 + $0x5f8] sm:$0xff]
  %v3387 = vld [vmem:[%s12 + $0x600] sm:$0xff]
  %v3388 = vld [vmem:[%s12 + $0x608] sm:$0xff]
  %v3389 = vld [vmem:[%s12 + $0x610] sm:$0xff]
  %v3390 = vld [vmem:[%s12 + $0x618] sm:$0xff]
  %v3391 = vld [vmem:[%s12 + $0x620] sm:$0xff]
  %v3392 = vld [vmem:[%s12 + $0x628] sm:$0xff]
  %v3393 = vld [vmem:[%s12 + $0x630] sm:$0xff]
  %v3394 = vld [vmem:[%s12 + $0x638] sm:$0xff]
  %v3395 = vld [vmem:[%s12 + $0x640] sm:$0xff]
  %v3396 = vld [vmem:[%s12 + $0x648] sm:$0xff]
  %v3397 = vld [vmem:[%s12 + $0x650] sm:$0xff]
  %v3398 = vld [vmem:[%s12 + $0x658] sm:$0xff]
  %v3399 = vld [vmem:[%s12 + $0x660] sm:$0xff]
  %v3400 = vld [vmem:[%s12 + $0x668] sm:$0xff]
  %v3401 = vld [vmem:[%s12 + $0x670] sm:$0xff]
  %v3402 = vld [vmem:[%s12 + $0x678] sm:$0xff]
  %v3403 = vld [vmem:[%s12 + $0x680] sm:$0xff]
  %v3404 = vld [vmem:[%s12 + $0x688] sm:$0xff]
  %v3405 = vld [vmem:[%s12 + $0x690] sm:$0xff]
  %v3406 = vld [vmem:[%s12 + $0x698] sm:$0xff]
  %v3407 = vld [vmem:[%s12 + $0x6a0] sm:$0xff]
  %v3408 = vld [vmem:[%s12 + $0x6a8] sm:$0xff]
  %v3409 = vld [vmem:[%s12 + $0x6b0] sm:$0xff]
  %v3410 = vld [vmem:[%s12 + $0x6b8] sm:$0xff]
  %v3411 = vld [vmem:[%s12 + $0x6c0] sm:$0xff]
  %v3412 = vld [vmem:[%s12 + $0x6c8] sm:$0xff]
  %v3413 = vld [vmem:[%s12 + $0x6d0] sm:$0xff]
  %v3414 = vld [vmem:[%s12 + $0x6d8] sm:$0xff]
  %v3415 = vld [vmem:[%s12 + $0x6e0] sm:$0xff]
  %v3416 = vld [vmem:[%s12 + $0x6e8] sm:$0xff]
  %v3417 = vld [vmem:[%s12 + $0x6f0] sm:$0xff]
  %v3418 = vld [vmem:[%s12 + $0x6f8] sm:$0xff]
  %v3419 = vld [vmem:[%s12 + $0x700] sm:$0xff]
  %v3420 = vld [vmem:[%s12 + $0x708] sm:$0xff]
  %v3421 = vld [vmem:[%s12 + $0x710] sm:$0xff]
  %v3422 = vld [vmem:[%s12 + $0x718] sm:$0xff]
  %v3423 = vld [vmem:[%s12 + $0x720] sm:$0xff]
  %v3424 = vld [vmem:[%s12 + $0x728] sm:$0xff]
  %v3425 = vld [vmem:[%s12 + $0x730] sm:$0xff]
  %v3426 = vld [vmem:[%s12 + $0x738] sm:$0xff]
  %v3427 = vld [vmem:[%s12 + $0x740] sm:$0xff]
  %v3428 = vld [vmem:[%s12 + $0x748] sm:$0xff]
  %v3429 = vld [vmem:[%s12 + $0x750] sm:$0xff]
  %v3430 = vld [vmem:[%s12 + $0x758] sm:$0xff]
  %v3431 = vld [vmem:[%s12 + $0x760] sm:$0xff]
  %v3432 = vld [vmem:[%s12 + $0x768] sm:$0xff]
  %v3433 = vld [vmem:[%s12 + $0x770] sm:$0xff]
  %v3434 = vld [vmem:[%s12 + $0x778] sm:$0xff]
  %v3435 = vld [vmem:[%s12 + $0x780] sm:$0xff]
  %v3436 = vld [vmem:[%s12 + $0x788] sm:$0xff]
  %v3437 = vld [vmem:[%s12 + $0x790] sm:$0xff]
  %v3438 = vld [vmem:[%s12 + $0x798] sm:$0xff]
  %v3439 = vld [vmem:[%s12 + $0x7a0] sm:$0xff]
  %v3440 = vld [vmem:[%s12 + $0x7a8] sm:$0xff]
  %v3441 = vld [vmem:[%s12 + $0x7b0] sm:$0xff]
  %v3442 = vld [vmem:[%s12 + $0x7b8] sm:$0xff]
  %v3443 = vld [vmem:[%s12 + $0x7c0] sm:$0xff]
  %v3444 = vld [vmem:[%s12 + $0x7c8] sm:$0xff]
  %v3445 = vld [vmem:[%s12 + $0x7d0] sm:$0xff]
  %v3446 = vld [vmem:[%s12 + $0x7d8] sm:$0xff]
  %v3447 = vld [vmem:[%s12 + $0x7e0] sm:$0xff]
  %v3448 = vld [vmem:[%s12 + $0x7e8] sm:$0xff]
  %v3449 = vld [vmem:[%s12 + $0x7f0] sm:$0xff]
  %v3450 = vld [vmem:[%s12 + $0x7f8] sm:$0xff]
  %v3451 = vld [vmem:[%s13] sm:$0xff]
  %v3452 = vld [vmem:[%s13 + $0x8] sm:$0xff]
  %v3455 = vlaneseq
  %v3456 = vshrl.u32 %v3455, 7
  %v3457 = vsub.s32 0, %v3456
  %v3458 = vrot.slane %v3451, %v3457
  %v3459 = vlaneseq
  %v3460 = vshrl.u32 %v3459, 7
  %v3461 = vsub.s32 1, %v3460
  %v3462 = vrot.slane %v3451, %v3461
  %v3463 = vlaneseq
  %v3464 = vshrl.u32 %v3463, 7
  %v3465 = vsub.s32 2, %v3464
  %v3466 = vrot.slane %v3451, %v3465
  %v3467 = vlaneseq
  %v3468 = vshrl.u32 %v3467, 7
  %v3469 = vsub.s32 3, %v3468
  %v3470 = vrot.slane %v3451, %v3469
  %v3471 = vlaneseq
  %v3472 = vshrl.u32 %v3471, 7
  %v3473 = vsub.s32 4, %v3472
  %v3474 = vrot.slane %v3451, %v3473
  %v3475 = vlaneseq
  %v3476 = vshrl.u32 %v3475, 7
  %v3477 = vsub.s32 5, %v3476
  %v3478 = vrot.slane %v3451, %v3477
  %v3479 = vlaneseq
  %v3480 = vshrl.u32 %v3479, 7
  %v3481 = vsub.s32 6, %v3480
  %v3482 = vrot.slane %v3451, %v3481
  %v3483 = vlaneseq
  %v3484 = vshrl.u32 %v3483, 7
  %v3485 = vsub.s32 7, %v3484
  %v3486 = vrot.slane %v3451, %v3485
  %v3487 = vlaneseq
  %v3488 = vshrl.u32 %v3487, 7
  %v3489 = vsub.s32 0, %v3488
  %v3490 = vrot.slane %v3452, %v3489
  %v3491 = vlaneseq
  %v3492 = vshrl.u32 %v3491, 7
  %v3493 = vsub.s32 1, %v3492
  %v3494 = vrot.slane %v3452, %v3493
  %v3495 = vlaneseq
  %v3496 = vshrl.u32 %v3495, 7
  %v3497 = vsub.s32 2, %v3496
  %v3498 = vrot.slane %v3452, %v3497
  %v3499 = vlaneseq
  %v3500 = vshrl.u32 %v3499, 7
  %v3501 = vsub.s32 3, %v3500
  %v3502 = vrot.slane %v3452, %v3501
  %v3503 = vlaneseq
  %v3504 = vshrl.u32 %v3503, 7
  %v3505 = vsub.s32 4, %v3504
  %v3506 = vrot.slane %v3452, %v3505
  %v3507 = vlaneseq
  %v3508 = vshrl.u32 %v3507, 7
  %v3509 = vsub.s32 5, %v3508
  %v3510 = vrot.slane %v3452, %v3509
  %v3511 = vlaneseq
  %v3512 = vshrl.u32 %v3511, 7
  %v3513 = vsub.s32 6, %v3512
  %v3514 = vrot.slane %v3452, %v3513
  %v3515 = vlaneseq
  %v3516 = vshrl.u32 %v3515, 7
  %v3517 = vsub.s32 7, %v3516
  %v3518 = vrot.slane %v3452, %v3517
  %v3791 = vunpack.c.l.b16 %v3195
  %v3792 = vunpack.c.h.b16 %v3195
  %v3793 = vunpack.c.l.b16 %v3196
  %v3794 = vunpack.c.h.b16 %v3196
  %v3795 = vunpack.c.l.b16 %v3197
  %v3796 = vunpack.c.h.b16 %v3197
  %v3797 = vunpack.c.l.b16 %v3198
  %v3798 = vunpack.c.h.b16 %v3198
  %v3799 = vunpack.c.l.b16 %v3199
  %v3800 = vunpack.c.h.b16 %v3199
  %v3801 = vunpack.c.l.b16 %v3200
  %v3802 = vunpack.c.h.b16 %v3200
  %v3803 = vunpack.c.l.b16 %v3201
  %v3804 = vunpack.c.h.b16 %v3201
  %v3805 = vunpack.c.l.b16 %v3202
  %v3806 = vunpack.c.h.b16 %v3202
  %v3807 = vunpack.c.l.b16 %v3203
  %v3808 = vunpack.c.h.b16 %v3203
  %v3809 = vunpack.c.l.b16 %v3204
  %v3810 = vunpack.c.h.b16 %v3204
  %v3811 = vunpack.c.l.b16 %v3205
  %v3812 = vunpack.c.h.b16 %v3205
  %v3813 = vunpack.c.l.b16 %v3206
  %v3814 = vunpack.c.h.b16 %v3206
  %v3815 = vunpack.c.l.b16 %v3207
  %v3816 = vunpack.c.h.b16 %v3207
  %v3817 = vunpack.c.l.b16 %v3208
  %v3818 = vunpack.c.h.b16 %v3208
  %v3819 = vunpack.c.l.b16 %v3209
  %v3820 = vunpack.c.h.b16 %v3209
  %v3821 = vunpack.c.l.b16 %v3210
  %v3822 = vunpack.c.h.b16 %v3210
  %v3823 = vunpack.c.l.b16 %v3211
  %v3824 = vunpack.c.h.b16 %v3211
  %v3825 = vunpack.c.l.b16 %v3212
  %v3826 = vunpack.c.h.b16 %v3212
  %v3827 = vunpack.c.l.b16 %v3213
  %v3828 = vunpack.c.h.b16 %v3213
  %v3829 = vunpack.c.l.b16 %v3214
  %v3830 = vunpack.c.h.b16 %v3214
  %v3831 = vunpack.c.l.b16 %v3215
  %v3832 = vunpack.c.h.b16 %v3215
  %v3833 = vunpack.c.l.b16 %v3216
  %v3834 = vunpack.c.h.b16 %v3216
  %v3835 = vunpack.c.l.b16 %v3217
  %v3836 = vunpack.c.h.b16 %v3217
  %v3837 = vunpack.c.l.b16 %v3218
  %v3838 = vunpack.c.h.b16 %v3218
  %v3839 = vunpack.c.l.b16 %v3219
  %v3840 = vunpack.c.h.b16 %v3219
  %v3841 = vunpack.c.l.b16 %v3220
  %v3842 = vunpack.c.h.b16 %v3220
  %v3843 = vunpack.c.l.b16 %v3221
  %v3844 = vunpack.c.h.b16 %v3221
  %v3845 = vunpack.c.l.b16 %v3222
  %v3846 = vunpack.c.h.b16 %v3222
  %v3847 = vunpack.c.l.b16 %v3223
  %v3848 = vunpack.c.h.b16 %v3223
  %v3849 = vunpack.c.l.b16 %v3224
  %v3850 = vunpack.c.h.b16 %v3224
  %v3851 = vunpack.c.l.b16 %v3225
  %v3852 = vunpack.c.h.b16 %v3225
  %v3853 = vunpack.c.l.b16 %v3226
  %v3854 = vunpack.c.h.b16 %v3226
  %v3855 = vunpack.c.l.b16 %v3227
  %v3856 = vunpack.c.h.b16 %v3227
  %v3857 = vunpack.c.l.b16 %v3228
  %v3858 = vunpack.c.h.b16 %v3228
  %v3859 = vunpack.c.l.b16 %v3229
  %v3860 = vunpack.c.h.b16 %v3229
  %v3861 = vunpack.c.l.b16 %v3230
  %v3862 = vunpack.c.h.b16 %v3230
  %v3863 = vunpack.c.l.b16 %v3231
  %v3864 = vunpack.c.h.b16 %v3231
  %v3865 = vunpack.c.l.b16 %v3232
  %v3866 = vunpack.c.h.b16 %v3232
  %v3867 = vunpack.c.l.b16 %v3233
  %v3868 = vunpack.c.h.b16 %v3233
  %v3869 = vunpack.c.l.b16 %v3234
  %v3870 = vunpack.c.h.b16 %v3234
  %v3871 = vunpack.c.l.b16 %v3235
  %v3872 = vunpack.c.h.b16 %v3235
  %v3873 = vunpack.c.l.b16 %v3236
  %v3874 = vunpack.c.h.b16 %v3236
  %v3875 = vunpack.c.l.b16 %v3237
  %v3876 = vunpack.c.h.b16 %v3237
  %v3877 = vunpack.c.l.b16 %v3238
  %v3878 = vunpack.c.h.b16 %v3238
  %v3879 = vunpack.c.l.b16 %v3239
  %v3880 = vunpack.c.h.b16 %v3239
  %v3881 = vunpack.c.l.b16 %v3240
  %v3882 = vunpack.c.h.b16 %v3240
  %v3883 = vunpack.c.l.b16 %v3241
  %v3884 = vunpack.c.h.b16 %v3241
  %v3885 = vunpack.c.l.b16 %v3242
  %v3886 = vunpack.c.h.b16 %v3242
  %v3887 = vunpack.c.l.b16 %v3243
  %v3888 = vunpack.c.h.b16 %v3243
  %v3889 = vunpack.c.l.b16 %v3244
  %v3890 = vunpack.c.h.b16 %v3244
  %v3891 = vunpack.c.l.b16 %v3245
  %v3892 = vunpack.c.h.b16 %v3245
  %v3893 = vunpack.c.l.b16 %v3246
  %v3894 = vunpack.c.h.b16 %v3246
  %v3895 = vunpack.c.l.b16 %v3247
  %v3896 = vunpack.c.h.b16 %v3247
  %v3897 = vunpack.c.l.b16 %v3248
  %v3898 = vunpack.c.h.b16 %v3248
  %v3899 = vunpack.c.l.b16 %v3249
  %v3900 = vunpack.c.h.b16 %v3249
  %v3901 = vunpack.c.l.b16 %v3250
  %v3902 = vunpack.c.h.b16 %v3250
  %v3903 = vunpack.c.l.b16 %v3251
  %v3904 = vunpack.c.h.b16 %v3251
  %v3905 = vunpack.c.l.b16 %v3252
  %v3906 = vunpack.c.h.b16 %v3252
  %v3907 = vunpack.c.l.b16 %v3253
  %v3908 = vunpack.c.h.b16 %v3253
  %v3909 = vunpack.c.l.b16 %v3254
  %v3910 = vunpack.c.h.b16 %v3254
  %v3911 = vunpack.c.l.b16 %v3255
  %v3912 = vunpack.c.h.b16 %v3255
  %v3913 = vunpack.c.l.b16 %v3256
  %v3914 = vunpack.c.h.b16 %v3256
  %v3915 = vunpack.c.l.b16 %v3257
  %v3916 = vunpack.c.h.b16 %v3257
  %v3917 = vunpack.c.l.b16 %v3258
  %v3918 = vunpack.c.h.b16 %v3258
  %v3919 = vunpack.c.l.b16 %v3259
  %v3920 = vunpack.c.h.b16 %v3259
  %v3921 = vunpack.c.l.b16 %v3260
  %v3922 = vunpack.c.h.b16 %v3260
  %v3923 = vunpack.c.l.b16 %v3261
  %v3924 = vunpack.c.h.b16 %v3261
  %v3925 = vunpack.c.l.b16 %v3262
  %v3926 = vunpack.c.h.b16 %v3262
  %v3927 = vunpack.c.l.b16 %v3263
  %v3928 = vunpack.c.h.b16 %v3263
  %v3929 = vunpack.c.l.b16 %v3264
  %v3930 = vunpack.c.h.b16 %v3264
  %v3931 = vunpack.c.l.b16 %v3265
  %v3932 = vunpack.c.h.b16 %v3265
  %v3933 = vunpack.c.l.b16 %v3266
  %v3934 = vunpack.c.h.b16 %v3266
  %v3935 = vunpack.c.l.b16 %v3267
  %v3936 = vunpack.c.h.b16 %v3267
  %v3937 = vunpack.c.l.b16 %v3268
  %v3938 = vunpack.c.h.b16 %v3268
  %v3939 = vunpack.c.l.b16 %v3269
  %v3940 = vunpack.c.h.b16 %v3269
  %v3941 = vunpack.c.l.b16 %v3270
  %v3942 = vunpack.c.h.b16 %v3270
  %v3943 = vunpack.c.l.b16 %v3271
  %v3944 = vunpack.c.h.b16 %v3271
  %v3945 = vunpack.c.l.b16 %v3272
  %v3946 = vunpack.c.h.b16 %v3272
  %v3947 = vunpack.c.l.b16 %v3273
  %v3948 = vunpack.c.h.b16 %v3273
  %v3949 = vunpack.c.l.b16 %v3274
  %v3950 = vunpack.c.h.b16 %v3274
  %v3951 = vunpack.c.l.b16 %v3275
  %v3952 = vunpack.c.h.b16 %v3275
  %v3953 = vunpack.c.l.b16 %v3276
  %v3954 = vunpack.c.h.b16 %v3276
  %v3955 = vunpack.c.l.b16 %v3277
  %v3956 = vunpack.c.h.b16 %v3277
  %v3957 = vunpack.c.l.b16 %v3278
  %v3958 = vunpack.c.h.b16 %v3278
  %v3959 = vunpack.c.l.b16 %v3279
  %v3960 = vunpack.c.h.b16 %v3279
  %v3961 = vunpack.c.l.b16 %v3280
  %v3962 = vunpack.c.h.b16 %v3280
  %v3963 = vunpack.c.l.b16 %v3281
  %v3964 = vunpack.c.h.b16 %v3281
  %v3965 = vunpack.c.l.b16 %v3282
  %v3966 = vunpack.c.h.b16 %v3282
  %v3967 = vunpack.c.l.b16 %v3283
  %v3968 = vunpack.c.h.b16 %v3283
  %v3969 = vunpack.c.l.b16 %v3284
  %v3970 = vunpack.c.h.b16 %v3284
  %v3971 = vunpack.c.l.b16 %v3285
  %v3972 = vunpack.c.h.b16 %v3285
  %v3973 = vunpack.c.l.b16 %v3286
  %v3974 = vunpack.c.h.b16 %v3286
  %v3975 = vunpack.c.l.b16 %v3287
  %v3976 = vunpack.c.h.b16 %v3287
  %v3977 = vunpack.c.l.b16 %v3288
  %v3978 = vunpack.c.h.b16 %v3288
  %v3979 = vunpack.c.l.b16 %v3289
  %v3980 = vunpack.c.h.b16 %v3289
  %v3981 = vunpack.c.l.b16 %v3290
  %v3982 = vunpack.c.h.b16 %v3290
  %v3983 = vunpack.c.l.b16 %v3291
  %v3984 = vunpack.c.h.b16 %v3291
  %v3985 = vunpack.c.l.b16 %v3292
  %v3986 = vunpack.c.h.b16 %v3292
  %v3987 = vunpack.c.l.b16 %v3293
  %v3988 = vunpack.c.h.b16 %v3293
  %v3989 = vunpack.c.l.b16 %v3294
  %v3990 = vunpack.c.h.b16 %v3294
  %v3991 = vunpack.c.l.b16 %v3295
  %v3992 = vunpack.c.h.b16 %v3295
  %v3993 = vunpack.c.l.b16 %v3296
  %v3994 = vunpack.c.h.b16 %v3296
  %v3995 = vunpack.c.l.b16 %v3297
  %v3996 = vunpack.c.h.b16 %v3297
  %v3997 = vunpack.c.l.b16 %v3298
  %v3998 = vunpack.c.h.b16 %v3298
  %v3999 = vunpack.c.l.b16 %v3299
  %v4000 = vunpack.c.h.b16 %v3299
  %v4001 = vunpack.c.l.b16 %v3300
  %v4002 = vunpack.c.h.b16 %v3300
  %v4003 = vunpack.c.l.b16 %v3301
  %v4004 = vunpack.c.h.b16 %v3301
  %v4005 = vunpack.c.l.b16 %v3302
  %v4006 = vunpack.c.h.b16 %v3302
  %v4007 = vunpack.c.l.b16 %v3303
  %v4008 = vunpack.c.h.b16 %v3303
  %v4009 = vunpack.c.l.b16 %v3304
  %v4010 = vunpack.c.h.b16 %v3304
  %v4011 = vunpack.c.l.b16 %v3305
  %v4012 = vunpack.c.h.b16 %v3305
  %v4013 = vunpack.c.l.b16 %v3306
  %v4014 = vunpack.c.h.b16 %v3306
  %v4015 = vunpack.c.l.b16 %v3307
  %v4016 = vunpack.c.h.b16 %v3307
  %v4017 = vunpack.c.l.b16 %v3308
  %v4018 = vunpack.c.h.b16 %v3308
  %v4019 = vunpack.c.l.b16 %v3309
  %v4020 = vunpack.c.h.b16 %v3309
  %v4021 = vunpack.c.l.b16 %v3310
  %v4022 = vunpack.c.h.b16 %v3310
  %v4023 = vunpack.c.l.b16 %v3311
  %v4024 = vunpack.c.h.b16 %v3311
  %v4025 = vunpack.c.l.b16 %v3312
  %v4026 = vunpack.c.h.b16 %v3312
  %v4027 = vunpack.c.l.b16 %v3313
  %v4028 = vunpack.c.h.b16 %v3313
  %v4029 = vunpack.c.l.b16 %v3314
  %v4030 = vunpack.c.h.b16 %v3314
  %v4031 = vunpack.c.l.b16 %v3315
  %v4032 = vunpack.c.h.b16 %v3315
  %v4033 = vunpack.c.l.b16 %v3316
  %v4034 = vunpack.c.h.b16 %v3316
  %v4035 = vunpack.c.l.b16 %v3317
  %v4036 = vunpack.c.h.b16 %v3317
  %v4037 = vunpack.c.l.b16 %v3318
  %v4038 = vunpack.c.h.b16 %v3318
  %v4039 = vunpack.c.l.b16 %v3319
  %v4040 = vunpack.c.h.b16 %v3319
  %v4041 = vunpack.c.l.b16 %v3320
  %v4042 = vunpack.c.h.b16 %v3320
  %v4043 = vunpack.c.l.b16 %v3321
  %v4044 = vunpack.c.h.b16 %v3321
  %v4045 = vunpack.c.l.b16 %v3322
  %v4046 = vunpack.c.h.b16 %v3322
  %v4047 = vunpack.c.l.b16 %v3323
  %v4048 = vunpack.c.h.b16 %v3323
  %v4049 = vunpack.c.l.b16 %v3324
  %v4050 = vunpack.c.h.b16 %v3324
  %v4051 = vunpack.c.l.b16 %v3325
  %v4052 = vunpack.c.h.b16 %v3325
  %v4053 = vunpack.c.l.b16 %v3326
  %v4054 = vunpack.c.h.b16 %v3326
  %v4055 = vunpack.c.l.b16 %v3327
  %v4056 = vunpack.c.h.b16 %v3327
  %v4057 = vunpack.c.l.b16 %v3328
  %v4058 = vunpack.c.h.b16 %v3328
  %v4059 = vunpack.c.l.b16 %v3329
  %v4060 = vunpack.c.h.b16 %v3329
  %v4061 = vunpack.c.l.b16 %v3330
  %v4062 = vunpack.c.h.b16 %v3330
  %v4063 = vunpack.c.l.b16 %v3331
  %v4064 = vunpack.c.h.b16 %v3331
  %v4065 = vunpack.c.l.b16 %v3332
  %v4066 = vunpack.c.h.b16 %v3332
  %v4067 = vunpack.c.l.b16 %v3333
  %v4068 = vunpack.c.h.b16 %v3333
  %v4069 = vunpack.c.l.b16 %v3334
  %v4070 = vunpack.c.h.b16 %v3334
  %v4071 = vunpack.c.l.b16 %v3335
  %v4072 = vunpack.c.h.b16 %v3335
  %v4073 = vunpack.c.l.b16 %v3336
  %v4074 = vunpack.c.h.b16 %v3336
  %v4075 = vunpack.c.l.b16 %v3337
  %v4076 = vunpack.c.h.b16 %v3337
  %v4077 = vunpack.c.l.b16 %v3338
  %v4078 = vunpack.c.h.b16 %v3338
  %v4079 = vunpack.c.l.b16 %v3339
  %v4080 = vunpack.c.h.b16 %v3339
  %v4081 = vunpack.c.l.b16 %v3340
  %v4082 = vunpack.c.h.b16 %v3340
  %v4083 = vunpack.c.l.b16 %v3341
  %v4084 = vunpack.c.h.b16 %v3341
  %v4085 = vunpack.c.l.b16 %v3342
  %v4086 = vunpack.c.h.b16 %v3342
  %v4087 = vunpack.c.l.b16 %v3343
  %v4088 = vunpack.c.h.b16 %v3343
  %v4089 = vunpack.c.l.b16 %v3344
  %v4090 = vunpack.c.h.b16 %v3344
  %v4091 = vunpack.c.l.b16 %v3345
  %v4092 = vunpack.c.h.b16 %v3345
  %v4093 = vunpack.c.l.b16 %v3346
  %v4094 = vunpack.c.h.b16 %v3346
  %v4095 = vunpack.c.l.b16 %v3347
  %v4096 = vunpack.c.h.b16 %v3347
  %v4097 = vunpack.c.l.b16 %v3348
  %v4098 = vunpack.c.h.b16 %v3348
  %v4099 = vunpack.c.l.b16 %v3349
  %v4100 = vunpack.c.h.b16 %v3349
  %v4101 = vunpack.c.l.b16 %v3350
  %v4102 = vunpack.c.h.b16 %v3350
  %v4103 = vunpack.c.l.b16 %v3351
  %v4104 = vunpack.c.h.b16 %v3351
  %v4105 = vunpack.c.l.b16 %v3352
  %v4106 = vunpack.c.h.b16 %v3352
  %v4107 = vunpack.c.l.b16 %v3353
  %v4108 = vunpack.c.h.b16 %v3353
  %v4109 = vunpack.c.l.b16 %v3354
  %v4110 = vunpack.c.h.b16 %v3354
  %v4111 = vunpack.c.l.b16 %v3355
  %v4112 = vunpack.c.h.b16 %v3355
  %v4113 = vunpack.c.l.b16 %v3356
  %v4114 = vunpack.c.h.b16 %v3356
  %v4115 = vunpack.c.l.b16 %v3357
  %v4116 = vunpack.c.h.b16 %v3357
  %v4117 = vunpack.c.l.b16 %v3358
  %v4118 = vunpack.c.h.b16 %v3358
  %v4119 = vunpack.c.l.b16 %v3359
  %v4120 = vunpack.c.h.b16 %v3359
  %v4121 = vunpack.c.l.b16 %v3360
  %v4122 = vunpack.c.h.b16 %v3360
  %v4123 = vunpack.c.l.b16 %v3361
  %v4124 = vunpack.c.h.b16 %v3361
  %v4125 = vunpack.c.l.b16 %v3362
  %v4126 = vunpack.c.h.b16 %v3362
  %v4127 = vunpack.c.l.b16 %v3363
  %v4128 = vunpack.c.h.b16 %v3363
  %v4129 = vunpack.c.l.b16 %v3364
  %v4130 = vunpack.c.h.b16 %v3364
  %v4131 = vunpack.c.l.b16 %v3365
  %v4132 = vunpack.c.h.b16 %v3365
  %v4133 = vunpack.c.l.b16 %v3366
  %v4134 = vunpack.c.h.b16 %v3366
  %v4135 = vunpack.c.l.b16 %v3367
  %v4136 = vunpack.c.h.b16 %v3367
  %v4137 = vunpack.c.l.b16 %v3368
  %v4138 = vunpack.c.h.b16 %v3368
  %v4139 = vunpack.c.l.b16 %v3369
  %v4140 = vunpack.c.h.b16 %v3369
  %v4141 = vunpack.c.l.b16 %v3370
  %v4142 = vunpack.c.h.b16 %v3370
  %v4143 = vunpack.c.l.b16 %v3371
  %v4144 = vunpack.c.h.b16 %v3371
  %v4145 = vunpack.c.l.b16 %v3372
  %v4146 = vunpack.c.h.b16 %v3372
  %v4147 = vunpack.c.l.b16 %v3373
  %v4148 = vunpack.c.h.b16 %v3373
  %v4149 = vunpack.c.l.b16 %v3374
  %v4150 = vunpack.c.h.b16 %v3374
  %v4151 = vunpack.c.l.b16 %v3375
  %v4152 = vunpack.c.h.b16 %v3375
  %v4153 = vunpack.c.l.b16 %v3376
  %v4154 = vunpack.c.h.b16 %v3376
  %v4155 = vunpack.c.l.b16 %v3377
  %v4156 = vunpack.c.h.b16 %v3377
  %v4157 = vunpack.c.l.b16 %v3378
  %v4158 = vunpack.c.h.b16 %v3378
  %v4159 = vunpack.c.l.b16 %v3379
  %v4160 = vunpack.c.h.b16 %v3379
  %v4161 = vunpack.c.l.b16 %v3380
  %v4162 = vunpack.c.h.b16 %v3380
  %v4163 = vunpack.c.l.b16 %v3381
  %v4164 = vunpack.c.h.b16 %v3381
  %v4165 = vunpack.c.l.b16 %v3382
  %v4166 = vunpack.c.h.b16 %v3382
  %v4167 = vunpack.c.l.b16 %v3383
  %v4168 = vunpack.c.h.b16 %v3383
  %v4169 = vunpack.c.l.b16 %v3384
  %v4170 = vunpack.c.h.b16 %v3384
  %v4171 = vunpack.c.l.b16 %v3385
  %v4172 = vunpack.c.h.b16 %v3385
  %v4173 = vunpack.c.l.b16 %v3386
  %v4174 = vunpack.c.h.b16 %v3386
  %v4175 = vunpack.c.l.b16 %v3387
  %v4176 = vunpack.c.h.b16 %v3387
  %v4177 = vunpack.c.l.b16 %v3388
  %v4178 = vunpack.c.h.b16 %v3388
  %v4179 = vunpack.c.l.b16 %v3389
  %v4180 = vunpack.c.h.b16 %v3389
  %v4181 = vunpack.c.l.b16 %v3390
  %v4182 = vunpack.c.h.b16 %v3390
  %v4183 = vunpack.c.l.b16 %v3391
  %v4184 = vunpack.c.h.b16 %v3391
  %v4185 = vunpack.c.l.b16 %v3392
  %v4186 = vunpack.c.h.b16 %v3392
  %v4187 = vunpack.c.l.b16 %v3393
  %v4188 = vunpack.c.h.b16 %v3393
  %v4189 = vunpack.c.l.b16 %v3394
  %v4190 = vunpack.c.h.b16 %v3394
  %v4191 = vunpack.c.l.b16 %v3395
  %v4192 = vunpack.c.h.b16 %v3395
  %v4193 = vunpack.c.l.b16 %v3396
  %v4194 = vunpack.c.h.b16 %v3396
  %v4195 = vunpack.c.l.b16 %v3397
  %v4196 = vunpack.c.h.b16 %v3397
  %v4197 = vunpack.c.l.b16 %v3398
  %v4198 = vunpack.c.h.b16 %v3398
  %v4199 = vunpack.c.l.b16 %v3399
  %v4200 = vunpack.c.h.b16 %v3399
  %v4201 = vunpack.c.l.b16 %v3400
  %v4202 = vunpack.c.h.b16 %v3400
  %v4203 = vunpack.c.l.b16 %v3401
  %v4204 = vunpack.c.h.b16 %v3401
  %v4205 = vunpack.c.l.b16 %v3402
  %v4206 = vunpack.c.h.b16 %v3402
  %v4207 = vunpack.c.l.b16 %v3403
  %v4208 = vunpack.c.h.b16 %v3403
  %v4209 = vunpack.c.l.b16 %v3404
  %v4210 = vunpack.c.h.b16 %v3404
  %v4211 = vunpack.c.l.b16 %v3405
  %v4212 = vunpack.c.h.b16 %v3405
  %v4213 = vunpack.c.l.b16 %v3406
  %v4214 = vunpack.c.h.b16 %v3406
  %v4215 = vunpack.c.l.b16 %v3407
  %v4216 = vunpack.c.h.b16 %v3407
  %v4217 = vunpack.c.l.b16 %v3408
  %v4218 = vunpack.c.h.b16 %v3408
  %v4219 = vunpack.c.l.b16 %v3409
  %v4220 = vunpack.c.h.b16 %v3409
  %v4221 = vunpack.c.l.b16 %v3410
  %v4222 = vunpack.c.h.b16 %v3410
  %v4223 = vunpack.c.l.b16 %v3411
  %v4224 = vunpack.c.h.b16 %v3411
  %v4225 = vunpack.c.l.b16 %v3412
  %v4226 = vunpack.c.h.b16 %v3412
  %v4227 = vunpack.c.l.b16 %v3413
  %v4228 = vunpack.c.h.b16 %v3413
  %v4229 = vunpack.c.l.b16 %v3414
  %v4230 = vunpack.c.h.b16 %v3414
  %v4231 = vunpack.c.l.b16 %v3415
  %v4232 = vunpack.c.h.b16 %v3415
  %v4233 = vunpack.c.l.b16 %v3416
  %v4234 = vunpack.c.h.b16 %v3416
  %v4235 = vunpack.c.l.b16 %v3417
  %v4236 = vunpack.c.h.b16 %v3417
  %v4237 = vunpack.c.l.b16 %v3418
  %v4238 = vunpack.c.h.b16 %v3418
  %v4239 = vunpack.c.l.b16 %v3419
  %v4240 = vunpack.c.h.b16 %v3419
  %v4241 = vunpack.c.l.b16 %v3420
  %v4242 = vunpack.c.h.b16 %v3420
  %v4243 = vunpack.c.l.b16 %v3421
  %v4244 = vunpack.c.h.b16 %v3421
  %v4245 = vunpack.c.l.b16 %v3422
  %v4246 = vunpack.c.h.b16 %v3422
  %v4247 = vunpack.c.l.b16 %v3423
  %v4248 = vunpack.c.h.b16 %v3423
  %v4249 = vunpack.c.l.b16 %v3424
  %v4250 = vunpack.c.h.b16 %v3424
  %v4251 = vunpack.c.l.b16 %v3425
  %v4252 = vunpack.c.h.b16 %v3425
  %v4253 = vunpack.c.l.b16 %v3426
  %v4254 = vunpack.c.h.b16 %v3426
  %v4255 = vunpack.c.l.b16 %v3427
  %v4256 = vunpack.c.h.b16 %v3427
  %v4257 = vunpack.c.l.b16 %v3428
  %v4258 = vunpack.c.h.b16 %v3428
  %v4259 = vunpack.c.l.b16 %v3429
  %v4260 = vunpack.c.h.b16 %v3429
  %v4261 = vunpack.c.l.b16 %v3430
  %v4262 = vunpack.c.h.b16 %v3430
  %v4263 = vunpack.c.l.b16 %v3431
  %v4264 = vunpack.c.h.b16 %v3431
  %v4265 = vunpack.c.l.b16 %v3432
  %v4266 = vunpack.c.h.b16 %v3432
  %v4267 = vunpack.c.l.b16 %v3433
  %v4268 = vunpack.c.h.b16 %v3433
  %v4269 = vunpack.c.l.b16 %v3434
  %v4270 = vunpack.c.h.b16 %v3434
  %v4271 = vunpack.c.l.b16 %v3435
  %v4272 = vunpack.c.h.b16 %v3435
  %v4273 = vunpack.c.l.b16 %v3436
  %v4274 = vunpack.c.h.b16 %v3436
  %v4275 = vunpack.c.l.b16 %v3437
  %v4276 = vunpack.c.h.b16 %v3437
  %v4277 = vunpack.c.l.b16 %v3438
  %v4278 = vunpack.c.h.b16 %v3438
  %v4279 = vunpack.c.l.b16 %v3439
  %v4280 = vunpack.c.h.b16 %v3439
  %v4281 = vunpack.c.l.b16 %v3440
  %v4282 = vunpack.c.h.b16 %v3440
  %v4283 = vunpack.c.l.b16 %v3441
  %v4284 = vunpack.c.h.b16 %v3441
  %v4285 = vunpack.c.l.b16 %v3442
  %v4286 = vunpack.c.h.b16 %v3442
  %v4287 = vunpack.c.l.b16 %v3443
  %v4288 = vunpack.c.h.b16 %v3443
  %v4289 = vunpack.c.l.b16 %v3444
  %v4290 = vunpack.c.h.b16 %v3444
  %v4291 = vunpack.c.l.b16 %v3445
  %v4292 = vunpack.c.h.b16 %v3445
  %v4293 = vunpack.c.l.b16 %v3446
  %v4294 = vunpack.c.h.b16 %v3446
  %v4295 = vunpack.c.l.b16 %v3447
  %v4296 = vunpack.c.h.b16 %v3447
  %v4297 = vunpack.c.l.b16 %v3448
  %v4298 = vunpack.c.h.b16 %v3448
  %v4299 = vunpack.c.l.b16 %v3449
  %v4300 = vunpack.c.h.b16 %v3449
  %v4301 = vunpack.c.l.b16 %v3450
  %v4302 = vunpack.c.h.b16 %v3450
  %v4303 = vpack.c.b16 %v3807, %v3791
  %v4304 = vpack.c.b16 %v3808, %v3792
  %v4305 = vpack.c.b16 %v3809, %v3793
  %v4306 = vpack.c.b16 %v3810, %v3794
  %v4307 = vpack.c.b16 %v3811, %v3795
  %v4308 = vpack.c.b16 %v3812, %v3796
  %v4309 = vpack.c.b16 %v3813, %v3797
  %v4310 = vpack.c.b16 %v3814, %v3798
  %v4311 = vpack.c.b16 %v3815, %v3799
  %v4312 = vpack.c.b16 %v3816, %v3800
  %v4313 = vpack.c.b16 %v3817, %v3801
  %v4314 = vpack.c.b16 %v3818, %v3802
  %v4315 = vpack.c.b16 %v3819, %v3803
  %v4316 = vpack.c.b16 %v3820, %v3804
  %v4317 = vpack.c.b16 %v3821, %v3805
  %v4318 = vpack.c.b16 %v3822, %v3806
  %v4319 = vpack.c.b16 %v3839, %v3823
  %v4320 = vpack.c.b16 %v3840, %v3824
  %v4321 = vpack.c.b16 %v3841, %v3825
  %v4322 = vpack.c.b16 %v3842, %v3826
  %v4323 = vpack.c.b16 %v3843, %v3827
  %v4324 = vpack.c.b16 %v3844, %v3828
  %v4325 = vpack.c.b16 %v3845, %v3829
  %v4326 = vpack.c.b16 %v3846, %v3830
  %v4327 = vpack.c.b16 %v3847, %v3831
  %v4328 = vpack.c.b16 %v3848, %v3832
  %v4329 = vpack.c.b16 %v3849, %v3833
  %v4330 = vpack.c.b16 %v3850, %v3834
  %v4331 = vpack.c.b16 %v3851, %v3835
  %v4332 = vpack.c.b16 %v3852, %v3836
  %v4333 = vpack.c.b16 %v3853, %v3837
  %v4334 = vpack.c.b16 %v3854, %v3838
  %v4335 = vpack.c.b16 %v3871, %v3855
  %v4336 = vpack.c.b16 %v3872, %v3856
  %v4337 = vpack.c.b16 %v3873, %v3857
  %v4338 = vpack.c.b16 %v3874, %v3858
  %v4339 = vpack.c.b16 %v3875, %v3859
  %v4340 = vpack.c.b16 %v3876, %v3860
  %v4341 = vpack.c.b16 %v3877, %v3861
  %v4342 = vpack.c.b16 %v3878, %v3862
  %v4343 = vpack.c.b16 %v3879, %v3863
  %v4344 = vpack.c.b16 %v3880, %v3864
  %v4345 = vpack.c.b16 %v3881, %v3865
  %v4346 = vpack.c.b16 %v3882, %v3866
  %v4347 = vpack.c.b16 %v3883, %v3867
  %v4348 = vpack.c.b16 %v3884, %v3868
  %v4349 = vpack.c.b16 %v3885, %v3869
  %v4350 = vpack.c.b16 %v3886, %v3870
  %v4351 = vpack.c.b16 %v3903, %v3887
  %v4352 = vpack.c.b16 %v3904, %v3888
  %v4353 = vpack.c.b16 %v3905, %v3889
  %v4354 = vpack.c.b16 %v3906, %v3890
  %v4355 = vpack.c.b16 %v3907, %v3891
  %v4356 = vpack.c.b16 %v3908, %v3892
  %v4357 = vpack.c.b16 %v3909, %v3893
  %v4358 = vpack.c.b16 %v3910, %v3894
  %v4359 = vpack.c.b16 %v3911, %v3895
  %v4360 = vpack.c.b16 %v3912, %v3896
  %v4361 = vpack.c.b16 %v3913, %v3897
  %v4362 = vpack.c.b16 %v3914, %v3898
  %v4363 = vpack.c.b16 %v3915, %v3899
  %v4364 = vpack.c.b16 %v3916, %v3900
  %v4365 = vpack.c.b16 %v3917, %v3901
  %v4366 = vpack.c.b16 %v3918, %v3902
  %v4367 = vpack.c.b16 %v3935, %v3919
  %v4368 = vpack.c.b16 %v3936, %v3920
  %v4369 = vpack.c.b16 %v3937, %v3921
  %v4370 = vpack.c.b16 %v3938, %v3922
  %v4371 = vpack.c.b16 %v3939, %v3923
  %v4372 = vpack.c.b16 %v3940, %v3924
  %v4373 = vpack.c.b16 %v3941, %v3925
  %v4374 = vpack.c.b16 %v3942, %v3926
  %v4375 = vpack.c.b16 %v3943, %v3927
  %v4376 = vpack.c.b16 %v3944, %v3928
  %v4377 = vpack.c.b16 %v3945, %v3929
  %v4378 = vpack.c.b16 %v3946, %v3930
  %v4379 = vpack.c.b16 %v3947, %v3931
  %v4380 = vpack.c.b16 %v3948, %v3932
  %v4381 = vpack.c.b16 %v3949, %v3933
  %v4382 = vpack.c.b16 %v3950, %v3934
  %v4383 = vpack.c.b16 %v3967, %v3951
  %v4384 = vpack.c.b16 %v3968, %v3952
  %v4385 = vpack.c.b16 %v3969, %v3953
  %v4386 = vpack.c.b16 %v3970, %v3954
  %v4387 = vpack.c.b16 %v3971, %v3955
  %v4388 = vpack.c.b16 %v3972, %v3956
  %v4389 = vpack.c.b16 %v3973, %v3957
  %v4390 = vpack.c.b16 %v3974, %v3958
  %v4391 = vpack.c.b16 %v3975, %v3959
  %v4392 = vpack.c.b16 %v3976, %v3960
  %v4393 = vpack.c.b16 %v3977, %v3961
  %v4394 = vpack.c.b16 %v3978, %v3962
  %v4395 = vpack.c.b16 %v3979, %v3963
  %v4396 = vpack.c.b16 %v3980, %v3964
  %v4397 = vpack.c.b16 %v3981, %v3965
  %v4398 = vpack.c.b16 %v3982, %v3966
  %v4399 = vpack.c.b16 %v3999, %v3983
  %v4400 = vpack.c.b16 %v4000, %v3984
  %v4401 = vpack.c.b16 %v4001, %v3985
  %v4402 = vpack.c.b16 %v4002, %v3986
  %v4403 = vpack.c.b16 %v4003, %v3987
  %v4404 = vpack.c.b16 %v4004, %v3988
  %v4405 = vpack.c.b16 %v4005, %v3989
  %v4406 = vpack.c.b16 %v4006, %v3990
  %v4407 = vpack.c.b16 %v4007, %v3991
  %v4408 = vpack.c.b16 %v4008, %v3992
  %v4409 = vpack.c.b16 %v4009, %v3993
  %v4410 = vpack.c.b16 %v4010, %v3994
  %v4411 = vpack.c.b16 %v4011, %v3995
  %v4412 = vpack.c.b16 %v4012, %v3996
  %v4413 = vpack.c.b16 %v4013, %v3997
  %v4414 = vpack.c.b16 %v4014, %v3998
  %v4415 = vpack.c.b16 %v4031, %v4015
  %v4416 = vpack.c.b16 %v4032, %v4016
  %v4417 = vpack.c.b16 %v4033, %v4017
  %v4418 = vpack.c.b16 %v4034, %v4018
  %v4419 = vpack.c.b16 %v4035, %v4019
  %v4420 = vpack.c.b16 %v4036, %v4020
  %v4421 = vpack.c.b16 %v4037, %v4021
  %v4422 = vpack.c.b16 %v4038, %v4022
  %v4423 = vpack.c.b16 %v4039, %v4023
  %v4424 = vpack.c.b16 %v4040, %v4024
  %v4425 = vpack.c.b16 %v4041, %v4025
  %v4426 = vpack.c.b16 %v4042, %v4026
  %v4427 = vpack.c.b16 %v4043, %v4027
  %v4428 = vpack.c.b16 %v4044, %v4028
  %v4429 = vpack.c.b16 %v4045, %v4029
  %v4430 = vpack.c.b16 %v4046, %v4030
  %v4431 = vpack.c.b16 %v4063, %v4047
  %v4432 = vpack.c.b16 %v4064, %v4048
  %v4433 = vpack.c.b16 %v4065, %v4049
  %v4434 = vpack.c.b16 %v4066, %v4050
  %v4435 = vpack.c.b16 %v4067, %v4051
  %v4436 = vpack.c.b16 %v4068, %v4052
  %v4437 = vpack.c.b16 %v4069, %v4053
  %v4438 = vpack.c.b16 %v4070, %v4054
  %v4439 = vpack.c.b16 %v4071, %v4055
  %v4440 = vpack.c.b16 %v4072, %v4056
  %v4441 = vpack.c.b16 %v4073, %v4057
  %v4442 = vpack.c.b16 %v4074, %v4058
  %v4443 = vpack.c.b16 %v4075, %v4059
  %v4444 = vpack.c.b16 %v4076, %v4060
  %v4445 = vpack.c.b16 %v4077, %v4061
  %v4446 = vpack.c.b16 %v4078, %v4062
  %v4447 = vpack.c.b16 %v4095, %v4079
  %v4448 = vpack.c.b16 %v4096, %v4080
  %v4449 = vpack.c.b16 %v4097, %v4081
  %v4450 = vpack.c.b16 %v4098, %v4082
  %v4451 = vpack.c.b16 %v4099, %v4083
  %v4452 = vpack.c.b16 %v4100, %v4084
  %v4453 = vpack.c.b16 %v4101, %v4085
  %v4454 = vpack.c.b16 %v4102, %v4086
  %v4455 = vpack.c.b16 %v4103, %v4087
  %v4456 = vpack.c.b16 %v4104, %v4088
  %v4457 = vpack.c.b16 %v4105, %v4089
  %v4458 = vpack.c.b16 %v4106, %v4090
  %v4459 = vpack.c.b16 %v4107, %v4091
  %v4460 = vpack.c.b16 %v4108, %v4092
  %v4461 = vpack.c.b16 %v4109, %v4093
  %v4462 = vpack.c.b16 %v4110, %v4094
  %v4463 = vpack.c.b16 %v4127, %v4111
  %v4464 = vpack.c.b16 %v4128, %v4112
  %v4465 = vpack.c.b16 %v4129, %v4113
  %v4466 = vpack.c.b16 %v4130, %v4114
  %v4467 = vpack.c.b16 %v4131, %v4115
  %v4468 = vpack.c.b16 %v4132, %v4116
  %v4469 = vpack.c.b16 %v4133, %v4117
  %v4470 = vpack.c.b16 %v4134, %v4118
  %v4471 = vpack.c.b16 %v4135, %v4119
  %v4472 = vpack.c.b16 %v4136, %v4120
  %v4473 = vpack.c.b16 %v4137, %v4121
  %v4474 = vpack.c.b16 %v4138, %v4122
  %v4475 = vpack.c.b16 %v4139, %v4123
  %v4476 = vpack.c.b16 %v4140, %v4124
  %v4477 = vpack.c.b16 %v4141, %v4125
  %v4478 = vpack.c.b16 %v4142, %v4126
  %v4479 = vpack.c.b16 %v4159, %v4143
  %v4480 = vpack.c.b16 %v4160, %v4144
  %v4481 = vpack.c.b16 %v4161, %v4145
  %v4482 = vpack.c.b16 %v4162, %v4146
  %v4483 = vpack.c.b16 %v4163, %v4147
  %v4484 = vpack.c.b16 %v4164, %v4148
  %v4485 = vpack.c.b16 %v4165, %v4149
  %v4486 = vpack.c.b16 %v4166, %v4150
  %v4487 = vpack.c.b16 %v4167, %v4151
  %v4488 = vpack.c.b16 %v4168, %v4152
  %v4489 = vpack.c.b16 %v4169, %v4153
  %v4490 = vpack.c.b16 %v4170, %v4154
  %v4491 = vpack.c.b16 %v4171, %v4155
  %v4492 = vpack.c.b16 %v4172, %v4156
  %v4493 = vpack.c.b16 %v4173, %v4157
  %v4494 = vpack.c.b16 %v4174, %v4158
  %v4495 = vpack.c.b16 %v4191, %v4175
  %v4496 = vpack.c.b16 %v4192, %v4176
  %v4497 = vpack.c.b16 %v4193, %v4177
  %v4498 = vpack.c.b16 %v4194, %v4178
  %v4499 = vpack.c.b16 %v4195, %v4179
  %v4500 = vpack.c.b16 %v4196, %v4180
  %v4501 = vpack.c.b16 %v4197, %v4181
  %v4502 = vpack.c.b16 %v4198, %v4182
  %v4503 = vpack.c.b16 %v4199, %v4183
  %v4504 = vpack.c.b16 %v4200, %v4184
  %v4505 = vpack.c.b16 %v4201, %v4185
  %v4506 = vpack.c.b16 %v4202, %v4186
  %v4507 = vpack.c.b16 %v4203, %v4187
  %v4508 = vpack.c.b16 %v4204, %v4188
  %v4509 = vpack.c.b16 %v4205, %v4189
  %v4510 = vpack.c.b16 %v4206, %v4190
  %v4511 = vpack.c.b16 %v4223, %v4207
  %v4512 = vpack.c.b16 %v4224, %v4208
  %v4513 = vpack.c.b16 %v4225, %v4209
  %v4514 = vpack.c.b16 %v4226, %v4210
  %v4515 = vpack.c.b16 %v4227, %v4211
  %v4516 = vpack.c.b16 %v4228, %v4212
  %v4517 = vpack.c.b16 %v4229, %v4213
  %v4518 = vpack.c.b16 %v4230, %v4214
  %v4519 = vpack.c.b16 %v4231, %v4215
  %v4520 = vpack.c.b16 %v4232, %v4216
  %v4521 = vpack.c.b16 %v4233, %v4217
  %v4522 = vpack.c.b16 %v4234, %v4218
  %v4523 = vpack.c.b16 %v4235, %v4219
  %v4524 = vpack.c.b16 %v4236, %v4220
  %v4525 = vpack.c.b16 %v4237, %v4221
  %v4526 = vpack.c.b16 %v4238, %v4222
  %v4527 = vpack.c.b16 %v4255, %v4239
  %v4528 = vpack.c.b16 %v4256, %v4240
  %v4529 = vpack.c.b16 %v4257, %v4241
  %v4530 = vpack.c.b16 %v4258, %v4242
  %v4531 = vpack.c.b16 %v4259, %v4243
  %v4532 = vpack.c.b16 %v4260, %v4244
  %v4533 = vpack.c.b16 %v4261, %v4245
  %v4534 = vpack.c.b16 %v4262, %v4246
  %v4535 = vpack.c.b16 %v4263, %v4247
  %v4536 = vpack.c.b16 %v4264, %v4248
  %v4537 = vpack.c.b16 %v4265, %v4249
  %v4538 = vpack.c.b16 %v4266, %v4250
  %v4539 = vpack.c.b16 %v4267, %v4251
  %v4540 = vpack.c.b16 %v4268, %v4252
  %v4541 = vpack.c.b16 %v4269, %v4253
  %v4542 = vpack.c.b16 %v4270, %v4254
  %v4543 = vpack.c.b16 %v4287, %v4271
  %v4544 = vpack.c.b16 %v4288, %v4272
  %v4545 = vpack.c.b16 %v4289, %v4273
  %v4546 = vpack.c.b16 %v4290, %v4274
  %v4547 = vpack.c.b16 %v4291, %v4275
  %v4548 = vpack.c.b16 %v4292, %v4276
  %v4549 = vpack.c.b16 %v4293, %v4277
  %v4550 = vpack.c.b16 %v4294, %v4278
  %v4551 = vpack.c.b16 %v4295, %v4279
  %v4552 = vpack.c.b16 %v4296, %v4280
  %v4553 = vpack.c.b16 %v4297, %v4281
  %v4554 = vpack.c.b16 %v4298, %v4282
  %v4555 = vpack.c.b16 %v4299, %v4283
  %v4556 = vpack.c.b16 %v4300, %v4284
  %v4557 = vpack.c.b16 %v4301, %v4285
  %v4558 = vpack.c.b16 %v4302, %v4286
  %4815 = vmatprep.subr.bf16.mxu0 %v4304
  %4816 = vmatpush1.bf16.msra.mxu0 %v4303
  %4817 = vmatprep.subr.bf16.mxu0 %v4320
  %4818 = vmatpush1.bf16.msra.mxu0 %v4319
  %4819 = vmatprep.subr.bf16.mxu0 %v4336
  %4820 = vmatpush1.bf16.msra.mxu0 %v4335
  %4821 = vmatprep.subr.bf16.mxu0 %v4352
  %4822 = vmatpush1.bf16.msra.mxu0 %v4351
  %4823 = vmatprep.subr.bf16.mxu0 %v4368
  %4824 = vmatpush1.bf16.msra.mxu0 %v4367
  %4825 = vmatprep.subr.bf16.mxu0 %v4384
  %4826 = vmatpush1.bf16.msra.mxu0 %v4383
  %4827 = vmatprep.subr.bf16.mxu0 %v4400
  %4828 = vmatpush1.bf16.msra.mxu0 %v4399
  %4829 = vmatprep.subr.bf16.mxu0 %v4416
  %4830 = vmatpush1.bf16.msra.mxu0 %v4415
  %4831 = vmatprep.subr.bf16.mxu0 %v4432
  %4832 = vmatpush1.bf16.msra.mxu0 %v4431
  %4833 = vmatprep.subr.bf16.mxu0 %v4448
  %4834 = vmatpush1.bf16.msra.mxu0 %v4447
  %4835 = vmatprep.subr.bf16.mxu0 %v4464
  %4836 = vmatpush1.bf16.msra.mxu0 %v4463
  %4837 = vmatprep.subr.bf16.mxu0 %v4480
  %4838 = vmatpush1.bf16.msra.mxu0 %v4479
  %4839 = vmatprep.subr.bf16.mxu0 %v4496
  %4840 = vmatpush1.bf16.msra.mxu0 %v4495
  %4841 = vmatprep.subr.bf16.mxu0 %v4512
  %4842 = vmatpush1.bf16.msra.mxu0 %v4511
  %4843 = vmatprep.subr.bf16.mxu0 %v4528
  %4844 = vmatpush1.bf16.msra.mxu0 %v4527
  %4845 = vmatprep.subr.bf16.mxu0 %v4544
  %4846 = vmatpush1.bf16.msra.mxu0 %v4543
  %4847 = vmatprep.mubr.bf16.mxu0 %v3194
  %4848 = vmatmul.mubr.bf16.gmra.mrb[0].mxu0 %v3193
  %v4849 = vpop.f32.mrb[0].mxu0
  %v4850 = vadd.f32 %v3458, %v4849
  %v4851 = vpop.f32.mrb[0].mxu0
  %v4852 = vadd.f32 %v3462, %v4851
  %v4853 = vpop.f32.mrb[0].mxu0
  %v4854 = vadd.f32 %v3458, %v4853
  %v4855 = vpop.f32.mrb[0].mxu0
  %v4856 = vadd.f32 %v3462, %v4855
  %4857 = vdwg.mxu0
  %4858 = vmatprep.subr.bf16.mxu0 %v4306
  %4859 = vmatpush1.bf16.msra.mxu0 %v4305
  %4860 = vmatprep.subr.bf16.mxu0 %v4322
  %4861 = vmatpush1.bf16.msra.mxu0 %v4321
  %4862 = vmatprep.subr.bf16.mxu0 %v4338
  %4863 = vmatpush1.bf16.msra.mxu0 %v4337
  %4864 = vmatprep.subr.bf16.mxu0 %v4354
  %4865 = vmatpush1.bf16.msra.mxu0 %v4353
  %4866 = vmatprep.subr.bf16.mxu0 %v4370
  %4867 = vmatpush1.bf16.msra.mxu0 %v4369
  %4868 = vmatprep.subr.bf16.mxu0 %v4386
  %4869 = vmatpush1.bf16.msra.mxu0 %v4385
  %4870 = vmatprep.subr.bf16.mxu0 %v4402
  %4871 = vmatpush1.bf16.msra.mxu0 %v4401
  %4872 = vmatprep.subr.bf16.mxu0 %v4418
  %4873 = vmatpush1.bf16.msra.mxu0 %v4417
  %4874 = vmatprep.subr.bf16.mxu0 %v4434
  %4875 = vmatpush1.bf16.msra.mxu0 %v4433
  %4876 = vmatprep.subr.bf16.mxu0 %v4450
  %4877 = vmatpush1.bf16.msra.mxu0 %v4449
  %4878 = vmatprep.subr.bf16.mxu0 %v4466
  %4879 = vmatpush1.bf16.msra.mxu0 %v4465
  %4880 = vmatprep.subr.bf16.mxu0 %v4482
  %4881 = vmatpush1.bf16.msra.mxu0 %v4481
  %4882 = vmatprep.subr.bf16.mxu0 %v4498
  %4883 = vmatpush1.bf16.msra.mxu0 %v4497
  %4884 = vmatprep.subr.bf16.mxu0 %v4514
  %4885 = vmatpush1.bf16.msra.mxu0 %v4513
  %4886 = vmatprep.subr.bf16.mxu0 %v4530
  %4887 = vmatpush1.bf16.msra.mxu0 %v4529
  %4888 = vmatprep.subr.bf16.mxu0 %v4546
  %4889 = vmatpush1.bf16.msra.mxu0 %v4545
  %4890 = vmatprep.mubr.bf16.mxu0 %v3194
  %4891 = vmatmul.mubr.bf16.gmra.mrb[0].mxu0 %v3193
  %v4892 = vpop.f32.mrb[0].mxu0
  %v4893 = vadd.f32 %v3466, %v4892
  %v4894 = vpop.f32.mrb[0].mxu0
  %v4895 = vadd.f32 %v3470, %v4894
  %v4896 = vpop.f32.mrb[0].mxu0
  %v4897 = vadd.f32 %v3466, %v4896
  %v4898 = vpop.f32.mrb[0].mxu0
  %v4899 = vadd.f32 %v3470, %v4898
  %4900 = vdwg.mxu0
  %4901 = vmatprep.subr.bf16.mxu0 %v4308
  %4902 = vmatpush1.bf16.msra.mxu0 %v4307
  %4903 = vmatprep.subr.bf16.mxu0 %v4324
  %4904 = vmatpush1.bf16.msra.mxu0 %v4323
  %4905 = vmatprep.subr.bf16.mxu0 %v4340
  %4906 = vmatpush1.bf16.msra.mxu0 %v4339
  %4907 = vmatprep.subr.bf16.mxu0 %v4356
  %4908 = vmatpush1.bf16.msra.mxu0 %v4355
  %4909 = vmatprep.subr.bf16.mxu0 %v4372
  %4910 = vmatpush1.bf16.msra.mxu0 %v4371
  %4911 = vmatprep.subr.bf16.mxu0 %v4388
  %4912 = vmatpush1.bf16.msra.mxu0 %v4387
  %4913 = vmatprep.subr.bf16.mxu0 %v4404
  %4914 = vmatpush1.bf16.msra.mxu0 %v4403
  %4915 = vmatprep.subr.bf16.mxu0 %v4420
  %4916 = vmatpush1.bf16.msra.mxu0 %v4419
  %4917 = vmatprep.subr.bf16.mxu0 %v4436
  %4918 = vmatpush1.bf16.msra.mxu0 %v4435
  %4919 = vmatprep.subr.bf16.mxu0 %v4452
  %4920 = vmatpush1.bf16.msra.mxu0 %v4451
  %4921 = vmatprep.subr.bf16.mxu0 %v4468
  %4922 = vmatpush1.bf16.msra.mxu0 %v4467
  %4923 = vmatprep.subr.bf16.mxu0 %v4484
  %4924 = vmatpush1.bf16.msra.mxu0 %v4483
  %4925 = vmatprep.subr.bf16.mxu0 %v4500
  %4926 = vmatpush1.bf16.msra.mxu0 %v4499
  %4927 = vmatprep.subr.bf16.mxu0 %v4516
  %4928 = vmatpush1.bf16.msra.mxu0 %v4515
  %4929 = vmatprep.subr.bf16.mxu0 %v4532
  %4930 = vmatpush1.bf16.msra.mxu0 %v4531
  %4931 = vmatprep.subr.bf16.mxu0 %v4548
  %4932 = vmatpush1.bf16.msra.mxu0 %v4547
  %4933 = vmatprep.mubr.bf16.mxu0 %v3194
  %4934 = vmatmul.mubr.bf16.gmra.mrb[0].mxu0 %v3193
  %v4935 = vpop.f32.mrb[0].mxu0
  %v4936 = vadd.f32 %v3474, %v4935
  %v4937 = vpop.f32.mrb[0].mxu0
  %v4938 = vadd.f32 %v3478, %v4937
  %v4939 = vpop.f32.mrb[0].mxu0
  %v4940 = vadd.f32 %v3474, %v4939
  %v4941 = vpop.f32.mrb[0].mxu0
  %v4942 = vadd.f32 %v3478, %v4941
  %4943 = vdwg.mxu0
  %4944 = vmatprep.subr.bf16.mxu0 %v4310
  %4945 = vmatpush1.bf16.msra.mxu0 %v4309
  %4946 = vmatprep.subr.bf16.mxu0 %v4326
  %4947 = vmatpush1.bf16.msra.mxu0 %v4325
  %4948 = vmatprep.subr.bf16.mxu0 %v4342
  %4949 = vmatpush1.bf16.msra.mxu0 %v4341
  %4950 = vmatprep.subr.bf16.mxu0 %v4358
  %4951 = vmatpush1.bf16.msra.mxu0 %v4357
  %4952 = vmatprep.subr.bf16.mxu0 %v4374
  %4953 = vmatpush1.bf16.msra.mxu0 %v4373
  %4954 = vmatprep.subr.bf16.mxu0 %v4390
  %4955 = vmatpush1.bf16.msra.mxu0 %v4389
  %4956 = vmatprep.subr.bf16.mxu0 %v4406
  %4957 = vmatpush1.bf16.msra.mxu0 %v4405
  %4958 = vmatprep.subr.bf16.mxu0 %v4422
  %4959 = vmatpush1.bf16.msra.mxu0 %v4421
  %4960 = vmatprep.subr.bf16.mxu0 %v4438
  %4961 = vmatpush1.bf16.msra.mxu0 %v4437
  %4962 = vmatprep.subr.bf16.mxu0 %v4454
  %4963 = vmatpush1.bf16.msra.mxu0 %v4453
  %4964 = vmatprep.subr.bf16.mxu0 %v4470
  %4965 = vmatpush1.bf16.msra.mxu0 %v4469
  %4966 = vmatprep.subr.bf16.mxu0 %v4486
  %4967 = vmatpush1.bf16.msra.mxu0 %v4485
  %4968 = vmatprep.subr.bf16.mxu0 %v4502
  %4969 = vmatpush1.bf16.msra.mxu0 %v4501
  %4970 = vmatprep.subr.bf16.mxu0 %v4518
  %4971 = vmatpush1.bf16.msra.mxu0 %v4517
  %4972 = vmatprep.subr.bf16.mxu0 %v4534
  %4973 = vmatpush1.bf16.msra.mxu0 %v4533
  %4974 = vmatprep.subr.bf16.mxu0 %v4550
  %4975 = vmatpush1.bf16.msra.mxu0 %v4549
  %4976 = vmatprep.mubr.bf16.mxu0 %v3194
  %4977 = vmatmul.mubr.bf16.gmra.mrb[0].mxu0 %v3193
  %v4978 = vpop.f32.mrb[0].mxu0
  %v4979 = vadd.f32 %v3482, %v4978
  %v4980 = vpop.f32.mrb[0].mxu0
  %v4981 = vadd.f32 %v3486, %v4980
  %v4982 = vpop.f32.mrb[0].mxu0
  %v4983 = vadd.f32 %v3482, %v4982
  %v4984 = vpop.f32.mrb[0].mxu0
  %v4985 = vadd.f32 %v3486, %v4984
  %4986 = vdwg.mxu0
  %4987 = vmatprep.subr.bf16.mxu0 %v4312
  %4988 = vmatpush1.bf16.msra.mxu0 %v4311
  %4989 = vmatprep.subr.bf16.mxu0 %v4328
  %4990 = vmatpush1.bf16.msra.mxu0 %v4327
  %4991 = vmatprep.subr.bf16.mxu0 %v4344
  %4992 = vmatpush1.bf16.msra.mxu0 %v4343
  %4993 = vmatprep.subr.bf16.mxu0 %v4360
  %4994 = vmatpush1.bf16.msra.mxu0 %v4359
  %4995 = vmatprep.subr.bf16.mxu0 %v4376
  %4996 = vmatpush1.bf16.msra.mxu0 %v4375
  %4997 = vmatprep.subr.bf16.mxu0 %v4392
  %4998 = vmatpush1.bf16.msra.mxu0 %v4391
  %4999 = vmatprep.subr.bf16.mxu0 %v4408
  %5000 = vmatpush1.bf16.msra.mxu0 %v4407
  %5001 = vmatprep.subr.bf16.mxu0 %v4424
  %5002 = vmatpush1.bf16.msra.mxu0 %v4423
  %5003 = vmatprep.subr.bf16.mxu0 %v4440
  %5004 = vmatpush1.bf16.msra.mxu0 %v4439
  %5005 = vmatprep.subr.bf16.mxu0 %v4456
  %5006 = vmatpush1.bf16.msra.mxu0 %v4455
  %5007 = vmatprep.subr.bf16.mxu0 %v4472
  %5008 = vmatpush1.bf16.msra.mxu0 %v4471
  %5009 = vmatprep.subr.bf16.mxu0 %v4488
  %5010 = vmatpush1.bf16.msra.mxu0 %v4487
  %5011 = vmatprep.subr.bf16.mxu0 %v4504
  %5012 = vmatpush1.bf16.msra.mxu0 %v4503
  %5013 = vmatprep.subr.bf16.mxu0 %v4520
  %5014 = vmatpush1.bf16.msra.mxu0 %v4519
  %5015 = vmatprep.subr.bf16.mxu0 %v4536
  %5016 = vmatpush1.bf16.msra.mxu0 %v4535
  %5017 = vmatprep.subr.bf16.mxu0 %v4552
  %5018 = vmatpush1.bf16.msra.mxu0 %v4551
  %5019 = vmatprep.mubr.bf16.mxu0 %v3194
  %5020 = vmatmul.mubr.bf16.gmra.mrb[0].mxu0 %v3193
  %v5021 = vpop.f32.mrb[0].mxu0
  %v5022 = vadd.f32 %v3490, %v5021
  %v5023 = vpop.f32.mrb[0].mxu0
  %v5024 = vadd.f32 %v3494, %v5023
  %v5025 = vpop.f32.mrb[0].mxu0
  %v5026 = vadd.f32 %v3490, %v5025
  %v5027 = vpop.f32.mrb[0].mxu0
  %v5028 = vadd.f32 %v3494, %v5027
  %5029 = vdwg.mxu0
  %5030 = vmatprep.subr.bf16.mxu0 %v4314
  %5031 = vmatpush1.bf16.msra.mxu0 %v4313
  %5032 = vmatprep.subr.bf16.mxu0 %v4330
  %5033 = vmatpush1.bf16.msra.mxu0 %v4329
  %5034 = vmatprep.subr.bf16.mxu0 %v4346
  %5035 = vmatpush1.bf16.msra.mxu0 %v4345
  %5036 = vmatprep.subr.bf16.mxu0 %v4362
  %5037 = vmatpush1.bf16.msra.mxu0 %v4361
  %5038 = vmatprep.subr.bf16.mxu0 %v4378
  %5039 = vmatpush1.bf16.msra.mxu0 %v4377
  %5040 = vmatprep.subr.bf16.mxu0 %v4394
  %5041 = vmatpush1.bf16.msra.mxu0 %v4393
  %5042 = vmatprep.subr.bf16.mxu0 %v4410
  %5043 = vmatpush1.bf16.msra.mxu0 %v4409
  %5044 = vmatprep.subr.bf16.mxu0 %v4426
  %5045 = vmatpush1.bf16.msra.mxu0 %v4425
  %5046 = vmatprep.subr.bf16.mxu0 %v4442
  %5047 = vmatpush1.bf16.msra.mxu0 %v4441
  %5048 = vmatprep.subr.bf16.mxu0 %v4458
  %5049 = vmatpush1.bf16.msra.mxu0 %v4457
  %5050 = vmatprep.subr.bf16.mxu0 %v4474
  %5051 = vmatpush1.bf16.msra.mxu0 %v4473
  %5052 = vmatprep.subr.bf16.mxu0 %v4490
  %5053 = vmatpush1.bf16.msra.mxu0 %v4489
  %5054 = vmatprep.subr.bf16.mxu0 %v4506
  %5055 = vmatpush1.bf16.msra.mxu0 %v4505
  %5056 = vmatprep.subr.bf16.mxu0 %v4522
  %5057 = vmatpush1.bf16.msra.mxu0 %v4521
  %5058 = vmatprep.subr.bf16.mxu0 %v4538
  %5059 = vmatpush1.bf16.msra.mxu0 %v4537
  %5060 = vmatprep.subr.bf16.mxu0 %v4554
  %5061 = vmatpush1.bf16.msra.mxu0 %v4553
  %5062 = vmatprep.mubr.bf16.mxu0 %v3194
  %5063 = vmatmul.mubr.bf16.gmra.mrb[0].mxu0 %v3193
  %v5064 = vpop.f32.mrb[0].mxu0
  %v5065 = vadd.f32 %v3498, %v5064
  %v5066 = vpop.f32.mrb[0].mxu0
  %v5067 = vadd.f32 %v3502, %v5066
  %v5068 = vpop.f32.mrb[0].mxu0
  %v5069 = vadd.f32 %v3498, %v5068
  %v5070 = vpop.f32.mrb[0].mxu0
  %v5071 = vadd.f32 %v3502, %v5070
  %5072 = vdwg.mxu0
  %5073 = vmatprep.subr.bf16.mxu0 %v4316
  %5074 = vmatpush1.bf16.msra.mxu0 %v4315
  %5075 = vmatprep.subr.bf16.mxu0 %v4332
  %5076 = vmatpush1.bf16.msra.mxu0 %v4331
  %5077 = vmatprep.subr.bf16.mxu0 %v4348
  %5078 = vmatpush1.bf16.msra.mxu0 %v4347
  %5079 = vmatprep.subr.bf16.mxu0 %v4364
  %5080 = vmatpush1.bf16.msra.mxu0 %v4363
  %5081 = vmatprep.subr.bf16.mxu0 %v4380
  %5082 = vmatpush1.bf16.msra.mxu0 %v4379
  %5083 = vmatprep.subr.bf16.mxu0 %v4396
  %5084 = vmatpush1.bf16.msra.mxu0 %v4395
  %5085 = vmatprep.subr.bf16.mxu0 %v4412
  %5086 = vmatpush1.bf16.msra.mxu0 %v4411
  %5087 = vmatprep.subr.bf16.mxu0 %v4428
  %5088 = vmatpush1.bf16.msra.mxu0 %v4427
  %5089 = vmatprep.subr.bf16.mxu0 %v4444
  %5090 = vmatpush1.bf16.msra.mxu0 %v4443
  %5091 = vmatprep.subr.bf16.mxu0 %v4460
  %5092 = vmatpush1.bf16.msra.mxu0 %v4459
  %5093 = vmatprep.subr.bf16.mxu0 %v4476
  %5094 = vmatpush1.bf16.msra.mxu0 %v4475
  %5095 = vmatprep.subr.bf16.mxu0 %v4492
  %5096 = vmatpush1.bf16.msra.mxu0 %v4491
  %5097 = vmatprep.subr.bf16.mxu0 %v4508
  %5098 = vmatpush1.bf16.msra.mxu0 %v4507
  %5099 = vmatprep.subr.bf16.mxu0 %v4524
  %5100 = vmatpush1.bf16.msra.mxu0 %v4523
  %5101 = vmatprep.subr.bf16.mxu0 %v4540
  %5102 = vmatpush1.bf16.msra.mxu0 %v4539
  %5103 = vmatprep.subr.bf16.mxu0 %v4556
  %5104 = vmatpush1.bf16.msra.mxu0 %v4555
  %5105 = vmatprep.mubr.bf16.mxu0 %v3194
  %5106 = vmatmul.mubr.bf16.gmra.mrb[0].mxu0 %v3193
  %v5107 = vpop.f32.mrb[0].mxu0
  %v5108 = vadd.f32 %v3506, %v5107
  %v5109 = vpop.f32.mrb[0].mxu0
  %v5110 = vadd.f32 %v3510, %v5109
  %v5111 = vpop.f32.mrb[0].mxu0
  %v5112 = vadd.f32 %v3506, %v5111
  %v5113 = vpop.f32.mrb[0].mxu0
  %v5114 = vadd.f32 %v3510, %v5113
  %5115 = vdwg.mxu0
  %5116 = vmatprep.subr.bf16.mxu0 %v4318
  %5117 = vmatpush1.bf16.msra.mxu0 %v4317
  %5118 = vmatprep.subr.bf16.mxu0 %v4334
  %5119 = vmatpush1.bf16.msra.mxu0 %v4333
  %5120 = vmatprep.subr.bf16.mxu0 %v4350
  %5121 = vmatpush1.bf16.msra.mxu0 %v4349
  %5122 = vmatprep.subr.bf16.mxu0 %v4366
  %5123 = vmatpush1.bf16.msra.mxu0 %v4365
  %5124 = vmatprep.subr.bf16.mxu0 %v4382
  %5125 = vmatpush1.bf16.msra.mxu0 %v4381
  %5126 = vmatprep.subr.bf16.mxu0 %v4398
  %5127 = vmatpush1.bf16.msra.mxu0 %v4397
  %5128 = vmatprep.subr.bf16.mxu0 %v4414
  %5129 = vmatpush1.bf16.msra.mxu0 %v4413
  %5130 = vmatprep.subr.bf16.mxu0 %v4430
  %5131 = vmatpush1.bf16.msra.mxu0 %v4429
  %5132 = vmatprep.subr.bf16.mxu0 %v4446
  %5133 = vmatpush1.bf16.msra.mxu0 %v4445
  %5134 = vmatprep.subr.bf16.mxu0 %v4462
  %5135 = vmatpush1.bf16.msra.mxu0 %v4461
  %5136 = vmatprep.subr.bf16.mxu0 %v4478
  %5137 = vmatpush1.bf16.msra.mxu0 %v4477
  %5138 = vmatprep.subr.bf16.mxu0 %v4494
  %5139 = vmatpush1.bf16.msra.mxu0 %v4493
  %5140 = vmatprep.subr.bf16.mxu0 %v4510
  %5141 = vmatpush1.bf16.msra.mxu0 %v4509
  %5142 = vmatprep.subr.bf16.mxu0 %v4526
  %5143 = vmatpush1.bf16.msra.mxu0 %v4525
  %5144 = vmatprep.subr.bf16.mxu0 %v4542
  %5145 = vmatpush1.bf16.msra.mxu0 %v4541
  %5146 = vmatprep.subr.bf16.mxu0 %v4558
  %5147 = vmatpush1.bf16.msra.mxu0 %v4557
  %5148 = vmatprep.mubr.bf16.mxu0 %v3194
  %5149 = vmatmul.mubr.bf16.gmra.mrb[0].mxu0 %v3193
  %v5150 = vpop.f32.mrb[0].mxu0
  %v5151 = vadd.f32 %v3514, %v5150
  %v5152 = vpop.f32.mrb[0].mxu0
  %v5153 = vadd.f32 %v3518, %v5152
  %v5154 = vpop.f32.mrb[0].mxu0
  %v5155 = vadd.f32 %v3514, %v5154
  %v5156 = vpop.f32.mrb[0].mxu0
  %v5157 = vadd.f32 %v3518, %v5156
  %5158 = vdwg.mxu0
  %v5159 = vmax.f32 %v4850, 0.0
  %v5160 = vmax.f32 %v4852, 0.0
  %v5161 = vmax.f32 %v4893, 0.0
  %v5162 = vmax.f32 %v4895, 0.0
  %v5163 = vmax.f32 %v4936, 0.0
  %v5164 = vmax.f32 %v4938, 0.0
  %v5165 = vmax.f32 %v4979, 0.0
  %v5166 = vmax.f32 %v4981, 0.0
  %v5167 = vmax.f32 %v5022, 0.0
  %v5168 = vmax.f32 %v5024, 0.0
  %v5169 = vmax.f32 %v5065, 0.0
  %v5170 = vmax.f32 %v5067, 0.0
  %v5171 = vmax.f32 %v5108, 0.0
  %v5172 = vmax.f32 %v5110, 0.0
  %v5173 = vmax.f32 %v5151, 0.0
  %v5174 = vmax.f32 %v5153, 0.0
  %v5175 = vmax.f32 %v4854, 0.0
  %v5176 = vmax.f32 %v4856, 0.0
  %v5177 = vmax.f32 %v4897, 0.0
  %v5178 = vmax.f32 %v4899, 0.0
  %v5179 = vmax.f32 %v4940, 0.0
  %v5180 = vmax.f32 %v4942, 0.0
  %v5181 = vmax.f32 %v4983, 0.0
  %v5182 = vmax.f32 %v4985, 0.0
  %v5183 = vmax.f32 %v5026, 0.0
  %v5184 = vmax.f32 %v5028, 0.0
  %v5185 = vmax.f32 %v5069, 0.0
  %v5186 = vmax.f32 %v5071, 0.0
  %v5187 = vmax.f32 %v5112, 0.0
  %v5188 = vmax.f32 %v5114, 0.0
  %v5189 = vmax.f32 %v5155, 0.0
  %v5190 = vmax.f32 %v5157, 0.0
  %v5191 = vpack.c.bf16 %v5175, %v5159
  %v5192 = vpack.c.bf16 %v5176, %v5160
  %v5193 = vpack.c.bf16 %v5177, %v5161
  %v5194 = vpack.c.bf16 %v5178, %v5162
  %v5195 = vpack.c.bf16 %v5179, %v5163
  %v5196 = vpack.c.bf16 %v5180, %v5164
  %v5197 = vpack.c.bf16 %v5181, %v5165
  %v5198 = vpack.c.bf16 %v5182, %v5166
  %v5199 = vpack.c.bf16 %v5183, %v5167
  %v5200 = vpack.c.bf16 %v5184, %v5168
  %v5201 = vpack.c.bf16 %v5185, %v5169
  %v5202 = vpack.c.bf16 %v5186, %v5170
  %v5203 = vpack.c.bf16 %v5187, %v5171
  %v5204 = vpack.c.bf16 %v5188, %v5172
  %v5205 = vpack.c.bf16 %v5189, %v5173
  %v5206 = vpack.c.bf16 %v5190, %v5174
  %5207 = vst [vmem:[#allocation3] sm:$0x1] 0
  %5208 = vst [vmem:[#allocation3 + $0x8] sm:$0x1] 0
  %5209 = vst [vmem:[#allocation3 + $0x10] sm:$0x1] 0
  %5210 = vst [vmem:[#allocation3 + $0x18] sm:$0x1] 0
  %5211 = vst [vmem:[#allocation3 + $0x20] sm:$0x1] %v5191
  %5212 = vst [vmem:[#allocation3 + $0x28] sm:$0x1] %v5192
  %5213 = vst [vmem:[#allocation3 + $0x30] sm:$0x1] 0
  %5214 = vst [vmem:[#allocation3 + $0x38] sm:$0x1] %v5195
  %5215 = vst [vmem:[#allocation3 + $0x40] sm:$0x1] %v5196
  %v5223 = vrot.slane 0, 7
  %v5224 = vrot.slane %v5191, 7
  %v5225 = vrot.slane %v5192, 7
  %v5226 = vrot.slane %v5193, 7
  %v5227 = vrot.slane %v5195, 7
  %v5228 = vrot.slane %v5196, 7
  %v5229 = vrot.slane %v5197, 7
  %5237 = vst [vmem:[#allocation3] sm:$0x2] %v5223
  %5238 = vst [vmem:[#allocation3 + $0x8] sm:$0x2] %v5223
  %5239 = vst [vmem:[#allocation3 + $0x10] sm:$0x2] %v5223
  %5240 = vst [vmem:[#allocation3 + $0x18] sm:$0x2] %v5224
  %5241 = vst [vmem:[#allocation3 + $0x20] sm:$0x2] %v5225
  %5242 = vst [vmem:[#allocation3 + $0x28] sm:$0x2] %v5226
  %5243 = vst [vmem:[#allocation3 + $0x30] sm:$0x2] %v5227
  %5244 = vst [vmem:[#allocation3 + $0x38] sm:$0x2] %v5228
  %5245 = vst [vmem:[#allocation3 + $0x40] sm:$0x2] %v5229
  %v5248 = vrot.slane 0, 6
  %v5249 = vrot.slane %v5192, 6
  %v5250 = vrot.slane %v5193, 6
  %v5251 = vrot.slane %v5194, 6
  %v5252 = vrot.slane %v5196, 6
  %v5253 = vrot.slane %v5197, 6
  %v5254 = vrot.slane %v5198, 6
  %5262 = vst [vmem:[#allocation3] sm:$0x4] %v5248
  %5263 = vst [vmem:[#allocation3 + $0x8] sm:$0x4] %v5248
  %5264 = vst [vmem:[#allocation3 + $0x10] sm:$0x4] %v5248
  %5265 = vst [vmem:[#allocation3 + $0x18] sm:$0x4] %v5249
  %5266 = vst [vmem:[#allocation3 + $0x20] sm:$0x4] %v5250
  %5267 = vst [vmem:[#allocation3 + $0x28] sm:$0x4] %v5251
  %5268 = vst [vmem:[#allocation3 + $0x30] sm:$0x4] %v5252
  %5269 = vst [vmem:[#allocation3 + $0x38] sm:$0x4] %v5253
  %5270 = vst [vmem:[#allocation3 + $0x40] sm:$0x4] %v5254
  %v5271 = vrot.slane 0, 5
  %v5272 = vrot.slane %v5193, 5
  %v5273 = vrot.slane %v5194, 5
  %v5274 = vrot.slane %v5197, 5
  %v5275 = vrot.slane %v5198, 5
  %5281 = vst [vmem:[#allocation3] sm:$0x8] %v5271
  %5282 = vst [vmem:[#allocation3 + $0x8] sm:$0x8] %v5271
  %5283 = vst [vmem:[#allocation3 + $0x10] sm:$0x8] %v5271
  %5284 = vst [vmem:[#allocation3 + $0x18] sm:$0x8] %v5272
  %5285 = vst [vmem:[#allocation3 + $0x20] sm:$0x8] %v5273
  %5286 = vst [vmem:[#allocation3 + $0x28] sm:$0x8] %v5271
  %5287 = vst [vmem:[#allocation3 + $0x30] sm:$0x8] %v5274
  %5288 = vst [vmem:[#allocation3 + $0x38] sm:$0x8] %v5275
  %5289 = vst [vmem:[#allocation3 + $0x40] sm:$0x8] %v5271
  %v5292 = vrot.slane 0, 4
  %v5293 = vrot.slane %v5191, 4
  %v5294 = vrot.slane %v5192, 4
  %v5295 = vrot.slane %v5195, 4
  %v5296 = vrot.slane %v5196, 4
  %v5297 = vrot.slane %v5199, 4
  %v5298 = vrot.slane %v5200, 4
  %5306 = vst [vmem:[#allocation3] sm:$0x10] %v5292
  %5307 = vst [vmem:[#allocation3 + $0x8] sm:$0x10] %v5293
  %5308 = vst [vmem:[#allocation3 + $0x10] sm:$0x10] %v5294
  %5309 = vst [vmem:[#allocation3 + $0x18] sm:$0x10] %v5292
  %5310 = vst [vmem:[#allocation3 + $0x20] sm:$0x10] %v5295
  %5311 = vst [vmem:[#allocation3 + $0x28] sm:$0x10] %v5296
  %5312 = vst [vmem:[#allocation3 + $0x30] sm:$0x10] %v5292
  %5313 = vst [vmem:[#allocation3 + $0x38] sm:$0x10] %v5297
  %5314 = vst [vmem:[#allocation3 + $0x40] sm:$0x10] %v5298
  %v5316 = vrot.slane %v5191, 3
  %v5317 = vrot.slane %v5192, 3
  %v5318 = vrot.slane %v5193, 3
  %v5319 = vrot.slane %v5195, 3
  %v5320 = vrot.slane %v5196, 3
  %v5321 = vrot.slane %v5197, 3
  %v5322 = vrot.slane %v5199, 3
  %v5323 = vrot.slane %v5200, 3
  %v5324 = vrot.slane %v5201, 3
  %5334 = vst [vmem:[#allocation3] sm:$0x20] %v5316
  %5335 = vst [vmem:[#allocation3 + $0x8] sm:$0x20] %v5317
  %5336 = vst [vmem:[#allocation3 + $0x10] sm:$0x20] %v5318
  %5337 = vst [vmem:[#allocation3 + $0x18] sm:$0x20] %v5319
  %5338 = vst [vmem:[#allocation3 + $0x20] sm:$0x20] %v5320
  %5339 = vst [vmem:[#allocation3 + $0x28] sm:$0x20] %v5321
  %5340 = vst [vmem:[#allocation3 + $0x30] sm:$0x20] %v5322
  %5341 = vst [vmem:[#allocation3 + $0x38] sm:$0x20] %v5323
  %5342 = vst [vmem:[#allocation3 + $0x40] sm:$0x20] %v5324
  %v5344 = vrot.slane %v5192, 2
  %v5345 = vrot.slane %v5193, 2
  %v5346 = vrot.slane %v5194, 2
  %v5347 = vrot.slane %v5196, 2
  %v5348 = vrot.slane %v5197, 2
  %v5349 = vrot.slane %v5198, 2
  %v5350 = vrot.slane %v5200, 2
  %v5351 = vrot.slane %v5201, 2
  %v5352 = vrot.slane %v5202, 2
  %5362 = vst [vmem:[#allocation3] sm:$0x40] %v5344
  %5363 = vst [vmem:[#allocation3 + $0x8] sm:$0x40] %v5345
  %5364 = vst [vmem:[#allocation3 + $0x10] sm:$0x40] %v5346
  %5365 = vst [vmem:[#allocation3 + $0x18] sm:$0x40] %v5347
  %5366 = vst [vmem:[#allocation3 + $0x20] sm:$0x40] %v5348
  %5367 = vst [vmem:[#allocation3 + $0x28] sm:$0x40] %v5349
  %5368 = vst [vmem:[#allocation3 + $0x30] sm:$0x40] %v5350
  %5369 = vst [vmem:[#allocation3 + $0x38] sm:$0x40] %v5351
  %5370 = vst [vmem:[#allocation3 + $0x40] sm:$0x40] %v5352
  %v5371 = vrot.slane %v5193, 1
  %v5372 = vrot.slane %v5194, 1
  %v5373 = vrot.slane 0, 1
  %v5374 = vrot.slane %v5197, 1
  %v5375 = vrot.slane %v5198, 1
  %v5376 = vrot.slane %v5201, 1
  %v5377 = vrot.slane %v5202, 1
  %5385 = vst [vmem:[#allocation3] sm:$0x80] %v5371
  %5386 = vst [vmem:[#allocation3 + $0x8] sm:$0x80] %v5372
  %5387 = vst [vmem:[#allocation3 + $0x10] sm:$0x80] %v5373
  %5388 = vst [vmem:[#allocation3 + $0x18] sm:$0x80] %v5374
  %5389 = vst [vmem:[#allocation3 + $0x20] sm:$0x80] %v5375
  %5390 = vst [vmem:[#allocation3 + $0x28] sm:$0x80] %v5373
  %5391 = vst [vmem:[#allocation3 + $0x30] sm:$0x80] %v5376
  %5392 = vst [vmem:[#allocation3 + $0x38] sm:$0x80] %v5377
  %5393 = vst [vmem:[#allocation3 + $0x40] sm:$0x80] %v5373
  %5394 = vst [vmem:[#allocation3 + $0x48] sm:$0x1] 0
  %5395 = vst [vmem:[#allocation3 + $0x50] sm:$0x1] %v5195
  %5396 = vst [vmem:[#allocation3 + $0x58] sm:$0x1] %v5196
  %5397 = vst [vmem:[#allocation3 + $0x60] sm:$0x1] 0
  %5398 = vst [vmem:[#allocation3 + $0x68] sm:$0x1] %v5199
  %5399 = vst [vmem:[#allocation3 + $0x70] sm:$0x1] %v5200
  %5400 = vst [vmem:[#allocation3 + $0x78] sm:$0x1] 0
  %5401 = vst [vmem:[#allocation3 + $0x80] sm:$0x1] %v5203
  %5402 = vst [vmem:[#allocation3 + $0x88] sm:$0x1] %v5204
  %v5406 = vrot.slane %v5199, 7
  %v5407 = vrot.slane %v5200, 7
  %v5408 = vrot.slane %v5201, 7
  %v5409 = vrot.slane %v5203, 7
  %v5410 = vrot.slane %v5204, 7
  %v5411 = vrot.slane %v5205, 7
  %5418 = vst [vmem:[#allocation3 + $0x48] sm:$0x2] %v5227
  %5419 = vst [vmem:[#allocation3 + $0x50] sm:$0x2] %v5228
  %5420 = vst [vmem:[#allocation3 + $0x58] sm:$0x2] %v5229
  %5421 = vst [vmem:[#allocation3 + $0x60] sm:$0x2] %v5406
  %5422 = vst [vmem:[#allocation3 + $0x68] sm:$0x2] %v5407
  %5423 = vst [vmem:[#allocation3 + $0x70] sm:$0x2] %v5408
  %5424 = vst [vmem:[#allocation3 + $0x78] sm:$0x2] %v5409
  %5425 = vst [vmem:[#allocation3 + $0x80] sm:$0x2] %v5410
  %5426 = vst [vmem:[#allocation3 + $0x88] sm:$0x2] %v5411
  %v5428 = vrot.slane %v5200, 6
  %v5429 = vrot.slane %v5201, 6
  %v5430 = vrot.slane %v5202, 6
  %v5431 = vrot.slane %v5204, 6
  %v5432 = vrot.slane %v5205, 6
  %v5433 = vrot.slane %v5206, 6
  %5440 = vst [vmem:[#allocation3 + $0x48] sm:$0x4] %v5252
  %5441 = vst [vmem:[#allocation3 + $0x50] sm:$0x4] %v5253
  %5442 = vst [vmem:[#allocation3 + $0x58] sm:$0x4] %v5254
  %5443 = vst [vmem:[#allocation3 + $0x60] sm:$0x4] %v5428
  %5444 = vst [vmem:[#allocation3 + $0x68] sm:$0x4] %v5429
  %5445 = vst [vmem:[#allocation3 + $0x70] sm:$0x4] %v5430
  %5446 = vst [vmem:[#allocation3 + $0x78] sm:$0x4] %v5431
  %5447 = vst [vmem:[#allocation3 + $0x80] sm:$0x4] %v5432
  %5448 = vst [vmem:[#allocation3 + $0x88] sm:$0x4] %v5433
  %v5449 = vrot.slane %v5201, 5
  %v5450 = vrot.slane %v5202, 5
  %v5451 = vrot.slane %v5205, 5
  %v5452 = vrot.slane %v5206, 5
  %5457 = vst [vmem:[#allocation3 + $0x48] sm:$0x8] %v5274
  %5458 = vst [vmem:[#allocation3 + $0x50] sm:$0x8] %v5275
  %5459 = vst [vmem:[#allocation3 + $0x58] sm:$0x8] %v5271
  %5460 = vst [vmem:[#allocation3 + $0x60] sm:$0x8] %v5449
  %5461 = vst [vmem:[#allocation3 + $0x68] sm:$0x8] %v5450
  %5462 = vst [vmem:[#allocation3 + $0x70] sm:$0x8] %v5271
  %5463 = vst [vmem:[#allocation3 + $0x78] sm:$0x8] %v5451
  %5464 = vst [vmem:[#allocation3 + $0x80] sm:$0x8] %v5452
  %5465 = vst [vmem:[#allocation3 + $0x88] sm:$0x8] %v5271
  %v5466 = vrot.slane %v5203, 4
  %v5467 = vrot.slane %v5204, 4
  %5470 = vst [vmem:[#allocation3 + $0x48] sm:$0x10] %v5292
  %5471 = vst [vmem:[#allocation3 + $0x50] sm:$0x10] %v5297
  %5472 = vst [vmem:[#allocation3 + $0x58] sm:$0x10] %v5298
  %5473 = vst [vmem:[#allocation3 + $0x60] sm:$0x10] %v5292
  %5474 = vst [vmem:[#allocation3 + $0x68] sm:$0x10] %v5466
  %5475 = vst [vmem:[#allocation3 + $0x70] sm:$0x10] %v5467
  %5476 = vst [vmem:[#allocation3 + $0x78] sm:$0x10] %v5292
  %5477 = vst [vmem:[#allocation3 + $0x80] sm:$0x10] %v5292
  %5478 = vst [vmem:[#allocation3 + $0x88] sm:$0x10] %v5292
  %v5479 = vrot.slane %v5203, 3
  %v5480 = vrot.slane %v5204, 3
  %v5481 = vrot.slane %v5205, 3
  %v5482 = vrot.slane 0, 3
  %5487 = vst [vmem:[#allocation3 + $0x48] sm:$0x20] %v5322
  %5488 = vst [vmem:[#allocation3 + $0x50] sm:$0x20] %v5323
  %5489 = vst [vmem:[#allocation3 + $0x58] sm:$0x20] %v5324
  %5490 = vst [vmem:[#allocation3 + $0x60] sm:$0x20] %v5479
  %5491 = vst [vmem:[#allocation3 + $0x68] sm:$0x20] %v5480
  %5492 = vst [vmem:[#allocation3 + $0x70] sm:$0x20] %v5481
  %5493 = vst [vmem:[#allocation3 + $0x78] sm:$0x20] %v5482
  %5494 = vst [vmem:[#allocation3 + $0x80] sm:$0x20] %v5482
  %5495 = vst [vmem:[#allocation3 + $0x88] sm:$0x20] %v5482
  %v5496 = vrot.slane %v5204, 2
  %v5497 = vrot.slane %v5205, 2
  %v5498 = vrot.slane %v5206, 2
  %v5499 = vrot.slane 0, 2
  %5504 = vst [vmem:[#allocation3 + $0x48] sm:$0x40] %v5350
  %5505 = vst [vmem:[#allocation3 + $0x50] sm:$0x40] %v5351
  %5506 = vst [vmem:[#allocation3 + $0x58] sm:$0x40] %v5352
  %5507 = vst [vmem:[#allocation3 + $0x60] sm:$0x40] %v5496
  %5508 = vst [vmem:[#allocation3 + $0x68] sm:$0x40] %v5497
  %5509 = vst [vmem:[#allocation3 + $0x70] sm:$0x40] %v5498
  %5510 = vst [vmem:[#allocation3 + $0x78] sm:$0x40] %v5499
  %5511 = vst [vmem:[#allocation3 + $0x80] sm:$0x40] %v5499
  %5512 = vst [vmem:[#allocation3 + $0x88] sm:$0x40] %v5499
  %v5513 = vrot.slane %v5205, 1
  %v5514 = vrot.slane %v5206, 1
  %5517 = vst [vmem:[#allocation3 + $0x48] sm:$0x80] %v5376
  %5518 = vst [vmem:[#allocation3 + $0x50] sm:$0x80] %v5377
  %5519 = vst [vmem:[#allocation3 + $0x58] sm:$0x80] %v5373
  %5520 = vst [vmem:[#allocation3 + $0x60] sm:$0x80] %v5513
  %5521 = vst [vmem:[#allocation3 + $0x68] sm:$0x80] %v5514
  %5522 = vst [vmem:[#allocation3 + $0x70] sm:$0x80] %v5373
  %5523 = vst [vmem:[#allocation3 + $0x78] sm:$0x80] %v5373
  %5524 = vst [vmem:[#allocation3 + $0x80] sm:$0x80] %v5373
  %5525 = vst [vmem:[#allocation3 + $0x88] sm:$0x80] %v5373
  %v5526 = vld [vmem:[#allocation3] sm:$0xff]
  %v5527 = vld [vmem:[#allocation3 + $0x8] sm:$0xff]
  %v5528 = vld [vmem:[#allocation3 + $0x10] sm:$0xff]
  %v5529 = vld [vmem:[#allocation3 + $0x18] sm:$0xff]
  %v5530 = vld [vmem:[#allocation3 + $0x20] sm:$0xff]
  %v5531 = vld [vmem:[#allocation3 + $0x28] sm:$0xff]
  %v5532 = vld [vmem:[#allocation3 + $0x30] sm:$0xff]
  %v5533 = vld [vmem:[#allocation3 + $0x38] sm:$0xff]
  %v5534 = vld [vmem:[#allocation3 + $0x40] sm:$0xff]
  %v5535 = vld [vmem:[#allocation3 + $0x48] sm:$0xff]
  %v5536 = vld [vmem:[#allocation3 + $0x50] sm:$0xff]
  %v5537 = vld [vmem:[#allocation3 + $0x58] sm:$0xff]
  %v5538 = vld [vmem:[#allocation3 + $0x60] sm:$0xff]
  %v5539 = vld [vmem:[#allocation3 + $0x68] sm:$0xff]
  %v5540 = vld [vmem:[#allocation3 + $0x70] sm:$0xff]
  %v5541 = vld [vmem:[#allocation3 + $0x78] sm:$0xff]
  %v5542 = vld [vmem:[#allocation3 + $0x80] sm:$0xff]
  %v5543 = vld [vmem:[#allocation3 + $0x88] sm:$0xff]
  %v5544 = vld [vmem:[%s14] sm:$0xff]
  %v5545 = vld [vmem:[%s14 + $0x8] sm:$0xff]
  %v5546 = vld [vmem:[%s14 + $0x10] sm:$0xff]
  %v5547 = vld [vmem:[%s14 + $0x18] sm:$0xff]
  %v5548 = vld [vmem:[%s14 + $0x20] sm:$0xff]
  %v5549 = vld [vmem:[%s14 + $0x28] sm:$0xff]
  %v5550 = vld [vmem:[%s14 + $0x30] sm:$0xff]
  %v5551 = vld [vmem:[%s14 + $0x38] sm:$0xff]
  %v5552 = vld [vmem:[%s14 + $0x40] sm:$0xff]
  %v5553 = vld [vmem:[%s14 + $0x48] sm:$0xff]
  %v5554 = vld [vmem:[%s14 + $0x50] sm:$0xff]
  %v5555 = vld [vmem:[%s14 + $0x58] sm:$0xff]
  %v5556 = vld [vmem:[%s14 + $0x60] sm:$0xff]
  %v5557 = vld [vmem:[%s14 + $0x68] sm:$0xff]
  %v5558 = vld [vmem:[%s14 + $0x70] sm:$0xff]
  %v5559 = vld [vmem:[%s14 + $0x78] sm:$0xff]
  %v5560 = vld [vmem:[%s14 + $0x80] sm:$0xff]
  %v5561 = vld [vmem:[%s14 + $0x88] sm:$0xff]
  %v5562 = vld [vmem:[%s14 + $0x90] sm:$0xff]
  %v5563 = vld [vmem:[%s14 + $0x98] sm:$0xff]
  %v5564 = vld [vmem:[%s14 + $0xa0] sm:$0xff]
  %v5565 = vld [vmem:[%s14 + $0xa8] sm:$0xff]
  %v5566 = vld [vmem:[%s14 + $0xb0] sm:$0xff]
  %v5567 = vld [vmem:[%s14 + $0xb8] sm:$0xff]
  %v5568 = vld [vmem:[%s14 + $0xc0] sm:$0xff]
  %v5569 = vld [vmem:[%s14 + $0xc8] sm:$0xff]
  %v5570 = vld [vmem:[%s14 + $0xd0] sm:$0xff]
  %v5571 = vld [vmem:[%s14 + $0xd8] sm:$0xff]
  %v5572 = vld [vmem:[%s14 + $0xe0] sm:$0xff]
  %v5573 = vld [vmem:[%s14 + $0xe8] sm:$0xff]
  %v5574 = vld [vmem:[%s14 + $0xf0] sm:$0xff]
  %v5575 = vld [vmem:[%s14 + $0xf8] sm:$0xff]
  %v5576 = vld [vmem:[%s14 + $0x100] sm:$0xff]
  %v5577 = vld [vmem:[%s14 + $0x108] sm:$0xff]
  %v5578 = vld [vmem:[%s14 + $0x110] sm:$0xff]
  %v5579 = vld [vmem:[%s14 + $0x118] sm:$0xff]
  %v5580 = vld [vmem:[%s14 + $0x120] sm:$0xff]
  %v5581 = vld [vmem:[%s14 + $0x128] sm:$0xff]
  %v5582 = vld [vmem:[%s14 + $0x130] sm:$0xff]
  %v5583 = vld [vmem:[%s14 + $0x138] sm:$0xff]
  %v5584 = vld [vmem:[%s14 + $0x140] sm:$0xff]
  %v5585 = vld [vmem:[%s14 + $0x148] sm:$0xff]
  %v5586 = vld [vmem:[%s14 + $0x150] sm:$0xff]
  %v5587 = vld [vmem:[%s14 + $0x158] sm:$0xff]
  %v5588 = vld [vmem:[%s14 + $0x160] sm:$0xff]
  %v5589 = vld [vmem:[%s14 + $0x168] sm:$0xff]
  %v5590 = vld [vmem:[%s14 + $0x170] sm:$0xff]
  %v5591 = vld [vmem:[%s14 + $0x178] sm:$0xff]
  %v5592 = vld [vmem:[%s14 + $0x180] sm:$0xff]
  %v5593 = vld [vmem:[%s14 + $0x188] sm:$0xff]
  %v5594 = vld [vmem:[%s14 + $0x190] sm:$0xff]
  %v5595 = vld [vmem:[%s14 + $0x198] sm:$0xff]
  %v5596 = vld [vmem:[%s14 + $0x1a0] sm:$0xff]
  %v5597 = vld [vmem:[%s14 + $0x1a8] sm:$0xff]
  %v5598 = vld [vmem:[%s14 + $0x1b0] sm:$0xff]
  %v5599 = vld [vmem:[%s14 + $0x1b8] sm:$0xff]
  %v5600 = vld [vmem:[%s14 + $0x1c0] sm:$0xff]
  %v5601 = vld [vmem:[%s14 + $0x1c8] sm:$0xff]
  %v5602 = vld [vmem:[%s14 + $0x1d0] sm:$0xff]
  %v5603 = vld [vmem:[%s14 + $0x1d8] sm:$0xff]
  %v5604 = vld [vmem:[%s14 + $0x1e0] sm:$0xff]
  %v5605 = vld [vmem:[%s14 + $0x1e8] sm:$0xff]
  %v5606 = vld [vmem:[%s14 + $0x1f0] sm:$0xff]
  %v5607 = vld [vmem:[%s14 + $0x1f8] sm:$0xff]
  %v5608 = vld [vmem:[%s14 + $0x200] sm:$0xff]
  %v5609 = vld [vmem:[%s14 + $0x208] sm:$0xff]
  %v5610 = vld [vmem:[%s14 + $0x210] sm:$0xff]
  %v5611 = vld [vmem:[%s14 + $0x218] sm:$0xff]
  %v5612 = vld [vmem:[%s14 + $0x220] sm:$0xff]
  %v5613 = vld [vmem:[%s14 + $0x228] sm:$0xff]
  %v5614 = vld [vmem:[%s14 + $0x230] sm:$0xff]
  %v5615 = vld [vmem:[%s14 + $0x238] sm:$0xff]
  %v5616 = vld [vmem:[%s14 + $0x240] sm:$0xff]
  %v5617 = vld [vmem:[%s14 + $0x248] sm:$0xff]
  %v5618 = vld [vmem:[%s14 + $0x250] sm:$0xff]
  %v5619 = vld [vmem:[%s14 + $0x258] sm:$0xff]
  %v5620 = vld [vmem:[%s14 + $0x260] sm:$0xff]
  %v5621 = vld [vmem:[%s14 + $0x268] sm:$0xff]
  %v5622 = vld [vmem:[%s14 + $0x270] sm:$0xff]
  %v5623 = vld [vmem:[%s14 + $0x278] sm:$0xff]
  %v5624 = vld [vmem:[%s14 + $0x280] sm:$0xff]
  %v5625 = vld [vmem:[%s14 + $0x288] sm:$0xff]
  %v5626 = vld [vmem:[%s14 + $0x290] sm:$0xff]
  %v5627 = vld [vmem:[%s14 + $0x298] sm:$0xff]
  %v5628 = vld [vmem:[%s14 + $0x2a0] sm:$0xff]
  %v5629 = vld [vmem:[%s14 + $0x2a8] sm:$0xff]
  %v5630 = vld [vmem:[%s14 + $0x2b0] sm:$0xff]
  %v5631 = vld [vmem:[%s14 + $0x2b8] sm:$0xff]
  %v5632 = vld [vmem:[%s14 + $0x2c0] sm:$0xff]
  %v5633 = vld [vmem:[%s14 + $0x2c8] sm:$0xff]
  %v5634 = vld [vmem:[%s14 + $0x2d0] sm:$0xff]
  %v5635 = vld [vmem:[%s14 + $0x2d8] sm:$0xff]
  %v5636 = vld [vmem:[%s14 + $0x2e0] sm:$0xff]
  %v5637 = vld [vmem:[%s14 + $0x2e8] sm:$0xff]
  %v5638 = vld [vmem:[%s14 + $0x2f0] sm:$0xff]
  %v5639 = vld [vmem:[%s14 + $0x2f8] sm:$0xff]
  %v5640 = vld [vmem:[%s14 + $0x300] sm:$0xff]
  %v5641 = vld [vmem:[%s14 + $0x308] sm:$0xff]
  %v5642 = vld [vmem:[%s14 + $0x310] sm:$0xff]
  %v5643 = vld [vmem:[%s14 + $0x318] sm:$0xff]
  %v5644 = vld [vmem:[%s14 + $0x320] sm:$0xff]
  %v5645 = vld [vmem:[%s14 + $0x328] sm:$0xff]
  %v5646 = vld [vmem:[%s14 + $0x330] sm:$0xff]
  %v5647 = vld [vmem:[%s14 + $0x338] sm:$0xff]
  %v5648 = vld [vmem:[%s14 + $0x340] sm:$0xff]
  %v5649 = vld [vmem:[%s14 + $0x348] sm:$0xff]
  %v5650 = vld [vmem:[%s14 + $0x350] sm:$0xff]
  %v5651 = vld [vmem:[%s14 + $0x358] sm:$0xff]
  %v5652 = vld [vmem:[%s14 + $0x360] sm:$0xff]
  %v5653 = vld [vmem:[%s14 + $0x368] sm:$0xff]
  %v5654 = vld [vmem:[%s14 + $0x370] sm:$0xff]
  %v5655 = vld [vmem:[%s14 + $0x378] sm:$0xff]
  %v5656 = vld [vmem:[%s14 + $0x380] sm:$0xff]
  %v5657 = vld [vmem:[%s14 + $0x388] sm:$0xff]
  %v5658 = vld [vmem:[%s14 + $0x390] sm:$0xff]
  %v5659 = vld [vmem:[%s14 + $0x398] sm:$0xff]
  %v5660 = vld [vmem:[%s14 + $0x3a0] sm:$0xff]
  %v5661 = vld [vmem:[%s14 + $0x3a8] sm:$0xff]
  %v5662 = vld [vmem:[%s14 + $0x3b0] sm:$0xff]
  %v5663 = vld [vmem:[%s14 + $0x3b8] sm:$0xff]
  %v5664 = vld [vmem:[%s14 + $0x3c0] sm:$0xff]
  %v5665 = vld [vmem:[%s14 + $0x3c8] sm:$0xff]
  %v5666 = vld [vmem:[%s14 + $0x3d0] sm:$0xff]
  %v5667 = vld [vmem:[%s14 + $0x3d8] sm:$0xff]
  %v5668 = vld [vmem:[%s14 + $0x3e0] sm:$0xff]
  %v5669 = vld [vmem:[%s14 + $0x3e8] sm:$0xff]
  %v5670 = vld [vmem:[%s14 + $0x3f0] sm:$0xff]
  %v5671 = vld [vmem:[%s14 + $0x3f8] sm:$0xff]
  %v5672 = vld [vmem:[%s14 + $0x400] sm:$0xff]
  %v5673 = vld [vmem:[%s14 + $0x408] sm:$0xff]
  %v5674 = vld [vmem:[%s14 + $0x410] sm:$0xff]
  %v5675 = vld [vmem:[%s14 + $0x418] sm:$0xff]
  %v5676 = vld [vmem:[%s14 + $0x420] sm:$0xff]
  %v5677 = vld [vmem:[%s14 + $0x428] sm:$0xff]
  %v5678 = vld [vmem:[%s14 + $0x430] sm:$0xff]
  %v5679 = vld [vmem:[%s14 + $0x438] sm:$0xff]
  %v5680 = vld [vmem:[%s14 + $0x440] sm:$0xff]
  %v5681 = vld [vmem:[%s14 + $0x448] sm:$0xff]
  %v5682 = vld [vmem:[%s14 + $0x450] sm:$0xff]
  %v5683 = vld [vmem:[%s14 + $0x458] sm:$0xff]
  %v5684 = vld [vmem:[%s14 + $0x460] sm:$0xff]
  %v5685 = vld [vmem:[%s14 + $0x468] sm:$0xff]
  %v5686 = vld [vmem:[%s14 + $0x470] sm:$0xff]
  %v5687 = vld [vmem:[%s14 + $0x478] sm:$0xff]
  %v5688 = vld [vmem:[%s15] sm:$0x3]
  %v5690 = vlaneseq
  %v5691 = vshrl.u32 %v5690, 7
  %v5692 = vsub.s32 0, %v5691
  %v5693 = vrot.slane %v5688, %v5692
  %v5694 = vlaneseq
  %v5695 = vshrl.u32 %v5694, 7
  %v5696 = vsub.s32 1, %v5695
  %v5697 = vrot.slane %v5688, %v5696
  %v5844 = vunpack.c.l.b16 %v5544
  %v5845 = vunpack.c.h.b16 %v5544
  %v5846 = vunpack.c.l.b16 %v5545
  %v5847 = vunpack.c.h.b16 %v5545
  %v5848 = vunpack.c.l.b16 %v5546
  %v5849 = vunpack.c.h.b16 %v5546
  %v5850 = vunpack.c.l.b16 %v5547
  %v5851 = vunpack.c.h.b16 %v5547
  %v5852 = vunpack.c.l.b16 %v5548
  %v5853 = vunpack.c.h.b16 %v5548
  %v5854 = vunpack.c.l.b16 %v5549
  %v5855 = vunpack.c.h.b16 %v5549
  %v5856 = vunpack.c.l.b16 %v5550
  %v5857 = vunpack.c.h.b16 %v5550
  %v5858 = vunpack.c.l.b16 %v5551
  %v5859 = vunpack.c.h.b16 %v5551
  %v5860 = vunpack.c.l.b16 %v5552
  %v5861 = vunpack.c.h.b16 %v5552
  %v5862 = vunpack.c.l.b16 %v5553
  %v5863 = vunpack.c.h.b16 %v5553
  %v5864 = vunpack.c.l.b16 %v5554
  %v5865 = vunpack.c.h.b16 %v5554
  %v5866 = vunpack.c.l.b16 %v5555
  %v5867 = vunpack.c.h.b16 %v5555
  %v5868 = vunpack.c.l.b16 %v5556
  %v5869 = vunpack.c.h.b16 %v5556
  %v5870 = vunpack.c.l.b16 %v5557
  %v5871 = vunpack.c.h.b16 %v5557
  %v5872 = vunpack.c.l.b16 %v5558
  %v5873 = vunpack.c.h.b16 %v5558
  %v5874 = vunpack.c.l.b16 %v5559
  %v5875 = vunpack.c.h.b16 %v5559
  %v5876 = vunpack.c.l.b16 %v5560
  %v5877 = vunpack.c.h.b16 %v5560
  %v5878 = vunpack.c.l.b16 %v5561
  %v5879 = vunpack.c.h.b16 %v5561
  %v5880 = vunpack.c.l.b16 %v5562
  %v5881 = vunpack.c.h.b16 %v5562
  %v5882 = vunpack.c.l.b16 %v5563
  %v5883 = vunpack.c.h.b16 %v5563
  %v5884 = vunpack.c.l.b16 %v5564
  %v5885 = vunpack.c.h.b16 %v5564
  %v5886 = vunpack.c.l.b16 %v5565
  %v5887 = vunpack.c.h.b16 %v5565
  %v5888 = vunpack.c.l.b16 %v5566
  %v5889 = vunpack.c.h.b16 %v5566
  %v5890 = vunpack.c.l.b16 %v5567
  %v5891 = vunpack.c.h.b16 %v5567
  %v5892 = vunpack.c.l.b16 %v5568
  %v5893 = vunpack.c.h.b16 %v5568
  %v5894 = vunpack.c.l.b16 %v5569
  %v5895 = vunpack.c.h.b16 %v5569
  %v5896 = vunpack.c.l.b16 %v5570
  %v5897 = vunpack.c.h.b16 %v5570
  %v5898 = vunpack.c.l.b16 %v5571
  %v5899 = vunpack.c.h.b16 %v5571
  %v5900 = vunpack.c.l.b16 %v5572
  %v5901 = vunpack.c.h.b16 %v5572
  %v5902 = vunpack.c.l.b16 %v5573
  %v5903 = vunpack.c.h.b16 %v5573
  %v5904 = vunpack.c.l.b16 %v5574
  %v5905 = vunpack.c.h.b16 %v5574
  %v5906 = vunpack.c.l.b16 %v5575
  %v5907 = vunpack.c.h.b16 %v5575
  %v5908 = vunpack.c.l.b16 %v5576
  %v5909 = vunpack.c.h.b16 %v5576
  %v5910 = vunpack.c.l.b16 %v5577
  %v5911 = vunpack.c.h.b16 %v5577
  %v5912 = vunpack.c.l.b16 %v5578
  %v5913 = vunpack.c.h.b16 %v5578
  %v5914 = vunpack.c.l.b16 %v5579
  %v5915 = vunpack.c.h.b16 %v5579
  %v5916 = vunpack.c.l.b16 %v5580
  %v5917 = vunpack.c.h.b16 %v5580
  %v5918 = vunpack.c.l.b16 %v5581
  %v5919 = vunpack.c.h.b16 %v5581
  %v5920 = vunpack.c.l.b16 %v5582
  %v5921 = vunpack.c.h.b16 %v5582
  %v5922 = vunpack.c.l.b16 %v5583
  %v5923 = vunpack.c.h.b16 %v5583
  %v5924 = vunpack.c.l.b16 %v5584
  %v5925 = vunpack.c.h.b16 %v5584
  %v5926 = vunpack.c.l.b16 %v5585
  %v5927 = vunpack.c.h.b16 %v5585
  %v5928 = vunpack.c.l.b16 %v5586
  %v5929 = vunpack.c.h.b16 %v5586
  %v5930 = vunpack.c.l.b16 %v5587
  %v5931 = vunpack.c.h.b16 %v5587
  %v5932 = vunpack.c.l.b16 %v5588
  %v5933 = vunpack.c.h.b16 %v5588
  %v5934 = vunpack.c.l.b16 %v5589
  %v5935 = vunpack.c.h.b16 %v5589
  %v5936 = vunpack.c.l.b16 %v5590
  %v5937 = vunpack.c.h.b16 %v5590
  %v5938 = vunpack.c.l.b16 %v5591
  %v5939 = vunpack.c.h.b16 %v5591
  %v5940 = vunpack.c.l.b16 %v5592
  %v5941 = vunpack.c.h.b16 %v5592
  %v5942 = vunpack.c.l.b16 %v5593
  %v5943 = vunpack.c.h.b16 %v5593
  %v5944 = vunpack.c.l.b16 %v5594
  %v5945 = vunpack.c.h.b16 %v5594
  %v5946 = vunpack.c.l.b16 %v5595
  %v5947 = vunpack.c.h.b16 %v5595
  %v5948 = vunpack.c.l.b16 %v5596
  %v5949 = vunpack.c.h.b16 %v5596
  %v5950 = vunpack.c.l.b16 %v5597
  %v5951 = vunpack.c.h.b16 %v5597
  %v5952 = vunpack.c.l.b16 %v5598
  %v5953 = vunpack.c.h.b16 %v5598
  %v5954 = vunpack.c.l.b16 %v5599
  %v5955 = vunpack.c.h.b16 %v5599
  %v5956 = vunpack.c.l.b16 %v5600
  %v5957 = vunpack.c.h.b16 %v5600
  %v5958 = vunpack.c.l.b16 %v5601
  %v5959 = vunpack.c.h.b16 %v5601
  %v5960 = vunpack.c.l.b16 %v5602
  %v5961 = vunpack.c.h.b16 %v5602
  %v5962 = vunpack.c.l.b16 %v5603
  %v5963 = vunpack.c.h.b16 %v5603
  %v5964 = vunpack.c.l.b16 %v5604
  %v5965 = vunpack.c.h.b16 %v5604
  %v5966 = vunpack.c.l.b16 %v5605
  %v5967 = vunpack.c.h.b16 %v5605
  %v5968 = vunpack.c.l.b16 %v5606
  %v5969 = vunpack.c.h.b16 %v5606
  %v5970 = vunpack.c.l.b16 %v5607
  %v5971 = vunpack.c.h.b16 %v5607
  %v5972 = vunpack.c.l.b16 %v5608
  %v5973 = vunpack.c.h.b16 %v5608
  %v5974 = vunpack.c.l.b16 %v5609
  %v5975 = vunpack.c.h.b16 %v5609
  %v5976 = vunpack.c.l.b16 %v5610
  %v5977 = vunpack.c.h.b16 %v5610
  %v5978 = vunpack.c.l.b16 %v5611
  %v5979 = vunpack.c.h.b16 %v5611
  %v5980 = vunpack.c.l.b16 %v5612
  %v5981 = vunpack.c.h.b16 %v5612
  %v5982 = vunpack.c.l.b16 %v5613
  %v5983 = vunpack.c.h.b16 %v5613
  %v5984 = vunpack.c.l.b16 %v5614
  %v5985 = vunpack.c.h.b16 %v5614
  %v5986 = vunpack.c.l.b16 %v5615
  %v5987 = vunpack.c.h.b16 %v5615
  %v5988 = vunpack.c.l.b16 %v5616
  %v5989 = vunpack.c.h.b16 %v5616
  %v5990 = vunpack.c.l.b16 %v5617
  %v5991 = vunpack.c.h.b16 %v5617
  %v5992 = vunpack.c.l.b16 %v5618
  %v5993 = vunpack.c.h.b16 %v5618
  %v5994 = vunpack.c.l.b16 %v5619
  %v5995 = vunpack.c.h.b16 %v5619
  %v5996 = vunpack.c.l.b16 %v5620
  %v5997 = vunpack.c.h.b16 %v5620
  %v5998 = vunpack.c.l.b16 %v5621
  %v5999 = vunpack.c.h.b16 %v5621
  %v6000 = vunpack.c.l.b16 %v5622
  %v6001 = vunpack.c.h.b16 %v5622
  %v6002 = vunpack.c.l.b16 %v5623
  %v6003 = vunpack.c.h.b16 %v5623
  %v6004 = vunpack.c.l.b16 %v5624
  %v6005 = vunpack.c.h.b16 %v5624
  %v6006 = vunpack.c.l.b16 %v5625
  %v6007 = vunpack.c.h.b16 %v5625
  %v6008 = vunpack.c.l.b16 %v5626
  %v6009 = vunpack.c.h.b16 %v5626
  %v6010 = vunpack.c.l.b16 %v5627
  %v6011 = vunpack.c.h.b16 %v5627
  %v6012 = vunpack.c.l.b16 %v5628
  %v6013 = vunpack.c.h.b16 %v5628
  %v6014 = vunpack.c.l.b16 %v5629
  %v6015 = vunpack.c.h.b16 %v5629
  %v6016 = vunpack.c.l.b16 %v5630
  %v6017 = vunpack.c.h.b16 %v5630
  %v6018 = vunpack.c.l.b16 %v5631
  %v6019 = vunpack.c.h.b16 %v5631
  %v6020 = vunpack.c.l.b16 %v5632
  %v6021 = vunpack.c.h.b16 %v5632
  %v6022 = vunpack.c.l.b16 %v5633
  %v6023 = vunpack.c.h.b16 %v5633
  %v6024 = vunpack.c.l.b16 %v5634
  %v6025 = vunpack.c.h.b16 %v5634
  %v6026 = vunpack.c.l.b16 %v5635
  %v6027 = vunpack.c.h.b16 %v5635
  %v6028 = vunpack.c.l.b16 %v5636
  %v6029 = vunpack.c.h.b16 %v5636
  %v6030 = vunpack.c.l.b16 %v5637
  %v6031 = vunpack.c.h.b16 %v5637
  %v6032 = vunpack.c.l.b16 %v5638
  %v6033 = vunpack.c.h.b16 %v5638
  %v6034 = vunpack.c.l.b16 %v5639
  %v6035 = vunpack.c.h.b16 %v5639
  %v6036 = vunpack.c.l.b16 %v5640
  %v6037 = vunpack.c.h.b16 %v5640
  %v6038 = vunpack.c.l.b16 %v5641
  %v6039 = vunpack.c.h.b16 %v5641
  %v6040 = vunpack.c.l.b16 %v5642
  %v6041 = vunpack.c.h.b16 %v5642
  %v6042 = vunpack.c.l.b16 %v5643
  %v6043 = vunpack.c.h.b16 %v5643
  %v6044 = vunpack.c.l.b16 %v5644
  %v6045 = vunpack.c.h.b16 %v5644
  %v6046 = vunpack.c.l.b16 %v5645
  %v6047 = vunpack.c.h.b16 %v5645
  %v6048 = vunpack.c.l.b16 %v5646
  %v6049 = vunpack.c.h.b16 %v5646
  %v6050 = vunpack.c.l.b16 %v5647
  %v6051 = vunpack.c.h.b16 %v5647
  %v6052 = vunpack.c.l.b16 %v5648
  %v6053 = vunpack.c.h.b16 %v5648
  %v6054 = vunpack.c.l.b16 %v5649
  %v6055 = vunpack.c.h.b16 %v5649
  %v6056 = vunpack.c.l.b16 %v5650
  %v6057 = vunpack.c.h.b16 %v5650
  %v6058 = vunpack.c.l.b16 %v5651
  %v6059 = vunpack.c.h.b16 %v5651
  %v6060 = vunpack.c.l.b16 %v5652
  %v6061 = vunpack.c.h.b16 %v5652
  %v6062 = vunpack.c.l.b16 %v5653
  %v6063 = vunpack.c.h.b16 %v5653
  %v6064 = vunpack.c.l.b16 %v5654
  %v6065 = vunpack.c.h.b16 %v5654
  %v6066 = vunpack.c.l.b16 %v5655
  %v6067 = vunpack.c.h.b16 %v5655
  %v6068 = vunpack.c.l.b16 %v5656
  %v6069 = vunpack.c.h.b16 %v5656
  %v6070 = vunpack.c.l.b16 %v5657
  %v6071 = vunpack.c.h.b16 %v5657
  %v6072 = vunpack.c.l.b16 %v5658
  %v6073 = vunpack.c.h.b16 %v5658
  %v6074 = vunpack.c.l.b16 %v5659
  %v6075 = vunpack.c.h.b16 %v5659
  %v6076 = vunpack.c.l.b16 %v5660
  %v6077 = vunpack.c.h.b16 %v5660
  %v6078 = vunpack.c.l.b16 %v5661
  %v6079 = vunpack.c.h.b16 %v5661
  %v6080 = vunpack.c.l.b16 %v5662
  %v6081 = vunpack.c.h.b16 %v5662
  %v6082 = vunpack.c.l.b16 %v5663
  %v6083 = vunpack.c.h.b16 %v5663
  %v6084 = vunpack.c.l.b16 %v5664
  %v6085 = vunpack.c.h.b16 %v5664
  %v6086 = vunpack.c.l.b16 %v5665
  %v6087 = vunpack.c.h.b16 %v5665
  %v6088 = vunpack.c.l.b16 %v5666
  %v6089 = vunpack.c.h.b16 %v5666
  %v6090 = vunpack.c.l.b16 %v5667
  %v6091 = vunpack.c.h.b16 %v5667
  %v6092 = vunpack.c.l.b16 %v5668
  %v6093 = vunpack.c.h.b16 %v5668
  %v6094 = vunpack.c.l.b16 %v5669
  %v6095 = vunpack.c.h.b16 %v5669
  %v6096 = vunpack.c.l.b16 %v5670
  %v6097 = vunpack.c.h.b16 %v5670
  %v6098 = vunpack.c.l.b16 %v5671
  %v6099 = vunpack.c.h.b16 %v5671
  %v6100 = vunpack.c.l.b16 %v5672
  %v6101 = vunpack.c.h.b16 %v5672
  %v6102 = vunpack.c.l.b16 %v5673
  %v6103 = vunpack.c.h.b16 %v5673
  %v6104 = vunpack.c.l.b16 %v5674
  %v6105 = vunpack.c.h.b16 %v5674
  %v6106 = vunpack.c.l.b16 %v5675
  %v6107 = vunpack.c.h.b16 %v5675
  %v6108 = vunpack.c.l.b16 %v5676
  %v6109 = vunpack.c.h.b16 %v5676
  %v6110 = vunpack.c.l.b16 %v5677
  %v6111 = vunpack.c.h.b16 %v5677
  %v6112 = vunpack.c.l.b16 %v5678
  %v6113 = vunpack.c.h.b16 %v5678
  %v6114 = vunpack.c.l.b16 %v5679
  %v6115 = vunpack.c.h.b16 %v5679
  %v6116 = vunpack.c.l.b16 %v5680
  %v6117 = vunpack.c.h.b16 %v5680
  %v6118 = vunpack.c.l.b16 %v5681
  %v6119 = vunpack.c.h.b16 %v5681
  %v6120 = vunpack.c.l.b16 %v5682
  %v6121 = vunpack.c.h.b16 %v5682
  %v6122 = vunpack.c.l.b16 %v5683
  %v6123 = vunpack.c.h.b16 %v5683
  %v6124 = vunpack.c.l.b16 %v5684
  %v6125 = vunpack.c.h.b16 %v5684
  %v6126 = vunpack.c.l.b16 %v5685
  %v6127 = vunpack.c.h.b16 %v5685
  %v6128 = vunpack.c.l.b16 %v5686
  %v6129 = vunpack.c.h.b16 %v5686
  %v6130 = vunpack.c.l.b16 %v5687
  %v6131 = vunpack.c.h.b16 %v5687
  %v6132 = vpack.c.b16 %v5846, %v5844
  %v6133 = vpack.c.b16 %v5847, %v5845
  %v6134 = vpack.c.b16 %v5850, %v5848
  %v6135 = vpack.c.b16 %v5851, %v5849
  %v6136 = vpack.c.b16 %v5854, %v5852
  %v6137 = vpack.c.b16 %v5855, %v5853
  %v6138 = vpack.c.b16 %v5858, %v5856
  %v6139 = vpack.c.b16 %v5859, %v5857
  %v6140 = vpack.c.b16 %v5862, %v5860
  %v6141 = vpack.c.b16 %v5863, %v5861
  %v6142 = vpack.c.b16 %v5866, %v5864
  %v6143 = vpack.c.b16 %v5867, %v5865
  %v6144 = vpack.c.b16 %v5870, %v5868
  %v6145 = vpack.c.b16 %v5871, %v5869
  %v6146 = vpack.c.b16 %v5874, %v5872
  %v6147 = vpack.c.b16 %v5875, %v5873
  %v6148 = vpack.c.b16 %v5878, %v5876
  %v6149 = vpack.c.b16 %v5879, %v5877
  %v6150 = vpack.c.b16 %v5882, %v5880
  %v6151 = vpack.c.b16 %v5883, %v5881
  %v6152 = vpack.c.b16 %v5886, %v5884
  %v6153 = vpack.c.b16 %v5887, %v5885
  %v6154 = vpack.c.b16 %v5890, %v5888
  %v6155 = vpack.c.b16 %v5891, %v5889
  %v6156 = vpack.c.b16 %v5894, %v5892
  %v6157 = vpack.c.b16 %v5895, %v5893
  %v6158 = vpack.c.b16 %v5898, %v5896
  %v6159 = vpack.c.b16 %v5899, %v5897
  %v6160 = vpack.c.b16 %v5902, %v5900
  %v6161 = vpack.c.b16 %v5903, %v5901
  %v6162 = vpack.c.b16 %v5906, %v5904
  %v6163 = vpack.c.b16 %v5907, %v5905
  %v6164 = vpack.c.b16 %v5910, %v5908
  %v6165 = vpack.c.b16 %v5911, %v5909
  %v6166 = vpack.c.b16 %v5914, %v5912
  %v6167 = vpack.c.b16 %v5915, %v5913
  %v6168 = vpack.c.b16 %v5918, %v5916
  %v6169 = vpack.c.b16 %v5919, %v5917
  %v6170 = vpack.c.b16 %v5922, %v5920
  %v6171 = vpack.c.b16 %v5923, %v5921
  %v6172 = vpack.c.b16 %v5926, %v5924
  %v6173 = vpack.c.b16 %v5927, %v5925
  %v6174 = vpack.c.b16 %v5930, %v5928
  %v6175 = vpack.c.b16 %v5931, %v5929
  %v6176 = vpack.c.b16 %v5934, %v5932
  %v6177 = vpack.c.b16 %v5935, %v5933
  %v6178 = vpack.c.b16 %v5938, %v5936
  %v6179 = vpack.c.b16 %v5939, %v5937
  %v6180 = vpack.c.b16 %v5942, %v5940
  %v6181 = vpack.c.b16 %v5943, %v5941
  %v6182 = vpack.c.b16 %v5946, %v5944
  %v6183 = vpack.c.b16 %v5947, %v5945
  %v6184 = vpack.c.b16 %v5950, %v5948
  %v6185 = vpack.c.b16 %v5951, %v5949
  %v6186 = vpack.c.b16 %v5954, %v5952
  %v6187 = vpack.c.b16 %v5955, %v5953
  %v6188 = vpack.c.b16 %v5958, %v5956
  %v6189 = vpack.c.b16 %v5959, %v5957
  %v6190 = vpack.c.b16 %v5962, %v5960
  %v6191 = vpack.c.b16 %v5963, %v5961
  %v6192 = vpack.c.b16 %v5966, %v5964
  %v6193 = vpack.c.b16 %v5967, %v5965
  %v6194 = vpack.c.b16 %v5970, %v5968
  %v6195 = vpack.c.b16 %v5971, %v5969
  %v6196 = vpack.c.b16 %v5974, %v5972
  %v6197 = vpack.c.b16 %v5975, %v5973
  %v6198 = vpack.c.b16 %v5978, %v5976
  %v6199 = vpack.c.b16 %v5979, %v5977
  %v6200 = vpack.c.b16 %v5982, %v5980
  %v6201 = vpack.c.b16 %v5983, %v5981
  %v6202 = vpack.c.b16 %v5986, %v5984
  %v6203 = vpack.c.b16 %v5987, %v5985
  %v6204 = vpack.c.b16 %v5990, %v5988
  %v6205 = vpack.c.b16 %v5991, %v5989
  %v6206 = vpack.c.b16 %v5994, %v5992
  %v6207 = vpack.c.b16 %v5995, %v5993
  %v6208 = vpack.c.b16 %v5998, %v5996
  %v6209 = vpack.c.b16 %v5999, %v5997
  %v6210 = vpack.c.b16 %v6002, %v6000
  %v6211 = vpack.c.b16 %v6003, %v6001
  %v6212 = vpack.c.b16 %v6006, %v6004
  %v6213 = vpack.c.b16 %v6007, %v6005
  %v6214 = vpack.c.b16 %v6010, %v6008
  %v6215 = vpack.c.b16 %v6011, %v6009
  %v6216 = vpack.c.b16 %v6014, %v6012
  %v6217 = vpack.c.b16 %v6015, %v6013
  %v6218 = vpack.c.b16 %v6018, %v6016
  %v6219 = vpack.c.b16 %v6019, %v6017
  %v6220 = vpack.c.b16 %v6022, %v6020
  %v6221 = vpack.c.b16 %v6023, %v6021
  %v6222 = vpack.c.b16 %v6026, %v6024
  %v6223 = vpack.c.b16 %v6027, %v6025
  %v6224 = vpack.c.b16 %v6030, %v6028
  %v6225 = vpack.c.b16 %v6031, %v6029
  %v6226 = vpack.c.b16 %v6034, %v6032
  %v6227 = vpack.c.b16 %v6035, %v6033
  %v6228 = vpack.c.b16 %v6038, %v6036
  %v6229 = vpack.c.b16 %v6039, %v6037
  %v6230 = vpack.c.b16 %v6042, %v6040
  %v6231 = vpack.c.b16 %v6043, %v6041
  %v6232 = vpack.c.b16 %v6046, %v6044
  %v6233 = vpack.c.b16 %v6047, %v6045
  %v6234 = vpack.c.b16 %v6050, %v6048
  %v6235 = vpack.c.b16 %v6051, %v6049
  %v6236 = vpack.c.b16 %v6054, %v6052
  %v6237 = vpack.c.b16 %v6055, %v6053
  %v6238 = vpack.c.b16 %v6058, %v6056
  %v6239 = vpack.c.b16 %v6059, %v6057
  %v6240 = vpack.c.b16 %v6062, %v6060
  %v6241 = vpack.c.b16 %v6063, %v6061
  %v6242 = vpack.c.b16 %v6066, %v6064
  %v6243 = vpack.c.b16 %v6067, %v6065
  %v6244 = vpack.c.b16 %v6070, %v6068
  %v6245 = vpack.c.b16 %v6071, %v6069
  %v6246 = vpack.c.b16 %v6074, %v6072
  %v6247 = vpack.c.b16 %v6075, %v6073
  %v6248 = vpack.c.b16 %v6078, %v6076
  %v6249 = vpack.c.b16 %v6079, %v6077
  %v6250 = vpack.c.b16 %v6082, %v6080
  %v6251 = vpack.c.b16 %v6083, %v6081
  %v6252 = vpack.c.b16 %v6086, %v6084
  %v6253 = vpack.c.b16 %v6087, %v6085
  %v6254 = vpack.c.b16 %v6090, %v6088
  %v6255 = vpack.c.b16 %v6091, %v6089
  %v6256 = vpack.c.b16 %v6094, %v6092
  %v6257 = vpack.c.b16 %v6095, %v6093
  %v6258 = vpack.c.b16 %v6098, %v6096
  %v6259 = vpack.c.b16 %v6099, %v6097
  %v6260 = vpack.c.b16 %v6102, %v6100
  %v6261 = vpack.c.b16 %v6103, %v6101
  %v6262 = vpack.c.b16 %v6106, %v6104
  %v6263 = vpack.c.b16 %v6107, %v6105
  %v6264 = vpack.c.b16 %v6110, %v6108
  %v6265 = vpack.c.b16 %v6111, %v6109
  %v6266 = vpack.c.b16 %v6114, %v6112
  %v6267 = vpack.c.b16 %v6115, %v6113
  %v6268 = vpack.c.b16 %v6118, %v6116
  %v6269 = vpack.c.b16 %v6119, %v6117
  %v6270 = vpack.c.b16 %v6122, %v6120
  %v6271 = vpack.c.b16 %v6123, %v6121
  %v6272 = vpack.c.b16 %v6126, %v6124
  %v6273 = vpack.c.b16 %v6127, %v6125
  %v6274 = vpack.c.b16 %v6130, %v6128
  %v6275 = vpack.c.b16 %v6131, %v6129
  %6420 = vmatprep.subr.bf16.mxu0 %v6133
  %6421 = vmatpush1.bf16.msra.mxu0 %v6132
  %6422 = vmatprep.subr.bf16.mxu0 %v6135
  %6423 = vmatpush1.bf16.msra.mxu0 %v6134
  %6424 = vmatprep.subr.bf16.mxu0 %v6137
  %6425 = vmatpush1.bf16.msra.mxu0 %v6136
  %6426 = vmatprep.subr.bf16.mxu0 %v6139
  %6427 = vmatpush1.bf16.msra.mxu0 %v6138
  %6428 = vmatprep.subr.bf16.mxu0 %v6141
  %6429 = vmatpush1.bf16.msra.mxu0 %v6140
  %6430 = vmatprep.subr.bf16.mxu0 %v6143
  %6431 = vmatpush1.bf16.msra.mxu0 %v6142
  %6432 = vmatprep.subr.bf16.mxu0 %v6145
  %6433 = vmatpush1.bf16.msra.mxu0 %v6144
  %6434 = vmatprep.subr.bf16.mxu0 %v6147
  %6435 = vmatpush1.bf16.msra.mxu0 %v6146
  %6436 = vmatprep.subr.bf16.mxu0 %v6149
  %6437 = vmatpush1.bf16.msra.mxu0 %v6148
  %6438 = vmatprep.subr.bf16.mxu0 %v6151
  %6439 = vmatpush1.bf16.msra.mxu0 %v6150
  %6440 = vmatprep.subr.bf16.mxu0 %v6153
  %6441 = vmatpush1.bf16.msra.mxu0 %v6152
  %6442 = vmatprep.subr.bf16.mxu0 %v6155
  %6443 = vmatpush1.bf16.msra.mxu0 %v6154
  %6444 = vmatprep.subr.bf16.mxu0 %v6157
  %6445 = vmatpush1.bf16.msra.mxu0 %v6156
  %6446 = vmatprep.subr.bf16.mxu0 %v6159
  %6447 = vmatpush1.bf16.msra.mxu0 %v6158
  %6448 = vmatprep.subr.bf16.mxu0 %v6161
  %6449 = vmatpush1.bf16.msra.mxu0 %v6160
  %6450 = vmatprep.subr.bf16.mxu0 %v6163
  %6451 = vmatpush1.bf16.msra.mxu0 %v6162
  %6452 = vmatprep.mubr.bf16.mxu0 %v5527
  %6453 = vmatmul.mubr.bf16.gmra.mrb[0].mxu0 %v5526
  %v6454 = vpop.f32.mrb[0].mxu0
  %v6455 = vadd.f32 %v5693, %v6454
  %v6456 = vpop.f32.mrb[0].mxu0
  %v6457 = vadd.f32 %v5697, %v6456
  %v6458 = vpop.f32.mrb[0].mxu0
  %v6459 = vadd.f32 %v5693, %v6458
  %v6460 = vpop.f32.mrb[0].mxu0
  %v6461 = vadd.f32 %v5697, %v6460
  %6462 = vmatprep.mubr.bf16.mxu0 %v5536
  %6463 = vmatmul.mubr.bf16.gmra.mrb[0].mxu0 %v5535
  %v6464 = vpop.f32.mrb[0].mxu0
  %v6465 = vadd.f32 %v5693, %v6464
  %v6466 = vpop.f32.mrb[0].mxu0
  %v6467 = vadd.f32 %v5697, %v6466
  %v6468 = vpop.f32.mrb[0].mxu0
  %v6469 = vadd.f32 %v5693, %v6468
  %v6470 = vpop.f32.mrb[0].mxu0
  %v6471 = vadd.f32 %v5697, %v6470
  %6472 = vdwg.mxu0
  %6473 = vmatprep.subr.bf16.mxu0 %v6165
  %6474 = vmatpush1.bf16.msra.mxu0 %v6164
  %6475 = vmatprep.subr.bf16.mxu0 %v6167
  %6476 = vmatpush1.bf16.msra.mxu0 %v6166
  %6477 = vmatprep.subr.bf16.mxu0 %v6169
  %6478 = vmatpush1.bf16.msra.mxu0 %v6168
  %6479 = vmatprep.subr.bf16.mxu0 %v6171
  %6480 = vmatpush1.bf16.msra.mxu0 %v6170
  %6481 = vmatprep.subr.bf16.mxu0 %v6173
  %6482 = vmatpush1.bf16.msra.mxu0 %v6172
  %6483 = vmatprep.subr.bf16.mxu0 %v6175
  %6484 = vmatpush1.bf16.msra.mxu0 %v6174
  %6485 = vmatprep.subr.bf16.mxu0 %v6177
  %6486 = vmatpush1.bf16.msra.mxu0 %v6176
  %6487 = vmatprep.subr.bf16.mxu0 %v6179
  %6488 = vmatpush1.bf16.msra.mxu0 %v6178
  %6489 = vmatprep.subr.bf16.mxu0 %v6181
  %6490 = vmatpush1.bf16.msra.mxu0 %v6180
  %6491 = vmatprep.subr.bf16.mxu0 %v6183
  %6492 = vmatpush1.bf16.msra.mxu0 %v6182
  %6493 = vmatprep.subr.bf16.mxu0 %v6185
  %6494 = vmatpush1.bf16.msra.mxu0 %v6184
  %6495 = vmatprep.subr.bf16.mxu0 %v6187
  %6496 = vmatpush1.bf16.msra.mxu0 %v6186
  %6497 = vmatprep.subr.bf16.mxu0 %v6189
  %6498 = vmatpush1.bf16.msra.mxu0 %v6188
  %6499 = vmatprep.subr.bf16.mxu0 %v6191
  %6500 = vmatpush1.bf16.msra.mxu0 %v6190
  %6501 = vmatprep.subr.bf16.mxu0 %v6193
  %6502 = vmatpush1.bf16.msra.mxu0 %v6192
  %6503 = vmatprep.subr.bf16.mxu0 %v6195
  %6504 = vmatpush1.bf16.msra.mxu0 %v6194
  %6505 = vmatprep.mubr.bf16.mxu0 %v5529
  %6506 = vmatmul.mubr.bf16.gmra.mrb[0].mxu0 %v5528
  %v6507 = vpop.f32.mrb[0].mxu0
  %v6508 = vadd.f32 %v6455, %v6507
  %v6509 = vpop.f32.mrb[0].mxu0
  %v6510 = vadd.f32 %v6457, %v6509
  %v6511 = vpop.f32.mrb[0].mxu0
  %v6512 = vadd.f32 %v6459, %v6511
  %v6513 = vpop.f32.mrb[0].mxu0
  %v6514 = vadd.f32 %v6461, %v6513
  %6515 = vmatprep.mubr.bf16.mxu0 %v5538
  %6516 = vmatmul.mubr.bf16.gmra.mrb[0].mxu0 %v5537
  %v6517 = vpop.f32.mrb[0].mxu0
  %v6518 = vadd.f32 %v6465, %v6517
  %v6519 = vpop.f32.mrb[0].mxu0
  %v6520 = vadd.f32 %v6467, %v6519
  %v6521 = vpop.f32.mrb[0].mxu0
  %v6522 = vadd.f32 %v6469, %v6521
  %v6523 = vpop.f32.mrb[0].mxu0
  %v6524 = vadd.f32 %v6471, %v6523
  %6525 = vdwg.mxu0
  %6526 = vmatprep.subr.bf16.mxu0 %v6197
  %6527 = vmatpush1.bf16.msra.mxu0 %v6196
  %6528 = vmatprep.subr.bf16.mxu0 %v6199
  %6529 = vmatpush1.bf16.msra.mxu0 %v6198
  %6530 = vmatprep.subr.bf16.mxu0 %v6201
  %6531 = vmatpush1.bf16.msra.mxu0 %v6200
  %6532 = vmatprep.subr.bf16.mxu0 %v6203
  %6533 = vmatpush1.bf16.msra.mxu0 %v6202
  %6534 = vmatprep.subr.bf16.mxu0 %v6205
  %6535 = vmatpush1.bf16.msra.mxu0 %v6204
  %6536 = vmatprep.subr.bf16.mxu0 %v6207
  %6537 = vmatpush1.bf16.msra.mxu0 %v6206
  %6538 = vmatprep.subr.bf16.mxu0 %v6209
  %6539 = vmatpush1.bf16.msra.mxu0 %v6208
  %6540 = vmatprep.subr.bf16.mxu0 %v6211
  %6541 = vmatpush1.bf16.msra.mxu0 %v6210
  %6542 = vmatprep.subr.bf16.mxu0 %v6213
  %6543 = vmatpush1.bf16.msra.mxu0 %v6212
  %6544 = vmatprep.subr.bf16.mxu0 %v6215
  %6545 = vmatpush1.bf16.msra.mxu0 %v6214
  %6546 = vmatprep.subr.bf16.mxu0 %v6217
  %6547 = vmatpush1.bf16.msra.mxu0 %v6216
  %6548 = vmatprep.subr.bf16.mxu0 %v6219
  %6549 = vmatpush1.bf16.msra.mxu0 %v6218
  %6550 = vmatprep.subr.bf16.mxu0 %v6221
  %6551 = vmatpush1.bf16.msra.mxu0 %v6220
  %6552 = vmatprep.subr.bf16.mxu0 %v6223
  %6553 = vmatpush1.bf16.msra.mxu0 %v6222
  %6554 = vmatprep.subr.bf16.mxu0 %v6225
  %6555 = vmatpush1.bf16.msra.mxu0 %v6224
  %6556 = vmatprep.subr.bf16.mxu0 %v6227
  %6557 = vmatpush1.bf16.msra.mxu0 %v6226
  %6558 = vmatprep.mubr.bf16.mxu0 %v5531
  %6559 = vmatmul.mubr.bf16.gmra.mrb[0].mxu0 %v5530
  %v6560 = vpop.f32.mrb[0].mxu0
  %v6561 = vadd.f32 %v6508, %v6560
  %v6562 = vpop.f32.mrb[0].mxu0
  %v6563 = vadd.f32 %v6510, %v6562
  %v6564 = vpop.f32.mrb[0].mxu0
  %v6565 = vadd.f32 %v6512, %v6564
  %v6566 = vpop.f32.mrb[0].mxu0
  %v6567 = vadd.f32 %v6514, %v6566
  %6568 = vmatprep.mubr.bf16.mxu0 %v5540
  %6569 = vmatmul.mubr.bf16.gmra.mrb[0].mxu0 %v5539
  %v6570 = vpop.f32.mrb[0].mxu0
  %v6571 = vadd.f32 %v6518, %v6570
  %v6572 = vpop.f32.mrb[0].mxu0
  %v6573 = vadd.f32 %v6520, %v6572
  %v6574 = vpop.f32.mrb[0].mxu0
  %v6575 = vadd.f32 %v6522, %v6574
  %v6576 = vpop.f32.mrb[0].mxu0
  %v6577 = vadd.f32 %v6524, %v6576
  %6578 = vdwg.mxu0
  %6579 = vmatprep.subr.bf16.mxu0 %v6229
  %6580 = vmatpush1.bf16.msra.mxu0 %v6228
  %6581 = vmatprep.subr.bf16.mxu0 %v6231
  %6582 = vmatpush1.bf16.msra.mxu0 %v6230
  %6583 = vmatprep.subr.bf16.mxu0 %v6233
  %6584 = vmatpush1.bf16.msra.mxu0 %v6232
  %6585 = vmatprep.subr.bf16.mxu0 %v6235
  %6586 = vmatpush1.bf16.msra.mxu0 %v6234
  %6587 = vmatprep.subr.bf16.mxu0 %v6237
  %6588 = vmatpush1.bf16.msra.mxu0 %v6236
  %6589 = vmatprep.subr.bf16.mxu0 %v6239
  %6590 = vmatpush1.bf16.msra.mxu0 %v6238
  %6591 = vmatprep.subr.bf16.mxu0 %v6241
  %6592 = vmatpush1.bf16.msra.mxu0 %v6240
  %6593 = vmatprep.subr.bf16.mxu0 %v6243
  %6594 = vmatpush1.bf16.msra.mxu0 %v6242
  %6595 = vmatprep.subr.bf16.mxu0 %v6245
  %6596 = vmatpush1.bf16.msra.mxu0 %v6244
  %6597 = vmatprep.subr.bf16.mxu0 %v6247
  %6598 = vmatpush1.bf16.msra.mxu0 %v6246
  %6599 = vmatprep.subr.bf16.mxu0 %v6249
  %6600 = vmatpush1.bf16.msra.mxu0 %v6248
  %6601 = vmatprep.subr.bf16.mxu0 %v6251
  %6602 = vmatpush1.bf16.msra.mxu0 %v6250
  %6603 = vmatprep.subr.bf16.mxu0 %v6253
  %6604 = vmatpush1.bf16.msra.mxu0 %v6252
  %6605 = vmatprep.subr.bf16.mxu0 %v6255
  %6606 = vmatpush1.bf16.msra.mxu0 %v6254
  %6607 = vmatprep.subr.bf16.mxu0 %v6257
  %6608 = vmatpush1.bf16.msra.mxu0 %v6256
  %6609 = vmatprep.subr.bf16.mxu0 %v6259
  %6610 = vmatpush1.bf16.msra.mxu0 %v6258
  %6611 = vmatprep.mubr.bf16.mxu0 %v5533
  %6612 = vmatmul.mubr.bf16.gmra.mrb[0].mxu0 %v5532
  %v6613 = vpop.f32.mrb[0].mxu0
  %v6614 = vadd.f32 %v6561, %v6613
  %v6615 = vpop.f32.mrb[0].mxu0
  %v6616 = vadd.f32 %v6563, %v6615
  %v6617 = vpop.f32.mrb[0].mxu0
  %v6618 = vadd.f32 %v6565, %v6617
  %v6619 = vpop.f32.mrb[0].mxu0
  %v6620 = vadd.f32 %v6567, %v6619
  %6621 = vmatprep.mubr.bf16.mxu0 %v5542
  %6622 = vmatmul.mubr.bf16.gmra.mrb[0].mxu0 %v5541
  %v6623 = vpop.f32.mrb[0].mxu0
  %v6624 = vadd.f32 %v6571, %v6623
  %v6625 = vpop.f32.mrb[0].mxu0
  %v6626 = vadd.f32 %v6573, %v6625
  %v6627 = vpop.f32.mrb[0].mxu0
  %v6628 = vadd.f32 %v6575, %v6627
  %v6629 = vpop.f32.mrb[0].mxu0
  %v6630 = vadd.f32 %v6577, %v6629
  %6631 = vdwg.mxu0
  %6632 = vmatprep.subr.bf16.mxu0 %v6261
  %6633 = vmatpush1.bf16.msra.mxu0 %v6260
  %6634 = vmatprep.subr.bf16.mxu0 %v6263
  %6635 = vmatpush1.bf16.msra.mxu0 %v6262
  %6636 = vmatprep.subr.bf16.mxu0 %v6265
  %6637 = vmatpush1.bf16.msra.mxu0 %v6264
  %6638 = vmatprep.subr.bf16.mxu0 %v6267
  %6639 = vmatpush1.bf16.msra.mxu0 %v6266
  %6640 = vmatprep.subr.bf16.mxu0 %v6269
  %6641 = vmatpush1.bf16.msra.mxu0 %v6268
  %6642 = vmatprep.subr.bf16.mxu0 %v6271
  %6643 = vmatpush1.bf16.msra.mxu0 %v6270
  %6644 = vmatprep.subr.bf16.mxu0 %v6273
  %6645 = vmatpush1.bf16.msra.mxu0 %v6272
  %6646 = vmatprep.subr.bf16.mxu0 %v6275
  %6647 = vmatpush1.bf16.msra.mxu0 %v6274
  %6648 = vmatprep.subr.bf16.mxu0 0
  %6649 = vmatpush1.bf16.msra.mxu0 0
  %6650 = vmatprep.subr.bf16.mxu0 0
  %6651 = vmatpush1.bf16.msra.mxu0 0
  %6652 = vmatprep.subr.bf16.mxu0 0
  %6653 = vmatpush1.bf16.msra.mxu0 0
  %6654 = vmatprep.subr.bf16.mxu0 0
  %6655 = vmatpush1.bf16.msra.mxu0 0
  %6656 = vmatprep.subr.bf16.mxu0 0
  %6657 = vmatpush1.bf16.msra.mxu0 0
  %6658 = vmatprep.subr.bf16.mxu0 0
  %6659 = vmatpush1.bf16.msra.mxu0 0
  %6660 = vmatprep.subr.bf16.mxu0 0
  %6661 = vmatpush1.bf16.msra.mxu0 0
  %6662 = vmatprep.subr.bf16.mxu0 0
  %6663 = vmatpush1.bf16.msra.mxu0 0
  %6664 = vmatprep.mubr.bf16.mxu0 0
  %6665 = vmatmul.mubr.bf16.gmra.mrb[0].mxu0 %v5534
  %v6666 = vpop.f32.mrb[0].mxu0
  %v6667 = vadd.f32 %v6614, %v6666
  %v6668 = vpop.f32.mrb[0].mxu0
  %v6669 = vadd.f32 %v6616, %v6668
  %v6670 = vpop.f32.mrb[0].mxu0
  %v6671 = vadd.f32 %v6618, %v6670
  %v6672 = vpop.f32.mrb[0].mxu0
  %v6673 = vadd.f32 %v6620, %v6672
  %6674 = vmatprep.mubr.bf16.mxu0 0
  %6675 = vmatmul.mubr.bf16.gmra.mrb[0].mxu0 %v5543
  %v6676 = vpop.f32.mrb[0].mxu0
  %v6677 = vadd.f32 %v6624, %v6676
  %v6678 = vpop.f32.mrb[0].mxu0
  %v6679 = vadd.f32 %v6626, %v6678
  %v6680 = vpop.f32.mrb[0].mxu0
  %v6681 = vadd.f32 %v6628, %v6680
  %v6682 = vpop.f32.mrb[0].mxu0
  %v6683 = vadd.f32 %v6630, %v6682
  %6684 = vdwg.mxu0
  %v6685 = vmax.f32 %v6667, 0.0
  %v6686 = vmax.f32 %v6669, 0.0
  %v6687 = vmax.f32 %v6671, 0.0
  %v6688 = vmax.f32 %v6673, 0.0
  %v6689 = vmax.f32 %v6677, 0.0
  %v6690 = vmax.f32 %v6679, 0.0
  %v6691 = vmax.f32 %v6681, 0.0
  %v6692 = vmax.f32 %v6683, 0.0
  %v6693 = vpack.c.bf16 %v6687, %v6685
  %v6694 = vpack.c.bf16 %v6688, %v6686
  %v6695 = vpack.c.bf16 %v6691, %v6689
  %v6696 = vpack.c.bf16 %v6692, %v6690
  %v6701 = vunpack.c.l.b16 %v6693
  %v6702 = vunpack.c.l.b16 %v6694
  %v6703 = vunpack.c.h.b16 %v6693
  %v6704 = vunpack.c.h.b16 %v6694
  %v6705 = vunpack.c.l.b16 %v6695
  %v6706 = vunpack.c.l.b16 %v6696
  %v6707 = vunpack.c.h.b16 %v6695
  %v6708 = vunpack.c.h.b16 %v6696
  %v6709 = vpack.c.b16 %v6702, %v6701
  %v6710 = vpack.c.b16 %v6704, %v6703
  %v6711 = vpack.c.b16 %v6706, %v6705
  %v6712 = vpack.c.b16 %v6708, %v6707
  %6717 = vst [vmem:[%s17] sm:$0xff] %v6709
  %6718 = vst [vmem:[%s17 + $0x8] sm:$0xff] %v6710
  %6719 = vst [vmem:[%s17 + $0x10] sm:$0xff] %v6711
  %6720 = vst [vmem:[%s17 + $0x18] sm:$0xff] %v6712
  // Predicated region
  $region66: #{forward.7} parent=0 // pred_check
    _
  $region67: #{forward.7} parent=0 // pred_check_branch
    %6722 = sbr.rel (0) target = $region69
  $region68: #{forward.7} parent=0 // pred_region
    _
  $region69: #{forward.7} parent=0 // pred_fallthru
    _
  // Predicated region
  $region70: #{forward.7} parent=0 // pred_check
    _
  $region71: #{forward.7} parent=0 // pred_check_branch
    %6724 = sbr.rel (0) target = $region73
  $region72: #{forward.7} parent=0 // pred_region
    _
  $region73: #{forward.7} parent=0 // pred_fallthru
    _
  // Predicated region
  $region74: #{forward.7} parent=0 // pred_check
    _
  $region75: #{forward.7} parent=0 // pred_check_branch
    %6726 = sbr.rel (0) target = $region77
  $region76: #{forward.7} parent=0 // pred_region
    _
  $region77: #{forward.7} parent=0 // pred_fallthru
    _
  // Predicated region
  $region78: #{forward.7} parent=0 // pred_check
    _
  $region79: #{forward.7} parent=0 // pred_check_branch
    %6728 = sbr.rel (0) target = $region81
  $region80: #{forward.7} parent=0 // pred_region
    _
  $region81: #{forward.7} parent=0 // pred_fallthru
    _

</llo_original>
